<compile_context>
chip_gen: v6e
topology: v6e:2x2x1
jax: 0.10.0
libtpu: 0.0.40
codegen_flags: <defaults>
</compile_context>

<pallas_src>
import numpy as np
import jax
import jax.numpy as jnp
from jax.experimental import pallas as pl
from jax.experimental.pallas import tpu as pltpu


# ----------------------------------------------------------------------------
# Tiling helpers
# ----------------------------------------------------------------------------
def _pick_tiles(cin, cout):
    """Channel tiles: TK<=512, TN<=128 (v5e MXU width, more parallel tiles)."""
    def pick(c, cap):
        if c <= cap or c % 128 != 0:
            return c
        t = cap
        while c % t != 0:
            t -= 128
        return t
    return pick(cin, 512), pick(cout, 128)


def _row_pad_top(wp):
    """Smallest top-pad row count >= 2 making the interior row offset 8-aligned."""
    r0 = 2
    while (r0 * wp) % 8 != 0:
        r0 += 1
    return r0


# ----------------------------------------------------------------------------
# Pallas kernel: fused 3x3 conv (stride=1, pad=1) + BN bias (+res) (+ReLU)
# ----------------------------------------------------------------------------
def _make_conv3x3_kernel(M, row_start, taps_off, apply_relu, padded_out,
                         has_residual):
    def kernel(*refs):
        if padded_out:
            x_ref, w_ref, b_ref, mask_ref, o_ref, acc_ref = refs
            r_ref = None
        elif has_residual:
            x_ref, w_ref, b_ref, r_ref, o_ref, acc_ref = refs
            mask_ref = None
        else:
            x_ref, w_ref, b_ref, o_ref, acc_ref = refs
            mask_ref = r_ref = None

        k = pl.program_id(2)

        @pl.when(k == 0)
        def _init():
            acc_ref[...] = jnp.zeros_like(acc_ref)

        # Nine tap GEMMs from contiguous row slices of the flat padded input.
        # Accumulate locally (f32); single scratch read-modify-write per step.
        part = None
        for t, off in enumerate(taps_off):
            a = x_ref[0, off:off + M, :]                       # (M, TK) bf16
            p = jnp.dot(a, w_ref[0, 0, t],
                        preferred_element_type=jnp.float32)    # MXU, f32 acc
            part = p if part is None else part + p
        acc_ref[...] += part

        @pl.when(k == pl.num_programs(2) - 1)
        def _finalize():
            y = acc_ref[...] + b_ref[...]                      # folded BN bias
            if has_residual:
                y = y + r_ref[0, row_start:row_start + M, :].astype(jnp.float32)
            if apply_relu:
                y = jnp.maximum(y, 0.0)
            if padded_out:
                y = y * mask_ref[...]                          # zero pad columns
                o_ref[...] = jnp.zeros_like(o_ref)             # zero halo rows
                o_ref[0, row_start:row_start + M, :] = y.astype(o_ref.dtype)
            else:
                o_ref[0] = y.astype(o_ref.dtype)

    return kernel


def conv3x3_bn_act(x_pad_flat, w_tiled, bias, *, H, W, r0, relu=True,
                   residual=None, mask=None, padded_out=False,
                   out_dtype=jnp.float32):
    """Fused 3x3 conv (stride=1, pad=1) + folded-BN bias (+residual) (+ReLU).

    x_pad_flat : (B, R*Wp, Cin) bf16 flat padded activations; Wp = W+2,
                 R = r0+H+2, image rows at [r0, r0+H), image cols at [1, W+1).
    w_tiled    : (Cin//TK, Cout//TN, 9, TK, TN) bf16, BN scale folded in.
    bias       : (Cout,) f32 folded BN shift (beta - scale*mean).
    residual   : optional (B, R*Wp, Cout) bf16 in the same padded-flat layout.
    mask       : (H*Wp, 1) f32 column-validity mask (required if padded_out).
    padded_out : True -> output is (B, R*Wp, Cout) in the padded-flat layout
                 (directly usable as the next conv's input); False -> output is
                 (B, H*Wp, Cout) with pad columns interleaved (caller slices).
    """
    assert not (padded_out and residual is not None)
    B, Min, Cin = x_pad_flat.shape
    KT, NT, _, TK, TN = w_tiled.shape
    Cout = NT * TN
    assert KT * TK == Cin
    Wp = W + 2
    M = H * Wp
    R = r0 + H + 2
    assert Min == R * Wp
    row_start = r0 * Wp
    taps_off = tuple((r0 - 1 + di) * Wp + (dj - 1)
                     for di in range(3) for dj in range(3))

    bias2d = bias.reshape(1, Cout).astype(jnp.float32)

    in_specs = [
        pl.BlockSpec((1, Min, TK), lambda b, j, k: (b, 0, k)),
        pl.BlockSpec((1, 1, 9, TK, TN), lambda b, j, k: (k, j, 0, 0, 0)),
        pl.BlockSpec((1, TN), lambda b, j, k: (0, j)),
    ]
    args = [x_pad_flat, w_tiled, bias2d]

    if padded_out:
        assert mask is not None and mask.shape == (M, 1)
        in_specs.append(pl.BlockSpec((M, 1), lambda b, j, k: (0, 0)))
        args.append(mask)
        out_rows = Min
    else:
        out_rows = M

    if residual is not None:
        assert residual.shape == (B, Min, Cout)
        in_specs.append(pl.BlockSpec((1, Min, TN), lambda b, j, k: (b, 0, j)))
        args.append(residual)

    out_shape = jax.ShapeDtypeStruct((B, out_rows, Cout), out_dtype)
    out_spec = pl.BlockSpec((1, out_rows, TN), lambda b, j, k: (b, 0, j))

    # Explicit VMEM budget from the per-step block footprint (with headroom).
    out_isz = 2 if out_dtype == jnp.bfloat16 else 4
    blk_bytes = (Min * TK * 2 + 9 * TK * TN * 2 + TN * 4
                 + (M * 4 if padded_out else 0)
                 + (Min * TN * 2 if residual is not None else 0)
                 + out_rows * TN * out_isz)
    vmem_est = 2 * blk_bytes + M * TN * 4
    vmem_limit = int(max(32 << 20, min(64 << 20, 2 * vmem_est + (2 << 20))))

    return pl.pallas_call(
        _make_conv3x3_kernel(M, row_start, taps_off, relu, padded_out,
                             residual is not None),
        out_shape=out_shape,
        grid_spec=pltpu.PrefetchScalarGridSpec(
            num_scalar_prefetch=0,
            grid=(B, NT, KT),
            in_specs=in_specs,
            out_specs=out_spec,
            scratch_shapes=[pltpu.VMEM((M, TN), jnp.float32)],
        ),
        compiler_params=pltpu.CompilerParams(
            dimension_semantics=("parallel", "parallel", "arbitrary"),
            vmem_limit_bytes=vmem_limit,
        ),
    )(*args)


# ----------------------------------------------------------------------------
# Parameters (Xavier-uniform convs, module-init eval-mode BN), folding + prep
# ----------------------------------------------------------------------------
def make_params(key, in_planes, out_planes):
    k1, k2 = jax.random.split(key)

    def xavier_conv(k, cin, cout):
        fan_in, fan_out = cin * 9, cout * 9
        bound = float(np.sqrt(6.0 / (fan_in + fan_out)))
        return jax.random.uniform(k, (3, 3, cin, cout), jnp.float32, -bound, bound)

    def bn_init(c):  # nn.BatchNorm2d init: gamma=1, beta=0, mean=0, var=1
        return {"gamma": jnp.ones((c,), jnp.float32),
                "beta": jnp.zeros((c,), jnp.float32),
                "mean": jnp.zeros((c,), jnp.float32),
                "var": jnp.ones((c,), jnp.float32)}

    return {"w1": xavier_conv(k1, in_planes, out_planes),
            "bn1": bn_init(out_planes),
            "w2": xavier_conv(k2, out_planes, out_planes),
            "bn2": bn_init(out_planes)}


def _tile_weights(w_bf16):
    """(3,3,Cin,Cout) -> (Cin//TK, Cout//TN, 9, TK, TN) contiguous slabs."""
    Cin, Cout = w_bf16.shape[2], w_bf16.shape[3]
    TK, TN = _pick_tiles(Cin, Cout)
    wt = w_bf16.reshape(3, 3, Cin // TK, TK, Cout // TN, TN)
    wt = jnp.transpose(wt, (2, 4, 0, 1, 3, 5))
    return wt.reshape(Cin // TK, Cout // TN, 9, TK, TN)


def prep_params(params, eps=1e-5):
    """Fold BN (eval mode) into bf16 conv weights + f32 bias; retile weights."""
    def fold(w, bn):
        scale = bn["gamma"] * jax.lax.rsqrt(bn["var"] + eps)
        bias = bn["beta"] - scale * bn["mean"]          # correct folded shift
        wf = (w * scale[None, None, None, :]).astype(jnp.bfloat16)
        return _tile_weights(wf), bias.astype(jnp.float32)

    w1, b1 = fold(params["w1"], params["bn1"])
    w2, b2 = fold(params["w2"], params["bn2"])
    return {"w1": w1, "b1": b1, "w2": w2, "b2": b2}


# ----------------------------------------------------------------------------
# ResidualBlock forward (default config: stride=1, downsample=None)
# ----------------------------------------------------------------------------
def residual_block_forward(prepped, x_nchw):
    B, C, H, W = x_nchw.shape
    Wp = W + 2
    r0 = _row_pad_top(Wp)
    R = r0 + H + 2

    # NCHW -> NHWC, bf16 cast, zero-pad into the flat padded layout (one pass).
    x_nhwc = jnp.transpose(x_nchw, (0, 2, 3, 1)).astype(jnp.bfloat16)
    xp = jnp.pad(x_nhwc, ((0, 0), (r0, 2), (1, 1), (0, 0)))
    xp_flat = xp.reshape(B, R * Wp, C)

    # Column-validity mask for conv1's padded output (pad columns stay zero).
    cols = np.arange(H * Wp) % Wp
    mask = jnp.asarray(((cols >= 1) & (cols <= W))
                       .astype(np.float32).reshape(-1, 1))

    # conv1 + bn1 + relu -> bf16, already in conv2's padded-flat input layout.
    h = conv3x3_bn_act(xp_flat, prepped["w1"], prepped["b1"], H=H, W=W, r0=r0,
                       relu=True, mask=mask, padded_out=True,
                       out_dtype=jnp.bfloat16)

    # conv2 + bn2 + residual add + relu (residual = bf16 padded block input).
    out = conv3x3_bn_act(h, prepped["w2"], prepped["b2"], H=H, W=W, r0=r0,
                         relu=True, residual=xp_flat, padded_out=False,
                         out_dtype=jnp.float32)

    # Drop interleaved pad columns and go back to NCHW (fused slice+transpose).
    out = out.reshape(B, H, Wp, -1)[:, :, 1:W + 1, :]
    return jnp.transpose(out, (0, 3, 1, 2))


def reference_forward(params, x_nchw, eps=1e-5):
    """Pure-JAX/XLA f32 reference for validation."""
    x = jnp.transpose(x_nchw, (0, 2, 3, 1)).astype(jnp.float32)

    def conv(h, w):
        return jax.lax.conv_general_dilated(
            h, w, window_strides=(1, 1), padding=((1, 1), (1, 1)),
            dimension_numbers=("NHWC", "HWIO", "NHWC"))

    def bn(h, p):
        inv = p["gamma"] * jax.lax.rsqrt(p["var"] + eps)
        return (h - p["mean"]) * inv + p["beta"]

    out = jax.nn.relu(bn(conv(x, params["w1"]), params["bn1"]))
    out = bn(conv(out, params["w2"]), params["bn2"]) + x
    return jnp.transpose(jax.nn.relu(out), (0, 3, 1, 2))


# ----------------------------------------------------------------------------
if __name__ == "__main__":
    key = jax.random.PRNGKey(0)
    pkey, xkey = jax.random.split(key)

    B, C, H, W = 2, 128, 16, 16          # in_planes == out_planes, no downsample
    params = make_params(pkey, C, C)
    prepped = prep_params(params)
    x = jax.random.normal(xkey, (B, C, H, W), jnp.float32)

    fwd = jax.jit(residual_block_forward)
    out = jax.block_until_ready(fwd(prepped, x))

    assert out.shape == (B, C, H, W), out.shape
    assert bool(jnp.all(jnp.isfinite(out)))

    ref = jax.block_until_ready(reference_forward(params, x))
    # bf16 MXU path vs f32 reference -> loose tolerances (documented/intended).
    np.testing.assert_allclose(np.asarray(out), np.asarray(ref),
                               atol=5e-2, rtol=5e-2)

    print("KERNEL_OK")
</pallas_src>

<mosaic_0001>
module attributes {stable_mosaic.version = 11 : i64} {
  func.func @kernel(%arg0: i32, %arg1: i32, %arg2: i32, %arg3: memref<1x396x128xbf16, #tpu.memory_space<vmem>>, %arg4: memref<1x1x9x128x128xbf16, #tpu.memory_space<vmem>>, %arg5: memref<1x128xf32, #tpu.memory_space<vmem>>, %arg6: memref<288x1xf32, #tpu.memory_space<vmem>>, %arg7: memref<1x396x128xbf16, #tpu.memory_space<vmem>>, %arg8: memref<288x128xf32, #tpu.memory_space<vmem>>) attributes {dimension_semantics = [#tpu.dimension_semantics<parallel>, #tpu.dimension_semantics<parallel>, #tpu.dimension_semantics<arbitrary>], iteration_bounds = array<i64: 2, 1, 1>, scalar_prefetch = 0 : i64, scratch_operands = 1 : i64, tpu.core_type = #tpu.core_type<tc>, window_params = [{transform_indices = @transform_0, window_bounds = array<i64: 1, 396, 128>}, {transform_indices = @transform_1, window_bounds = array<i64: 1, 1, 9, 128, 128>}, {transform_indices = @transform_2, window_bounds = array<i64: 1, 128>}, {pipeline_mode = #tpu.pipeline_mode<synchronous>, transform_indices = @transform_3, window_bounds = array<i64: 288, 1>}, {transform_indices = @transform_4, window_bounds = array<i64: 1, 396, 128>}]} {
    %c0_i32 = arith.constant 0 : i32
    %0 = arith.cmpi eq, %arg2, %c0_i32 : i32
    %1 = arith.extui %0 : i1 to i32
    %c0_i32_0 = arith.constant 0 : i32
    %2 = arith.cmpi ne, %1, %c0_i32_0 : i32
    scf.if %2 {
      %cst_69 = arith.constant 0.000000e+00 : f32
      %62 = vector.broadcast %cst_69 : f32 to vector<288x128xf32>
      %c0_70 = arith.constant 0 : index
      %c0_71 = arith.constant 0 : index
      %63 = vector.load %arg8[%c0_70, %c0_71] : memref<288x128xf32, #tpu.memory_space<vmem>>, vector<288x128xf32>
      tpu.vector_store %arg8[%c0_70, %c0_71], %62 {strides = array<i32>} : memref<288x128xf32, #tpu.memory_space<vmem>>, vector<288x128xf32>,
    } else {
    }
    %c0 = arith.constant 0 : index
    %c53 = arith.constant 53 : index
    %c0_1 = arith.constant 0 : index
    %3 = vector.load %arg3[%c0, %c53, %c0_1] : memref<1x396x128xbf16, #tpu.memory_space<vmem>>, vector<1x288x128xbf16>
    %4 = vector.shape_cast %3 : vector<1x288x128xbf16> to vector<288x128xbf16>
    %c0_2 = arith.constant 0 : index
    %c0_3 = arith.constant 0 : index
    %c0_4 = arith.constant 0 : index
    %c0_5 = arith.constant 0 : index
    %c0_6 = arith.constant 0 : index
    %5 = vector.load %arg4[%c0_2, %c0_3, %c0_4, %c0_5, %c0_6] : memref<1x1x9x128x128xbf16, #tpu.memory_space<vmem>>, vector<1x1x1x128x128xbf16>
    %6 = vector.shape_cast %5 : vector<1x1x1x128x128xbf16> to vector<128x128xbf16>
    %cst = arith.constant dense<0.000000e+00> : vector<288x128xf32>
    %7 = tpu.matmul %4, %6, %cst {dimension_numbers = #tpu.dot_dimension_numbers<[1], [0], [0], [1], [0, 0, 1, 1], [], []>} : vector<288x128xbf16>, vector<128x128xbf16>, vector<288x128xf32> -> vector<288x128xf32>
    %c0_7 = arith.constant 0 : index
    %c54 = arith.constant 54 : index
    %c0_8 = arith.constant 0 : index
    %8 = vector.load %arg3[%c0_7, %c54, %c0_8] : memref<1x396x128xbf16, #tpu.memory_space<vmem>>, vector<1x288x128xbf16>
    %9 = vector.shape_cast %8 : vector<1x288x128xbf16> to vector<288x128xbf16>
    %c0_9 = arith.constant 0 : index
    %c0_10 = arith.constant 0 : index
    %c1 = arith.constant 1 : index
    %c0_11 = arith.constant 0 : index
    %c0_12 = arith.constant 0 : index
    %10 = vector.load %arg4[%c0_9, %c0_10, %c1, %c0_11, %c0_12] : memref<1x1x9x128x128xbf16, #tpu.memory_space<vmem>>, vector<1x1x1x128x128xbf16>
    %11 = vector.shape_cast %10 : vector<1x1x1x128x128xbf16> to vector<128x128xbf16>
    %cst_13 = arith.constant dense<0.000000e+00> : vector<288x128xf32>
    %12 = tpu.matmul %9, %11, %cst_13 {dimension_numbers = #tpu.dot_dimension_numbers<[1], [0], [0], [1], [0, 0, 1, 1], [], []>} : vector<288x128xbf16>, vector<128x128xbf16>, vector<288x128xf32> -> vector<288x128xf32>
    %13 = arith.addf %7, %12 : vector<288x128xf32>
    %c0_14 = arith.constant 0 : index
    %c55 = arith.constant 55 : index
    %c0_15 = arith.constant 0 : index
    %14 = vector.load %arg3[%c0_14, %c55, %c0_15] : memref<1x396x128xbf16, #tpu.memory_space<vmem>>, vector<1x288x128xbf16>
    %15 = vector.shape_cast %14 : vector<1x288x128xbf16> to vector<288x128xbf16>
    %c0_16 = arith.constant 0 : index
    %c0_17 = arith.constant 0 : index
    %c2 = arith.constant 2 : index
    %c0_18 = arith.constant 0 : index
    %c0_19 = arith.constant 0 : index
    %16 = vector.load %arg4[%c0_16, %c0_17, %c2, %c0_18, %c0_19] : memref<1x1x9x128x128xbf16, #tpu.memory_space<vmem>>, vector<1x1x1x128x128xbf16>
    %17 = vector.shape_cast %16 : vector<1x1x1x128x128xbf16> to vector<128x128xbf16>
    %cst_20 = arith.constant dense<0.000000e+00> : vector<288x128xf32>
    %18 = tpu.matmul %15, %17, %cst_20 {dimension_numbers = #tpu.dot_dimension_numbers<[1], [0], [0], [1], [0, 0, 1, 1], [], []>} : vector<288x128xbf16>, vector<128x128xbf16>, vector<288x128xf32> -> vector<288x128xf32>
    %19 = arith.addf %13, %18 : vector<288x128xf32>
    %c0_21 = arith.constant 0 : index
    %c71 = arith.constant 71 : index
    %c0_22 = arith.constant 0 : index
    %20 = vector.load %arg3[%c0_21, %c71, %c0_22] : memref<1x396x128xbf16, #tpu.memory_space<vmem>>, vector<1x288x128xbf16>
    %21 = vector.shape_cast %20 : vector<1x288x128xbf16> to vector<288x128xbf16>
    %c0_23 = arith.constant 0 : index
    %c0_24 = arith.constant 0 : index
    %c3 = arith.constant 3 : index
    %c0_25 = arith.constant 0 : index
    %c0_26 = arith.constant 0 : index
    %22 = vector.load %arg4[%c0_23, %c0_24, %c3, %c0_25, %c0_26] : memref<1x1x9x128x128xbf16, #tpu.memory_space<vmem>>, vector<1x1x1x128x128xbf16>
    %23 = vector.shape_cast %22 : vector<1x1x1x128x128xbf16> to vector<128x128xbf16>
    %cst_27 = arith.constant dense<0.000000e+00> : vector<288x128xf32>
    %24 = tpu.matmul %21, %23, %cst_27 {dimension_numbers = #tpu.dot_dimension_numbers<[1], [0], [0], [1], [0, 0, 1, 1], [], []>} : vector<288x128xbf16>, vector<128x128xbf16>, vector<288x128xf32> -> vector<288x128xf32>
    %25 = arith.addf %19, %24 : vector<288x128xf32>
    %c0_28 = arith.constant 0 : index
    %c72 = arith.constant 72 : index
    %c0_29 = arith.constant 0 : index
    %26 = vector.load %arg3[%c0_28, %c72, %c0_29] : memref<1x396x128xbf16, #tpu.memory_space<vmem>>, vector<1x288x128xbf16>
    %27 = vector.shape_cast %26 : vector<1x288x128xbf16> to vector<288x128xbf16>
    %c0_30 = arith.constant 0 : index
    %c0_31 = arith.constant 0 : index
    %c4 = arith.constant 4 : index
    %c0_32 = arith.constant 0 : index
    %c0_33 = arith.constant 0 : index
    %28 = vector.load %arg4[%c0_30, %c0_31, %c4, %c0_32, %c0_33] : memref<1x1x9x128x128xbf16, #tpu.memory_space<vmem>>, vector<1x1x1x128x128xbf16>
    %29 = vector.shape_cast %28 : vector<1x1x1x128x128xbf16> to vector<128x128xbf16>
    %cst_34 = arith.constant dense<0.000000e+00> : vector<288x128xf32>
    %30 = tpu.matmul %27, %29, %cst_34 {dimension_numbers = #tpu.dot_dimension_numbers<[1], [0], [0], [1], [0, 0, 1, 1], [], []>} : vector<288x128xbf16>, vector<128x128xbf16>, vector<288x128xf32> -> vector<288x128xf32>
    %31 = arith.addf %25, %30 : vector<288x128xf32>
    %c0_35 = arith.constant 0 : index
    %c73 = arith.constant 73 : index
    %c0_36 = arith.constant 0 : index
    %32 = vector.load %arg3[%c0_35, %c73, %c0_36] : memref<1x396x128xbf16, #tpu.memory_space<vmem>>, vector<1x288x128xbf16>
    %33 = vector.shape_cast %32 : vector<1x288x128xbf16> to vector<288x128xbf16>
    %c0_37 = arith.constant 0 : index
    %c0_38 = arith.constant 0 : index
    %c5 = arith.constant 5 : index
    %c0_39 = arith.constant 0 : index
    %c0_40 = arith.constant 0 : index
    %34 = vector.load %arg4[%c0_37, %c0_38, %c5, %c0_39, %c0_40] : memref<1x1x9x128x128xbf16, #tpu.memory_space<vmem>>, vector<1x1x1x128x128xbf16>
    %35 = vector.shape_cast %34 : vector<1x1x1x128x128xbf16> to vector<128x128xbf16>
    %cst_41 = arith.constant dense<0.000000e+00> : vector<288x128xf32>
    %36 = tpu.matmul %33, %35, %cst_41 {dimension_numbers = #tpu.dot_dimension_numbers<[1], [0], [0], [1], [0, 0, 1, 1], [], []>} : vector<288x128xbf16>, vector<128x128xbf16>, vector<288x128xf32> -> vector<288x128xf32>
    %37 = arith.addf %31, %36 : vector<288x128xf32>
    %c0_42 = arith.constant 0 : index
    %c89 = arith.constant 89 : index
    %c0_43 = arith.constant 0 : index
    %38 = vector.load %arg3[%c0_42, %c89, %c0_43] : memref<1x396x128xbf16, #tpu.memory_space<vmem>>, vector<1x288x128xbf16>
    %39 = vector.shape_cast %38 : vector<1x288x128xbf16> to vector<288x128xbf16>
    %c0_44 = arith.constant 0 : index
    %c0_45 = arith.constant 0 : index
    %c6 = arith.constant 6 : index
    %c0_46 = arith.constant 0 : index
    %c0_47 = arith.constant 0 : index
    %40 = vector.load %arg4[%c0_44, %c0_45, %c6, %c0_46, %c0_47] : memref<1x1x9x128x128xbf16, #tpu.memory_space<vmem>>, vector<1x1x1x128x128xbf16>
    %41 = vector.shape_cast %40 : vector<1x1x1x128x128xbf16> to vector<128x128xbf16>
    %cst_48 = arith.constant dense<0.000000e+00> : vector<288x128xf32>
    %42 = tpu.matmul %39, %41, %cst_48 {dimension_numbers = #tpu.dot_dimension_numbers<[1], [0], [0], [1], [0, 0, 1, 1], [], []>} : vector<288x128xbf16>, vector<128x128xbf16>, vector<288x128xf32> -> vector<288x128xf32>
    %43 = arith.addf %37, %42 : vector<288x128xf32>
    %c0_49 = arith.constant 0 : index
    %c90 = arith.constant 90 : index
    %c0_50 = arith.constant 0 : index
    %44 = vector.load %arg3[%c0_49, %c90, %c0_50] : memref<1x396x128xbf16, #tpu.memory_space<vmem>>, vector<1x288x128xbf16>
    %45 = vector.shape_cast %44 : vector<1x288x128xbf16> to vector<288x128xbf16>
    %c0_51 = arith.constant 0 : index
    %c0_52 = arith.constant 0 : index
    %c7 = arith.constant 7 : index
    %c0_53 = arith.constant 0 : index
    %c0_54 = arith.constant 0 : index
    %46 = vector.load %arg4[%c0_51, %c0_52, %c7, %c0_53, %c0_54] : memref<1x1x9x128x128xbf16, #tpu.memory_space<vmem>>, vector<1x1x1x128x128xbf16>
    %47 = vector.shape_cast %46 : vector<1x1x1x128x128xbf16> to vector<128x128xbf16>
    %cst_55 = arith.constant dense<0.000000e+00> : vector<288x128xf32>
    %48 = tpu.matmul %45, %47, %cst_55 {dimension_numbers = #tpu.dot_dimension_numbers<[1], [0], [0], [1], [0, 0, 1, 1], [], []>} : vector<288x128xbf16>, vector<128x128xbf16>, vector<288x128xf32> -> vector<288x128xf32>
    %49 = arith.addf %43, %48 : vector<288x128xf32>
    %c0_56 = arith.constant 0 : index
    %c91 = arith.constant 91 : index
    %c0_57 = arith.constant 0 : index
    %50 = vector.load %arg3[%c0_56, %c91, %c0_57] : memref<1x396x128xbf16, #tpu.memory_space<vmem>>, vector<1x288x128xbf16>
    %51 = vector.shape_cast %50 : vector<1x288x128xbf16> to vector<288x128xbf16>
    %c0_58 = arith.constant 0 : index
    %c0_59 = arith.constant 0 : index
    %c8 = arith.constant 8 : index
    %c0_60 = arith.constant 0 : index
    %c0_61 = arith.constant 0 : index
    %52 = vector.load %arg4[%c0_58, %c0_59, %c8, %c0_60, %c0_61] : memref<1x1x9x128x128xbf16, #tpu.memory_space<vmem>>, vector<1x1x1x128x128xbf16>
    %53 = vector.shape_cast %52 : vector<1x1x1x128x128xbf16> to vector<128x128xbf16>
    %cst_62 = arith.constant dense<0.000000e+00> : vector<288x128xf32>
    %54 = tpu.matmul %51, %53, %cst_62 {dimension_numbers = #tpu.dot_dimension_numbers<[1], [0], [0], [1], [0, 0, 1, 1], [], []>} : vector<288x128xbf16>, vector<128x128xbf16>, vector<288x128xf32> -> vector<288x128xf32>
    %55 = arith.addf %49, %54 : vector<288x128xf32>
    %c0_63 = arith.constant 0 : index
    %c0_64 = arith.constant 0 : index
    %56 = vector.load %arg8[%c0_63, %c0_64] : memref<288x128xf32, #tpu.memory_space<vmem>>, vector<288x128xf32>
    %57 = arith.addf %56, %55 : vector<288x128xf32>
    %c0_65 = arith.constant 0 : index
    %c0_66 = arith.constant 0 : index
    %58 = vector.load %arg8[%c0_65, %c0_66] : memref<288x128xf32, #tpu.memory_space<vmem>>, vector<288x128xf32>
    tpu.vector_store %arg8[%c0_65, %c0_66], %57 {strides = array<i32>} : memref<288x128xf32, #tpu.memory_space<vmem>>, vector<288x128xf32>,
    %c0_i32_67 = arith.constant 0 : i32
    %59 = arith.cmpi eq, %arg2, %c0_i32_67 : i32
    %60 = arith.extui %59 : i1 to i32
    %c0_i32_68 = arith.constant 0 : i32
    %61 = arith.cmpi ne, %60, %c0_i32_68 : i32
    scf.if %61 {
      %c0_69 = arith.constant 0 : index
      %c0_70 = arith.constant 0 : index
      %62 = vector.load %arg8[%c0_69, %c0_70] : memref<288x128xf32, #tpu.memory_space<vmem>>, vector<288x128xf32>
      %c0_71 = arith.constant 0 : index
      %c0_72 = arith.constant 0 : index
      %63 = vector.load %arg5[%c0_71, %c0_72] : memref<1x128xf32, #tpu.memory_space<vmem>>, vector<1x128xf32>
      %64 = vector.broadcast %63 : vector<1x128xf32> to vector<288x128xf32>
      %65 = arith.addf %62, %64 : vector<288x128xf32>
      %cst_73 = arith.constant 0.000000e+00 : f32
      %66 = vector.broadcast %cst_73 : f32 to vector<288x128xf32>
      %67 = arith.maximumf %65, %66 : vector<288x128xf32>
      %c0_74 = arith.constant 0 : index
      %c0_75 = arith.constant 0 : index
      %68 = vector.load %arg6[%c0_74, %c0_75] : memref<288x1xf32, #tpu.memory_space<vmem>>, vector<288x1xf32>
      %69 = vector.broadcast %68 : vector<288x1xf32> to vector<288x128xf32>
      %70 = arith.mulf %67, %69 : vector<288x128xf32>
      %cst_76 = arith.constant 0.000000e+00 : bf16
      %71 = vector.broadcast %cst_76 : bf16 to vector<1x396x128xbf16>
      %c0_77 = arith.constant 0 : index
      %c0_78 = arith.constant 0 : index
      %c0_79 = arith.constant 0 : index
      %72 = vector.load %arg7[%c0_77, %c0_78, %c0_79] : memref<1x396x128xbf16, #tpu.memory_space<vmem>>, vector<1x396x128xbf16>
      tpu.vector_store %arg7[%c0_77, %c0_78, %c0_79], %71 {strides = array<i32>} : memref<1x396x128xbf16, #tpu.memory_space<vmem>>, vector<1x396x128xbf16>,
      %73 = arith.truncf %70 : vector<288x128xf32> to vector<288x128xbf16>
      %c0_80 = arith.constant 0 : index
      %c72_81 = arith.constant 72 : index
      %c0_82 = arith.constant 0 : index
      %74 = vector.load %arg7[%c0_80, %c72_81, %c0_82] : memref<1x396x128xbf16, #tpu.memory_space<vmem>>, vector<1x288x128xbf16>
      %75 = vector.shape_cast %74 : vector<1x288x128xbf16> to vector<288x128xbf16>
      %76 = vector.shape_cast %73 : vector<288x128xbf16> to vector<1x288x128xbf16>
      tpu.vector_store %arg7[%c0_80, %c72_81, %c0_82], %76 {strides = array<i32>} : memref<1x396x128xbf16, #tpu.memory_space<vmem>>, vector<1x288x128xbf16>,
    } else {
    }
    return
  }
  func.func @transform_0(%arg0: i32, %arg1: i32, %arg2: i32) -> (i32, i32, i32) {
    %c0_i32 = arith.constant 0 : i32
    %c0_i32_0 = arith.constant 0 : i32
    return %arg0, %c0_i32, %arg2 : i32, i32, i32
  }
  func.func @transform_1(%arg0: i32, %arg1: i32, %arg2: i32) -> (i32, i32, i32, i32, i32) {
    %c0_i32 = arith.constant 0 : i32
    %c0_i32_0 = arith.constant 0 : i32
    %c0_i32_1 = arith.constant 0 : i32
    %c0_i32_2 = arith.constant 0 : i32
    return %arg2, %arg1, %c0_i32, %c0_i32_0, %c0_i32_1 : i32, i32, i32, i32, i32
  }
  func.func @transform_2(%arg0: i32, %arg1: i32, %arg2: i32) -> (i32, i32) {
    %c0_i32 = arith.constant 0 : i32
    %c0_i32_0 = arith.constant 0 : i32
    return %c0_i32, %arg1 : i32, i32
  }
  func.func @transform_3(%arg0: i32, %arg1: i32, %arg2: i32) -> (i32, i32) {
    %c0_i32 = arith.constant 0 : i32
    %c0_i32_0 = arith.constant 0 : i32
    %c0_i32_1 = arith.constant 0 : i32
    return %c0_i32, %c0_i32_0 : i32, i32
  }
  func.func @transform_4(%arg0: i32, %arg1: i32, %arg2: i32) -> (i32, i32, i32) {
    %c0_i32 = arith.constant 0 : i32
    %c0_i32_0 = arith.constant 0 : i32
    return %arg0, %c0_i32, %arg1 : i32, i32, i32
  }
}

module attributes {stable_mosaic.version = 11 : i64} {
  func.func @kernel(%arg0: i32, %arg1: i32, %arg2: i32, %arg3: memref<1x396x128xbf16, #tpu.memory_space<vmem>>, %arg4: memref<1x1x9x128x128xbf16, #tpu.memory_space<vmem>>, %arg5: memref<1x128xf32, #tpu.memory_space<vmem>>, %arg6: memref<1x396x128xbf16, #tpu.memory_space<vmem>>, %arg7: memref<1x288x128xf32, #tpu.memory_space<vmem>>, %arg8: memref<288x128xf32, #tpu.memory_space<vmem>>) attributes {dimension_semantics = [#tpu.dimension_semantics<parallel>, #tpu.dimension_semantics<parallel>, #tpu.dimension_semantics<arbitrary>], iteration_bounds = array<i64: 2, 1, 1>, scalar_prefetch = 0 : i64, scratch_operands = 1 : i64, tpu.core_type = #tpu.core_type<tc>, window_params = [{transform_indices = @transform_0, window_bounds = array<i64: 1, 396, 128>}, {transform_indices = @transform_1, window_bounds = array<i64: 1, 1, 9, 128, 128>}, {transform_indices = @transform_2, window_bounds = array<i64: 1, 128>}, {transform_indices = @transform_3, window_bounds = array<i64: 1, 396, 128>}, {transform_indices = @transform_4, window_bounds = array<i64: 1, 288, 128>}]} {
    %c0_i32 = arith.constant 0 : i32
    %0 = arith.cmpi eq, %arg2, %c0_i32 : i32
    %1 = arith.extui %0 : i1 to i32
    %c0_i32_0 = arith.constant 0 : i32
    %2 = arith.cmpi ne, %1, %c0_i32_0 : i32
    scf.if %2 {
      %cst_69 = arith.constant 0.000000e+00 : f32
      %62 = vector.broadcast %cst_69 : f32 to vector<288x128xf32>
      %c0_70 = arith.constant 0 : index
      %c0_71 = arith.constant 0 : index
      %63 = vector.load %arg8[%c0_70, %c0_71] : memref<288x128xf32, #tpu.memory_space<vmem>>, vector<288x128xf32>
      tpu.vector_store %arg8[%c0_70, %c0_71], %62 {strides = array<i32>} : memref<288x128xf32, #tpu.memory_space<vmem>>, vector<288x128xf32>,
    } else {
    }
    %c0 = arith.constant 0 : index
    %c53 = arith.constant 53 : index
    %c0_1 = arith.constant 0 : index
    %3 = vector.load %arg3[%c0, %c53, %c0_1] : memref<1x396x128xbf16, #tpu.memory_space<vmem>>, vector<1x288x128xbf16>
    %4 = vector.shape_cast %3 : vector<1x288x128xbf16> to vector<288x128xbf16>
    %c0_2 = arith.constant 0 : index
    %c0_3 = arith.constant 0 : index
    %c0_4 = arith.constant 0 : index
    %c0_5 = arith.constant 0 : index
    %c0_6 = arith.constant 0 : index
    %5 = vector.load %arg4[%c0_2, %c0_3, %c0_4, %c0_5, %c0_6] : memref<1x1x9x128x128xbf16, #tpu.memory_space<vmem>>, vector<1x1x1x128x128xbf16>
    %6 = vector.shape_cast %5 : vector<1x1x1x128x128xbf16> to vector<128x128xbf16>
    %cst = arith.constant dense<0.000000e+00> : vector<288x128xf32>
    %7 = tpu.matmul %4, %6, %cst {dimension_numbers = #tpu.dot_dimension_numbers<[1], [0], [0], [1], [0, 0, 1, 1], [], []>} : vector<288x128xbf16>, vector<128x128xbf16>, vector<288x128xf32> -> vector<288x128xf32>
    %c0_7 = arith.constant 0 : index
    %c54 = arith.constant 54 : index
    %c0_8 = arith.constant 0 : index
    %8 = vector.load %arg3[%c0_7, %c54, %c0_8] : memref<1x396x128xbf16, #tpu.memory_space<vmem>>, vector<1x288x128xbf16>
    %9 = vector.shape_cast %8 : vector<1x288x128xbf16> to vector<288x128xbf16>
    %c0_9 = arith.constant 0 : index
    %c0_10 = arith.constant 0 : index
    %c1 = arith.constant 1 : index
    %c0_11 = arith.constant 0 : index
    %c0_12 = arith.constant 0 : index
    %10 = vector.load %arg4[%c0_9, %c0_10, %c1, %c0_11, %c0_12] : memref<1x1x9x128x128xbf16, #tpu.memory_space<vmem>>, vector<1x1x1x128x128xbf16>
    %11 = vector.shape_cast %10 : vector<1x1x1x128x128xbf16> to vector<128x128xbf16>
    %cst_13 = arith.constant dense<0.000000e+00> : vector<288x128xf32>
    %12 = tpu.matmul %9, %11, %cst_13 {dimension_numbers = #tpu.dot_dimension_numbers<[1], [0], [0], [1], [0, 0, 1, 1], [], []>} : vector<288x128xbf16>, vector<128x128xbf16>, vector<288x128xf32> -> vector<288x128xf32>
    %13 = arith.addf %7, %12 : vector<288x128xf32>
    %c0_14 = arith.constant 0 : index
    %c55 = arith.constant 55 : index
    %c0_15 = arith.constant 0 : index
    %14 = vector.load %arg3[%c0_14, %c55, %c0_15] : memref<1x396x128xbf16, #tpu.memory_space<vmem>>, vector<1x288x128xbf16>
    %15 = vector.shape_cast %14 : vector<1x288x128xbf16> to vector<288x128xbf16>
    %c0_16 = arith.constant 0 : index
    %c0_17 = arith.constant 0 : index
    %c2 = arith.constant 2 : index
    %c0_18 = arith.constant 0 : index
    %c0_19 = arith.constant 0 : index
    %16 = vector.load %arg4[%c0_16, %c0_17, %c2, %c0_18, %c0_19] : memref<1x1x9x128x128xbf16, #tpu.memory_space<vmem>>, vector<1x1x1x128x128xbf16>
    %17 = vector.shape_cast %16 : vector<1x1x1x128x128xbf16> to vector<128x128xbf16>
    %cst_20 = arith.constant dense<0.000000e+00> : vector<288x128xf32>
    %18 = tpu.matmul %15, %17, %cst_20 {dimension_numbers = #tpu.dot_dimension_numbers<[1], [0], [0], [1], [0, 0, 1, 1], [], []>} : vector<288x128xbf16>, vector<128x128xbf16>, vector<288x128xf32> -> vector<288x128xf32>
    %19 = arith.addf %13, %18 : vector<288x128xf32>
    %c0_21 = arith.constant 0 : index
    %c71 = arith.constant 71 : index
    %c0_22 = arith.constant 0 : index
    %20 = vector.load %arg3[%c0_21, %c71, %c0_22] : memref<1x396x128xbf16, #tpu.memory_space<vmem>>, vector<1x288x128xbf16>
    %21 = vector.shape_cast %20 : vector<1x288x128xbf16> to vector<288x128xbf16>
    %c0_23 = arith.constant 0 : index
    %c0_24 = arith.constant 0 : index
    %c3 = arith.constant 3 : index
    %c0_25 = arith.constant 0 : index
    %c0_26 = arith.constant 0 : index
    %22 = vector.load %arg4[%c0_23, %c0_24, %c3, %c0_25, %c0_26] : memref<1x1x9x128x128xbf16, #tpu.memory_space<vmem>>, vector<1x1x1x128x128xbf16>
    %23 = vector.shape_cast %22 : vector<1x1x1x128x128xbf16> to vector<128x128xbf16>
    %cst_27 = arith.constant dense<0.000000e+00> : vector<288x128xf32>
    %24 = tpu.matmul %21, %23, %cst_27 {dimension_numbers = #tpu.dot_dimension_numbers<[1], [0], [0], [1], [0, 0, 1, 1], [], []>} : vector<288x128xbf16>, vector<128x128xbf16>, vector<288x128xf32> -> vector<288x128xf32>
    %25 = arith.addf %19, %24 : vector<288x128xf32>
    %c0_28 = arith.constant 0 : index
    %c72 = arith.constant 72 : index
    %c0_29 = arith.constant 0 : index
    %26 = vector.load %arg3[%c0_28, %c72, %c0_29] : memref<1x396x128xbf16, #tpu.memory_space<vmem>>, vector<1x288x128xbf16>
    %27 = vector.shape_cast %26 : vector<1x288x128xbf16> to vector<288x128xbf16>
    %c0_30 = arith.constant 0 : index
    %c0_31 = arith.constant 0 : index
    %c4 = arith.constant 4 : index
    %c0_32 = arith.constant 0 : index
    %c0_33 = arith.constant 0 : index
    %28 = vector.load %arg4[%c0_30, %c0_31, %c4, %c0_32, %c0_33] : memref<1x1x9x128x128xbf16, #tpu.memory_space<vmem>>, vector<1x1x1x128x128xbf16>
    %29 = vector.shape_cast %28 : vector<1x1x1x128x128xbf16> to vector<128x128xbf16>
    %cst_34 = arith.constant dense<0.000000e+00> : vector<288x128xf32>
    %30 = tpu.matmul %27, %29, %cst_34 {dimension_numbers = #tpu.dot_dimension_numbers<[1], [0], [0], [1], [0, 0, 1, 1], [], []>} : vector<288x128xbf16>, vector<128x128xbf16>, vector<288x128xf32> -> vector<288x128xf32>
    %31 = arith.addf %25, %30 : vector<288x128xf32>
    %c0_35 = arith.constant 0 : index
    %c73 = arith.constant 73 : index
    %c0_36 = arith.constant 0 : index
    %32 = vector.load %arg3[%c0_35, %c73, %c0_36] : memref<1x396x128xbf16, #tpu.memory_space<vmem>>, vector<1x288x128xbf16>
    %33 = vector.shape_cast %32 : vector<1x288x128xbf16> to vector<288x128xbf16>
    %c0_37 = arith.constant 0 : index
    %c0_38 = arith.constant 0 : index
    %c5 = arith.constant 5 : index
    %c0_39 = arith.constant 0 : index
    %c0_40 = arith.constant 0 : index
    %34 = vector.load %arg4[%c0_37, %c0_38, %c5, %c0_39, %c0_40] : memref<1x1x9x128x128xbf16, #tpu.memory_space<vmem>>, vector<1x1x1x128x128xbf16>
    %35 = vector.shape_cast %34 : vector<1x1x1x128x128xbf16> to vector<128x128xbf16>
    %cst_41 = arith.constant dense<0.000000e+00> : vector<288x128xf32>
    %36 = tpu.matmul %33, %35, %cst_41 {dimension_numbers = #tpu.dot_dimension_numbers<[1], [0], [0], [1], [0, 0, 1, 1], [], []>} : vector<288x128xbf16>, vector<128x128xbf16>, vector<288x128xf32> -> vector<288x128xf32>
    %37 = arith.addf %31, %36 : vector<288x128xf32>
    %c0_42 = arith.constant 0 : index
    %c89 = arith.constant 89 : index
    %c0_43 = arith.constant 0 : index
    %38 = vector.load %arg3[%c0_42, %c89, %c0_43] : memref<1x396x128xbf16, #tpu.memory_space<vmem>>, vector<1x288x128xbf16>
    %39 = vector.shape_cast %38 : vector<1x288x128xbf16> to vector<288x128xbf16>
    %c0_44 = arith.constant 0 : index
    %c0_45 = arith.constant 0 : index
    %c6 = arith.constant 6 : index
    %c0_46 = arith.constant 0 : index
    %c0_47 = arith.constant 0 : index
    %40 = vector.load %arg4[%c0_44, %c0_45, %c6, %c0_46, %c0_47] : memref<1x1x9x128x128xbf16, #tpu.memory_space<vmem>>, vector<1x1x1x128x128xbf16>
    %41 = vector.shape_cast %40 : vector<1x1x1x128x128xbf16> to vector<128x128xbf16>
    %cst_48 = arith.constant dense<0.000000e+00> : vector<288x128xf32>
    %42 = tpu.matmul %39, %41, %cst_48 {dimension_numbers = #tpu.dot_dimension_numbers<[1], [0], [0], [1], [0, 0, 1, 1], [], []>} : vector<288x128xbf16>, vector<128x128xbf16>, vector<288x128xf32> -> vector<288x128xf32>
    %43 = arith.addf %37, %42 : vector<288x128xf32>
    %c0_49 = arith.constant 0 : index
    %c90 = arith.constant 90 : index
    %c0_50 = arith.constant 0 : index
    %44 = vector.load %arg3[%c0_49, %c90, %c0_50] : memref<1x396x128xbf16, #tpu.memory_space<vmem>>, vector<1x288x128xbf16>
    %45 = vector.shape_cast %44 : vector<1x288x128xbf16> to vector<288x128xbf16>
    %c0_51 = arith.constant 0 : index
    %c0_52 = arith.constant 0 : index
    %c7 = arith.constant 7 : index
    %c0_53 = arith.constant 0 : index
    %c0_54 = arith.constant 0 : index
    %46 = vector.load %arg4[%c0_51, %c0_52, %c7, %c0_53, %c0_54] : memref<1x1x9x128x128xbf16, #tpu.memory_space<vmem>>, vector<1x1x1x128x128xbf16>
    %47 = vector.shape_cast %46 : vector<1x1x1x128x128xbf16> to vector<128x128xbf16>
    %cst_55 = arith.constant dense<0.000000e+00> : vector<288x128xf32>
    %48 = tpu.matmul %45, %47, %cst_55 {dimension_numbers = #tpu.dot_dimension_numbers<[1], [0], [0], [1], [0, 0, 1, 1], [], []>} : vector<288x128xbf16>, vector<128x128xbf16>, vector<288x128xf32> -> vector<288x128xf32>
    %49 = arith.addf %43, %48 : vector<288x128xf32>
    %c0_56 = arith.constant 0 : index
    %c91 = arith.constant 91 : index
    %c0_57 = arith.constant 0 : index
    %50 = vector.load %arg3[%c0_56, %c91, %c0_57] : memref<1x396x128xbf16, #tpu.memory_space<vmem>>, vector<1x288x128xbf16>
    %51 = vector.shape_cast %50 : vector<1x288x128xbf16> to vector<288x128xbf16>
    %c0_58 = arith.constant 0 : index
    %c0_59 = arith.constant 0 : index
    %c8 = arith.constant 8 : index
    %c0_60 = arith.constant 0 : index
    %c0_61 = arith.constant 0 : index
    %52 = vector.load %arg4[%c0_58, %c0_59, %c8, %c0_60, %c0_61] : memref<1x1x9x128x128xbf16, #tpu.memory_space<vmem>>, vector<1x1x1x128x128xbf16>
    %53 = vector.shape_cast %52 : vector<1x1x1x128x128xbf16> to vector<128x128xbf16>
    %cst_62 = arith.constant dense<0.000000e+00> : vector<288x128xf32>
    %54 = tpu.matmul %51, %53, %cst_62 {dimension_numbers = #tpu.dot_dimension_numbers<[1], [0], [0], [1], [0, 0, 1, 1], [], []>} : vector<288x128xbf16>, vector<128x128xbf16>, vector<288x128xf32> -> vector<288x128xf32>
    %55 = arith.addf %49, %54 : vector<288x128xf32>
    %c0_63 = arith.constant 0 : index
    %c0_64 = arith.constant 0 : index
    %56 = vector.load %arg8[%c0_63, %c0_64] : memref<288x128xf32, #tpu.memory_space<vmem>>, vector<288x128xf32>
    %57 = arith.addf %56, %55 : vector<288x128xf32>
    %c0_65 = arith.constant 0 : index
    %c0_66 = arith.constant 0 : index
    %58 = vector.load %arg8[%c0_65, %c0_66] : memref<288x128xf32, #tpu.memory_space<vmem>>, vector<288x128xf32>
    tpu.vector_store %arg8[%c0_65, %c0_66], %57 {strides = array<i32>} : memref<288x128xf32, #tpu.memory_space<vmem>>, vector<288x128xf32>,
    %c0_i32_67 = arith.constant 0 : i32
    %59 = arith.cmpi eq, %arg2, %c0_i32_67 : i32
    %60 = arith.extui %59 : i1 to i32
    %c0_i32_68 = arith.constant 0 : i32
    %61 = arith.cmpi ne, %60, %c0_i32_68 : i32
    scf.if %61 {
      %c0_69 = arith.constant 0 : index
      %c0_70 = arith.constant 0 : index
      %62 = vector.load %arg8[%c0_69, %c0_70] : memref<288x128xf32, #tpu.memory_space<vmem>>, vector<288x128xf32>
      %c0_71 = arith.constant 0 : index
      %c0_72 = arith.constant 0 : index
      %63 = vector.load %arg5[%c0_71, %c0_72] : memref<1x128xf32, #tpu.memory_space<vmem>>, vector<1x128xf32>
      %64 = vector.broadcast %63 : vector<1x128xf32> to vector<288x128xf32>
      %65 = arith.addf %62, %64 : vector<288x128xf32>
      %c0_73 = arith.constant 0 : index
      %c72_74 = arith.constant 72 : index
      %c0_75 = arith.constant 0 : index
      %66 = vector.load %arg6[%c0_73, %c72_74, %c0_75] : memref<1x396x128xbf16, #tpu.memory_space<vmem>>, vector<1x288x128xbf16>
      %67 = vector.shape_cast %66 : vector<1x288x128xbf16> to vector<288x128xbf16>
      %68 = arith.extf %67 : vector<288x128xbf16> to vector<288x128xf32>
      %69 = arith.addf %65, %68 : vector<288x128xf32>
      %cst_76 = arith.constant 0.000000e+00 : f32
      %70 = vector.broadcast %cst_76 : f32 to vector<288x128xf32>
      %71 = arith.maximumf %69, %70 : vector<288x128xf32>
      %c0_77 = arith.constant 0 : index
      %c0_78 = arith.constant 0 : index
      %c0_79 = arith.constant 0 : index
      %72 = vector.load %arg7[%c0_77, %c0_78, %c0_79] : memref<1x288x128xf32, #tpu.memory_space<vmem>>, vector<1x288x128xf32>
      %73 = vector.shape_cast %72 : vector<1x288x128xf32> to vector<288x128xf32>
      %74 = vector.shape_cast %71 : vector<288x128xf32> to vector<1x288x128xf32>
      tpu.vector_store %arg7[%c0_77, %c0_78, %c0_79], %74 {strides = array<i32>} : memref<1x288x128xf32, #tpu.memory_space<vmem>>, vector<1x288x128xf32>,
    } else {
    }
    return
  }
  func.func @transform_0(%arg0: i32, %arg1: i32, %arg2: i32) -> (i32, i32, i32) {
    %c0_i32 = arith.constant 0 : i32
    %c0_i32_0 = arith.constant 0 : i32
    return %arg0, %c0_i32, %arg2 : i32, i32, i32
  }
  func.func @transform_1(%arg0: i32, %arg1: i32, %arg2: i32) -> (i32, i32, i32, i32, i32) {
    %c0_i32 = arith.constant 0 : i32
    %c0_i32_0 = arith.constant 0 : i32
    %c0_i32_1 = arith.constant 0 : i32
    %c0_i32_2 = arith.constant 0 : i32
    return %arg2, %arg1, %c0_i32, %c0_i32_0, %c0_i32_1 : i32, i32, i32, i32, i32
  }
  func.func @transform_2(%arg0: i32, %arg1: i32, %arg2: i32) -> (i32, i32) {
    %c0_i32 = arith.constant 0 : i32
    %c0_i32_0 = arith.constant 0 : i32
    return %c0_i32, %arg1 : i32, i32
  }
  func.func @transform_3(%arg0: i32, %arg1: i32, %arg2: i32) -> (i32, i32, i32) {
    %c0_i32 = arith.constant 0 : i32
    %c0_i32_0 = arith.constant 0 : i32
    return %arg0, %c0_i32, %arg1 : i32, i32, i32
  }
  func.func @transform_4(%arg0: i32, %arg1: i32, %arg2: i32) -> (i32, i32, i32) {
    %c0_i32 = arith.constant 0 : i32
    %c0_i32_0 = arith.constant 0 : i32
    return %arg0, %c0_i32, %arg1 : i32, i32, i32
  }
}

</mosaic_0001>

<llo_original>
// kernel: residual_block_forward.3
$region0: #{residual_block_forward.3}
  #allocation0 [shape = 'u32[]', space=smem, size = 0x4, offset = 0x4, fixed_abs, tag = 'smem constant byte address 0x4 - core index']
  #allocation1 [shape = 'u32[144,128]{1,0:T(1,128)}', space=vmem, size = 0x12000, scoped, tag = 'internal scratch']
  #allocation2 [shape = 'f32[288,128]{1,0:T(8,128)}', space=vmem, size = 0x24000, scoped, tag = 'scratch operand']
  %s0 = inlined_call_operand.vmem [shape: bf16[2,396,128], index: 0, kind: input, shape index: {}]
  %s1 = inlined_call_operand.vmem [shape: bf16[1,1,9,128,128], index: 1, kind: input, shape index: {}]
  %s2 = inlined_call_operand.vmem [shape: f32[1,128], index: 2, kind: input, shape index: {}]
  %s3 = inlined_call_operand.vmem [shape: bf16[2,396,128], index: 3, kind: input, shape index: {}]
  %s4 = inlined_call_operand.vmem [shape: f32[2,288,128], index: 4, kind: output, shape index: {}]
  %s5 = sld [smem:[#allocation0]]
  $region57: #{residual_block_forward.3} parent=0
    _
  %s7 = ssub.s32 1, %s5
  %s8 = scalar_select 0, %s7, %s5
  loop: start=0, step=1, limit=4
  $region2: #{residual_block_forward.3} parent=0 // loop_pre_header
    _
  $region3: #{residual_block_forward.3} parent=0 // loop_header
    %s10 = sphi 0, %s14
    %p11 = scmp.ge.s32.totalorder %s10, 4
    %s17 = sphi 0, %s36
    %s18 = sphi 0, %s32
    %s19 = sphi 0, %s28
    %s20 = sphi 0, %s17
    %s21 = sphi 0, %s18
    %s22 = sphi 0, %s19
    %s23 = sphi 0, %s20
    %s24 = sphi 0, %s21
    %s25 = sphi 0, %s22
    %s41 = sphi 0, %s43
    %s44 = sphi 0, %s41
    %s45 = sphi 0, %s44
    %s61 = sphi 0, %s45
    %s69 = sphi 0, %s71
    %s72 = sphi 0, %s69
    %s73 = sphi 0, %s72
    %s89 = sphi 0, %s73
    %s95 = sphi 0, %s97
    %s98 = sphi 0, %s95
    %s99 = sphi 0, %s98
    %s115 = sphi 0, %s99
    %s123 = sphi 0, %s125
    %s126 = sphi 0, %s123
    %s127 = sphi 0, %s126
    %s143 = sphi 0, %s127
    %s151 = sphi 0, %s153
    %s154 = sphi 0, %s151
    %s155 = sphi 0, %s154
    %s171 = sphi 0, %s155
  $region4: #{residual_block_forward.3} parent=0 // loop_header_branch
    %13 = sbr.rel (%p11) target = $region8
  $region5: #{residual_block_forward.3} parent=0 // loop_body
    %s15 = ssub.s32 %s10, 1
    %s16 = ssub.s32 %s10, 2
    %s26 = sadd.s32 1, %s19
    %p27 = scmp.ge.s32.totalorder %s26, 1
    %s28 = scalar_select %p27, 0, %s26
    %s29 = sadd.s32 1, %s18
    %s30 = scalar_select %p27, %s29, %s18
    %p31 = scmp.ge.s32.totalorder %s30, 1
    %s32 = scalar_select %p31, 0, %s30
    %s33 = sadd.s32 1, %s17
    %s34 = scalar_select %p31, %s33, %s17
    %p35 = scmp.ge.s32.totalorder %s34, 2
    %s36 = scalar_select %p35, 0, %s34
    %s37 = ssub.s32 %s17, %s36
    %s38 = ssub.s32 %s19, %s28
    %s39 = sor.u32 %s37, %s38
    %p40 = scmp.eq.s32.totalorder %s39, 0
    %s42 = sadd.s32 %s41, 1
    %s43 = scalar_select %p40, %s41, %s42
    %p46 = pneg %p40
    %p47 = scmp.eq.s32.totalorder %s10, 1
    %p48 = por %p46, %p47
    %p49 = scmp.ne.s32.totalorder %s41, %s44
    %p50 = scmp.eq.s32.totalorder %s10, 0
    %p51 = por %p49, %p50
    %p52 = scmp.ne.s32.totalorder %s41, %s44
    %p53 = scmp.eq.s32.totalorder %s15, 1
    %p54 = por %p52, %p53
    %p55 = scmp.ne.s32.totalorder %s44, %s45
    %p56 = scmp.eq.s32.totalorder %s15, 0
    %p57 = por %p55, %p56
    %p58 = scmp.ne.s32.totalorder %s44, %s45
    %p59 = scmp.eq.s32.totalorder %s16, 1
    %p60 = por %p58, %p59
    %p62 = scmp.ne.s32.totalorder %s45, %s61
    %p63 = scmp.eq.s32.totalorder %s16, 0
    %p64 = por %p62, %p63
    %s65 = ssub.s32 %s19, %s28
    %s66 = ssub.s32 %s18, %s32
    %s67 = sor.u32 %s65, %s66
    %p68 = scmp.eq.s32.totalorder %s67, 0
    %s70 = sadd.s32 %s69, 1
    %s71 = scalar_select %p68, %s69, %s70
    %p74 = pneg %p68
    %p75 = scmp.eq.s32.totalorder %s10, 1
    %p76 = por %p74, %p75
    %p77 = scmp.ne.s32.totalorder %s69, %s72
    %p78 = scmp.eq.s32.totalorder %s10, 0
    %p79 = por %p77, %p78
    %p80 = scmp.ne.s32.totalorder %s69, %s72
    %p81 = scmp.eq.s32.totalorder %s15, 1
    %p82 = por %p80, %p81
    %p83 = scmp.ne.s32.totalorder %s72, %s73
    %p84 = scmp.eq.s32.totalorder %s15, 0
    %p85 = por %p83, %p84
    %p86 = scmp.ne.s32.totalorder %s72, %s73
    %p87 = scmp.eq.s32.totalorder %s16, 1
    %p88 = por %p86, %p87
    %p90 = scmp.ne.s32.totalorder %s73, %s89
    %p91 = scmp.eq.s32.totalorder %s16, 0
    %p92 = por %p90, %p91
    %s93 = ssub.s32 %s18, %s32
    %p94 = scmp.eq.s32.totalorder %s93, 0
    %s96 = sadd.s32 %s95, 1
    %s97 = scalar_select %p94, %s95, %s96
    %p100 = pneg %p94
    %p101 = scmp.eq.s32.totalorder %s10, 1
    %p102 = por %p100, %p101
    %p103 = scmp.ne.s32.totalorder %s95, %s98
    %p104 = scmp.eq.s32.totalorder %s10, 0
    %p105 = por %p103, %p104
    %p106 = scmp.ne.s32.totalorder %s95, %s98
    %p107 = scmp.eq.s32.totalorder %s15, 1
    %p108 = por %p106, %p107
    %p109 = scmp.ne.s32.totalorder %s98, %s99
    %p110 = scmp.eq.s32.totalorder %s15, 0
    %p111 = por %p109, %p110
    %p112 = scmp.ne.s32.totalorder %s98, %s99
    %p113 = scmp.eq.s32.totalorder %s16, 1
    %p114 = por %p112, %p113
    %p116 = scmp.ne.s32.totalorder %s99, %s115
    %p117 = scmp.eq.s32.totalorder %s16, 0
    %p118 = por %p116, %p117
    %s119 = ssub.s32 %s17, %s36
    %s120 = ssub.s32 %s18, %s32
    %s121 = sor.u32 %s119, %s120
    %p122 = scmp.eq.s32.totalorder %s121, 0
    %s124 = sadd.s32 %s123, 1
    %s125 = scalar_select %p122, %s123, %s124
    %p128 = pneg %p122
    %p129 = scmp.eq.s32.totalorder %s10, 1
    %p130 = por %p128, %p129
    %p131 = scmp.ne.s32.totalorder %s123, %s126
    %p132 = scmp.eq.s32.totalorder %s10, 0
    %p133 = por %p131, %p132
    %p134 = scmp.ne.s32.totalorder %s123, %s126
    %p135 = scmp.eq.s32.totalorder %s15, 1
    %p136 = por %p134, %p135
    %p137 = scmp.ne.s32.totalorder %s126, %s127
    %p138 = scmp.eq.s32.totalorder %s15, 0
    %p139 = por %p137, %p138
    %p140 = scmp.ne.s32.totalorder %s126, %s127
    %p141 = scmp.eq.s32.totalorder %s16, 1
    %p142 = por %p140, %p141
    %p144 = scmp.ne.s32.totalorder %s127, %s143
    %p145 = scmp.eq.s32.totalorder %s16, 0
    %p146 = por %p144, %p145
    %s147 = ssub.s32 %s17, %s36
    %s148 = ssub.s32 %s18, %s32
    %s149 = sor.u32 %s147, %s148
    %p150 = scmp.eq.s32.totalorder %s149, 0
    %s152 = sadd.s32 %s151, 1
    %s153 = scalar_select %p150, %s151, %s152
    %p156 = pneg %p150
    %p157 = scmp.eq.s32.totalorder %s10, 1
    %p158 = por %p156, %p157
    %p159 = scmp.ne.s32.totalorder %s151, %s154
    %p160 = scmp.eq.s32.totalorder %s10, 0
    %p161 = por %p159, %p160
    %p162 = scmp.ne.s32.totalorder %s151, %s154
    %p163 = scmp.eq.s32.totalorder %s15, 1
    %p164 = por %p162, %p163
    %p165 = scmp.ne.s32.totalorder %s154, %s155
    %p166 = scmp.eq.s32.totalorder %s15, 0
    %p167 = por %p165, %p166
    %p168 = scmp.ne.s32.totalorder %s154, %s155
    %p169 = scmp.eq.s32.totalorder %s16, 1
    %p170 = por %p168, %p169
    %p172 = scmp.ne.s32.totalorder %s155, %s171
    %p173 = scmp.eq.s32.totalorder %s16, 0
    %p174 = por %p172, %p173
    %p175 = scmp.le.s32.totalorder 1, %s10
    %p176 = scmp.lt.s32.totalorder %s10, 3
    %p177 = pnand %p175, %p176
    %p178 = pneg %p177
    // Predicated region
    $region9: #{residual_block_forward.3} parent=5 // pred_check
      _
    $region10: #{residual_block_forward.3} parent=5 // pred_check_branch
      %180 = sbr.rel (%p177) target = $region12
    $region11: #{residual_block_forward.3} parent=5 // pred_region
      %s181 = ssub.s32 %s10, 1
      // Predicated region
      $region13: #{residual_block_forward.3} parent=11 // pred_check
        %p182 = pneg %p85
      $region14: #{residual_block_forward.3} parent=11 // pred_check_branch
        %184 = sbr.rel (%p182) target = $region16
      $region15: #{residual_block_forward.3} parent=11 // pred_region
        %p185 = scmp.lt.s32.totalorder %s22, 0
        %s186 = scalar_select %p185, %s22, 0
        %p187 = scmp.lt.s32.totalorder %s21, 0
        %s188 = scalar_select %p187, %s21, 0
        %s189 = smul.addr %s188, 144
        %s190 = smul.addr %s186, 144
        %s191 = sadd.s32 %s189, %s190
        %s192 = smul.addr %s191, 4
        %s193 = scalar_lea.vmem %s1, %s192
      $region16: #{residual_block_forward.3} parent=11 // pred_fallthru
        _
      // Predicated region
      $region17: #{residual_block_forward.3} parent=11 // pred_check
        %p194 = pneg %p111
      $region18: #{residual_block_forward.3} parent=11 // pred_check_branch
        %196 = sbr.rel (%p194) target = $region20
      $region19: #{residual_block_forward.3} parent=11 // pred_region
        %p197 = scmp.lt.s32.totalorder %s21, 0
        %s198 = scalar_select %p197, %s21, 0
        %s199 = scalar_lea.vmem %s2, %s198
      $region20: #{residual_block_forward.3} parent=11 // pred_fallthru
        _
    $region12: #{residual_block_forward.3} parent=5 // pred_fallthru
      _
    %p200 = scmp.lt.s32.totalorder %s10, 2
    // Predicated region
    $region21: #{residual_block_forward.3} parent=5 // pred_check
      %p201 = pneg %p200
    $region22: #{residual_block_forward.3} parent=5 // pred_check_branch
      %203 = sbr.rel (%p201) target = $region24
    $region23: #{residual_block_forward.3} parent=5 // pred_region
      // Predicated region
      $region25: #{residual_block_forward.3} parent=23 // pred_check
        %p204 = pneg %p51
      $region26: #{residual_block_forward.3} parent=23 // pred_check_branch
        %206 = sbr.rel (%p204) target = $region28
      $region27: #{residual_block_forward.3} parent=23 // pred_region
        %p207 = scmp.lt.s32.totalorder %s17, 1
        %s208 = scalar_select %p207, %s17, 1
        %p209 = scmp.lt.s32.totalorder %s19, 0
        %s210 = scalar_select %p209, %s19, 0
        %s211 = smul.addr %s208, 50
        %s212 = sadd.s32 %s210, %s211
        %s213 = smul.addr %s212, 4
        %s214 = scalar_lea.vmem %s0, %s213
      $region28: #{residual_block_forward.3} parent=23 // pred_fallthru
        _
      // Predicated region
      $region29: #{residual_block_forward.3} parent=23 // pred_check
        %p215 = pneg %p133
      $region30: #{residual_block_forward.3} parent=23 // pred_check_branch
        %217 = sbr.rel (%p215) target = $region32
      $region31: #{residual_block_forward.3} parent=23 // pred_region
        %p218 = scmp.lt.s32.totalorder %s17, 1
        %s219 = scalar_select %p218, %s17, 1
        %p220 = scmp.lt.s32.totalorder %s18, 0
        %s221 = scalar_select %p220, %s18, 0
        %s222 = smul.addr %s219, 50
        %s223 = sadd.s32 %s221, %s222
        %s224 = smul.addr %s223, 4
        %s225 = scalar_lea.vmem %s3, %s224
      $region32: #{residual_block_forward.3} parent=23 // pred_fallthru
        _
    $region24: #{residual_block_forward.3} parent=5 // pred_fallthru
      _
    %p226 = scmp.le.s32.totalorder 1, %s10
    %p227 = scmp.lt.s32.totalorder %s10, 3
    %p228 = pnand %p226, %p227
    %p229 = pneg %p228
    // Predicated region
    $region33: #{residual_block_forward.3} parent=5 // pred_check
      _
    $region34: #{residual_block_forward.3} parent=5 // pred_check_branch
      %231 = sbr.rel (%p228) target = $region36
    $region35: #{residual_block_forward.3} parent=5 // pred_region
      %s232 = ssub.s32 %s10, 1
      %p233 = scmp.lt.s32.totalorder %s20, 1
      %s234 = scalar_select %p233, %s20, 1
      %p235 = scmp.lt.s32.totalorder %s22, 0
      %s236 = scalar_select %p235, %s22, 0
      %s237 = smul.addr %s234, 50
      %s238 = sadd.s32 %s236, %s237
      %s239 = smul.addr %s238, 4
      %s240 = scalar_lea.vmem %s0, %s239
      %p241 = pneg %p57
      %p242 = pneg %p54
      %p243 = scmp.lt.s32.totalorder %s22, 0
      %s244 = scalar_select %p243, %s22, 0
      %p245 = scmp.lt.s32.totalorder %s21, 0
      %s246 = scalar_select %p245, %s21, 0
      %s247 = smul.addr %s246, 144
      %s248 = smul.addr %s244, 144
      %s249 = sadd.s32 %s247, %s248
      %s250 = smul.addr %s249, 4
      %s251 = scalar_lea.vmem %s1, %s250
      %p252 = pneg %p85
      %p253 = pneg %p82
      %p254 = scmp.lt.s32.totalorder %s21, 0
      %s255 = scalar_select %p254, %s21, 0
      %s256 = scalar_lea.vmem %s2, %s255
      %p257 = pneg %p111
      %p258 = pneg %p108
      %p259 = scmp.lt.s32.totalorder %s20, 1
      %s260 = scalar_select %p259, %s20, 1
      %p261 = scmp.lt.s32.totalorder %s21, 0
      %s262 = scalar_select %p261, %s21, 0
      %s263 = smul.addr %s260, 50
      %s264 = sadd.s32 %s262, %s263
      %s265 = smul.addr %s264, 4
      %s266 = scalar_lea.vmem %s3, %s265
      %p267 = pneg %p139
      %p268 = pneg %p136
      %p269 = pneg %p167
      %p270 = pneg %p164
      %p271 = scmp.lt.s32.totalorder %s20, 1
      %s272 = scalar_select %p271, %s20, 1
      %p273 = scmp.lt.s32.totalorder %s21, 0
      %s274 = scalar_select %p273, %s21, 0
      %s275 = smul.addr %s272, 36
      %s276 = sadd.s32 %s274, %s275
      %s277 = smul.addr %s276, 8
      %s278 = scalar_lea.vmem %s4, %s277
      %p279 = scmp.lt.s32.totalorder %s20, 1
      %s280 = scalar_select %p279, %s20, 1
      %p281 = scmp.lt.s32.totalorder %s22, 0
      %s282 = scalar_select %p281, %s22, 0
      %s283 = smul.addr %s280, 50
      %s284 = sadd.s32 %s282, %s283
      %s285 = smul.addr %s284, 4
      %s286 = scalar_lea.vmem %s0, %s285
      %p287 = scmp.lt.s32.totalorder %s22, 0
      %s288 = scalar_select %p287, %s22, 0
      %p289 = scmp.lt.s32.totalorder %s21, 0
      %s290 = scalar_select %p289, %s21, 0
      %s291 = smul.addr %s290, 144
      %s292 = smul.addr %s288, 144
      %s293 = sadd.s32 %s291, %s292
      %s294 = smul.addr %s293, 4
      %s295 = scalar_lea.vmem %s1, %s294
      %p296 = scmp.lt.s32.totalorder %s21, 0
      %s297 = scalar_select %p296, %s21, 0
      %s298 = scalar_lea.vmem %s2, %s297
      %p299 = scmp.lt.s32.totalorder %s20, 1
      %s300 = scalar_select %p299, %s20, 1
      %p301 = scmp.lt.s32.totalorder %s21, 0
      %s302 = scalar_select %p301, %s21, 0
      %s303 = smul.addr %s300, 50
      %s304 = sadd.s32 %s302, %s303
      %s305 = smul.addr %s304, 4
      %s306 = scalar_lea.vmem %s3, %s305
      %p307 = scmp.lt.s32.totalorder %s20, 1
      %s308 = scalar_select %p307, %s20, 1
      %p309 = scmp.lt.s32.totalorder %s21, 0
      %s310 = scalar_select %p309, %s21, 0
      %s311 = smul.addr %s308, 36
      %s312 = sadd.s32 %s310, %s311
      %s313 = smul.addr %s312, 8
      %s314 = scalar_lea.vmem %s4, %s313
      %p316 = scmp.eq.s32.totalorder %s22, 0
      // Predicated region
      $region37: #{residual_block_forward.3} parent=35 // pred_check
        %p317 = pneg %p316
      $region38: #{residual_block_forward.3} parent=35 // pred_check_branch
        %319 = sbr.rel (%p317) target = $region40
      $region39: #{residual_block_forward.3} parent=35 // pred_region
        %320 = vst [vmem:[#allocation2] sm:$0xff] 0.0
        %321 = vst [vmem:[#allocation2 + $0x8] sm:$0xff] 0.0
        %322 = vst [vmem:[#allocation2 + $0x10] sm:$0xff] 0.0
        %323 = vst [vmem:[#allocation2 + $0x18] sm:$0xff] 0.0
        %324 = vst [vmem:[#allocation2 + $0x20] sm:$0xff] 0.0
        %325 = vst [vmem:[#allocation2 + $0x28] sm:$0xff] 0.0
        %326 = vst [vmem:[#allocation2 + $0x30] sm:$0xff] 0.0
        %327 = vst [vmem:[#allocation2 + $0x38] sm:$0xff] 0.0
        %328 = vst [vmem:[#allocation2 + $0x40] sm:$0xff] 0.0
        %329 = vst [vmem:[#allocation2 + $0x48] sm:$0xff] 0.0
        %330 = vst [vmem:[#allocation2 + $0x50] sm:$0xff] 0.0
        %331 = vst [vmem:[#allocation2 + $0x58] sm:$0xff] 0.0
        %332 = vst [vmem:[#allocation2 + $0x60] sm:$0xff] 0.0
        %333 = vst [vmem:[#allocation2 + $0x68] sm:$0xff] 0.0
        %334 = vst [vmem:[#allocation2 + $0x70] sm:$0xff] 0.0
        %335 = vst [vmem:[#allocation2 + $0x78] sm:$0xff] 0.0
        %336 = vst [vmem:[#allocation2 + $0x80] sm:$0xff] 0.0
        %337 = vst [vmem:[#allocation2 + $0x88] sm:$0xff] 0.0
        %338 = vst [vmem:[#allocation2 + $0x90] sm:$0xff] 0.0
        %339 = vst [vmem:[#allocation2 + $0x98] sm:$0xff] 0.0
        %340 = vst [vmem:[#allocation2 + $0xa0] sm:$0xff] 0.0
        %341 = vst [vmem:[#allocation2 + $0xa8] sm:$0xff] 0.0
        %342 = vst [vmem:[#allocation2 + $0xb0] sm:$0xff] 0.0
        %343 = vst [vmem:[#allocation2 + $0xb8] sm:$0xff] 0.0
        %344 = vst [vmem:[#allocation2 + $0xc0] sm:$0xff] 0.0
        %345 = vst [vmem:[#allocation2 + $0xc8] sm:$0xff] 0.0
        %346 = vst [vmem:[#allocation2 + $0xd0] sm:$0xff] 0.0
        %347 = vst [vmem:[#allocation2 + $0xd8] sm:$0xff] 0.0
        %348 = vst [vmem:[#allocation2 + $0xe0] sm:$0xff] 0.0
        %349 = vst [vmem:[#allocation2 + $0xe8] sm:$0xff] 0.0
        %350 = vst [vmem:[#allocation2 + $0xf0] sm:$0xff] 0.0
        %351 = vst [vmem:[#allocation2 + $0xf8] sm:$0xff] 0.0
        %352 = vst [vmem:[#allocation2 + $0x100] sm:$0xff] 0.0
        %353 = vst [vmem:[#allocation2 + $0x108] sm:$0xff] 0.0
        %354 = vst [vmem:[#allocation2 + $0x110] sm:$0xff] 0.0
        %355 = vst [vmem:[#allocation2 + $0x118] sm:$0xff] 0.0
      $region40: #{residual_block_forward.3} parent=35 // pred_fallthru
        _
      %v356 = vld [vmem:[%s286 + $0x18] sm:$0xc]
      %v357 = vld [vmem:[%s286 + $0x1c] sm:$0xf]
      %v358 = vld [vmem:[%s286 + $0x20] sm:$0xf]
      %v359 = vld [vmem:[%s286 + $0x24] sm:$0xf]
      %v360 = vld [vmem:[%s286 + $0x28] sm:$0xf]
      %v361 = vld [vmem:[%s286 + $0x2c] sm:$0xf]
      %v362 = vld [vmem:[%s286 + $0x30] sm:$0xf]
      %v363 = vld [vmem:[%s286 + $0x34] sm:$0xf]
      %v364 = vld [vmem:[%s286 + $0x38] sm:$0xf]
      %v365 = vld [vmem:[%s286 + $0x3c] sm:$0xf]
      %v366 = vld [vmem:[%s286 + $0x40] sm:$0xf]
      %v367 = vld [vmem:[%s286 + $0x44] sm:$0xf]
      %v368 = vld [vmem:[%s286 + $0x48] sm:$0xf]
      %v369 = vld [vmem:[%s286 + $0x4c] sm:$0xf]
      %v370 = vld [vmem:[%s286 + $0x50] sm:$0xf]
      %v371 = vld [vmem:[%s286 + $0x54] sm:$0xf]
      %v372 = vld [vmem:[%s286 + $0x58] sm:$0xf]
      %v373 = vld [vmem:[%s286 + $0x5c] sm:$0xf]
      %v374 = vld [vmem:[%s286 + $0x60] sm:$0xf]
      %v375 = vld [vmem:[%s286 + $0x64] sm:$0xf]
      %v376 = vld [vmem:[%s286 + $0x68] sm:$0xf]
      %v377 = vld [vmem:[%s286 + $0x6c] sm:$0xf]
      %v378 = vld [vmem:[%s286 + $0x70] sm:$0xf]
      %v379 = vld [vmem:[%s286 + $0x74] sm:$0xf]
      %v380 = vld [vmem:[%s286 + $0x78] sm:$0xf]
      %v381 = vld [vmem:[%s286 + $0x7c] sm:$0xf]
      %v382 = vld [vmem:[%s286 + $0x80] sm:$0xf]
      %v383 = vld [vmem:[%s286 + $0x84] sm:$0xf]
      %v384 = vld [vmem:[%s286 + $0x88] sm:$0xf]
      %v385 = vld [vmem:[%s286 + $0x8c] sm:$0xf]
      %v386 = vld [vmem:[%s286 + $0x90] sm:$0xf]
      %v387 = vld [vmem:[%s286 + $0x94] sm:$0xf]
      %v388 = vld [vmem:[%s286 + $0x98] sm:$0xf]
      %v389 = vld [vmem:[%s286 + $0x9c] sm:$0xf]
      %v390 = vld [vmem:[%s286 + $0xa0] sm:$0xf]
      %v391 = vld [vmem:[%s286 + $0xa4] sm:$0xf]
      %v392 = vld [vmem:[%s286 + $0xa8] sm:$0x7]
      %v393 = vld [vmem:[%s295] sm:$0xf]
      %v394 = vld [vmem:[%s295 + $0x4] sm:$0xf]
      %v395 = vld [vmem:[%s295 + $0x8] sm:$0xf]
      %v396 = vld [vmem:[%s295 + $0xc] sm:$0xf]
      %v397 = vld [vmem:[%s295 + $0x10] sm:$0xf]
      %v398 = vld [vmem:[%s295 + $0x14] sm:$0xf]
      %v399 = vld [vmem:[%s295 + $0x18] sm:$0xf]
      %v400 = vld [vmem:[%s295 + $0x1c] sm:$0xf]
      %v401 = vld [vmem:[%s295 + $0x20] sm:$0xf]
      %v402 = vld [vmem:[%s295 + $0x24] sm:$0xf]
      %v403 = vld [vmem:[%s295 + $0x28] sm:$0xf]
      %v404 = vld [vmem:[%s295 + $0x2c] sm:$0xf]
      %v405 = vld [vmem:[%s295 + $0x30] sm:$0xf]
      %v406 = vld [vmem:[%s295 + $0x34] sm:$0xf]
      %v407 = vld [vmem:[%s295 + $0x38] sm:$0xf]
      %v408 = vld [vmem:[%s295 + $0x3c] sm:$0xf]
      %v409 = vld [vmem:[%s286 + $0x18] sm:$0x8]
      %s410 = scalar_lea.vmem %s295, 64
      %v411 = vld [vmem:[%s410] sm:$0xf]
      %v412 = vld [vmem:[%s410 + $0x4] sm:$0xf]
      %v413 = vld [vmem:[%s410 + $0x8] sm:$0xf]
      %v414 = vld [vmem:[%s410 + $0xc] sm:$0xf]
      %v415 = vld [vmem:[%s410 + $0x10] sm:$0xf]
      %v416 = vld [vmem:[%s410 + $0x14] sm:$0xf]
      %v417 = vld [vmem:[%s410 + $0x18] sm:$0xf]
      %v418 = vld [vmem:[%s410 + $0x1c] sm:$0xf]
      %v419 = vld [vmem:[%s410 + $0x20] sm:$0xf]
      %v420 = vld [vmem:[%s410 + $0x24] sm:$0xf]
      %v421 = vld [vmem:[%s410 + $0x28] sm:$0xf]
      %v422 = vld [vmem:[%s410 + $0x2c] sm:$0xf]
      %v423 = vld [vmem:[%s410 + $0x30] sm:$0xf]
      %v424 = vld [vmem:[%s410 + $0x34] sm:$0xf]
      %v425 = vld [vmem:[%s410 + $0x38] sm:$0xf]
      %v426 = vld [vmem:[%s410 + $0x3c] sm:$0xf]
      %v464 = vunpack.c.l.b16 %v409
      %v465 = vunpack.c.l.b16 %v357
      %v466 = vunpack.c.l.b16 %v358
      %v467 = vunpack.c.l.b16 %v359
      %v468 = vunpack.c.l.b16 %v360
      %v469 = vunpack.c.l.b16 %v361
      %v470 = vunpack.c.l.b16 %v362
      %v471 = vunpack.c.l.b16 %v363
      %v472 = vunpack.c.l.b16 %v364
      %v473 = vunpack.c.l.b16 %v365
      %v474 = vunpack.c.l.b16 %v366
      %v475 = vunpack.c.l.b16 %v367
      %v476 = vunpack.c.l.b16 %v368
      %v477 = vunpack.c.l.b16 %v369
      %v478 = vunpack.c.l.b16 %v370
      %v479 = vunpack.c.l.b16 %v371
      %v480 = vunpack.c.l.b16 %v372
      %v481 = vunpack.c.l.b16 %v373
      %v482 = vunpack.c.l.b16 %v374
      %v483 = vunpack.c.l.b16 %v375
      %v484 = vunpack.c.l.b16 %v376
      %v485 = vunpack.c.l.b16 %v377
      %v486 = vunpack.c.l.b16 %v378
      %v487 = vunpack.c.l.b16 %v379
      %v488 = vunpack.c.l.b16 %v380
      %v489 = vunpack.c.l.b16 %v381
      %v490 = vunpack.c.l.b16 %v382
      %v491 = vunpack.c.l.b16 %v383
      %v492 = vunpack.c.l.b16 %v384
      %v493 = vunpack.c.l.b16 %v385
      %v494 = vunpack.c.l.b16 %v386
      %v495 = vunpack.c.l.b16 %v387
      %v496 = vunpack.c.l.b16 %v388
      %v497 = vunpack.c.l.b16 %v389
      %v498 = vunpack.c.l.b16 %v390
      %v499 = vunpack.c.l.b16 %v391
      %v500 = vunpack.c.l.b16 %v392
      %v501 = vpack.c.b16 %v465, %v464
      %v502 = vpack.c.b16 %v467, %v466
      %v503 = vpack.c.b16 %v469, %v468
      %v504 = vpack.c.b16 %v471, %v470
      %v505 = vpack.c.b16 %v473, %v472
      %v506 = vpack.c.b16 %v475, %v474
      %v507 = vpack.c.b16 %v477, %v476
      %v508 = vpack.c.b16 %v479, %v478
      %v509 = vpack.c.b16 %v481, %v480
      %v510 = vpack.c.b16 %v483, %v482
      %v511 = vpack.c.b16 %v485, %v484
      %v512 = vpack.c.b16 %v487, %v486
      %v513 = vpack.c.b16 %v489, %v488
      %v514 = vpack.c.b16 %v491, %v490
      %v515 = vpack.c.b16 %v493, %v492
      %v516 = vpack.c.b16 %v495, %v494
      %v517 = vpack.c.b16 %v497, %v496
      %v518 = vpack.c.b16 %v499, %v498
      %v519 = vpack.c.b16 %v500, %v500
      %vm520 = vcmask 1044480
      %v521 = vrot.slane %v501, 3
      %v522 = vrot.slane %v502, 3
      %v523 = vsel %vm520, %v521, %v522
      %v524 = vrot.slane %v503, 3
      %v525 = vsel %vm520, %v522, %v524
      %v526 = vrot.slane %v504, 3
      %v527 = vsel %vm520, %v524, %v526
      %v528 = vrot.slane %v505, 3
      %v529 = vsel %vm520, %v526, %v528
      %v530 = vrot.slane %v506, 3
      %v531 = vsel %vm520, %v528, %v530
      %v532 = vrot.slane %v507, 3
      %v533 = vsel %vm520, %v530, %v532
      %v534 = vrot.slane %v508, 3
      %v535 = vsel %vm520, %v532, %v534
      %v536 = vrot.slane %v509, 3
      %v537 = vsel %vm520, %v534, %v536
      %v538 = vrot.slane %v510, 3
      %v539 = vsel %vm520, %v536, %v538
      %v540 = vrot.slane %v511, 3
      %v541 = vsel %vm520, %v538, %v540
      %v542 = vrot.slane %v512, 3
      %v543 = vsel %vm520, %v540, %v542
      %v544 = vrot.slane %v513, 3
      %v545 = vsel %vm520, %v542, %v544
      %v546 = vrot.slane %v514, 3
      %v547 = vsel %vm520, %v544, %v546
      %v548 = vrot.slane %v515, 3
      %v549 = vsel %vm520, %v546, %v548
      %v550 = vrot.slane %v516, 3
      %v551 = vsel %vm520, %v548, %v550
      %v552 = vrot.slane %v517, 3
      %v553 = vsel %vm520, %v550, %v552
      %v554 = vrot.slane %v518, 3
      %v555 = vsel %vm520, %v552, %v554
      %v556 = vrot.slane %v519, 3
      %v557 = vsel %vm520, %v554, %v556
      %v592 = vunpack.c.l.b16 %v411
      %v593 = vunpack.c.l.b16 %v412
      %v594 = vunpack.c.l.b16 %v413
      %v595 = vunpack.c.l.b16 %v414
      %v596 = vunpack.c.l.b16 %v415
      %v597 = vunpack.c.l.b16 %v416
      %v598 = vunpack.c.l.b16 %v417
      %v599 = vunpack.c.l.b16 %v418
      %v600 = vunpack.c.l.b16 %v419
      %v601 = vunpack.c.l.b16 %v420
      %v602 = vunpack.c.l.b16 %v421
      %v603 = vunpack.c.l.b16 %v422
      %v604 = vunpack.c.l.b16 %v423
      %v605 = vunpack.c.l.b16 %v424
      %v606 = vunpack.c.l.b16 %v425
      %v607 = vunpack.c.l.b16 %v426
      %v608 = vpack.c.b16 %v593, %v592
      %v609 = vpack.c.b16 %v595, %v594
      %v610 = vpack.c.b16 %v597, %v596
      %v611 = vpack.c.b16 %v599, %v598
      %v612 = vpack.c.b16 %v601, %v600
      %v613 = vpack.c.b16 %v603, %v602
      %v614 = vpack.c.b16 %v605, %v604
      %v615 = vpack.c.b16 %v607, %v606
      %624 = vmatprep.subr.bf16.mxu0 0
      %625 = vmatpush1.bf16.msra.mxu0 %v615
      %626 = vmatprep.subr.bf16.mxu0 0
      %627 = vmatpush1.bf16.msra.mxu0 %v614
      %628 = vmatprep.subr.bf16.mxu0 0
      %629 = vmatpush1.bf16.msra.mxu0 %v613
      %630 = vmatprep.subr.bf16.mxu0 0
      %631 = vmatpush1.bf16.msra.mxu0 %v612
      %632 = vmatprep.subr.bf16.mxu0 0
      %633 = vmatpush1.bf16.msra.mxu0 %v611
      %634 = vmatprep.subr.bf16.mxu0 0
      %635 = vmatpush1.bf16.msra.mxu0 %v610
      %636 = vmatprep.subr.bf16.mxu0 0
      %637 = vmatpush1.bf16.msra.mxu0 %v609
      %638 = vmatprep.subr.bf16.mxu0 0
      %639 = vmatpush1.bf16.msra.mxu0 %v608
      %640 = vmatprep.subr.bf16.mxu0 0
      %641 = vmatpush2.bf16.msra.mxu0 0
      %642 = vmatprep.subr.bf16.mxu0 0
      %643 = vmatpush2.bf16.msra.mxu0 0
      %644 = vmatprep.subr.bf16.mxu0 0
      %645 = vmatpush2.bf16.msra.mxu0 0
      %646 = vmatprep.subr.bf16.mxu0 0
      %647 = vmatpush2.bf16.msra.mxu0 0
      %648 = vmatprep.subr.bf16.mxu0 0
      %649 = vmatpush2.bf16.msra.mxu0 0
      %650 = vmatprep.subr.bf16.mxu0 0
      %651 = vmatpush2.bf16.msra.mxu0 0
      %652 = vmatprep.subr.bf16.mxu0 0
      %653 = vmatpush2.bf16.msra.mxu0 0
      %654 = vmatprep.subr.bf16.mxu0 0
      %655 = vmatpush2.bf16.msra.mxu0 0
      %656 = vmatprep.mubr.bf16.mxu0 0
      %657 = vmatmul.mubr.bf16.gmra.mxu0 %v523
      %v658 = vpop.f32.mrf.mxu0
      %v659 = vadd.f32 0.0, %v658
      %v660 = vpop.f32.mrf.mxu0
      %v661 = vpop.f32.mrf.mxu0
      %v662 = vadd.f32 0.0, %v661
      %v663 = vpop.f32.mrf.mxu0
      %664 = vmatprep.mubr.bf16.mxu0 0
      %665 = vmatmul.mubr.bf16.gmra.mxu0 %v525
      %v666 = vpop.f32.mrf.mxu0
      %v667 = vadd.f32 0.0, %v666
      %v668 = vpop.f32.mrf.mxu0
      %v669 = vpop.f32.mrf.mxu0
      %v670 = vadd.f32 0.0, %v669
      %v671 = vpop.f32.mrf.mxu0
      %672 = vmatprep.mubr.bf16.mxu0 0
      %673 = vmatmul.mubr.bf16.gmra.mxu0 %v527
      %v674 = vpop.f32.mrf.mxu0
      %v675 = vadd.f32 0.0, %v674
      %v676 = vpop.f32.mrf.mxu0
      %v677 = vpop.f32.mrf.mxu0
      %v678 = vadd.f32 0.0, %v677
      %v679 = vpop.f32.mrf.mxu0
      %680 = vmatprep.mubr.bf16.mxu0 0
      %681 = vmatmul.mubr.bf16.gmra.mxu0 %v529
      %v682 = vpop.f32.mrf.mxu0
      %v683 = vadd.f32 0.0, %v682
      %v684 = vpop.f32.mrf.mxu0
      %v685 = vpop.f32.mrf.mxu0
      %v686 = vadd.f32 0.0, %v685
      %v687 = vpop.f32.mrf.mxu0
      %688 = vmatprep.mubr.bf16.mxu0 0
      %689 = vmatmul.mubr.bf16.gmra.mxu0 %v531
      %v690 = vpop.f32.mrf.mxu0
      %v691 = vadd.f32 0.0, %v690
      %v692 = vpop.f32.mrf.mxu0
      %v693 = vpop.f32.mrf.mxu0
      %v694 = vadd.f32 0.0, %v693
      %v695 = vpop.f32.mrf.mxu0
      %696 = vmatprep.mubr.bf16.mxu0 0
      %697 = vmatmul.mubr.bf16.gmra.mxu0 %v533
      %v698 = vpop.f32.mrf.mxu0
      %v699 = vadd.f32 0.0, %v698
      %v700 = vpop.f32.mrf.mxu0
      %v701 = vpop.f32.mrf.mxu0
      %v702 = vadd.f32 0.0, %v701
      %v703 = vpop.f32.mrf.mxu0
      %704 = vmatprep.mubr.bf16.mxu0 0
      %705 = vmatmul.mubr.bf16.gmra.mxu0 %v535
      %v706 = vpop.f32.mrf.mxu0
      %v707 = vadd.f32 0.0, %v706
      %v708 = vpop.f32.mrf.mxu0
      %v709 = vpop.f32.mrf.mxu0
      %v710 = vadd.f32 0.0, %v709
      %v711 = vpop.f32.mrf.mxu0
      %712 = vmatprep.mubr.bf16.mxu0 0
      %713 = vmatmul.mubr.bf16.gmra.mxu0 %v537
      %v714 = vpop.f32.mrf.mxu0
      %v715 = vadd.f32 0.0, %v714
      %v716 = vpop.f32.mrf.mxu0
      %v717 = vpop.f32.mrf.mxu0
      %v718 = vadd.f32 0.0, %v717
      %v719 = vpop.f32.mrf.mxu0
      %720 = vmatprep.mubr.bf16.mxu0 0
      %721 = vmatmul.mubr.bf16.gmra.mxu0 %v539
      %v722 = vpop.f32.mrf.mxu0
      %v723 = vadd.f32 0.0, %v722
      %v724 = vpop.f32.mrf.mxu0
      %v725 = vpop.f32.mrf.mxu0
      %v726 = vadd.f32 0.0, %v725
      %v727 = vpop.f32.mrf.mxu0
      %728 = vmatprep.mubr.bf16.mxu0 0
      %729 = vmatmul.mubr.bf16.gmra.mxu0 %v541
      %v730 = vpop.f32.mrf.mxu0
      %v731 = vadd.f32 0.0, %v730
      %v732 = vpop.f32.mrf.mxu0
      %v733 = vpop.f32.mrf.mxu0
      %v734 = vadd.f32 0.0, %v733
      %v735 = vpop.f32.mrf.mxu0
      %736 = vmatprep.mubr.bf16.mxu0 0
      %737 = vmatmul.mubr.bf16.gmra.mxu0 %v543
      %v738 = vpop.f32.mrf.mxu0
      %v739 = vadd.f32 0.0, %v738
      %v740 = vpop.f32.mrf.mxu0
      %v741 = vpop.f32.mrf.mxu0
      %v742 = vadd.f32 0.0, %v741
      %v743 = vpop.f32.mrf.mxu0
      %744 = vmatprep.mubr.bf16.mxu0 0
      %745 = vmatmul.mubr.bf16.gmra.mxu0 %v545
      %v746 = vpop.f32.mrf.mxu0
      %v747 = vadd.f32 0.0, %v746
      %v748 = vpop.f32.mrf.mxu0
      %v749 = vpop.f32.mrf.mxu0
      %v750 = vadd.f32 0.0, %v749
      %v751 = vpop.f32.mrf.mxu0
      %752 = vmatprep.mubr.bf16.mxu0 0
      %753 = vmatmul.mubr.bf16.gmra.mxu0 %v547
      %v754 = vpop.f32.mrf.mxu0
      %v755 = vadd.f32 0.0, %v754
      %v756 = vpop.f32.mrf.mxu0
      %v757 = vpop.f32.mrf.mxu0
      %v758 = vadd.f32 0.0, %v757
      %v759 = vpop.f32.mrf.mxu0
      %760 = vmatprep.mubr.bf16.mxu0 0
      %761 = vmatmul.mubr.bf16.gmra.mxu0 %v549
      %v762 = vpop.f32.mrf.mxu0
      %v763 = vadd.f32 0.0, %v762
      %v764 = vpop.f32.mrf.mxu0
      %v765 = vpop.f32.mrf.mxu0
      %v766 = vadd.f32 0.0, %v765
      %v767 = vpop.f32.mrf.mxu0
      %768 = vmatprep.mubr.bf16.mxu0 0
      %769 = vmatmul.mubr.bf16.gmra.mxu0 %v551
      %v770 = vpop.f32.mrf.mxu0
      %v771 = vadd.f32 0.0, %v770
      %v772 = vpop.f32.mrf.mxu0
      %v773 = vpop.f32.mrf.mxu0
      %v774 = vadd.f32 0.0, %v773
      %v775 = vpop.f32.mrf.mxu0
      %776 = vmatprep.mubr.bf16.mxu0 0
      %777 = vmatmul.mubr.bf16.gmra.mxu0 %v553
      %v778 = vpop.f32.mrf.mxu0
      %v779 = vadd.f32 0.0, %v778
      %v780 = vpop.f32.mrf.mxu0
      %v781 = vpop.f32.mrf.mxu0
      %v782 = vadd.f32 0.0, %v781
      %v783 = vpop.f32.mrf.mxu0
      %784 = vmatprep.mubr.bf16.mxu0 0
      %785 = vmatmul.mubr.bf16.gmra.mxu0 %v555
      %v786 = vpop.f32.mrf.mxu0
      %v787 = vadd.f32 0.0, %v786
      %v788 = vpop.f32.mrf.mxu0
      %v789 = vpop.f32.mrf.mxu0
      %v790 = vadd.f32 0.0, %v789
      %v791 = vpop.f32.mrf.mxu0
      %792 = vmatprep.mubr.bf16.mxu0 0
      %793 = vmatmul.mubr.bf16.gmra.mxu0 %v557
      %v794 = vpop.f32.mrf.mxu0
      %v795 = vadd.f32 0.0, %v794
      %v796 = vpop.f32.mrf.mxu0
      %v797 = vpop.f32.mrf.mxu0
      %v798 = vadd.f32 0.0, %v797
      %v799 = vpop.f32.mrf.mxu0
      %800 = vdwg.mxu0
      %v802 = vunpack.c.l.b16 %v356
      %v803 = vpack.c.b16 %v465, %v802
      %vm804 = vsmask.f32 5376
      %v806 = vshrl.u32 %v803, 16
      %v808 = vrot.slane %v806, 2
      %v809 = vshll.u32 %v803, 16
      %v811 = vrot.slane %v809, 3
      %v812 = vor.u32 %v808, %v811
      %v814 = vshrl.u32 %v502, 16
      %v816 = vrot.slane %v814, 2
      %v817 = vshll.u32 %v502, 16
      %v819 = vrot.slane %v817, 3
      %v820 = vor.u32 %v816, %v819
      %v821 = vsel %vm804, %v812, %v820
      %v823 = vshrl.u32 %v503, 16
      %v825 = vrot.slane %v823, 2
      %v826 = vshll.u32 %v503, 16
      %v828 = vrot.slane %v826, 3
      %v829 = vor.u32 %v825, %v828
      %v830 = vsel %vm804, %v820, %v829
      %v832 = vshrl.u32 %v504, 16
      %v834 = vrot.slane %v832, 2
      %v835 = vshll.u32 %v504, 16
      %v837 = vrot.slane %v835, 3
      %v838 = vor.u32 %v834, %v837
      %v839 = vsel %vm804, %v829, %v838
      %v841 = vshrl.u32 %v505, 16
      %v843 = vrot.slane %v841, 2
      %v844 = vshll.u32 %v505, 16
      %v846 = vrot.slane %v844, 3
      %v847 = vor.u32 %v843, %v846
      %v848 = vsel %vm804, %v838, %v847
      %v850 = vshrl.u32 %v506, 16
      %v852 = vrot.slane %v850, 2
      %v853 = vshll.u32 %v506, 16
      %v855 = vrot.slane %v853, 3
      %v856 = vor.u32 %v852, %v855
      %v857 = vsel %vm804, %v847, %v856
      %v859 = vshrl.u32 %v507, 16
      %v861 = vrot.slane %v859, 2
      %v862 = vshll.u32 %v507, 16
      %v864 = vrot.slane %v862, 3
      %v865 = vor.u32 %v861, %v864
      %v866 = vsel %vm804, %v856, %v865
      %v868 = vshrl.u32 %v508, 16
      %v870 = vrot.slane %v868, 2
      %v871 = vshll.u32 %v508, 16
      %v873 = vrot.slane %v871, 3
      %v874 = vor.u32 %v870, %v873
      %v875 = vsel %vm804, %v865, %v874
      %v877 = vshrl.u32 %v509, 16
      %v879 = vrot.slane %v877, 2
      %v880 = vshll.u32 %v509, 16
      %v882 = vrot.slane %v880, 3
      %v883 = vor.u32 %v879, %v882
      %v884 = vsel %vm804, %v874, %v883
      %v886 = vshrl.u32 %v510, 16
      %v888 = vrot.slane %v886, 2
      %v889 = vshll.u32 %v510, 16
      %v891 = vrot.slane %v889, 3
      %v892 = vor.u32 %v888, %v891
      %v893 = vsel %vm804, %v883, %v892
      %v895 = vshrl.u32 %v511, 16
      %v897 = vrot.slane %v895, 2
      %v898 = vshll.u32 %v511, 16
      %v900 = vrot.slane %v898, 3
      %v901 = vor.u32 %v897, %v900
      %v902 = vsel %vm804, %v892, %v901
      %v904 = vshrl.u32 %v512, 16
      %v906 = vrot.slane %v904, 2
      %v907 = vshll.u32 %v512, 16
      %v909 = vrot.slane %v907, 3
      %v910 = vor.u32 %v906, %v909
      %v911 = vsel %vm804, %v901, %v910
      %v913 = vshrl.u32 %v513, 16
      %v915 = vrot.slane %v913, 2
      %v916 = vshll.u32 %v513, 16
      %v918 = vrot.slane %v916, 3
      %v919 = vor.u32 %v915, %v918
      %v920 = vsel %vm804, %v910, %v919
      %v922 = vshrl.u32 %v514, 16
      %v924 = vrot.slane %v922, 2
      %v925 = vshll.u32 %v514, 16
      %v927 = vrot.slane %v925, 3
      %v928 = vor.u32 %v924, %v927
      %v929 = vsel %vm804, %v919, %v928
      %v931 = vshrl.u32 %v515, 16
      %v933 = vrot.slane %v931, 2
      %v934 = vshll.u32 %v515, 16
      %v936 = vrot.slane %v934, 3
      %v937 = vor.u32 %v933, %v936
      %v938 = vsel %vm804, %v928, %v937
      %v940 = vshrl.u32 %v516, 16
      %v942 = vrot.slane %v940, 2
      %v943 = vshll.u32 %v516, 16
      %v945 = vrot.slane %v943, 3
      %v946 = vor.u32 %v942, %v945
      %v947 = vsel %vm804, %v937, %v946
      %v949 = vshrl.u32 %v517, 16
      %v951 = vrot.slane %v949, 2
      %v952 = vshll.u32 %v517, 16
      %v954 = vrot.slane %v952, 3
      %v955 = vor.u32 %v951, %v954
      %v956 = vsel %vm804, %v946, %v955
      %v958 = vshrl.u32 %v518, 16
      %v960 = vrot.slane %v958, 2
      %v961 = vshll.u32 %v518, 16
      %v963 = vrot.slane %v961, 3
      %v964 = vor.u32 %v960, %v963
      %v965 = vsel %vm804, %v955, %v964
      %v967 = vshrl.u32 %v519, 16
      %v969 = vrot.slane %v967, 2
      %v970 = vshll.u32 %v519, 16
      %v972 = vrot.slane %v970, 3
      %v973 = vor.u32 %v969, %v972
      %v974 = vsel %vm804, %v964, %v973
      %v1009 = vunpack.c.l.b16 %v393
      %v1010 = vunpack.c.l.b16 %v394
      %v1011 = vunpack.c.l.b16 %v395
      %v1012 = vunpack.c.l.b16 %v396
      %v1013 = vunpack.c.l.b16 %v397
      %v1014 = vunpack.c.l.b16 %v398
      %v1015 = vunpack.c.l.b16 %v399
      %v1016 = vunpack.c.l.b16 %v400
      %v1017 = vunpack.c.l.b16 %v401
      %v1018 = vunpack.c.l.b16 %v402
      %v1019 = vunpack.c.l.b16 %v403
      %v1020 = vunpack.c.l.b16 %v404
      %v1021 = vunpack.c.l.b16 %v405
      %v1022 = vunpack.c.l.b16 %v406
      %v1023 = vunpack.c.l.b16 %v407
      %v1024 = vunpack.c.l.b16 %v408
      %v1025 = vpack.c.b16 %v1010, %v1009
      %v1026 = vpack.c.b16 %v1012, %v1011
      %v1027 = vpack.c.b16 %v1014, %v1013
      %v1028 = vpack.c.b16 %v1016, %v1015
      %v1029 = vpack.c.b16 %v1018, %v1017
      %v1030 = vpack.c.b16 %v1020, %v1019
      %v1031 = vpack.c.b16 %v1022, %v1021
      %v1032 = vpack.c.b16 %v1024, %v1023
      %1041 = vmatprep.subr.bf16.mxu0 0
      %1042 = vmatpush1.bf16.msra.mxu0 %v1032
      %1043 = vmatprep.subr.bf16.mxu0 0
      %1044 = vmatpush1.bf16.msra.mxu0 %v1031
      %1045 = vmatprep.subr.bf16.mxu0 0
      %1046 = vmatpush1.bf16.msra.mxu0 %v1030
      %1047 = vmatprep.subr.bf16.mxu0 0
      %1048 = vmatpush1.bf16.msra.mxu0 %v1029
      %1049 = vmatprep.subr.bf16.mxu0 0
      %1050 = vmatpush1.bf16.msra.mxu0 %v1028
      %1051 = vmatprep.subr.bf16.mxu0 0
      %1052 = vmatpush1.bf16.msra.mxu0 %v1027
      %1053 = vmatprep.subr.bf16.mxu0 0
      %1054 = vmatpush1.bf16.msra.mxu0 %v1026
      %1055 = vmatprep.subr.bf16.mxu0 0
      %1056 = vmatpush1.bf16.msra.mxu0 %v1025
      %1057 = vmatprep.subr.bf16.mxu0 0
      %1058 = vmatpush2.bf16.msra.mxu0 0
      %1059 = vmatprep.subr.bf16.mxu0 0
      %1060 = vmatpush2.bf16.msra.mxu0 0
      %1061 = vmatprep.subr.bf16.mxu0 0
      %1062 = vmatpush2.bf16.msra.mxu0 0
      %1063 = vmatprep.subr.bf16.mxu0 0
      %1064 = vmatpush2.bf16.msra.mxu0 0
      %1065 = vmatprep.subr.bf16.mxu0 0
      %1066 = vmatpush2.bf16.msra.mxu0 0
      %1067 = vmatprep.subr.bf16.mxu0 0
      %1068 = vmatpush2.bf16.msra.mxu0 0
      %1069 = vmatprep.subr.bf16.mxu0 0
      %1070 = vmatpush2.bf16.msra.mxu0 0
      %1071 = vmatprep.subr.bf16.mxu0 0
      %1072 = vmatpush2.bf16.msra.mxu0 0
      %1073 = vmatprep.mubr.bf16.mxu0 0
      %1074 = vmatmul.mubr.bf16.gmra.mxu0 %v821
      %v1075 = vpop.f32.mrf.mxu0
      %v1076 = vadd.f32 %v659, %v1075
      %v1077 = vpop.f32.mrf.mxu0
      %v1078 = vpop.f32.mrf.mxu0
      %v1079 = vadd.f32 %v662, %v1078
      %v1080 = vpop.f32.mrf.mxu0
      %1081 = vmatprep.mubr.bf16.mxu0 0
      %1082 = vmatmul.mubr.bf16.gmra.mxu0 %v830
      %v1083 = vpop.f32.mrf.mxu0
      %v1084 = vadd.f32 %v667, %v1083
      %v1085 = vpop.f32.mrf.mxu0
      %v1086 = vpop.f32.mrf.mxu0
      %v1087 = vadd.f32 %v670, %v1086
      %v1088 = vpop.f32.mrf.mxu0
      %1089 = vmatprep.mubr.bf16.mxu0 0
      %1090 = vmatmul.mubr.bf16.gmra.mxu0 %v839
      %v1091 = vpop.f32.mrf.mxu0
      %v1092 = vadd.f32 %v675, %v1091
      %v1093 = vpop.f32.mrf.mxu0
      %v1094 = vpop.f32.mrf.mxu0
      %v1095 = vadd.f32 %v678, %v1094
      %v1096 = vpop.f32.mrf.mxu0
      %1097 = vmatprep.mubr.bf16.mxu0 0
      %1098 = vmatmul.mubr.bf16.gmra.mxu0 %v848
      %v1099 = vpop.f32.mrf.mxu0
      %v1100 = vadd.f32 %v683, %v1099
      %v1101 = vpop.f32.mrf.mxu0
      %v1102 = vpop.f32.mrf.mxu0
      %v1103 = vadd.f32 %v686, %v1102
      %v1104 = vpop.f32.mrf.mxu0
      %1105 = vmatprep.mubr.bf16.mxu0 0
      %1106 = vmatmul.mubr.bf16.gmra.mxu0 %v857
      %v1107 = vpop.f32.mrf.mxu0
      %v1108 = vadd.f32 %v691, %v1107
      %v1109 = vpop.f32.mrf.mxu0
      %v1110 = vpop.f32.mrf.mxu0
      %v1111 = vadd.f32 %v694, %v1110
      %v1112 = vpop.f32.mrf.mxu0
      %1113 = vmatprep.mubr.bf16.mxu0 0
      %1114 = vmatmul.mubr.bf16.gmra.mxu0 %v866
      %v1115 = vpop.f32.mrf.mxu0
      %v1116 = vadd.f32 %v699, %v1115
      %v1117 = vpop.f32.mrf.mxu0
      %v1118 = vpop.f32.mrf.mxu0
      %v1119 = vadd.f32 %v702, %v1118
      %v1120 = vpop.f32.mrf.mxu0
      %1121 = vmatprep.mubr.bf16.mxu0 0
      %1122 = vmatmul.mubr.bf16.gmra.mxu0 %v875
      %v1123 = vpop.f32.mrf.mxu0
      %v1124 = vadd.f32 %v707, %v1123
      %v1125 = vpop.f32.mrf.mxu0
      %v1126 = vpop.f32.mrf.mxu0
      %v1127 = vadd.f32 %v710, %v1126
      %v1128 = vpop.f32.mrf.mxu0
      %1129 = vmatprep.mubr.bf16.mxu0 0
      %1130 = vmatmul.mubr.bf16.gmra.mxu0 %v884
      %v1131 = vpop.f32.mrf.mxu0
      %v1132 = vadd.f32 %v715, %v1131
      %v1133 = vpop.f32.mrf.mxu0
      %v1134 = vpop.f32.mrf.mxu0
      %v1135 = vadd.f32 %v718, %v1134
      %v1136 = vpop.f32.mrf.mxu0
      %1137 = vmatprep.mubr.bf16.mxu0 0
      %1138 = vmatmul.mubr.bf16.gmra.mxu0 %v893
      %v1139 = vpop.f32.mrf.mxu0
      %v1140 = vadd.f32 %v723, %v1139
      %v1141 = vpop.f32.mrf.mxu0
      %v1142 = vpop.f32.mrf.mxu0
      %v1143 = vadd.f32 %v726, %v1142
      %v1144 = vpop.f32.mrf.mxu0
      %1145 = vmatprep.mubr.bf16.mxu0 0
      %1146 = vmatmul.mubr.bf16.gmra.mxu0 %v902
      %v1147 = vpop.f32.mrf.mxu0
      %v1148 = vadd.f32 %v731, %v1147
      %v1149 = vpop.f32.mrf.mxu0
      %v1150 = vpop.f32.mrf.mxu0
      %v1151 = vadd.f32 %v734, %v1150
      %v1152 = vpop.f32.mrf.mxu0
      %1153 = vmatprep.mubr.bf16.mxu0 0
      %1154 = vmatmul.mubr.bf16.gmra.mxu0 %v911
      %v1155 = vpop.f32.mrf.mxu0
      %v1156 = vadd.f32 %v739, %v1155
      %v1157 = vpop.f32.mrf.mxu0
      %v1158 = vpop.f32.mrf.mxu0
      %v1159 = vadd.f32 %v742, %v1158
      %v1160 = vpop.f32.mrf.mxu0
      %1161 = vmatprep.mubr.bf16.mxu0 0
      %1162 = vmatmul.mubr.bf16.gmra.mxu0 %v920
      %v1163 = vpop.f32.mrf.mxu0
      %v1164 = vadd.f32 %v747, %v1163
      %v1165 = vpop.f32.mrf.mxu0
      %v1166 = vpop.f32.mrf.mxu0
      %v1167 = vadd.f32 %v750, %v1166
      %v1168 = vpop.f32.mrf.mxu0
      %1169 = vmatprep.mubr.bf16.mxu0 0
      %1170 = vmatmul.mubr.bf16.gmra.mxu0 %v929
      %v1171 = vpop.f32.mrf.mxu0
      %v1172 = vadd.f32 %v755, %v1171
      %v1173 = vpop.f32.mrf.mxu0
      %v1174 = vpop.f32.mrf.mxu0
      %v1175 = vadd.f32 %v758, %v1174
      %v1176 = vpop.f32.mrf.mxu0
      %1177 = vmatprep.mubr.bf16.mxu0 0
      %1178 = vmatmul.mubr.bf16.gmra.mxu0 %v938
      %v1179 = vpop.f32.mrf.mxu0
      %v1180 = vadd.f32 %v763, %v1179
      %v1181 = vpop.f32.mrf.mxu0
      %v1182 = vpop.f32.mrf.mxu0
      %v1183 = vadd.f32 %v766, %v1182
      %v1184 = vpop.f32.mrf.mxu0
      %1185 = vmatprep.mubr.bf16.mxu0 0
      %1186 = vmatmul.mubr.bf16.gmra.mxu0 %v947
      %v1187 = vpop.f32.mrf.mxu0
      %v1188 = vadd.f32 %v771, %v1187
      %v1189 = vpop.f32.mrf.mxu0
      %v1190 = vpop.f32.mrf.mxu0
      %v1191 = vadd.f32 %v774, %v1190
      %v1192 = vpop.f32.mrf.mxu0
      %1193 = vmatprep.mubr.bf16.mxu0 0
      %1194 = vmatmul.mubr.bf16.gmra.mxu0 %v956
      %v1195 = vpop.f32.mrf.mxu0
      %v1196 = vadd.f32 %v779, %v1195
      %v1197 = vpop.f32.mrf.mxu0
      %v1198 = vpop.f32.mrf.mxu0
      %v1199 = vadd.f32 %v782, %v1198
      %v1200 = vpop.f32.mrf.mxu0
      %1201 = vmatprep.mubr.bf16.mxu0 0
      %1202 = vmatmul.mubr.bf16.gmra.mxu0 %v965
      %v1203 = vpop.f32.mrf.mxu0
      %v1204 = vadd.f32 %v787, %v1203
      %v1205 = vpop.f32.mrf.mxu0
      %v1206 = vpop.f32.mrf.mxu0
      %v1207 = vadd.f32 %v790, %v1206
      %v1208 = vpop.f32.mrf.mxu0
      %1209 = vmatprep.mubr.bf16.mxu0 0
      %1210 = vmatmul.mubr.bf16.gmra.mxu0 %v974
      %v1211 = vpop.f32.mrf.mxu0
      %v1212 = vadd.f32 %v795, %v1211
      %v1213 = vpop.f32.mrf.mxu0
      %v1214 = vpop.f32.mrf.mxu0
      %v1215 = vadd.f32 %v798, %v1214
      %v1216 = vpop.f32.mrf.mxu0
      %1217 = vdwg.mxu0
      %v1218 = vld [vmem:[%s286 + $0xa8] sm:$0xf]
      %s1219 = scalar_lea.vmem %s295, 128
      %v1220 = vld [vmem:[%s1219] sm:$0xf]
      %v1221 = vld [vmem:[%s1219 + $0x4] sm:$0xf]
      %v1222 = vld [vmem:[%s1219 + $0x8] sm:$0xf]
      %v1223 = vld [vmem:[%s1219 + $0xc] sm:$0xf]
      %v1224 = vld [vmem:[%s1219 + $0x10] sm:$0xf]
      %v1225 = vld [vmem:[%s1219 + $0x14] sm:$0xf]
      %v1226 = vld [vmem:[%s1219 + $0x18] sm:$0xf]
      %v1227 = vld [vmem:[%s1219 + $0x1c] sm:$0xf]
      %v1228 = vld [vmem:[%s1219 + $0x20] sm:$0xf]
      %v1229 = vld [vmem:[%s1219 + $0x24] sm:$0xf]
      %v1230 = vld [vmem:[%s1219 + $0x28] sm:$0xf]
      %v1231 = vld [vmem:[%s1219 + $0x2c] sm:$0xf]
      %v1232 = vld [vmem:[%s1219 + $0x30] sm:$0xf]
      %v1233 = vld [vmem:[%s1219 + $0x34] sm:$0xf]
      %v1234 = vld [vmem:[%s1219 + $0x38] sm:$0xf]
      %v1235 = vld [vmem:[%s1219 + $0x3c] sm:$0xf]
      %v1237 = vunpack.c.l.b16 %v1218
      %v1238 = vpack.c.b16 %v1237, %v1237
      %vm1239 = vsmask.f32 4352
      %v1241 = vshrl.u32 %v501, 16
      %v1243 = vrot.slane %v1241, 3
      %v1244 = vshll.u32 %v501, 16
      %v1246 = vrot.slane %v1244, 4
      %v1247 = vor.u32 %v1243, %v1246
      %v1248 = vrot.slane %v814, 3
      %v1249 = vrot.slane %v817, 4
      %v1250 = vor.u32 %v1248, %v1249
      %v1251 = vsel %vm1239, %v1247, %v1250
      %v1252 = vrot.slane %v823, 3
      %v1253 = vrot.slane %v826, 4
      %v1254 = vor.u32 %v1252, %v1253
      %v1255 = vsel %vm1239, %v1250, %v1254
      %v1256 = vrot.slane %v832, 3
      %v1257 = vrot.slane %v835, 4
      %v1258 = vor.u32 %v1256, %v1257
      %v1259 = vsel %vm1239, %v1254, %v1258
      %v1260 = vrot.slane %v841, 3
      %v1261 = vrot.slane %v844, 4
      %v1262 = vor.u32 %v1260, %v1261
      %v1263 = vsel %vm1239, %v1258, %v1262
      %v1264 = vrot.slane %v850, 3
      %v1265 = vrot.slane %v853, 4
      %v1266 = vor.u32 %v1264, %v1265
      %v1267 = vsel %vm1239, %v1262, %v1266
      %v1268 = vrot.slane %v859, 3
      %v1269 = vrot.slane %v862, 4
      %v1270 = vor.u32 %v1268, %v1269
      %v1271 = vsel %vm1239, %v1266, %v1270
      %v1272 = vrot.slane %v868, 3
      %v1273 = vrot.slane %v871, 4
      %v1274 = vor.u32 %v1272, %v1273
      %v1275 = vsel %vm1239, %v1270, %v1274
      %v1276 = vrot.slane %v877, 3
      %v1277 = vrot.slane %v880, 4
      %v1278 = vor.u32 %v1276, %v1277
      %v1279 = vsel %vm1239, %v1274, %v1278
      %v1280 = vrot.slane %v886, 3
      %v1281 = vrot.slane %v889, 4
      %v1282 = vor.u32 %v1280, %v1281
      %v1283 = vsel %vm1239, %v1278, %v1282
      %v1284 = vrot.slane %v895, 3
      %v1285 = vrot.slane %v898, 4
      %v1286 = vor.u32 %v1284, %v1285
      %v1287 = vsel %vm1239, %v1282, %v1286
      %v1288 = vrot.slane %v904, 3
      %v1289 = vrot.slane %v907, 4
      %v1290 = vor.u32 %v1288, %v1289
      %v1291 = vsel %vm1239, %v1286, %v1290
      %v1292 = vrot.slane %v913, 3
      %v1293 = vrot.slane %v916, 4
      %v1294 = vor.u32 %v1292, %v1293
      %v1295 = vsel %vm1239, %v1290, %v1294
      %v1296 = vrot.slane %v922, 3
      %v1297 = vrot.slane %v925, 4
      %v1298 = vor.u32 %v1296, %v1297
      %v1299 = vsel %vm1239, %v1294, %v1298
      %v1300 = vrot.slane %v931, 3
      %v1301 = vrot.slane %v934, 4
      %v1302 = vor.u32 %v1300, %v1301
      %v1303 = vsel %vm1239, %v1298, %v1302
      %v1304 = vrot.slane %v940, 3
      %v1305 = vrot.slane %v943, 4
      %v1306 = vor.u32 %v1304, %v1305
      %v1307 = vsel %vm1239, %v1302, %v1306
      %v1308 = vrot.slane %v949, 3
      %v1309 = vrot.slane %v952, 4
      %v1310 = vor.u32 %v1308, %v1309
      %v1311 = vsel %vm1239, %v1306, %v1310
      %v1312 = vrot.slane %v958, 3
      %v1313 = vrot.slane %v961, 4
      %v1314 = vor.u32 %v1312, %v1313
      %v1315 = vsel %vm1239, %v1310, %v1314
      %v1317 = vshrl.u32 %v1238, 16
      %v1319 = vrot.slane %v1317, 3
      %v1320 = vshll.u32 %v1238, 16
      %v1322 = vrot.slane %v1320, 4
      %v1323 = vor.u32 %v1319, %v1322
      %v1324 = vsel %vm1239, %v1314, %v1323
      %v1359 = vunpack.c.l.b16 %v1220
      %v1360 = vunpack.c.l.b16 %v1221
      %v1361 = vunpack.c.l.b16 %v1222
      %v1362 = vunpack.c.l.b16 %v1223
      %v1363 = vunpack.c.l.b16 %v1224
      %v1364 = vunpack.c.l.b16 %v1225
      %v1365 = vunpack.c.l.b16 %v1226
      %v1366 = vunpack.c.l.b16 %v1227
      %v1367 = vunpack.c.l.b16 %v1228
      %v1368 = vunpack.c.l.b16 %v1229
      %v1369 = vunpack.c.l.b16 %v1230
      %v1370 = vunpack.c.l.b16 %v1231
      %v1371 = vunpack.c.l.b16 %v1232
      %v1372 = vunpack.c.l.b16 %v1233
      %v1373 = vunpack.c.l.b16 %v1234
      %v1374 = vunpack.c.l.b16 %v1235
      %v1375 = vpack.c.b16 %v1360, %v1359
      %v1376 = vpack.c.b16 %v1362, %v1361
      %v1377 = vpack.c.b16 %v1364, %v1363
      %v1378 = vpack.c.b16 %v1366, %v1365
      %v1379 = vpack.c.b16 %v1368, %v1367
      %v1380 = vpack.c.b16 %v1370, %v1369
      %v1381 = vpack.c.b16 %v1372, %v1371
      %v1382 = vpack.c.b16 %v1374, %v1373
      %1391 = vmatprep.subr.bf16.mxu0 0
      %1392 = vmatpush1.bf16.msra.mxu0 %v1382
      %1393 = vmatprep.subr.bf16.mxu0 0
      %1394 = vmatpush1.bf16.msra.mxu0 %v1381
      %1395 = vmatprep.subr.bf16.mxu0 0
      %1396 = vmatpush1.bf16.msra.mxu0 %v1380
      %1397 = vmatprep.subr.bf16.mxu0 0
      %1398 = vmatpush1.bf16.msra.mxu0 %v1379
      %1399 = vmatprep.subr.bf16.mxu0 0
      %1400 = vmatpush1.bf16.msra.mxu0 %v1378
      %1401 = vmatprep.subr.bf16.mxu0 0
      %1402 = vmatpush1.bf16.msra.mxu0 %v1377
      %1403 = vmatprep.subr.bf16.mxu0 0
      %1404 = vmatpush1.bf16.msra.mxu0 %v1376
      %1405 = vmatprep.subr.bf16.mxu0 0
      %1406 = vmatpush1.bf16.msra.mxu0 %v1375
      %1407 = vmatprep.subr.bf16.mxu0 0
      %1408 = vmatpush2.bf16.msra.mxu0 0
      %1409 = vmatprep.subr.bf16.mxu0 0
      %1410 = vmatpush2.bf16.msra.mxu0 0
      %1411 = vmatprep.subr.bf16.mxu0 0
      %1412 = vmatpush2.bf16.msra.mxu0 0
      %1413 = vmatprep.subr.bf16.mxu0 0
      %1414 = vmatpush2.bf16.msra.mxu0 0
      %1415 = vmatprep.subr.bf16.mxu0 0
      %1416 = vmatpush2.bf16.msra.mxu0 0
      %1417 = vmatprep.subr.bf16.mxu0 0
      %1418 = vmatpush2.bf16.msra.mxu0 0
      %1419 = vmatprep.subr.bf16.mxu0 0
      %1420 = vmatpush2.bf16.msra.mxu0 0
      %1421 = vmatprep.subr.bf16.mxu0 0
      %1422 = vmatpush2.bf16.msra.mxu0 0
      %1423 = vmatprep.mubr.bf16.mxu0 0
      %1424 = vmatmul.mubr.bf16.gmra.mxu0 %v1251
      %v1425 = vpop.f32.mrf.mxu0
      %v1426 = vadd.f32 0.0, %v1425
      %v1427 = vpop.f32.mrf.mxu0
      %v1428 = vpop.f32.mrf.mxu0
      %v1429 = vadd.f32 0.0, %v1428
      %v1430 = vpop.f32.mrf.mxu0
      %1431 = vmatprep.mubr.bf16.mxu0 0
      %1432 = vmatmul.mubr.bf16.gmra.mxu0 %v1255
      %v1433 = vpop.f32.mrf.mxu0
      %v1434 = vadd.f32 0.0, %v1433
      %v1435 = vpop.f32.mrf.mxu0
      %v1436 = vpop.f32.mrf.mxu0
      %v1437 = vadd.f32 0.0, %v1436
      %v1438 = vpop.f32.mrf.mxu0
      %1439 = vmatprep.mubr.bf16.mxu0 0
      %1440 = vmatmul.mubr.bf16.gmra.mxu0 %v1259
      %v1441 = vpop.f32.mrf.mxu0
      %v1442 = vadd.f32 0.0, %v1441
      %v1443 = vpop.f32.mrf.mxu0
      %v1444 = vpop.f32.mrf.mxu0
      %v1445 = vadd.f32 0.0, %v1444
      %v1446 = vpop.f32.mrf.mxu0
      %1447 = vmatprep.mubr.bf16.mxu0 0
      %1448 = vmatmul.mubr.bf16.gmra.mxu0 %v1263
      %v1449 = vpop.f32.mrf.mxu0
      %v1450 = vadd.f32 0.0, %v1449
      %v1451 = vpop.f32.mrf.mxu0
      %v1452 = vpop.f32.mrf.mxu0
      %v1453 = vadd.f32 0.0, %v1452
      %v1454 = vpop.f32.mrf.mxu0
      %1455 = vmatprep.mubr.bf16.mxu0 0
      %1456 = vmatmul.mubr.bf16.gmra.mxu0 %v1267
      %v1457 = vpop.f32.mrf.mxu0
      %v1458 = vadd.f32 0.0, %v1457
      %v1459 = vpop.f32.mrf.mxu0
      %v1460 = vpop.f32.mrf.mxu0
      %v1461 = vadd.f32 0.0, %v1460
      %v1462 = vpop.f32.mrf.mxu0
      %1463 = vmatprep.mubr.bf16.mxu0 0
      %1464 = vmatmul.mubr.bf16.gmra.mxu0 %v1271
      %v1465 = vpop.f32.mrf.mxu0
      %v1466 = vadd.f32 0.0, %v1465
      %v1467 = vpop.f32.mrf.mxu0
      %v1468 = vpop.f32.mrf.mxu0
      %v1469 = vadd.f32 0.0, %v1468
      %v1470 = vpop.f32.mrf.mxu0
      %1471 = vmatprep.mubr.bf16.mxu0 0
      %1472 = vmatmul.mubr.bf16.gmra.mxu0 %v1275
      %v1473 = vpop.f32.mrf.mxu0
      %v1474 = vadd.f32 0.0, %v1473
      %v1475 = vpop.f32.mrf.mxu0
      %v1476 = vpop.f32.mrf.mxu0
      %v1477 = vadd.f32 0.0, %v1476
      %v1478 = vpop.f32.mrf.mxu0
      %1479 = vmatprep.mubr.bf16.mxu0 0
      %1480 = vmatmul.mubr.bf16.gmra.mxu0 %v1279
      %v1481 = vpop.f32.mrf.mxu0
      %v1482 = vadd.f32 0.0, %v1481
      %v1483 = vpop.f32.mrf.mxu0
      %v1484 = vpop.f32.mrf.mxu0
      %v1485 = vadd.f32 0.0, %v1484
      %v1486 = vpop.f32.mrf.mxu0
      %1487 = vmatprep.mubr.bf16.mxu0 0
      %1488 = vmatmul.mubr.bf16.gmra.mxu0 %v1283
      %v1489 = vpop.f32.mrf.mxu0
      %v1490 = vadd.f32 0.0, %v1489
      %v1491 = vpop.f32.mrf.mxu0
      %v1492 = vpop.f32.mrf.mxu0
      %v1493 = vadd.f32 0.0, %v1492
      %v1494 = vpop.f32.mrf.mxu0
      %1495 = vmatprep.mubr.bf16.mxu0 0
      %1496 = vmatmul.mubr.bf16.gmra.mxu0 %v1287
      %v1497 = vpop.f32.mrf.mxu0
      %v1498 = vadd.f32 0.0, %v1497
      %v1499 = vpop.f32.mrf.mxu0
      %v1500 = vpop.f32.mrf.mxu0
      %v1501 = vadd.f32 0.0, %v1500
      %v1502 = vpop.f32.mrf.mxu0
      %1503 = vmatprep.mubr.bf16.mxu0 0
      %1504 = vmatmul.mubr.bf16.gmra.mxu0 %v1291
      %v1505 = vpop.f32.mrf.mxu0
      %v1506 = vadd.f32 0.0, %v1505
      %v1507 = vpop.f32.mrf.mxu0
      %v1508 = vpop.f32.mrf.mxu0
      %v1509 = vadd.f32 0.0, %v1508
      %v1510 = vpop.f32.mrf.mxu0
      %1511 = vmatprep.mubr.bf16.mxu0 0
      %1512 = vmatmul.mubr.bf16.gmra.mxu0 %v1295
      %v1513 = vpop.f32.mrf.mxu0
      %v1514 = vadd.f32 0.0, %v1513
      %v1515 = vpop.f32.mrf.mxu0
      %v1516 = vpop.f32.mrf.mxu0
      %v1517 = vadd.f32 0.0, %v1516
      %v1518 = vpop.f32.mrf.mxu0
      %1519 = vmatprep.mubr.bf16.mxu0 0
      %1520 = vmatmul.mubr.bf16.gmra.mxu0 %v1299
      %v1521 = vpop.f32.mrf.mxu0
      %v1522 = vadd.f32 0.0, %v1521
      %v1523 = vpop.f32.mrf.mxu0
      %v1524 = vpop.f32.mrf.mxu0
      %v1525 = vadd.f32 0.0, %v1524
      %v1526 = vpop.f32.mrf.mxu0
      %1527 = vmatprep.mubr.bf16.mxu0 0
      %1528 = vmatmul.mubr.bf16.gmra.mxu0 %v1303
      %v1529 = vpop.f32.mrf.mxu0
      %v1530 = vadd.f32 0.0, %v1529
      %v1531 = vpop.f32.mrf.mxu0
      %v1532 = vpop.f32.mrf.mxu0
      %v1533 = vadd.f32 0.0, %v1532
      %v1534 = vpop.f32.mrf.mxu0
      %1535 = vmatprep.mubr.bf16.mxu0 0
      %1536 = vmatmul.mubr.bf16.gmra.mxu0 %v1307
      %v1537 = vpop.f32.mrf.mxu0
      %v1538 = vadd.f32 0.0, %v1537
      %v1539 = vpop.f32.mrf.mxu0
      %v1540 = vpop.f32.mrf.mxu0
      %v1541 = vadd.f32 0.0, %v1540
      %v1542 = vpop.f32.mrf.mxu0
      %1543 = vmatprep.mubr.bf16.mxu0 0
      %1544 = vmatmul.mubr.bf16.gmra.mxu0 %v1311
      %v1545 = vpop.f32.mrf.mxu0
      %v1546 = vadd.f32 0.0, %v1545
      %v1547 = vpop.f32.mrf.mxu0
      %v1548 = vpop.f32.mrf.mxu0
      %v1549 = vadd.f32 0.0, %v1548
      %v1550 = vpop.f32.mrf.mxu0
      %1551 = vmatprep.mubr.bf16.mxu0 0
      %1552 = vmatmul.mubr.bf16.gmra.mxu0 %v1315
      %v1553 = vpop.f32.mrf.mxu0
      %v1554 = vadd.f32 0.0, %v1553
      %v1555 = vpop.f32.mrf.mxu0
      %v1556 = vpop.f32.mrf.mxu0
      %v1557 = vadd.f32 0.0, %v1556
      %v1558 = vpop.f32.mrf.mxu0
      %1559 = vmatprep.mubr.bf16.mxu0 0
      %1560 = vmatmul.mubr.bf16.gmra.mxu0 %v1324
      %v1561 = vpop.f32.mrf.mxu0
      %v1562 = vadd.f32 0.0, %v1561
      %v1563 = vpop.f32.mrf.mxu0
      %v1564 = vpop.f32.mrf.mxu0
      %v1565 = vadd.f32 0.0, %v1564
      %v1566 = vpop.f32.mrf.mxu0
      %1567 = vdwg.mxu0
      %v1568 = vadd.f32 %v1076, %v1426
      %v1569 = vadd.f32 %v1079, %v1429
      %v1570 = vadd.f32 %v1084, %v1434
      %v1571 = vadd.f32 %v1087, %v1437
      %v1572 = vadd.f32 %v1092, %v1442
      %v1573 = vadd.f32 %v1095, %v1445
      %v1574 = vadd.f32 %v1100, %v1450
      %v1575 = vadd.f32 %v1103, %v1453
      %v1576 = vadd.f32 %v1108, %v1458
      %v1577 = vadd.f32 %v1111, %v1461
      %v1578 = vadd.f32 %v1116, %v1466
      %v1579 = vadd.f32 %v1119, %v1469
      %v1580 = vadd.f32 %v1124, %v1474
      %v1581 = vadd.f32 %v1127, %v1477
      %v1582 = vadd.f32 %v1132, %v1482
      %v1583 = vadd.f32 %v1135, %v1485
      %v1584 = vadd.f32 %v1140, %v1490
      %v1585 = vadd.f32 %v1143, %v1493
      %v1586 = vadd.f32 %v1148, %v1498
      %v1587 = vadd.f32 %v1151, %v1501
      %v1588 = vadd.f32 %v1156, %v1506
      %v1589 = vadd.f32 %v1159, %v1509
      %v1590 = vadd.f32 %v1164, %v1514
      %v1591 = vadd.f32 %v1167, %v1517
      %v1592 = vadd.f32 %v1172, %v1522
      %v1593 = vadd.f32 %v1175, %v1525
      %v1594 = vadd.f32 %v1180, %v1530
      %v1595 = vadd.f32 %v1183, %v1533
      %v1596 = vadd.f32 %v1188, %v1538
      %v1597 = vadd.f32 %v1191, %v1541
      %v1598 = vadd.f32 %v1196, %v1546
      %v1599 = vadd.f32 %v1199, %v1549
      %v1600 = vadd.f32 %v1204, %v1554
      %v1601 = vadd.f32 %v1207, %v1557
      %v1602 = vadd.f32 %v1212, %v1562
      %v1603 = vadd.f32 %v1215, %v1565
      %v1604 = vld [vmem:[%s286 + $0x20] sm:$0x8]
      %v1605 = vld [vmem:[%s286 + $0x24] sm:$0xf]
      %v1606 = vld [vmem:[%s286 + $0x28] sm:$0xf]
      %v1607 = vld [vmem:[%s286 + $0x2c] sm:$0xf]
      %v1608 = vld [vmem:[%s286 + $0x30] sm:$0xf]
      %v1609 = vld [vmem:[%s286 + $0x34] sm:$0xf]
      %v1610 = vld [vmem:[%s286 + $0x38] sm:$0xf]
      %v1611 = vld [vmem:[%s286 + $0x3c] sm:$0xf]
      %v1612 = vld [vmem:[%s286 + $0x40] sm:$0xf]
      %v1613 = vld [vmem:[%s286 + $0x44] sm:$0xf]
      %v1614 = vld [vmem:[%s286 + $0x48] sm:$0xf]
      %v1615 = vld [vmem:[%s286 + $0x4c] sm:$0xf]
      %v1616 = vld [vmem:[%s286 + $0x50] sm:$0xf]
      %v1617 = vld [vmem:[%s286 + $0x54] sm:$0xf]
      %v1618 = vld [vmem:[%s286 + $0x58] sm:$0xf]
      %v1619 = vld [vmem:[%s286 + $0x5c] sm:$0xf]
      %v1620 = vld [vmem:[%s286 + $0x60] sm:$0xf]
      %v1621 = vld [vmem:[%s286 + $0x64] sm:$0xf]
      %v1622 = vld [vmem:[%s286 + $0x68] sm:$0xf]
      %v1623 = vld [vmem:[%s286 + $0x6c] sm:$0xf]
      %v1624 = vld [vmem:[%s286 + $0x70] sm:$0xf]
      %v1625 = vld [vmem:[%s286 + $0x74] sm:$0xf]
      %v1626 = vld [vmem:[%s286 + $0x78] sm:$0xf]
      %v1627 = vld [vmem:[%s286 + $0x7c] sm:$0xf]
      %v1628 = vld [vmem:[%s286 + $0x80] sm:$0xf]
      %v1629 = vld [vmem:[%s286 + $0x84] sm:$0xf]
      %v1630 = vld [vmem:[%s286 + $0x88] sm:$0xf]
      %v1631 = vld [vmem:[%s286 + $0x8c] sm:$0xf]
      %v1632 = vld [vmem:[%s286 + $0x90] sm:$0xf]
      %v1633 = vld [vmem:[%s286 + $0x94] sm:$0xf]
      %v1634 = vld [vmem:[%s286 + $0x98] sm:$0xf]
      %v1635 = vld [vmem:[%s286 + $0x9c] sm:$0xf]
      %v1636 = vld [vmem:[%s286 + $0xa0] sm:$0xf]
      %v1637 = vld [vmem:[%s286 + $0xa4] sm:$0xf]
      %v1638 = vld [vmem:[%s286 + $0xa8] sm:$0xf]
      %v1639 = vld [vmem:[%s286 + $0xac] sm:$0xf]
      %v1640 = vld [vmem:[%s286 + $0xb0] sm:$0xf]
      %s1641 = scalar_lea.vmem %s295, 192
      %v1642 = vld [vmem:[%s1641] sm:$0xf]
      %v1643 = vld [vmem:[%s1641 + $0x4] sm:$0xf]
      %v1644 = vld [vmem:[%s1641 + $0x8] sm:$0xf]
      %v1645 = vld [vmem:[%s1641 + $0xc] sm:$0xf]
      %v1646 = vld [vmem:[%s1641 + $0x10] sm:$0xf]
      %v1647 = vld [vmem:[%s1641 + $0x14] sm:$0xf]
      %v1648 = vld [vmem:[%s1641 + $0x18] sm:$0xf]
      %v1649 = vld [vmem:[%s1641 + $0x1c] sm:$0xf]
      %v1650 = vld [vmem:[%s1641 + $0x20] sm:$0xf]
      %v1651 = vld [vmem:[%s1641 + $0x24] sm:$0xf]
      %v1652 = vld [vmem:[%s1641 + $0x28] sm:$0xf]
      %v1653 = vld [vmem:[%s1641 + $0x2c] sm:$0xf]
      %v1654 = vld [vmem:[%s1641 + $0x30] sm:$0xf]
      %v1655 = vld [vmem:[%s1641 + $0x34] sm:$0xf]
      %v1656 = vld [vmem:[%s1641 + $0x38] sm:$0xf]
      %v1657 = vld [vmem:[%s1641 + $0x3c] sm:$0xf]
      %v1695 = vunpack.c.l.b16 %v1604
      %v1696 = vunpack.c.l.b16 %v1605
      %v1697 = vunpack.c.l.b16 %v1606
      %v1698 = vunpack.c.l.b16 %v1607
      %v1699 = vunpack.c.l.b16 %v1608
      %v1700 = vunpack.c.l.b16 %v1609
      %v1701 = vunpack.c.l.b16 %v1610
      %v1702 = vunpack.c.l.b16 %v1611
      %v1703 = vunpack.c.l.b16 %v1612
      %v1704 = vunpack.c.l.b16 %v1613
      %v1705 = vunpack.c.l.b16 %v1614
      %v1706 = vunpack.c.l.b16 %v1615
      %v1707 = vunpack.c.l.b16 %v1616
      %v1708 = vunpack.c.l.b16 %v1617
      %v1709 = vunpack.c.l.b16 %v1618
      %v1710 = vunpack.c.l.b16 %v1619
      %v1711 = vunpack.c.l.b16 %v1620
      %v1712 = vunpack.c.l.b16 %v1621
      %v1713 = vunpack.c.l.b16 %v1622
      %v1714 = vunpack.c.l.b16 %v1623
      %v1715 = vunpack.c.l.b16 %v1624
      %v1716 = vunpack.c.l.b16 %v1625
      %v1717 = vunpack.c.l.b16 %v1626
      %v1718 = vunpack.c.l.b16 %v1627
      %v1719 = vunpack.c.l.b16 %v1628
      %v1720 = vunpack.c.l.b16 %v1629
      %v1721 = vunpack.c.l.b16 %v1630
      %v1722 = vunpack.c.l.b16 %v1631
      %v1723 = vunpack.c.l.b16 %v1632
      %v1724 = vunpack.c.l.b16 %v1633
      %v1725 = vunpack.c.l.b16 %v1634
      %v1726 = vunpack.c.l.b16 %v1635
      %v1727 = vunpack.c.l.b16 %v1636
      %v1728 = vunpack.c.l.b16 %v1637
      %v1729 = vunpack.c.l.b16 %v1638
      %v1730 = vunpack.c.l.b16 %v1639
      %v1731 = vunpack.c.l.b16 %v1640
      %v1732 = vpack.c.b16 %v1696, %v1695
      %v1733 = vpack.c.b16 %v1698, %v1697
      %v1734 = vpack.c.b16 %v1700, %v1699
      %v1735 = vpack.c.b16 %v1702, %v1701
      %v1736 = vpack.c.b16 %v1704, %v1703
      %v1737 = vpack.c.b16 %v1706, %v1705
      %v1738 = vpack.c.b16 %v1708, %v1707
      %v1739 = vpack.c.b16 %v1710, %v1709
      %v1740 = vpack.c.b16 %v1712, %v1711
      %v1741 = vpack.c.b16 %v1714, %v1713
      %v1742 = vpack.c.b16 %v1716, %v1715
      %v1743 = vpack.c.b16 %v1718, %v1717
      %v1744 = vpack.c.b16 %v1720, %v1719
      %v1745 = vpack.c.b16 %v1722, %v1721
      %v1746 = vpack.c.b16 %v1724, %v1723
      %v1747 = vpack.c.b16 %v1726, %v1725
      %v1748 = vpack.c.b16 %v1728, %v1727
      %v1749 = vpack.c.b16 %v1730, %v1729
      %v1750 = vpack.c.b16 %v1731, %v1731
      %v1752 = vshrl.u32 %v1732, 16
      %v1754 = vrot.slane %v1752, 3
      %v1755 = vshll.u32 %v1732, 16
      %v1757 = vrot.slane %v1755, 4
      %v1758 = vor.u32 %v1754, %v1757
      %v1760 = vshrl.u32 %v1733, 16
      %v1762 = vrot.slane %v1760, 3
      %v1763 = vshll.u32 %v1733, 16
      %v1765 = vrot.slane %v1763, 4
      %v1766 = vor.u32 %v1762, %v1765
      %v1767 = vsel %vm1239, %v1758, %v1766
      %v1769 = vshrl.u32 %v1734, 16
      %v1771 = vrot.slane %v1769, 3
      %v1772 = vshll.u32 %v1734, 16
      %v1774 = vrot.slane %v1772, 4
      %v1775 = vor.u32 %v1771, %v1774
      %v1776 = vsel %vm1239, %v1766, %v1775
      %v1778 = vshrl.u32 %v1735, 16
      %v1780 = vrot.slane %v1778, 3
      %v1781 = vshll.u32 %v1735, 16
      %v1783 = vrot.slane %v1781, 4
      %v1784 = vor.u32 %v1780, %v1783
      %v1785 = vsel %vm1239, %v1775, %v1784
      %v1787 = vshrl.u32 %v1736, 16
      %v1789 = vrot.slane %v1787, 3
      %v1790 = vshll.u32 %v1736, 16
      %v1792 = vrot.slane %v1790, 4
      %v1793 = vor.u32 %v1789, %v1792
      %v1794 = vsel %vm1239, %v1784, %v1793
      %v1796 = vshrl.u32 %v1737, 16
      %v1798 = vrot.slane %v1796, 3
      %v1799 = vshll.u32 %v1737, 16
      %v1801 = vrot.slane %v1799, 4
      %v1802 = vor.u32 %v1798, %v1801
      %v1803 = vsel %vm1239, %v1793, %v1802
      %v1805 = vshrl.u32 %v1738, 16
      %v1807 = vrot.slane %v1805, 3
      %v1808 = vshll.u32 %v1738, 16
      %v1810 = vrot.slane %v1808, 4
      %v1811 = vor.u32 %v1807, %v1810
      %v1812 = vsel %vm1239, %v1802, %v1811
      %v1814 = vshrl.u32 %v1739, 16
      %v1816 = vrot.slane %v1814, 3
      %v1817 = vshll.u32 %v1739, 16
      %v1819 = vrot.slane %v1817, 4
      %v1820 = vor.u32 %v1816, %v1819
      %v1821 = vsel %vm1239, %v1811, %v1820
      %v1823 = vshrl.u32 %v1740, 16
      %v1825 = vrot.slane %v1823, 3
      %v1826 = vshll.u32 %v1740, 16
      %v1828 = vrot.slane %v1826, 4
      %v1829 = vor.u32 %v1825, %v1828
      %v1830 = vsel %vm1239, %v1820, %v1829
      %v1832 = vshrl.u32 %v1741, 16
      %v1834 = vrot.slane %v1832, 3
      %v1835 = vshll.u32 %v1741, 16
      %v1837 = vrot.slane %v1835, 4
      %v1838 = vor.u32 %v1834, %v1837
      %v1839 = vsel %vm1239, %v1829, %v1838
      %v1841 = vshrl.u32 %v1742, 16
      %v1843 = vrot.slane %v1841, 3
      %v1844 = vshll.u32 %v1742, 16
      %v1846 = vrot.slane %v1844, 4
      %v1847 = vor.u32 %v1843, %v1846
      %v1848 = vsel %vm1239, %v1838, %v1847
      %v1850 = vshrl.u32 %v1743, 16
      %v1852 = vrot.slane %v1850, 3
      %v1853 = vshll.u32 %v1743, 16
      %v1855 = vrot.slane %v1853, 4
      %v1856 = vor.u32 %v1852, %v1855
      %v1857 = vsel %vm1239, %v1847, %v1856
      %v1859 = vshrl.u32 %v1744, 16
      %v1861 = vrot.slane %v1859, 3
      %v1862 = vshll.u32 %v1744, 16
      %v1864 = vrot.slane %v1862, 4
      %v1865 = vor.u32 %v1861, %v1864
      %v1866 = vsel %vm1239, %v1856, %v1865
      %v1868 = vshrl.u32 %v1745, 16
      %v1870 = vrot.slane %v1868, 3
      %v1871 = vshll.u32 %v1745, 16
      %v1873 = vrot.slane %v1871, 4
      %v1874 = vor.u32 %v1870, %v1873
      %v1875 = vsel %vm1239, %v1865, %v1874
      %v1877 = vshrl.u32 %v1746, 16
      %v1879 = vrot.slane %v1877, 3
      %v1880 = vshll.u32 %v1746, 16
      %v1882 = vrot.slane %v1880, 4
      %v1883 = vor.u32 %v1879, %v1882
      %v1884 = vsel %vm1239, %v1874, %v1883
      %v1886 = vshrl.u32 %v1747, 16
      %v1888 = vrot.slane %v1886, 3
      %v1889 = vshll.u32 %v1747, 16
      %v1891 = vrot.slane %v1889, 4
      %v1892 = vor.u32 %v1888, %v1891
      %v1893 = vsel %vm1239, %v1883, %v1892
      %v1895 = vshrl.u32 %v1748, 16
      %v1897 = vrot.slane %v1895, 3
      %v1898 = vshll.u32 %v1748, 16
      %v1900 = vrot.slane %v1898, 4
      %v1901 = vor.u32 %v1897, %v1900
      %v1902 = vsel %vm1239, %v1892, %v1901
      %v1904 = vshrl.u32 %v1749, 16
      %v1906 = vrot.slane %v1904, 3
      %v1907 = vshll.u32 %v1749, 16
      %v1909 = vrot.slane %v1907, 4
      %v1910 = vor.u32 %v1906, %v1909
      %v1911 = vsel %vm1239, %v1901, %v1910
      %v1913 = vshrl.u32 %v1750, 16
      %v1915 = vrot.slane %v1913, 3
      %v1916 = vshll.u32 %v1750, 16
      %v1918 = vrot.slane %v1916, 4
      %v1919 = vor.u32 %v1915, %v1918
      %v1920 = vsel %vm1239, %v1910, %v1919
      %v1955 = vunpack.c.l.b16 %v1642
      %v1956 = vunpack.c.l.b16 %v1643
      %v1957 = vunpack.c.l.b16 %v1644
      %v1958 = vunpack.c.l.b16 %v1645
      %v1959 = vunpack.c.l.b16 %v1646
      %v1960 = vunpack.c.l.b16 %v1647
      %v1961 = vunpack.c.l.b16 %v1648
      %v1962 = vunpack.c.l.b16 %v1649
      %v1963 = vunpack.c.l.b16 %v1650
      %v1964 = vunpack.c.l.b16 %v1651
      %v1965 = vunpack.c.l.b16 %v1652
      %v1966 = vunpack.c.l.b16 %v1653
      %v1967 = vunpack.c.l.b16 %v1654
      %v1968 = vunpack.c.l.b16 %v1655
      %v1969 = vunpack.c.l.b16 %v1656
      %v1970 = vunpack.c.l.b16 %v1657
      %v1971 = vpack.c.b16 %v1956, %v1955
      %v1972 = vpack.c.b16 %v1958, %v1957
      %v1973 = vpack.c.b16 %v1960, %v1959
      %v1974 = vpack.c.b16 %v1962, %v1961
      %v1975 = vpack.c.b16 %v1964, %v1963
      %v1976 = vpack.c.b16 %v1966, %v1965
      %v1977 = vpack.c.b16 %v1968, %v1967
      %v1978 = vpack.c.b16 %v1970, %v1969
      %1987 = vmatprep.subr.bf16.mxu0 0
      %1988 = vmatpush1.bf16.msra.mxu0 %v1978
      %1989 = vmatprep.subr.bf16.mxu0 0
      %1990 = vmatpush1.bf16.msra.mxu0 %v1977
      %1991 = vmatprep.subr.bf16.mxu0 0
      %1992 = vmatpush1.bf16.msra.mxu0 %v1976
      %1993 = vmatprep.subr.bf16.mxu0 0
      %1994 = vmatpush1.bf16.msra.mxu0 %v1975
      %1995 = vmatprep.subr.bf16.mxu0 0
      %1996 = vmatpush1.bf16.msra.mxu0 %v1974
      %1997 = vmatprep.subr.bf16.mxu0 0
      %1998 = vmatpush1.bf16.msra.mxu0 %v1973
      %1999 = vmatprep.subr.bf16.mxu0 0
      %2000 = vmatpush1.bf16.msra.mxu0 %v1972
      %2001 = vmatprep.subr.bf16.mxu0 0
      %2002 = vmatpush1.bf16.msra.mxu0 %v1971
      %2003 = vmatprep.subr.bf16.mxu0 0
      %2004 = vmatpush2.bf16.msra.mxu0 0
      %2005 = vmatprep.subr.bf16.mxu0 0
      %2006 = vmatpush2.bf16.msra.mxu0 0
      %2007 = vmatprep.subr.bf16.mxu0 0
      %2008 = vmatpush2.bf16.msra.mxu0 0
      %2009 = vmatprep.subr.bf16.mxu0 0
      %2010 = vmatpush2.bf16.msra.mxu0 0
      %2011 = vmatprep.subr.bf16.mxu0 0
      %2012 = vmatpush2.bf16.msra.mxu0 0
      %2013 = vmatprep.subr.bf16.mxu0 0
      %2014 = vmatpush2.bf16.msra.mxu0 0
      %2015 = vmatprep.subr.bf16.mxu0 0
      %2016 = vmatpush2.bf16.msra.mxu0 0
      %2017 = vmatprep.subr.bf16.mxu0 0
      %2018 = vmatpush2.bf16.msra.mxu0 0
      %2019 = vmatprep.mubr.bf16.mxu0 0
      %2020 = vmatmul.mubr.bf16.gmra.mxu0 %v1767
      %v2021 = vpop.f32.mrf.mxu0
      %v2022 = vadd.f32 0.0, %v2021
      %v2023 = vpop.f32.mrf.mxu0
      %v2024 = vpop.f32.mrf.mxu0
      %v2025 = vadd.f32 0.0, %v2024
      %v2026 = vpop.f32.mrf.mxu0
      %2027 = vmatprep.mubr.bf16.mxu0 0
      %2028 = vmatmul.mubr.bf16.gmra.mxu0 %v1776
      %v2029 = vpop.f32.mrf.mxu0
      %v2030 = vadd.f32 0.0, %v2029
      %v2031 = vpop.f32.mrf.mxu0
      %v2032 = vpop.f32.mrf.mxu0
      %v2033 = vadd.f32 0.0, %v2032
      %v2034 = vpop.f32.mrf.mxu0
      %2035 = vmatprep.mubr.bf16.mxu0 0
      %2036 = vmatmul.mubr.bf16.gmra.mxu0 %v1785
      %v2037 = vpop.f32.mrf.mxu0
      %v2038 = vadd.f32 0.0, %v2037
      %v2039 = vpop.f32.mrf.mxu0
      %v2040 = vpop.f32.mrf.mxu0
      %v2041 = vadd.f32 0.0, %v2040
      %v2042 = vpop.f32.mrf.mxu0
      %2043 = vmatprep.mubr.bf16.mxu0 0
      %2044 = vmatmul.mubr.bf16.gmra.mxu0 %v1794
      %v2045 = vpop.f32.mrf.mxu0
      %v2046 = vadd.f32 0.0, %v2045
      %v2047 = vpop.f32.mrf.mxu0
      %v2048 = vpop.f32.mrf.mxu0
      %v2049 = vadd.f32 0.0, %v2048
      %v2050 = vpop.f32.mrf.mxu0
      %2051 = vmatprep.mubr.bf16.mxu0 0
      %2052 = vmatmul.mubr.bf16.gmra.mxu0 %v1803
      %v2053 = vpop.f32.mrf.mxu0
      %v2054 = vadd.f32 0.0, %v2053
      %v2055 = vpop.f32.mrf.mxu0
      %v2056 = vpop.f32.mrf.mxu0
      %v2057 = vadd.f32 0.0, %v2056
      %v2058 = vpop.f32.mrf.mxu0
      %2059 = vmatprep.mubr.bf16.mxu0 0
      %2060 = vmatmul.mubr.bf16.gmra.mxu0 %v1812
      %v2061 = vpop.f32.mrf.mxu0
      %v2062 = vadd.f32 0.0, %v2061
      %v2063 = vpop.f32.mrf.mxu0
      %v2064 = vpop.f32.mrf.mxu0
      %v2065 = vadd.f32 0.0, %v2064
      %v2066 = vpop.f32.mrf.mxu0
      %2067 = vmatprep.mubr.bf16.mxu0 0
      %2068 = vmatmul.mubr.bf16.gmra.mxu0 %v1821
      %v2069 = vpop.f32.mrf.mxu0
      %v2070 = vadd.f32 0.0, %v2069
      %v2071 = vpop.f32.mrf.mxu0
      %v2072 = vpop.f32.mrf.mxu0
      %v2073 = vadd.f32 0.0, %v2072
      %v2074 = vpop.f32.mrf.mxu0
      %2075 = vmatprep.mubr.bf16.mxu0 0
      %2076 = vmatmul.mubr.bf16.gmra.mxu0 %v1830
      %v2077 = vpop.f32.mrf.mxu0
      %v2078 = vadd.f32 0.0, %v2077
      %v2079 = vpop.f32.mrf.mxu0
      %v2080 = vpop.f32.mrf.mxu0
      %v2081 = vadd.f32 0.0, %v2080
      %v2082 = vpop.f32.mrf.mxu0
      %2083 = vmatprep.mubr.bf16.mxu0 0
      %2084 = vmatmul.mubr.bf16.gmra.mxu0 %v1839
      %v2085 = vpop.f32.mrf.mxu0
      %v2086 = vadd.f32 0.0, %v2085
      %v2087 = vpop.f32.mrf.mxu0
      %v2088 = vpop.f32.mrf.mxu0
      %v2089 = vadd.f32 0.0, %v2088
      %v2090 = vpop.f32.mrf.mxu0
      %2091 = vmatprep.mubr.bf16.mxu0 0
      %2092 = vmatmul.mubr.bf16.gmra.mxu0 %v1848
      %v2093 = vpop.f32.mrf.mxu0
      %v2094 = vadd.f32 0.0, %v2093
      %v2095 = vpop.f32.mrf.mxu0
      %v2096 = vpop.f32.mrf.mxu0
      %v2097 = vadd.f32 0.0, %v2096
      %v2098 = vpop.f32.mrf.mxu0
      %2099 = vmatprep.mubr.bf16.mxu0 0
      %2100 = vmatmul.mubr.bf16.gmra.mxu0 %v1857
      %v2101 = vpop.f32.mrf.mxu0
      %v2102 = vadd.f32 0.0, %v2101
      %v2103 = vpop.f32.mrf.mxu0
      %v2104 = vpop.f32.mrf.mxu0
      %v2105 = vadd.f32 0.0, %v2104
      %v2106 = vpop.f32.mrf.mxu0
      %2107 = vmatprep.mubr.bf16.mxu0 0
      %2108 = vmatmul.mubr.bf16.gmra.mxu0 %v1866
      %v2109 = vpop.f32.mrf.mxu0
      %v2110 = vadd.f32 0.0, %v2109
      %v2111 = vpop.f32.mrf.mxu0
      %v2112 = vpop.f32.mrf.mxu0
      %v2113 = vadd.f32 0.0, %v2112
      %v2114 = vpop.f32.mrf.mxu0
      %2115 = vmatprep.mubr.bf16.mxu0 0
      %2116 = vmatmul.mubr.bf16.gmra.mxu0 %v1875
      %v2117 = vpop.f32.mrf.mxu0
      %v2118 = vadd.f32 0.0, %v2117
      %v2119 = vpop.f32.mrf.mxu0
      %v2120 = vpop.f32.mrf.mxu0
      %v2121 = vadd.f32 0.0, %v2120
      %v2122 = vpop.f32.mrf.mxu0
      %2123 = vmatprep.mubr.bf16.mxu0 0
      %2124 = vmatmul.mubr.bf16.gmra.mxu0 %v1884
      %v2125 = vpop.f32.mrf.mxu0
      %v2126 = vadd.f32 0.0, %v2125
      %v2127 = vpop.f32.mrf.mxu0
      %v2128 = vpop.f32.mrf.mxu0
      %v2129 = vadd.f32 0.0, %v2128
      %v2130 = vpop.f32.mrf.mxu0
      %2131 = vmatprep.mubr.bf16.mxu0 0
      %2132 = vmatmul.mubr.bf16.gmra.mxu0 %v1893
      %v2133 = vpop.f32.mrf.mxu0
      %v2134 = vadd.f32 0.0, %v2133
      %v2135 = vpop.f32.mrf.mxu0
      %v2136 = vpop.f32.mrf.mxu0
      %v2137 = vadd.f32 0.0, %v2136
      %v2138 = vpop.f32.mrf.mxu0
      %2139 = vmatprep.mubr.bf16.mxu0 0
      %2140 = vmatmul.mubr.bf16.gmra.mxu0 %v1902
      %v2141 = vpop.f32.mrf.mxu0
      %v2142 = vadd.f32 0.0, %v2141
      %v2143 = vpop.f32.mrf.mxu0
      %v2144 = vpop.f32.mrf.mxu0
      %v2145 = vadd.f32 0.0, %v2144
      %v2146 = vpop.f32.mrf.mxu0
      %2147 = vmatprep.mubr.bf16.mxu0 0
      %2148 = vmatmul.mubr.bf16.gmra.mxu0 %v1911
      %v2149 = vpop.f32.mrf.mxu0
      %v2150 = vadd.f32 0.0, %v2149
      %v2151 = vpop.f32.mrf.mxu0
      %v2152 = vpop.f32.mrf.mxu0
      %v2153 = vadd.f32 0.0, %v2152
      %v2154 = vpop.f32.mrf.mxu0
      %2155 = vmatprep.mubr.bf16.mxu0 0
      %2156 = vmatmul.mubr.bf16.gmra.mxu0 %v1920
      %v2157 = vpop.f32.mrf.mxu0
      %v2158 = vadd.f32 0.0, %v2157
      %v2159 = vpop.f32.mrf.mxu0
      %v2160 = vpop.f32.mrf.mxu0
      %v2161 = vadd.f32 0.0, %v2160
      %v2162 = vpop.f32.mrf.mxu0
      %2163 = vdwg.mxu0
      %v2164 = vadd.f32 %v1568, %v2022
      %v2165 = vadd.f32 %v1569, %v2025
      %v2166 = vadd.f32 %v1570, %v2030
      %v2167 = vadd.f32 %v1571, %v2033
      %v2168 = vadd.f32 %v1572, %v2038
      %v2169 = vadd.f32 %v1573, %v2041
      %v2170 = vadd.f32 %v1574, %v2046
      %v2171 = vadd.f32 %v1575, %v2049
      %v2172 = vadd.f32 %v1576, %v2054
      %v2173 = vadd.f32 %v1577, %v2057
      %v2174 = vadd.f32 %v1578, %v2062
      %v2175 = vadd.f32 %v1579, %v2065
      %v2176 = vadd.f32 %v1580, %v2070
      %v2177 = vadd.f32 %v1581, %v2073
      %v2178 = vadd.f32 %v1582, %v2078
      %v2179 = vadd.f32 %v1583, %v2081
      %v2180 = vadd.f32 %v1584, %v2086
      %v2181 = vadd.f32 %v1585, %v2089
      %v2182 = vadd.f32 %v1586, %v2094
      %v2183 = vadd.f32 %v1587, %v2097
      %v2184 = vadd.f32 %v1588, %v2102
      %v2185 = vadd.f32 %v1589, %v2105
      %v2186 = vadd.f32 %v1590, %v2110
      %v2187 = vadd.f32 %v1591, %v2113
      %v2188 = vadd.f32 %v1592, %v2118
      %v2189 = vadd.f32 %v1593, %v2121
      %v2190 = vadd.f32 %v1594, %v2126
      %v2191 = vadd.f32 %v1595, %v2129
      %v2192 = vadd.f32 %v1596, %v2134
      %v2193 = vadd.f32 %v1597, %v2137
      %v2194 = vadd.f32 %v1598, %v2142
      %v2195 = vadd.f32 %v1599, %v2145
      %v2196 = vadd.f32 %v1600, %v2150
      %v2197 = vadd.f32 %v1601, %v2153
      %v2198 = vadd.f32 %v1602, %v2158
      %v2199 = vadd.f32 %v1603, %v2161
      %s2200 = scalar_lea.vmem %s295, 256
      %v2201 = vld [vmem:[%s2200] sm:$0xf]
      %v2202 = vld [vmem:[%s2200 + $0x4] sm:$0xf]
      %v2203 = vld [vmem:[%s2200 + $0x8] sm:$0xf]
      %v2204 = vld [vmem:[%s2200 + $0xc] sm:$0xf]
      %v2205 = vld [vmem:[%s2200 + $0x10] sm:$0xf]
      %v2206 = vld [vmem:[%s2200 + $0x14] sm:$0xf]
      %v2207 = vld [vmem:[%s2200 + $0x18] sm:$0xf]
      %v2208 = vld [vmem:[%s2200 + $0x1c] sm:$0xf]
      %v2209 = vld [vmem:[%s2200 + $0x20] sm:$0xf]
      %v2210 = vld [vmem:[%s2200 + $0x24] sm:$0xf]
      %v2211 = vld [vmem:[%s2200 + $0x28] sm:$0xf]
      %v2212 = vld [vmem:[%s2200 + $0x2c] sm:$0xf]
      %v2213 = vld [vmem:[%s2200 + $0x30] sm:$0xf]
      %v2214 = vld [vmem:[%s2200 + $0x34] sm:$0xf]
      %v2215 = vld [vmem:[%s2200 + $0x38] sm:$0xf]
      %v2216 = vld [vmem:[%s2200 + $0x3c] sm:$0xf]
      %v2217 = vpack.c.b16 %v1697, %v1696
      %v2218 = vpack.c.b16 %v1699, %v1698
      %v2219 = vpack.c.b16 %v1701, %v1700
      %v2220 = vpack.c.b16 %v1703, %v1702
      %v2221 = vpack.c.b16 %v1705, %v1704
      %v2222 = vpack.c.b16 %v1707, %v1706
      %v2223 = vpack.c.b16 %v1709, %v1708
      %v2224 = vpack.c.b16 %v1711, %v1710
      %v2225 = vpack.c.b16 %v1713, %v1712
      %v2226 = vpack.c.b16 %v1715, %v1714
      %v2227 = vpack.c.b16 %v1717, %v1716
      %v2228 = vpack.c.b16 %v1719, %v1718
      %v2229 = vpack.c.b16 %v1721, %v1720
      %v2230 = vpack.c.b16 %v1723, %v1722
      %v2231 = vpack.c.b16 %v1725, %v1724
      %v2232 = vpack.c.b16 %v1727, %v1726
      %v2233 = vpack.c.b16 %v1729, %v1728
      %v2234 = vpack.c.b16 %v1731, %v1730
      %v2269 = vunpack.c.l.b16 %v2201
      %v2270 = vunpack.c.l.b16 %v2202
      %v2271 = vunpack.c.l.b16 %v2203
      %v2272 = vunpack.c.l.b16 %v2204
      %v2273 = vunpack.c.l.b16 %v2205
      %v2274 = vunpack.c.l.b16 %v2206
      %v2275 = vunpack.c.l.b16 %v2207
      %v2276 = vunpack.c.l.b16 %v2208
      %v2277 = vunpack.c.l.b16 %v2209
      %v2278 = vunpack.c.l.b16 %v2210
      %v2279 = vunpack.c.l.b16 %v2211
      %v2280 = vunpack.c.l.b16 %v2212
      %v2281 = vunpack.c.l.b16 %v2213
      %v2282 = vunpack.c.l.b16 %v2214
      %v2283 = vunpack.c.l.b16 %v2215
      %v2284 = vunpack.c.l.b16 %v2216
      %v2285 = vpack.c.b16 %v2270, %v2269
      %v2286 = vpack.c.b16 %v2272, %v2271
      %v2287 = vpack.c.b16 %v2274, %v2273
      %v2288 = vpack.c.b16 %v2276, %v2275
      %v2289 = vpack.c.b16 %v2278, %v2277
      %v2290 = vpack.c.b16 %v2280, %v2279
      %v2291 = vpack.c.b16 %v2282, %v2281
      %v2292 = vpack.c.b16 %v2284, %v2283
      %2301 = vmatprep.subr.bf16.mxu0 0
      %2302 = vmatpush1.bf16.msra.mxu0 %v2292
      %2303 = vmatprep.subr.bf16.mxu0 0
      %2304 = vmatpush1.bf16.msra.mxu0 %v2291
      %2305 = vmatprep.subr.bf16.mxu0 0
      %2306 = vmatpush1.bf16.msra.mxu0 %v2290
      %2307 = vmatprep.subr.bf16.mxu0 0
      %2308 = vmatpush1.bf16.msra.mxu0 %v2289
      %2309 = vmatprep.subr.bf16.mxu0 0
      %2310 = vmatpush1.bf16.msra.mxu0 %v2288
      %2311 = vmatprep.subr.bf16.mxu0 0
      %2312 = vmatpush1.bf16.msra.mxu0 %v2287
      %2313 = vmatprep.subr.bf16.mxu0 0
      %2314 = vmatpush1.bf16.msra.mxu0 %v2286
      %2315 = vmatprep.subr.bf16.mxu0 0
      %2316 = vmatpush1.bf16.msra.mxu0 %v2285
      %2317 = vmatprep.subr.bf16.mxu0 0
      %2318 = vmatpush2.bf16.msra.mxu0 0
      %2319 = vmatprep.subr.bf16.mxu0 0
      %2320 = vmatpush2.bf16.msra.mxu0 0
      %2321 = vmatprep.subr.bf16.mxu0 0
      %2322 = vmatpush2.bf16.msra.mxu0 0
      %2323 = vmatprep.subr.bf16.mxu0 0
      %2324 = vmatpush2.bf16.msra.mxu0 0
      %2325 = vmatprep.subr.bf16.mxu0 0
      %2326 = vmatpush2.bf16.msra.mxu0 0
      %2327 = vmatprep.subr.bf16.mxu0 0
      %2328 = vmatpush2.bf16.msra.mxu0 0
      %2329 = vmatprep.subr.bf16.mxu0 0
      %2330 = vmatpush2.bf16.msra.mxu0 0
      %2331 = vmatprep.subr.bf16.mxu0 0
      %2332 = vmatpush2.bf16.msra.mxu0 0
      %2333 = vmatprep.mubr.bf16.mxu0 0
      %2334 = vmatmul.mubr.bf16.gmra.mxu0 %v2217
      %v2335 = vpop.f32.mrf.mxu0
      %v2336 = vadd.f32 0.0, %v2335
      %v2337 = vpop.f32.mrf.mxu0
      %v2338 = vpop.f32.mrf.mxu0
      %v2339 = vadd.f32 0.0, %v2338
      %v2340 = vpop.f32.mrf.mxu0
      %2341 = vmatprep.mubr.bf16.mxu0 0
      %2342 = vmatmul.mubr.bf16.gmra.mxu0 %v2218
      %v2343 = vpop.f32.mrf.mxu0
      %v2344 = vadd.f32 0.0, %v2343
      %v2345 = vpop.f32.mrf.mxu0
      %v2346 = vpop.f32.mrf.mxu0
      %v2347 = vadd.f32 0.0, %v2346
      %v2348 = vpop.f32.mrf.mxu0
      %2349 = vmatprep.mubr.bf16.mxu0 0
      %2350 = vmatmul.mubr.bf16.gmra.mxu0 %v2219
      %v2351 = vpop.f32.mrf.mxu0
      %v2352 = vadd.f32 0.0, %v2351
      %v2353 = vpop.f32.mrf.mxu0
      %v2354 = vpop.f32.mrf.mxu0
      %v2355 = vadd.f32 0.0, %v2354
      %v2356 = vpop.f32.mrf.mxu0
      %2357 = vmatprep.mubr.bf16.mxu0 0
      %2358 = vmatmul.mubr.bf16.gmra.mxu0 %v2220
      %v2359 = vpop.f32.mrf.mxu0
      %v2360 = vadd.f32 0.0, %v2359
      %v2361 = vpop.f32.mrf.mxu0
      %v2362 = vpop.f32.mrf.mxu0
      %v2363 = vadd.f32 0.0, %v2362
      %v2364 = vpop.f32.mrf.mxu0
      %2365 = vmatprep.mubr.bf16.mxu0 0
      %2366 = vmatmul.mubr.bf16.gmra.mxu0 %v2221
      %v2367 = vpop.f32.mrf.mxu0
      %v2368 = vadd.f32 0.0, %v2367
      %v2369 = vpop.f32.mrf.mxu0
      %v2370 = vpop.f32.mrf.mxu0
      %v2371 = vadd.f32 0.0, %v2370
      %v2372 = vpop.f32.mrf.mxu0
      %2373 = vmatprep.mubr.bf16.mxu0 0
      %2374 = vmatmul.mubr.bf16.gmra.mxu0 %v2222
      %v2375 = vpop.f32.mrf.mxu0
      %v2376 = vadd.f32 0.0, %v2375
      %v2377 = vpop.f32.mrf.mxu0
      %v2378 = vpop.f32.mrf.mxu0
      %v2379 = vadd.f32 0.0, %v2378
      %v2380 = vpop.f32.mrf.mxu0
      %2381 = vmatprep.mubr.bf16.mxu0 0
      %2382 = vmatmul.mubr.bf16.gmra.mxu0 %v2223
      %v2383 = vpop.f32.mrf.mxu0
      %v2384 = vadd.f32 0.0, %v2383
      %v2385 = vpop.f32.mrf.mxu0
      %v2386 = vpop.f32.mrf.mxu0
      %v2387 = vadd.f32 0.0, %v2386
      %v2388 = vpop.f32.mrf.mxu0
      %2389 = vmatprep.mubr.bf16.mxu0 0
      %2390 = vmatmul.mubr.bf16.gmra.mxu0 %v2224
      %v2391 = vpop.f32.mrf.mxu0
      %v2392 = vadd.f32 0.0, %v2391
      %v2393 = vpop.f32.mrf.mxu0
      %v2394 = vpop.f32.mrf.mxu0
      %v2395 = vadd.f32 0.0, %v2394
      %v2396 = vpop.f32.mrf.mxu0
      %2397 = vmatprep.mubr.bf16.mxu0 0
      %2398 = vmatmul.mubr.bf16.gmra.mxu0 %v2225
      %v2399 = vpop.f32.mrf.mxu0
      %v2400 = vadd.f32 0.0, %v2399
      %v2401 = vpop.f32.mrf.mxu0
      %v2402 = vpop.f32.mrf.mxu0
      %v2403 = vadd.f32 0.0, %v2402
      %v2404 = vpop.f32.mrf.mxu0
      %2405 = vmatprep.mubr.bf16.mxu0 0
      %2406 = vmatmul.mubr.bf16.gmra.mxu0 %v2226
      %v2407 = vpop.f32.mrf.mxu0
      %v2408 = vadd.f32 0.0, %v2407
      %v2409 = vpop.f32.mrf.mxu0
      %v2410 = vpop.f32.mrf.mxu0
      %v2411 = vadd.f32 0.0, %v2410
      %v2412 = vpop.f32.mrf.mxu0
      %2413 = vmatprep.mubr.bf16.mxu0 0
      %2414 = vmatmul.mubr.bf16.gmra.mxu0 %v2227
      %v2415 = vpop.f32.mrf.mxu0
      %v2416 = vadd.f32 0.0, %v2415
      %v2417 = vpop.f32.mrf.mxu0
      %v2418 = vpop.f32.mrf.mxu0
      %v2419 = vadd.f32 0.0, %v2418
      %v2420 = vpop.f32.mrf.mxu0
      %2421 = vmatprep.mubr.bf16.mxu0 0
      %2422 = vmatmul.mubr.bf16.gmra.mxu0 %v2228
      %v2423 = vpop.f32.mrf.mxu0
      %v2424 = vadd.f32 0.0, %v2423
      %v2425 = vpop.f32.mrf.mxu0
      %v2426 = vpop.f32.mrf.mxu0
      %v2427 = vadd.f32 0.0, %v2426
      %v2428 = vpop.f32.mrf.mxu0
      %2429 = vmatprep.mubr.bf16.mxu0 0
      %2430 = vmatmul.mubr.bf16.gmra.mxu0 %v2229
      %v2431 = vpop.f32.mrf.mxu0
      %v2432 = vadd.f32 0.0, %v2431
      %v2433 = vpop.f32.mrf.mxu0
      %v2434 = vpop.f32.mrf.mxu0
      %v2435 = vadd.f32 0.0, %v2434
      %v2436 = vpop.f32.mrf.mxu0
      %2437 = vmatprep.mubr.bf16.mxu0 0
      %2438 = vmatmul.mubr.bf16.gmra.mxu0 %v2230
      %v2439 = vpop.f32.mrf.mxu0
      %v2440 = vadd.f32 0.0, %v2439
      %v2441 = vpop.f32.mrf.mxu0
      %v2442 = vpop.f32.mrf.mxu0
      %v2443 = vadd.f32 0.0, %v2442
      %v2444 = vpop.f32.mrf.mxu0
      %2445 = vmatprep.mubr.bf16.mxu0 0
      %2446 = vmatmul.mubr.bf16.gmra.mxu0 %v2231
      %v2447 = vpop.f32.mrf.mxu0
      %v2448 = vadd.f32 0.0, %v2447
      %v2449 = vpop.f32.mrf.mxu0
      %v2450 = vpop.f32.mrf.mxu0
      %v2451 = vadd.f32 0.0, %v2450
      %v2452 = vpop.f32.mrf.mxu0
      %2453 = vmatprep.mubr.bf16.mxu0 0
      %2454 = vmatmul.mubr.bf16.gmra.mxu0 %v2232
      %v2455 = vpop.f32.mrf.mxu0
      %v2456 = vadd.f32 0.0, %v2455
      %v2457 = vpop.f32.mrf.mxu0
      %v2458 = vpop.f32.mrf.mxu0
      %v2459 = vadd.f32 0.0, %v2458
      %v2460 = vpop.f32.mrf.mxu0
      %2461 = vmatprep.mubr.bf16.mxu0 0
      %2462 = vmatmul.mubr.bf16.gmra.mxu0 %v2233
      %v2463 = vpop.f32.mrf.mxu0
      %v2464 = vadd.f32 0.0, %v2463
      %v2465 = vpop.f32.mrf.mxu0
      %v2466 = vpop.f32.mrf.mxu0
      %v2467 = vadd.f32 0.0, %v2466
      %v2468 = vpop.f32.mrf.mxu0
      %2469 = vmatprep.mubr.bf16.mxu0 0
      %2470 = vmatmul.mubr.bf16.gmra.mxu0 %v2234
      %v2471 = vpop.f32.mrf.mxu0
      %v2472 = vadd.f32 0.0, %v2471
      %v2473 = vpop.f32.mrf.mxu0
      %v2474 = vpop.f32.mrf.mxu0
      %v2475 = vadd.f32 0.0, %v2474
      %v2476 = vpop.f32.mrf.mxu0
      %2477 = vdwg.mxu0
      %v2478 = vadd.f32 %v2164, %v2336
      %v2479 = vadd.f32 %v2165, %v2339
      %v2480 = vadd.f32 %v2166, %v2344
      %v2481 = vadd.f32 %v2167, %v2347
      %v2482 = vadd.f32 %v2168, %v2352
      %v2483 = vadd.f32 %v2169, %v2355
      %v2484 = vadd.f32 %v2170, %v2360
      %v2485 = vadd.f32 %v2171, %v2363
      %v2486 = vadd.f32 %v2172, %v2368
      %v2487 = vadd.f32 %v2173, %v2371
      %v2488 = vadd.f32 %v2174, %v2376
      %v2489 = vadd.f32 %v2175, %v2379
      %v2490 = vadd.f32 %v2176, %v2384
      %v2491 = vadd.f32 %v2177, %v2387
      %v2492 = vadd.f32 %v2178, %v2392
      %v2493 = vadd.f32 %v2179, %v2395
      %v2494 = vadd.f32 %v2180, %v2400
      %v2495 = vadd.f32 %v2181, %v2403
      %v2496 = vadd.f32 %v2182, %v2408
      %v2497 = vadd.f32 %v2183, %v2411
      %v2498 = vadd.f32 %v2184, %v2416
      %v2499 = vadd.f32 %v2185, %v2419
      %v2500 = vadd.f32 %v2186, %v2424
      %v2501 = vadd.f32 %v2187, %v2427
      %v2502 = vadd.f32 %v2188, %v2432
      %v2503 = vadd.f32 %v2189, %v2435
      %v2504 = vadd.f32 %v2190, %v2440
      %v2505 = vadd.f32 %v2191, %v2443
      %v2506 = vadd.f32 %v2192, %v2448
      %v2507 = vadd.f32 %v2193, %v2451
      %v2508 = vadd.f32 %v2194, %v2456
      %v2509 = vadd.f32 %v2195, %v2459
      %v2510 = vadd.f32 %v2196, %v2464
      %v2511 = vadd.f32 %v2197, %v2467
      %v2512 = vadd.f32 %v2198, %v2472
      %v2513 = vadd.f32 %v2199, %v2475
      %v2514 = vld [vmem:[%s286 + $0x24] sm:$0xf]
      %v2515 = vld [vmem:[%s286 + $0x28] sm:$0xf]
      %v2516 = vld [vmem:[%s286 + $0x2c] sm:$0xf]
      %v2517 = vld [vmem:[%s286 + $0x30] sm:$0xf]
      %v2518 = vld [vmem:[%s286 + $0x34] sm:$0xf]
      %v2519 = vld [vmem:[%s286 + $0x38] sm:$0xf]
      %v2520 = vld [vmem:[%s286 + $0x3c] sm:$0xf]
      %v2521 = vld [vmem:[%s286 + $0x40] sm:$0xf]
      %v2522 = vld [vmem:[%s286 + $0x44] sm:$0xf]
      %v2523 = vld [vmem:[%s286 + $0x48] sm:$0xf]
      %v2524 = vld [vmem:[%s286 + $0x4c] sm:$0xf]
      %v2525 = vld [vmem:[%s286 + $0x50] sm:$0xf]
      %v2526 = vld [vmem:[%s286 + $0x54] sm:$0xf]
      %v2527 = vld [vmem:[%s286 + $0x58] sm:$0xf]
      %v2528 = vld [vmem:[%s286 + $0x5c] sm:$0xf]
      %v2529 = vld [vmem:[%s286 + $0x60] sm:$0xf]
      %v2530 = vld [vmem:[%s286 + $0x64] sm:$0xf]
      %v2531 = vld [vmem:[%s286 + $0x68] sm:$0xf]
      %v2532 = vld [vmem:[%s286 + $0x6c] sm:$0xf]
      %v2533 = vld [vmem:[%s286 + $0x70] sm:$0xf]
      %v2534 = vld [vmem:[%s286 + $0x74] sm:$0xf]
      %v2535 = vld [vmem:[%s286 + $0x78] sm:$0xf]
      %v2536 = vld [vmem:[%s286 + $0x7c] sm:$0xf]
      %v2537 = vld [vmem:[%s286 + $0x80] sm:$0xf]
      %v2538 = vld [vmem:[%s286 + $0x84] sm:$0xf]
      %v2539 = vld [vmem:[%s286 + $0x88] sm:$0xf]
      %v2540 = vld [vmem:[%s286 + $0x8c] sm:$0xf]
      %v2541 = vld [vmem:[%s286 + $0x90] sm:$0xf]
      %v2542 = vld [vmem:[%s286 + $0x94] sm:$0xf]
      %v2543 = vld [vmem:[%s286 + $0x98] sm:$0xf]
      %v2544 = vld [vmem:[%s286 + $0x9c] sm:$0xf]
      %v2545 = vld [vmem:[%s286 + $0xa0] sm:$0xf]
      %v2546 = vld [vmem:[%s286 + $0xa4] sm:$0xf]
      %v2547 = vld [vmem:[%s286 + $0xa8] sm:$0xf]
      %v2548 = vld [vmem:[%s286 + $0xac] sm:$0xf]
      %v2549 = vld [vmem:[%s286 + $0xb0] sm:$0xf]
      %v2550 = vld [vmem:[%s286 + $0xb4] sm:$0x1]
      %s2551 = scalar_lea.vmem %s295, 320
      %v2552 = vld [vmem:[%s2551] sm:$0xf]
      %v2553 = vld [vmem:[%s2551 + $0x4] sm:$0xf]
      %v2554 = vld [vmem:[%s2551 + $0x8] sm:$0xf]
      %v2555 = vld [vmem:[%s2551 + $0xc] sm:$0xf]
      %v2556 = vld [vmem:[%s2551 + $0x10] sm:$0xf]
      %v2557 = vld [vmem:[%s2551 + $0x14] sm:$0xf]
      %v2558 = vld [vmem:[%s2551 + $0x18] sm:$0xf]
      %v2559 = vld [vmem:[%s2551 + $0x1c] sm:$0xf]
      %v2560 = vld [vmem:[%s2551 + $0x20] sm:$0xf]
      %v2561 = vld [vmem:[%s2551 + $0x24] sm:$0xf]
      %v2562 = vld [vmem:[%s2551 + $0x28] sm:$0xf]
      %v2563 = vld [vmem:[%s2551 + $0x2c] sm:$0xf]
      %v2564 = vld [vmem:[%s2551 + $0x30] sm:$0xf]
      %v2565 = vld [vmem:[%s2551 + $0x34] sm:$0xf]
      %v2566 = vld [vmem:[%s2551 + $0x38] sm:$0xf]
      %v2567 = vld [vmem:[%s2551 + $0x3c] sm:$0xf]
      %v2605 = vunpack.c.l.b16 %v2514
      %v2606 = vunpack.c.l.b16 %v2515
      %v2607 = vunpack.c.l.b16 %v2516
      %v2608 = vunpack.c.l.b16 %v2517
      %v2609 = vunpack.c.l.b16 %v2518
      %v2610 = vunpack.c.l.b16 %v2519
      %v2611 = vunpack.c.l.b16 %v2520
      %v2612 = vunpack.c.l.b16 %v2521
      %v2613 = vunpack.c.l.b16 %v2522
      %v2614 = vunpack.c.l.b16 %v2523
      %v2615 = vunpack.c.l.b16 %v2524
      %v2616 = vunpack.c.l.b16 %v2525
      %v2617 = vunpack.c.l.b16 %v2526
      %v2618 = vunpack.c.l.b16 %v2527
      %v2619 = vunpack.c.l.b16 %v2528
      %v2620 = vunpack.c.l.b16 %v2529
      %v2621 = vunpack.c.l.b16 %v2530
      %v2622 = vunpack.c.l.b16 %v2531
      %v2623 = vunpack.c.l.b16 %v2532
      %v2624 = vunpack.c.l.b16 %v2533
      %v2625 = vunpack.c.l.b16 %v2534
      %v2626 = vunpack.c.l.b16 %v2535
      %v2627 = vunpack.c.l.b16 %v2536
      %v2628 = vunpack.c.l.b16 %v2537
      %v2629 = vunpack.c.l.b16 %v2538
      %v2630 = vunpack.c.l.b16 %v2539
      %v2631 = vunpack.c.l.b16 %v2540
      %v2632 = vunpack.c.l.b16 %v2541
      %v2633 = vunpack.c.l.b16 %v2542
      %v2634 = vunpack.c.l.b16 %v2543
      %v2635 = vunpack.c.l.b16 %v2544
      %v2636 = vunpack.c.l.b16 %v2545
      %v2637 = vunpack.c.l.b16 %v2546
      %v2638 = vunpack.c.l.b16 %v2547
      %v2639 = vunpack.c.l.b16 %v2548
      %v2640 = vunpack.c.l.b16 %v2549
      %v2641 = vunpack.c.l.b16 %v2550
      %v2642 = vpack.c.b16 %v2606, %v2605
      %v2643 = vpack.c.b16 %v2608, %v2607
      %v2644 = vpack.c.b16 %v2610, %v2609
      %v2645 = vpack.c.b16 %v2612, %v2611
      %v2646 = vpack.c.b16 %v2614, %v2613
      %v2647 = vpack.c.b16 %v2616, %v2615
      %v2648 = vpack.c.b16 %v2618, %v2617
      %v2649 = vpack.c.b16 %v2620, %v2619
      %v2650 = vpack.c.b16 %v2622, %v2621
      %v2651 = vpack.c.b16 %v2624, %v2623
      %v2652 = vpack.c.b16 %v2626, %v2625
      %v2653 = vpack.c.b16 %v2628, %v2627
      %v2654 = vpack.c.b16 %v2630, %v2629
      %v2655 = vpack.c.b16 %v2632, %v2631
      %v2656 = vpack.c.b16 %v2634, %v2633
      %v2657 = vpack.c.b16 %v2636, %v2635
      %v2658 = vpack.c.b16 %v2638, %v2637
      %v2659 = vpack.c.b16 %v2640, %v2639
      %v2660 = vpack.c.b16 %v2641, %v2641
      %vm2661 = vsmask.f32 7424
      %v2663 = vshrl.u32 %v2642, 16
      %v2665 = vshll.u32 %v2642, 16
      %v2667 = vrot.slane %v2665, 1
      %v2668 = vor.u32 %v2663, %v2667
      %v2670 = vshll.u32 %v2643, 16
      %v2672 = vrot.slane %v2670, 1
      %v2673 = vsel %vm2661, %v2668, %v2672
      %v2674 = vshrl.u32 %v2643, 16
      %v2676 = vor.u32 %v2674, %v2672
      %v2678 = vshll.u32 %v2644, 16
      %v2680 = vrot.slane %v2678, 1
      %v2681 = vsel %vm2661, %v2676, %v2680
      %v2682 = vshrl.u32 %v2644, 16
      %v2684 = vor.u32 %v2682, %v2680
      %v2686 = vshll.u32 %v2645, 16
      %v2688 = vrot.slane %v2686, 1
      %v2689 = vsel %vm2661, %v2684, %v2688
      %v2690 = vshrl.u32 %v2645, 16
      %v2692 = vor.u32 %v2690, %v2688
      %v2694 = vshll.u32 %v2646, 16
      %v2696 = vrot.slane %v2694, 1
      %v2697 = vsel %vm2661, %v2692, %v2696
      %v2698 = vshrl.u32 %v2646, 16
      %v2700 = vor.u32 %v2698, %v2696
      %v2702 = vshll.u32 %v2647, 16
      %v2704 = vrot.slane %v2702, 1
      %v2705 = vsel %vm2661, %v2700, %v2704
      %v2706 = vshrl.u32 %v2647, 16
      %v2708 = vor.u32 %v2706, %v2704
      %v2710 = vshll.u32 %v2648, 16
      %v2712 = vrot.slane %v2710, 1
      %v2713 = vsel %vm2661, %v2708, %v2712
      %v2714 = vshrl.u32 %v2648, 16
      %v2716 = vor.u32 %v2714, %v2712
      %v2718 = vshll.u32 %v2649, 16
      %v2720 = vrot.slane %v2718, 1
      %v2721 = vsel %vm2661, %v2716, %v2720
      %v2722 = vshrl.u32 %v2649, 16
      %v2724 = vor.u32 %v2722, %v2720
      %v2726 = vshll.u32 %v2650, 16
      %v2728 = vrot.slane %v2726, 1
      %v2729 = vsel %vm2661, %v2724, %v2728
      %v2730 = vshrl.u32 %v2650, 16
      %v2732 = vor.u32 %v2730, %v2728
      %v2734 = vshll.u32 %v2651, 16
      %v2736 = vrot.slane %v2734, 1
      %v2737 = vsel %vm2661, %v2732, %v2736
      %v2738 = vshrl.u32 %v2651, 16
      %v2740 = vor.u32 %v2738, %v2736
      %v2742 = vshll.u32 %v2652, 16
      %v2744 = vrot.slane %v2742, 1
      %v2745 = vsel %vm2661, %v2740, %v2744
      %v2746 = vshrl.u32 %v2652, 16
      %v2748 = vor.u32 %v2746, %v2744
      %v2750 = vshll.u32 %v2653, 16
      %v2752 = vrot.slane %v2750, 1
      %v2753 = vsel %vm2661, %v2748, %v2752
      %v2754 = vshrl.u32 %v2653, 16
      %v2756 = vor.u32 %v2754, %v2752
      %v2758 = vshll.u32 %v2654, 16
      %v2760 = vrot.slane %v2758, 1
      %v2761 = vsel %vm2661, %v2756, %v2760
      %v2762 = vshrl.u32 %v2654, 16
      %v2764 = vor.u32 %v2762, %v2760
      %v2766 = vshll.u32 %v2655, 16
      %v2768 = vrot.slane %v2766, 1
      %v2769 = vsel %vm2661, %v2764, %v2768
      %v2770 = vshrl.u32 %v2655, 16
      %v2772 = vor.u32 %v2770, %v2768
      %v2774 = vshll.u32 %v2656, 16
      %v2776 = vrot.slane %v2774, 1
      %v2777 = vsel %vm2661, %v2772, %v2776
      %v2778 = vshrl.u32 %v2656, 16
      %v2780 = vor.u32 %v2778, %v2776
      %v2782 = vshll.u32 %v2657, 16
      %v2784 = vrot.slane %v2782, 1
      %v2785 = vsel %vm2661, %v2780, %v2784
      %v2786 = vshrl.u32 %v2657, 16
      %v2788 = vor.u32 %v2786, %v2784
      %v2790 = vshll.u32 %v2658, 16
      %v2792 = vrot.slane %v2790, 1
      %v2793 = vsel %vm2661, %v2788, %v2792
      %v2794 = vshrl.u32 %v2658, 16
      %v2796 = vor.u32 %v2794, %v2792
      %v2798 = vshll.u32 %v2659, 16
      %v2800 = vrot.slane %v2798, 1
      %v2801 = vsel %vm2661, %v2796, %v2800
      %v2802 = vshrl.u32 %v2659, 16
      %v2804 = vor.u32 %v2802, %v2800
      %v2806 = vshll.u32 %v2660, 16
      %v2808 = vrot.slane %v2806, 1
      %v2809 = vsel %vm2661, %v2804, %v2808
      %v2844 = vunpack.c.l.b16 %v2552
      %v2845 = vunpack.c.l.b16 %v2553
      %v2846 = vunpack.c.l.b16 %v2554
      %v2847 = vunpack.c.l.b16 %v2555
      %v2848 = vunpack.c.l.b16 %v2556
      %v2849 = vunpack.c.l.b16 %v2557
      %v2850 = vunpack.c.l.b16 %v2558
      %v2851 = vunpack.c.l.b16 %v2559
      %v2852 = vunpack.c.l.b16 %v2560
      %v2853 = vunpack.c.l.b16 %v2561
      %v2854 = vunpack.c.l.b16 %v2562
      %v2855 = vunpack.c.l.b16 %v2563
      %v2856 = vunpack.c.l.b16 %v2564
      %v2857 = vunpack.c.l.b16 %v2565
      %v2858 = vunpack.c.l.b16 %v2566
      %v2859 = vunpack.c.l.b16 %v2567
      %v2860 = vpack.c.b16 %v2845, %v2844
      %v2861 = vpack.c.b16 %v2847, %v2846
      %v2862 = vpack.c.b16 %v2849, %v2848
      %v2863 = vpack.c.b16 %v2851, %v2850
      %v2864 = vpack.c.b16 %v2853, %v2852
      %v2865 = vpack.c.b16 %v2855, %v2854
      %v2866 = vpack.c.b16 %v2857, %v2856
      %v2867 = vpack.c.b16 %v2859, %v2858
      %2876 = vmatprep.subr.bf16.mxu0 0
      %2877 = vmatpush1.bf16.msra.mxu0 %v2867
      %2878 = vmatprep.subr.bf16.mxu0 0
      %2879 = vmatpush1.bf16.msra.mxu0 %v2866
      %2880 = vmatprep.subr.bf16.mxu0 0
      %2881 = vmatpush1.bf16.msra.mxu0 %v2865
      %2882 = vmatprep.subr.bf16.mxu0 0
      %2883 = vmatpush1.bf16.msra.mxu0 %v2864
      %2884 = vmatprep.subr.bf16.mxu0 0
      %2885 = vmatpush1.bf16.msra.mxu0 %v2863
      %2886 = vmatprep.subr.bf16.mxu0 0
      %2887 = vmatpush1.bf16.msra.mxu0 %v2862
      %2888 = vmatprep.subr.bf16.mxu0 0
      %2889 = vmatpush1.bf16.msra.mxu0 %v2861
      %2890 = vmatprep.subr.bf16.mxu0 0
      %2891 = vmatpush1.bf16.msra.mxu0 %v2860
      %2892 = vmatprep.subr.bf16.mxu0 0
      %2893 = vmatpush2.bf16.msra.mxu0 0
      %2894 = vmatprep.subr.bf16.mxu0 0
      %2895 = vmatpush2.bf16.msra.mxu0 0
      %2896 = vmatprep.subr.bf16.mxu0 0
      %2897 = vmatpush2.bf16.msra.mxu0 0
      %2898 = vmatprep.subr.bf16.mxu0 0
      %2899 = vmatpush2.bf16.msra.mxu0 0
      %2900 = vmatprep.subr.bf16.mxu0 0
      %2901 = vmatpush2.bf16.msra.mxu0 0
      %2902 = vmatprep.subr.bf16.mxu0 0
      %2903 = vmatpush2.bf16.msra.mxu0 0
      %2904 = vmatprep.subr.bf16.mxu0 0
      %2905 = vmatpush2.bf16.msra.mxu0 0
      %2906 = vmatprep.subr.bf16.mxu0 0
      %2907 = vmatpush2.bf16.msra.mxu0 0
      %2908 = vmatprep.mubr.bf16.mxu0 0
      %2909 = vmatmul.mubr.bf16.gmra.mxu0 %v2673
      %v2910 = vpop.f32.mrf.mxu0
      %v2911 = vadd.f32 0.0, %v2910
      %v2912 = vpop.f32.mrf.mxu0
      %v2913 = vpop.f32.mrf.mxu0
      %v2914 = vadd.f32 0.0, %v2913
      %v2915 = vpop.f32.mrf.mxu0
      %2916 = vmatprep.mubr.bf16.mxu0 0
      %2917 = vmatmul.mubr.bf16.gmra.mxu0 %v2681
      %v2918 = vpop.f32.mrf.mxu0
      %v2919 = vadd.f32 0.0, %v2918
      %v2920 = vpop.f32.mrf.mxu0
      %v2921 = vpop.f32.mrf.mxu0
      %v2922 = vadd.f32 0.0, %v2921
      %v2923 = vpop.f32.mrf.mxu0
      %2924 = vmatprep.mubr.bf16.mxu0 0
      %2925 = vmatmul.mubr.bf16.gmra.mxu0 %v2689
      %v2926 = vpop.f32.mrf.mxu0
      %v2927 = vadd.f32 0.0, %v2926
      %v2928 = vpop.f32.mrf.mxu0
      %v2929 = vpop.f32.mrf.mxu0
      %v2930 = vadd.f32 0.0, %v2929
      %v2931 = vpop.f32.mrf.mxu0
      %2932 = vmatprep.mubr.bf16.mxu0 0
      %2933 = vmatmul.mubr.bf16.gmra.mxu0 %v2697
      %v2934 = vpop.f32.mrf.mxu0
      %v2935 = vadd.f32 0.0, %v2934
      %v2936 = vpop.f32.mrf.mxu0
      %v2937 = vpop.f32.mrf.mxu0
      %v2938 = vadd.f32 0.0, %v2937
      %v2939 = vpop.f32.mrf.mxu0
      %2940 = vmatprep.mubr.bf16.mxu0 0
      %2941 = vmatmul.mubr.bf16.gmra.mxu0 %v2705
      %v2942 = vpop.f32.mrf.mxu0
      %v2943 = vadd.f32 0.0, %v2942
      %v2944 = vpop.f32.mrf.mxu0
      %v2945 = vpop.f32.mrf.mxu0
      %v2946 = vadd.f32 0.0, %v2945
      %v2947 = vpop.f32.mrf.mxu0
      %2948 = vmatprep.mubr.bf16.mxu0 0
      %2949 = vmatmul.mubr.bf16.gmra.mxu0 %v2713
      %v2950 = vpop.f32.mrf.mxu0
      %v2951 = vadd.f32 0.0, %v2950
      %v2952 = vpop.f32.mrf.mxu0
      %v2953 = vpop.f32.mrf.mxu0
      %v2954 = vadd.f32 0.0, %v2953
      %v2955 = vpop.f32.mrf.mxu0
      %2956 = vmatprep.mubr.bf16.mxu0 0
      %2957 = vmatmul.mubr.bf16.gmra.mxu0 %v2721
      %v2958 = vpop.f32.mrf.mxu0
      %v2959 = vadd.f32 0.0, %v2958
      %v2960 = vpop.f32.mrf.mxu0
      %v2961 = vpop.f32.mrf.mxu0
      %v2962 = vadd.f32 0.0, %v2961
      %v2963 = vpop.f32.mrf.mxu0
      %2964 = vmatprep.mubr.bf16.mxu0 0
      %2965 = vmatmul.mubr.bf16.gmra.mxu0 %v2729
      %v2966 = vpop.f32.mrf.mxu0
      %v2967 = vadd.f32 0.0, %v2966
      %v2968 = vpop.f32.mrf.mxu0
      %v2969 = vpop.f32.mrf.mxu0
      %v2970 = vadd.f32 0.0, %v2969
      %v2971 = vpop.f32.mrf.mxu0
      %2972 = vmatprep.mubr.bf16.mxu0 0
      %2973 = vmatmul.mubr.bf16.gmra.mxu0 %v2737
      %v2974 = vpop.f32.mrf.mxu0
      %v2975 = vadd.f32 0.0, %v2974
      %v2976 = vpop.f32.mrf.mxu0
      %v2977 = vpop.f32.mrf.mxu0
      %v2978 = vadd.f32 0.0, %v2977
      %v2979 = vpop.f32.mrf.mxu0
      %2980 = vmatprep.mubr.bf16.mxu0 0
      %2981 = vmatmul.mubr.bf16.gmra.mxu0 %v2745
      %v2982 = vpop.f32.mrf.mxu0
      %v2983 = vadd.f32 0.0, %v2982
      %v2984 = vpop.f32.mrf.mxu0
      %v2985 = vpop.f32.mrf.mxu0
      %v2986 = vadd.f32 0.0, %v2985
      %v2987 = vpop.f32.mrf.mxu0
      %2988 = vmatprep.mubr.bf16.mxu0 0
      %2989 = vmatmul.mubr.bf16.gmra.mxu0 %v2753
      %v2990 = vpop.f32.mrf.mxu0
      %v2991 = vadd.f32 0.0, %v2990
      %v2992 = vpop.f32.mrf.mxu0
      %v2993 = vpop.f32.mrf.mxu0
      %v2994 = vadd.f32 0.0, %v2993
      %v2995 = vpop.f32.mrf.mxu0
      %2996 = vmatprep.mubr.bf16.mxu0 0
      %2997 = vmatmul.mubr.bf16.gmra.mxu0 %v2761
      %v2998 = vpop.f32.mrf.mxu0
      %v2999 = vadd.f32 0.0, %v2998
      %v3000 = vpop.f32.mrf.mxu0
      %v3001 = vpop.f32.mrf.mxu0
      %v3002 = vadd.f32 0.0, %v3001
      %v3003 = vpop.f32.mrf.mxu0
      %3004 = vmatprep.mubr.bf16.mxu0 0
      %3005 = vmatmul.mubr.bf16.gmra.mxu0 %v2769
      %v3006 = vpop.f32.mrf.mxu0
      %v3007 = vadd.f32 0.0, %v3006
      %v3008 = vpop.f32.mrf.mxu0
      %v3009 = vpop.f32.mrf.mxu0
      %v3010 = vadd.f32 0.0, %v3009
      %v3011 = vpop.f32.mrf.mxu0
      %3012 = vmatprep.mubr.bf16.mxu0 0
      %3013 = vmatmul.mubr.bf16.gmra.mxu0 %v2777
      %v3014 = vpop.f32.mrf.mxu0
      %v3015 = vadd.f32 0.0, %v3014
      %v3016 = vpop.f32.mrf.mxu0
      %v3017 = vpop.f32.mrf.mxu0
      %v3018 = vadd.f32 0.0, %v3017
      %v3019 = vpop.f32.mrf.mxu0
      %3020 = vmatprep.mubr.bf16.mxu0 0
      %3021 = vmatmul.mubr.bf16.gmra.mxu0 %v2785
      %v3022 = vpop.f32.mrf.mxu0
      %v3023 = vadd.f32 0.0, %v3022
      %v3024 = vpop.f32.mrf.mxu0
      %v3025 = vpop.f32.mrf.mxu0
      %v3026 = vadd.f32 0.0, %v3025
      %v3027 = vpop.f32.mrf.mxu0
      %3028 = vmatprep.mubr.bf16.mxu0 0
      %3029 = vmatmul.mubr.bf16.gmra.mxu0 %v2793
      %v3030 = vpop.f32.mrf.mxu0
      %v3031 = vadd.f32 0.0, %v3030
      %v3032 = vpop.f32.mrf.mxu0
      %v3033 = vpop.f32.mrf.mxu0
      %v3034 = vadd.f32 0.0, %v3033
      %v3035 = vpop.f32.mrf.mxu0
      %3036 = vmatprep.mubr.bf16.mxu0 0
      %3037 = vmatmul.mubr.bf16.gmra.mxu0 %v2801
      %v3038 = vpop.f32.mrf.mxu0
      %v3039 = vadd.f32 0.0, %v3038
      %v3040 = vpop.f32.mrf.mxu0
      %v3041 = vpop.f32.mrf.mxu0
      %v3042 = vadd.f32 0.0, %v3041
      %v3043 = vpop.f32.mrf.mxu0
      %3044 = vmatprep.mubr.bf16.mxu0 0
      %3045 = vmatmul.mubr.bf16.gmra.mxu0 %v2809
      %v3046 = vpop.f32.mrf.mxu0
      %v3047 = vadd.f32 0.0, %v3046
      %v3048 = vpop.f32.mrf.mxu0
      %v3049 = vpop.f32.mrf.mxu0
      %v3050 = vadd.f32 0.0, %v3049
      %v3051 = vpop.f32.mrf.mxu0
      %3052 = vdwg.mxu0
      %v3053 = vadd.f32 %v2478, %v2911
      %v3054 = vadd.f32 %v2479, %v2914
      %v3055 = vadd.f32 %v2480, %v2919
      %v3056 = vadd.f32 %v2481, %v2922
      %v3057 = vadd.f32 %v2482, %v2927
      %v3058 = vadd.f32 %v2483, %v2930
      %v3059 = vadd.f32 %v2484, %v2935
      %v3060 = vadd.f32 %v2485, %v2938
      %v3061 = vadd.f32 %v2486, %v2943
      %v3062 = vadd.f32 %v2487, %v2946
      %v3063 = vadd.f32 %v2488, %v2951
      %v3064 = vadd.f32 %v2489, %v2954
      %v3065 = vadd.f32 %v2490, %v2959
      %v3066 = vadd.f32 %v2491, %v2962
      %v3067 = vadd.f32 %v2492, %v2967
      %v3068 = vadd.f32 %v2493, %v2970
      %v3069 = vadd.f32 %v2494, %v2975
      %v3070 = vadd.f32 %v2495, %v2978
      %v3071 = vadd.f32 %v2496, %v2983
      %v3072 = vadd.f32 %v2497, %v2986
      %v3073 = vadd.f32 %v2498, %v2991
      %v3074 = vadd.f32 %v2499, %v2994
      %v3075 = vadd.f32 %v2500, %v2999
      %v3076 = vadd.f32 %v2501, %v3002
      %v3077 = vadd.f32 %v2502, %v3007
      %v3078 = vadd.f32 %v2503, %v3010
      %v3079 = vadd.f32 %v2504, %v3015
      %v3080 = vadd.f32 %v2505, %v3018
      %v3081 = vadd.f32 %v2506, %v3023
      %v3082 = vadd.f32 %v2507, %v3026
      %v3083 = vadd.f32 %v2508, %v3031
      %v3084 = vadd.f32 %v2509, %v3034
      %v3085 = vadd.f32 %v2510, %v3039
      %v3086 = vadd.f32 %v2511, %v3042
      %v3087 = vadd.f32 %v2512, %v3047
      %v3088 = vadd.f32 %v2513, %v3050
      %v3089 = vld [vmem:[%s286 + $0x2c] sm:$0xf]
      %v3090 = vld [vmem:[%s286 + $0x30] sm:$0xf]
      %v3091 = vld [vmem:[%s286 + $0x34] sm:$0xf]
      %v3092 = vld [vmem:[%s286 + $0x38] sm:$0xf]
      %v3093 = vld [vmem:[%s286 + $0x3c] sm:$0xf]
      %v3094 = vld [vmem:[%s286 + $0x40] sm:$0xf]
      %v3095 = vld [vmem:[%s286 + $0x44] sm:$0xf]
      %v3096 = vld [vmem:[%s286 + $0x48] sm:$0xf]
      %v3097 = vld [vmem:[%s286 + $0x4c] sm:$0xf]
      %v3098 = vld [vmem:[%s286 + $0x50] sm:$0xf]
      %v3099 = vld [vmem:[%s286 + $0x54] sm:$0xf]
      %v3100 = vld [vmem:[%s286 + $0x58] sm:$0xf]
      %v3101 = vld [vmem:[%s286 + $0x5c] sm:$0xf]
      %v3102 = vld [vmem:[%s286 + $0x60] sm:$0xf]
      %v3103 = vld [vmem:[%s286 + $0x64] sm:$0xf]
      %v3104 = vld [vmem:[%s286 + $0x68] sm:$0xf]
      %v3105 = vld [vmem:[%s286 + $0x6c] sm:$0xf]
      %v3106 = vld [vmem:[%s286 + $0x70] sm:$0xf]
      %v3107 = vld [vmem:[%s286 + $0x74] sm:$0xf]
      %v3108 = vld [vmem:[%s286 + $0x78] sm:$0xf]
      %v3109 = vld [vmem:[%s286 + $0x7c] sm:$0xf]
      %v3110 = vld [vmem:[%s286 + $0x80] sm:$0xf]
      %v3111 = vld [vmem:[%s286 + $0x84] sm:$0xf]
      %v3112 = vld [vmem:[%s286 + $0x88] sm:$0xf]
      %v3113 = vld [vmem:[%s286 + $0x8c] sm:$0xf]
      %v3114 = vld [vmem:[%s286 + $0x90] sm:$0xf]
      %v3115 = vld [vmem:[%s286 + $0x94] sm:$0xf]
      %v3116 = vld [vmem:[%s286 + $0x98] sm:$0xf]
      %v3117 = vld [vmem:[%s286 + $0x9c] sm:$0xf]
      %v3118 = vld [vmem:[%s286 + $0xa0] sm:$0xf]
      %v3119 = vld [vmem:[%s286 + $0xa4] sm:$0xf]
      %v3120 = vld [vmem:[%s286 + $0xa8] sm:$0xf]
      %v3121 = vld [vmem:[%s286 + $0xac] sm:$0xf]
      %v3122 = vld [vmem:[%s286 + $0xb0] sm:$0xf]
      %v3123 = vld [vmem:[%s286 + $0xb4] sm:$0xf]
      %v3124 = vld [vmem:[%s286 + $0xb8] sm:$0xf]
      %v3125 = vld [vmem:[%s286 + $0xbc] sm:$0x1]
      %s3126 = scalar_lea.vmem %s295, 384
      %v3127 = vld [vmem:[%s3126] sm:$0xf]
      %v3128 = vld [vmem:[%s3126 + $0x4] sm:$0xf]
      %v3129 = vld [vmem:[%s3126 + $0x8] sm:$0xf]
      %v3130 = vld [vmem:[%s3126 + $0xc] sm:$0xf]
      %v3131 = vld [vmem:[%s3126 + $0x10] sm:$0xf]
      %v3132 = vld [vmem:[%s3126 + $0x14] sm:$0xf]
      %v3133 = vld [vmem:[%s3126 + $0x18] sm:$0xf]
      %v3134 = vld [vmem:[%s3126 + $0x1c] sm:$0xf]
      %v3135 = vld [vmem:[%s3126 + $0x20] sm:$0xf]
      %v3136 = vld [vmem:[%s3126 + $0x24] sm:$0xf]
      %v3137 = vld [vmem:[%s3126 + $0x28] sm:$0xf]
      %v3138 = vld [vmem:[%s3126 + $0x2c] sm:$0xf]
      %v3139 = vld [vmem:[%s3126 + $0x30] sm:$0xf]
      %v3140 = vld [vmem:[%s3126 + $0x34] sm:$0xf]
      %v3141 = vld [vmem:[%s3126 + $0x38] sm:$0xf]
      %v3142 = vld [vmem:[%s3126 + $0x3c] sm:$0xf]
      %v3180 = vunpack.c.l.b16 %v3089
      %v3181 = vunpack.c.l.b16 %v3090
      %v3182 = vunpack.c.l.b16 %v3091
      %v3183 = vunpack.c.l.b16 %v3092
      %v3184 = vunpack.c.l.b16 %v3093
      %v3185 = vunpack.c.l.b16 %v3094
      %v3186 = vunpack.c.l.b16 %v3095
      %v3187 = vunpack.c.l.b16 %v3096
      %v3188 = vunpack.c.l.b16 %v3097
      %v3189 = vunpack.c.l.b16 %v3098
      %v3190 = vunpack.c.l.b16 %v3099
      %v3191 = vunpack.c.l.b16 %v3100
      %v3192 = vunpack.c.l.b16 %v3101
      %v3193 = vunpack.c.l.b16 %v3102
      %v3194 = vunpack.c.l.b16 %v3103
      %v3195 = vunpack.c.l.b16 %v3104
      %v3196 = vunpack.c.l.b16 %v3105
      %v3197 = vunpack.c.l.b16 %v3106
      %v3198 = vunpack.c.l.b16 %v3107
      %v3199 = vunpack.c.l.b16 %v3108
      %v3200 = vunpack.c.l.b16 %v3109
      %v3201 = vunpack.c.l.b16 %v3110
      %v3202 = vunpack.c.l.b16 %v3111
      %v3203 = vunpack.c.l.b16 %v3112
      %v3204 = vunpack.c.l.b16 %v3113
      %v3205 = vunpack.c.l.b16 %v3114
      %v3206 = vunpack.c.l.b16 %v3115
      %v3207 = vunpack.c.l.b16 %v3116
      %v3208 = vunpack.c.l.b16 %v3117
      %v3209 = vunpack.c.l.b16 %v3118
      %v3210 = vunpack.c.l.b16 %v3119
      %v3211 = vunpack.c.l.b16 %v3120
      %v3212 = vunpack.c.l.b16 %v3121
      %v3213 = vunpack.c.l.b16 %v3122
      %v3214 = vunpack.c.l.b16 %v3123
      %v3215 = vunpack.c.l.b16 %v3124
      %v3216 = vunpack.c.l.b16 %v3125
      %v3217 = vpack.c.b16 %v3181, %v3180
      %v3218 = vpack.c.b16 %v3183, %v3182
      %v3219 = vpack.c.b16 %v3185, %v3184
      %v3220 = vpack.c.b16 %v3187, %v3186
      %v3221 = vpack.c.b16 %v3189, %v3188
      %v3222 = vpack.c.b16 %v3191, %v3190
      %v3223 = vpack.c.b16 %v3193, %v3192
      %v3224 = vpack.c.b16 %v3195, %v3194
      %v3225 = vpack.c.b16 %v3197, %v3196
      %v3226 = vpack.c.b16 %v3199, %v3198
      %v3227 = vpack.c.b16 %v3201, %v3200
      %v3228 = vpack.c.b16 %v3203, %v3202
      %v3229 = vpack.c.b16 %v3205, %v3204
      %v3230 = vpack.c.b16 %v3207, %v3206
      %v3231 = vpack.c.b16 %v3209, %v3208
      %v3232 = vpack.c.b16 %v3211, %v3210
      %v3233 = vpack.c.b16 %v3213, %v3212
      %v3234 = vpack.c.b16 %v3215, %v3214
      %v3235 = vpack.c.b16 %v3216, %v3216
      %v3237 = vshrl.u32 %v3217, 16
      %v3239 = vshll.u32 %v3217, 16
      %v3241 = vrot.slane %v3239, 1
      %v3242 = vor.u32 %v3237, %v3241
      %v3244 = vshll.u32 %v3218, 16
      %v3246 = vrot.slane %v3244, 1
      %v3247 = vsel %vm2661, %v3242, %v3246
      %v3248 = vshrl.u32 %v3218, 16
      %v3250 = vor.u32 %v3248, %v3246
      %v3252 = vshll.u32 %v3219, 16
      %v3254 = vrot.slane %v3252, 1
      %v3255 = vsel %vm2661, %v3250, %v3254
      %v3256 = vshrl.u32 %v3219, 16
      %v3258 = vor.u32 %v3256, %v3254
      %v3260 = vshll.u32 %v3220, 16
      %v3262 = vrot.slane %v3260, 1
      %v3263 = vsel %vm2661, %v3258, %v3262
      %v3264 = vshrl.u32 %v3220, 16
      %v3266 = vor.u32 %v3264, %v3262
      %v3268 = vshll.u32 %v3221, 16
      %v3270 = vrot.slane %v3268, 1
      %v3271 = vsel %vm2661, %v3266, %v3270
      %v3272 = vshrl.u32 %v3221, 16
      %v3274 = vor.u32 %v3272, %v3270
      %v3276 = vshll.u32 %v3222, 16
      %v3278 = vrot.slane %v3276, 1
      %v3279 = vsel %vm2661, %v3274, %v3278
      %v3280 = vshrl.u32 %v3222, 16
      %v3282 = vor.u32 %v3280, %v3278
      %v3284 = vshll.u32 %v3223, 16
      %v3286 = vrot.slane %v3284, 1
      %v3287 = vsel %vm2661, %v3282, %v3286
      %v3288 = vshrl.u32 %v3223, 16
      %v3290 = vor.u32 %v3288, %v3286
      %v3292 = vshll.u32 %v3224, 16
      %v3294 = vrot.slane %v3292, 1
      %v3295 = vsel %vm2661, %v3290, %v3294
      %v3296 = vshrl.u32 %v3224, 16
      %v3298 = vor.u32 %v3296, %v3294
      %v3300 = vshll.u32 %v3225, 16
      %v3302 = vrot.slane %v3300, 1
      %v3303 = vsel %vm2661, %v3298, %v3302
      %v3304 = vshrl.u32 %v3225, 16
      %v3306 = vor.u32 %v3304, %v3302
      %v3308 = vshll.u32 %v3226, 16
      %v3310 = vrot.slane %v3308, 1
      %v3311 = vsel %vm2661, %v3306, %v3310
      %v3312 = vshrl.u32 %v3226, 16
      %v3314 = vor.u32 %v3312, %v3310
      %v3316 = vshll.u32 %v3227, 16
      %v3318 = vrot.slane %v3316, 1
      %v3319 = vsel %vm2661, %v3314, %v3318
      %v3320 = vshrl.u32 %v3227, 16
      %v3322 = vor.u32 %v3320, %v3318
      %v3324 = vshll.u32 %v3228, 16
      %v3326 = vrot.slane %v3324, 1
      %v3327 = vsel %vm2661, %v3322, %v3326
      %v3328 = vshrl.u32 %v3228, 16
      %v3330 = vor.u32 %v3328, %v3326
      %v3332 = vshll.u32 %v3229, 16
      %v3334 = vrot.slane %v3332, 1
      %v3335 = vsel %vm2661, %v3330, %v3334
      %v3336 = vshrl.u32 %v3229, 16
      %v3338 = vor.u32 %v3336, %v3334
      %v3340 = vshll.u32 %v3230, 16
      %v3342 = vrot.slane %v3340, 1
      %v3343 = vsel %vm2661, %v3338, %v3342
      %v3344 = vshrl.u32 %v3230, 16
      %v3346 = vor.u32 %v3344, %v3342
      %v3348 = vshll.u32 %v3231, 16
      %v3350 = vrot.slane %v3348, 1
      %v3351 = vsel %vm2661, %v3346, %v3350
      %v3352 = vshrl.u32 %v3231, 16
      %v3354 = vor.u32 %v3352, %v3350
      %v3356 = vshll.u32 %v3232, 16
      %v3358 = vrot.slane %v3356, 1
      %v3359 = vsel %vm2661, %v3354, %v3358
      %v3360 = vshrl.u32 %v3232, 16
      %v3362 = vor.u32 %v3360, %v3358
      %v3364 = vshll.u32 %v3233, 16
      %v3366 = vrot.slane %v3364, 1
      %v3367 = vsel %vm2661, %v3362, %v3366
      %v3368 = vshrl.u32 %v3233, 16
      %v3370 = vor.u32 %v3368, %v3366
      %v3372 = vshll.u32 %v3234, 16
      %v3374 = vrot.slane %v3372, 1
      %v3375 = vsel %vm2661, %v3370, %v3374
      %v3376 = vshrl.u32 %v3234, 16
      %v3378 = vor.u32 %v3376, %v3374
      %v3380 = vshll.u32 %v3235, 16
      %v3382 = vrot.slane %v3380, 1
      %v3383 = vsel %vm2661, %v3378, %v3382
      %v3418 = vunpack.c.l.b16 %v3127
      %v3419 = vunpack.c.l.b16 %v3128
      %v3420 = vunpack.c.l.b16 %v3129
      %v3421 = vunpack.c.l.b16 %v3130
      %v3422 = vunpack.c.l.b16 %v3131
      %v3423 = vunpack.c.l.b16 %v3132
      %v3424 = vunpack.c.l.b16 %v3133
      %v3425 = vunpack.c.l.b16 %v3134
      %v3426 = vunpack.c.l.b16 %v3135
      %v3427 = vunpack.c.l.b16 %v3136
      %v3428 = vunpack.c.l.b16 %v3137
      %v3429 = vunpack.c.l.b16 %v3138
      %v3430 = vunpack.c.l.b16 %v3139
      %v3431 = vunpack.c.l.b16 %v3140
      %v3432 = vunpack.c.l.b16 %v3141
      %v3433 = vunpack.c.l.b16 %v3142
      %v3434 = vpack.c.b16 %v3419, %v3418
      %v3435 = vpack.c.b16 %v3421, %v3420
      %v3436 = vpack.c.b16 %v3423, %v3422
      %v3437 = vpack.c.b16 %v3425, %v3424
      %v3438 = vpack.c.b16 %v3427, %v3426
      %v3439 = vpack.c.b16 %v3429, %v3428
      %v3440 = vpack.c.b16 %v3431, %v3430
      %v3441 = vpack.c.b16 %v3433, %v3432
      %3450 = vmatprep.subr.bf16.mxu0 0
      %3451 = vmatpush1.bf16.msra.mxu0 %v3441
      %3452 = vmatprep.subr.bf16.mxu0 0
      %3453 = vmatpush1.bf16.msra.mxu0 %v3440
      %3454 = vmatprep.subr.bf16.mxu0 0
      %3455 = vmatpush1.bf16.msra.mxu0 %v3439
      %3456 = vmatprep.subr.bf16.mxu0 0
      %3457 = vmatpush1.bf16.msra.mxu0 %v3438
      %3458 = vmatprep.subr.bf16.mxu0 0
      %3459 = vmatpush1.bf16.msra.mxu0 %v3437
      %3460 = vmatprep.subr.bf16.mxu0 0
      %3461 = vmatpush1.bf16.msra.mxu0 %v3436
      %3462 = vmatprep.subr.bf16.mxu0 0
      %3463 = vmatpush1.bf16.msra.mxu0 %v3435
      %3464 = vmatprep.subr.bf16.mxu0 0
      %3465 = vmatpush1.bf16.msra.mxu0 %v3434
      %3466 = vmatprep.subr.bf16.mxu0 0
      %3467 = vmatpush2.bf16.msra.mxu0 0
      %3468 = vmatprep.subr.bf16.mxu0 0
      %3469 = vmatpush2.bf16.msra.mxu0 0
      %3470 = vmatprep.subr.bf16.mxu0 0
      %3471 = vmatpush2.bf16.msra.mxu0 0
      %3472 = vmatprep.subr.bf16.mxu0 0
      %3473 = vmatpush2.bf16.msra.mxu0 0
      %3474 = vmatprep.subr.bf16.mxu0 0
      %3475 = vmatpush2.bf16.msra.mxu0 0
      %3476 = vmatprep.subr.bf16.mxu0 0
      %3477 = vmatpush2.bf16.msra.mxu0 0
      %3478 = vmatprep.subr.bf16.mxu0 0
      %3479 = vmatpush2.bf16.msra.mxu0 0
      %3480 = vmatprep.subr.bf16.mxu0 0
      %3481 = vmatpush2.bf16.msra.mxu0 0
      %3482 = vmatprep.mubr.bf16.mxu0 0
      %3483 = vmatmul.mubr.bf16.gmra.mxu0 %v3247
      %v3484 = vpop.f32.mrf.mxu0
      %v3485 = vadd.f32 0.0, %v3484
      %v3486 = vpop.f32.mrf.mxu0
      %v3487 = vpop.f32.mrf.mxu0
      %v3488 = vadd.f32 0.0, %v3487
      %v3489 = vpop.f32.mrf.mxu0
      %3490 = vmatprep.mubr.bf16.mxu0 0
      %3491 = vmatmul.mubr.bf16.gmra.mxu0 %v3255
      %v3492 = vpop.f32.mrf.mxu0
      %v3493 = vadd.f32 0.0, %v3492
      %v3494 = vpop.f32.mrf.mxu0
      %v3495 = vpop.f32.mrf.mxu0
      %v3496 = vadd.f32 0.0, %v3495
      %v3497 = vpop.f32.mrf.mxu0
      %3498 = vmatprep.mubr.bf16.mxu0 0
      %3499 = vmatmul.mubr.bf16.gmra.mxu0 %v3263
      %v3500 = vpop.f32.mrf.mxu0
      %v3501 = vadd.f32 0.0, %v3500
      %v3502 = vpop.f32.mrf.mxu0
      %v3503 = vpop.f32.mrf.mxu0
      %v3504 = vadd.f32 0.0, %v3503
      %v3505 = vpop.f32.mrf.mxu0
      %3506 = vmatprep.mubr.bf16.mxu0 0
      %3507 = vmatmul.mubr.bf16.gmra.mxu0 %v3271
      %v3508 = vpop.f32.mrf.mxu0
      %v3509 = vadd.f32 0.0, %v3508
      %v3510 = vpop.f32.mrf.mxu0
      %v3511 = vpop.f32.mrf.mxu0
      %v3512 = vadd.f32 0.0, %v3511
      %v3513 = vpop.f32.mrf.mxu0
      %3514 = vmatprep.mubr.bf16.mxu0 0
      %3515 = vmatmul.mubr.bf16.gmra.mxu0 %v3279
      %v3516 = vpop.f32.mrf.mxu0
      %v3517 = vadd.f32 0.0, %v3516
      %v3518 = vpop.f32.mrf.mxu0
      %v3519 = vpop.f32.mrf.mxu0
      %v3520 = vadd.f32 0.0, %v3519
      %v3521 = vpop.f32.mrf.mxu0
      %3522 = vmatprep.mubr.bf16.mxu0 0
      %3523 = vmatmul.mubr.bf16.gmra.mxu0 %v3287
      %v3524 = vpop.f32.mrf.mxu0
      %v3525 = vadd.f32 0.0, %v3524
      %v3526 = vpop.f32.mrf.mxu0
      %v3527 = vpop.f32.mrf.mxu0
      %v3528 = vadd.f32 0.0, %v3527
      %v3529 = vpop.f32.mrf.mxu0
      %3530 = vmatprep.mubr.bf16.mxu0 0
      %3531 = vmatmul.mubr.bf16.gmra.mxu0 %v3295
      %v3532 = vpop.f32.mrf.mxu0
      %v3533 = vadd.f32 0.0, %v3532
      %v3534 = vpop.f32.mrf.mxu0
      %v3535 = vpop.f32.mrf.mxu0
      %v3536 = vadd.f32 0.0, %v3535
      %v3537 = vpop.f32.mrf.mxu0
      %3538 = vmatprep.mubr.bf16.mxu0 0
      %3539 = vmatmul.mubr.bf16.gmra.mxu0 %v3303
      %v3540 = vpop.f32.mrf.mxu0
      %v3541 = vadd.f32 0.0, %v3540
      %v3542 = vpop.f32.mrf.mxu0
      %v3543 = vpop.f32.mrf.mxu0
      %v3544 = vadd.f32 0.0, %v3543
      %v3545 = vpop.f32.mrf.mxu0
      %3546 = vmatprep.mubr.bf16.mxu0 0
      %3547 = vmatmul.mubr.bf16.gmra.mxu0 %v3311
      %v3548 = vpop.f32.mrf.mxu0
      %v3549 = vadd.f32 0.0, %v3548
      %v3550 = vpop.f32.mrf.mxu0
      %v3551 = vpop.f32.mrf.mxu0
      %v3552 = vadd.f32 0.0, %v3551
      %v3553 = vpop.f32.mrf.mxu0
      %3554 = vmatprep.mubr.bf16.mxu0 0
      %3555 = vmatmul.mubr.bf16.gmra.mxu0 %v3319
      %v3556 = vpop.f32.mrf.mxu0
      %v3557 = vadd.f32 0.0, %v3556
      %v3558 = vpop.f32.mrf.mxu0
      %v3559 = vpop.f32.mrf.mxu0
      %v3560 = vadd.f32 0.0, %v3559
      %v3561 = vpop.f32.mrf.mxu0
      %3562 = vmatprep.mubr.bf16.mxu0 0
      %3563 = vmatmul.mubr.bf16.gmra.mxu0 %v3327
      %v3564 = vpop.f32.mrf.mxu0
      %v3565 = vadd.f32 0.0, %v3564
      %v3566 = vpop.f32.mrf.mxu0
      %v3567 = vpop.f32.mrf.mxu0
      %v3568 = vadd.f32 0.0, %v3567
      %v3569 = vpop.f32.mrf.mxu0
      %3570 = vmatprep.mubr.bf16.mxu0 0
      %3571 = vmatmul.mubr.bf16.gmra.mxu0 %v3335
      %v3572 = vpop.f32.mrf.mxu0
      %v3573 = vadd.f32 0.0, %v3572
      %v3574 = vpop.f32.mrf.mxu0
      %v3575 = vpop.f32.mrf.mxu0
      %v3576 = vadd.f32 0.0, %v3575
      %v3577 = vpop.f32.mrf.mxu0
      %3578 = vmatprep.mubr.bf16.mxu0 0
      %3579 = vmatmul.mubr.bf16.gmra.mxu0 %v3343
      %v3580 = vpop.f32.mrf.mxu0
      %v3581 = vadd.f32 0.0, %v3580
      %v3582 = vpop.f32.mrf.mxu0
      %v3583 = vpop.f32.mrf.mxu0
      %v3584 = vadd.f32 0.0, %v3583
      %v3585 = vpop.f32.mrf.mxu0
      %3586 = vmatprep.mubr.bf16.mxu0 0
      %3587 = vmatmul.mubr.bf16.gmra.mxu0 %v3351
      %v3588 = vpop.f32.mrf.mxu0
      %v3589 = vadd.f32 0.0, %v3588
      %v3590 = vpop.f32.mrf.mxu0
      %v3591 = vpop.f32.mrf.mxu0
      %v3592 = vadd.f32 0.0, %v3591
      %v3593 = vpop.f32.mrf.mxu0
      %3594 = vmatprep.mubr.bf16.mxu0 0
      %3595 = vmatmul.mubr.bf16.gmra.mxu0 %v3359
      %v3596 = vpop.f32.mrf.mxu0
      %v3597 = vadd.f32 0.0, %v3596
      %v3598 = vpop.f32.mrf.mxu0
      %v3599 = vpop.f32.mrf.mxu0
      %v3600 = vadd.f32 0.0, %v3599
      %v3601 = vpop.f32.mrf.mxu0
      %3602 = vmatprep.mubr.bf16.mxu0 0
      %3603 = vmatmul.mubr.bf16.gmra.mxu0 %v3367
      %v3604 = vpop.f32.mrf.mxu0
      %v3605 = vadd.f32 0.0, %v3604
      %v3606 = vpop.f32.mrf.mxu0
      %v3607 = vpop.f32.mrf.mxu0
      %v3608 = vadd.f32 0.0, %v3607
      %v3609 = vpop.f32.mrf.mxu0
      %3610 = vmatprep.mubr.bf16.mxu0 0
      %3611 = vmatmul.mubr.bf16.gmra.mxu0 %v3375
      %v3612 = vpop.f32.mrf.mxu0
      %v3613 = vadd.f32 0.0, %v3612
      %v3614 = vpop.f32.mrf.mxu0
      %v3615 = vpop.f32.mrf.mxu0
      %v3616 = vadd.f32 0.0, %v3615
      %v3617 = vpop.f32.mrf.mxu0
      %3618 = vmatprep.mubr.bf16.mxu0 0
      %3619 = vmatmul.mubr.bf16.gmra.mxu0 %v3383
      %v3620 = vpop.f32.mrf.mxu0
      %v3621 = vadd.f32 0.0, %v3620
      %v3622 = vpop.f32.mrf.mxu0
      %v3623 = vpop.f32.mrf.mxu0
      %v3624 = vadd.f32 0.0, %v3623
      %v3625 = vpop.f32.mrf.mxu0
      %3626 = vdwg.mxu0
      %v3627 = vadd.f32 %v3053, %v3485
      %v3628 = vadd.f32 %v3054, %v3488
      %v3629 = vadd.f32 %v3055, %v3493
      %v3630 = vadd.f32 %v3056, %v3496
      %v3631 = vadd.f32 %v3057, %v3501
      %v3632 = vadd.f32 %v3058, %v3504
      %v3633 = vadd.f32 %v3059, %v3509
      %v3634 = vadd.f32 %v3060, %v3512
      %v3635 = vadd.f32 %v3061, %v3517
      %v3636 = vadd.f32 %v3062, %v3520
      %v3637 = vadd.f32 %v3063, %v3525
      %v3638 = vadd.f32 %v3064, %v3528
      %v3639 = vadd.f32 %v3065, %v3533
      %v3640 = vadd.f32 %v3066, %v3536
      %v3641 = vadd.f32 %v3067, %v3541
      %v3642 = vadd.f32 %v3068, %v3544
      %v3643 = vadd.f32 %v3069, %v3549
      %v3644 = vadd.f32 %v3070, %v3552
      %v3645 = vadd.f32 %v3071, %v3557
      %v3646 = vadd.f32 %v3072, %v3560
      %v3647 = vadd.f32 %v3073, %v3565
      %v3648 = vadd.f32 %v3074, %v3568
      %v3649 = vadd.f32 %v3075, %v3573
      %v3650 = vadd.f32 %v3076, %v3576
      %v3651 = vadd.f32 %v3077, %v3581
      %v3652 = vadd.f32 %v3078, %v3584
      %v3653 = vadd.f32 %v3079, %v3589
      %v3654 = vadd.f32 %v3080, %v3592
      %v3655 = vadd.f32 %v3081, %v3597
      %v3656 = vadd.f32 %v3082, %v3600
      %v3657 = vadd.f32 %v3083, %v3605
      %v3658 = vadd.f32 %v3084, %v3608
      %v3659 = vadd.f32 %v3085, %v3613
      %v3660 = vadd.f32 %v3086, %v3616
      %v3661 = vadd.f32 %v3087, %v3621
      %v3662 = vadd.f32 %v3088, %v3624
      %v3663 = vld [vmem:[%s286 + $0x2c] sm:$0xe]
      %s3664 = scalar_lea.vmem %s295, 448
      %v3665 = vld [vmem:[%s3664] sm:$0xf]
      %v3666 = vld [vmem:[%s3664 + $0x4] sm:$0xf]
      %v3667 = vld [vmem:[%s3664 + $0x8] sm:$0xf]
      %v3668 = vld [vmem:[%s3664 + $0xc] sm:$0xf]
      %v3669 = vld [vmem:[%s3664 + $0x10] sm:$0xf]
      %v3670 = vld [vmem:[%s3664 + $0x14] sm:$0xf]
      %v3671 = vld [vmem:[%s3664 + $0x18] sm:$0xf]
      %v3672 = vld [vmem:[%s3664 + $0x1c] sm:$0xf]
      %v3673 = vld [vmem:[%s3664 + $0x20] sm:$0xf]
      %v3674 = vld [vmem:[%s3664 + $0x24] sm:$0xf]
      %v3675 = vld [vmem:[%s3664 + $0x28] sm:$0xf]
      %v3676 = vld [vmem:[%s3664 + $0x2c] sm:$0xf]
      %v3677 = vld [vmem:[%s3664 + $0x30] sm:$0xf]
      %v3678 = vld [vmem:[%s3664 + $0x34] sm:$0xf]
      %v3679 = vld [vmem:[%s3664 + $0x38] sm:$0xf]
      %v3680 = vld [vmem:[%s3664 + $0x3c] sm:$0xf]
      %v3682 = vunpack.c.l.b16 %v3663
      %v3683 = vpack.c.b16 %v3181, %v3682
      %vm3684 = vcmask 1046528
      %v3685 = vrot.slane %v3683, 1
      %v3686 = vrot.slane %v3218, 1
      %v3687 = vsel %vm3684, %v3685, %v3686
      %v3688 = vrot.slane %v3219, 1
      %v3689 = vsel %vm3684, %v3686, %v3688
      %v3690 = vrot.slane %v3220, 1
      %v3691 = vsel %vm3684, %v3688, %v3690
      %v3692 = vrot.slane %v3221, 1
      %v3693 = vsel %vm3684, %v3690, %v3692
      %v3694 = vrot.slane %v3222, 1
      %v3695 = vsel %vm3684, %v3692, %v3694
      %v3696 = vrot.slane %v3223, 1
      %v3697 = vsel %vm3684, %v3694, %v3696
      %v3698 = vrot.slane %v3224, 1
      %v3699 = vsel %vm3684, %v3696, %v3698
      %v3700 = vrot.slane %v3225, 1
      %v3701 = vsel %vm3684, %v3698, %v3700
      %v3702 = vrot.slane %v3226, 1
      %v3703 = vsel %vm3684, %v3700, %v3702
      %v3704 = vrot.slane %v3227, 1
      %v3705 = vsel %vm3684, %v3702, %v3704
      %v3706 = vrot.slane %v3228, 1
      %v3707 = vsel %vm3684, %v3704, %v3706
      %v3708 = vrot.slane %v3229, 1
      %v3709 = vsel %vm3684, %v3706, %v3708
      %v3710 = vrot.slane %v3230, 1
      %v3711 = vsel %vm3684, %v3708, %v3710
      %v3712 = vrot.slane %v3231, 1
      %v3713 = vsel %vm3684, %v3710, %v3712
      %v3714 = vrot.slane %v3232, 1
      %v3715 = vsel %vm3684, %v3712, %v3714
      %v3716 = vrot.slane %v3233, 1
      %v3717 = vsel %vm3684, %v3714, %v3716
      %v3718 = vrot.slane %v3234, 1
      %v3719 = vsel %vm3684, %v3716, %v3718
      %v3720 = vrot.slane %v3235, 1
      %v3721 = vsel %vm3684, %v3718, %v3720
      %v3756 = vunpack.c.l.b16 %v3665
      %v3757 = vunpack.c.l.b16 %v3666
      %v3758 = vunpack.c.l.b16 %v3667
      %v3759 = vunpack.c.l.b16 %v3668
      %v3760 = vunpack.c.l.b16 %v3669
      %v3761 = vunpack.c.l.b16 %v3670
      %v3762 = vunpack.c.l.b16 %v3671
      %v3763 = vunpack.c.l.b16 %v3672
      %v3764 = vunpack.c.l.b16 %v3673
      %v3765 = vunpack.c.l.b16 %v3674
      %v3766 = vunpack.c.l.b16 %v3675
      %v3767 = vunpack.c.l.b16 %v3676
      %v3768 = vunpack.c.l.b16 %v3677
      %v3769 = vunpack.c.l.b16 %v3678
      %v3770 = vunpack.c.l.b16 %v3679
      %v3771 = vunpack.c.l.b16 %v3680
      %v3772 = vpack.c.b16 %v3757, %v3756
      %v3773 = vpack.c.b16 %v3759, %v3758
      %v3774 = vpack.c.b16 %v3761, %v3760
      %v3775 = vpack.c.b16 %v3763, %v3762
      %v3776 = vpack.c.b16 %v3765, %v3764
      %v3777 = vpack.c.b16 %v3767, %v3766
      %v3778 = vpack.c.b16 %v3769, %v3768
      %v3779 = vpack.c.b16 %v3771, %v3770
      %3788 = vmatprep.subr.bf16.mxu0 0
      %3789 = vmatpush1.bf16.msra.mxu0 %v3779
      %3790 = vmatprep.subr.bf16.mxu0 0
      %3791 = vmatpush1.bf16.msra.mxu0 %v3778
      %3792 = vmatprep.subr.bf16.mxu0 0
      %3793 = vmatpush1.bf16.msra.mxu0 %v3777
      %3794 = vmatprep.subr.bf16.mxu0 0
      %3795 = vmatpush1.bf16.msra.mxu0 %v3776
      %3796 = vmatprep.subr.bf16.mxu0 0
      %3797 = vmatpush1.bf16.msra.mxu0 %v3775
      %3798 = vmatprep.subr.bf16.mxu0 0
      %3799 = vmatpush1.bf16.msra.mxu0 %v3774
      %3800 = vmatprep.subr.bf16.mxu0 0
      %3801 = vmatpush1.bf16.msra.mxu0 %v3773
      %3802 = vmatprep.subr.bf16.mxu0 0
      %3803 = vmatpush1.bf16.msra.mxu0 %v3772
      %3804 = vmatprep.subr.bf16.mxu0 0
      %3805 = vmatpush2.bf16.msra.mxu0 0
      %3806 = vmatprep.subr.bf16.mxu0 0
      %3807 = vmatpush2.bf16.msra.mxu0 0
      %3808 = vmatprep.subr.bf16.mxu0 0
      %3809 = vmatpush2.bf16.msra.mxu0 0
      %3810 = vmatprep.subr.bf16.mxu0 0
      %3811 = vmatpush2.bf16.msra.mxu0 0
      %3812 = vmatprep.subr.bf16.mxu0 0
      %3813 = vmatpush2.bf16.msra.mxu0 0
      %3814 = vmatprep.subr.bf16.mxu0 0
      %3815 = vmatpush2.bf16.msra.mxu0 0
      %3816 = vmatprep.subr.bf16.mxu0 0
      %3817 = vmatpush2.bf16.msra.mxu0 0
      %3818 = vmatprep.subr.bf16.mxu0 0
      %3819 = vmatpush2.bf16.msra.mxu0 0
      %3820 = vmatprep.mubr.bf16.mxu0 0
      %3821 = vmatmul.mubr.bf16.gmra.mxu0 %v3687
      %v3822 = vpop.f32.mrf.mxu0
      %v3823 = vadd.f32 0.0, %v3822
      %v3824 = vpop.f32.mrf.mxu0
      %v3825 = vpop.f32.mrf.mxu0
      %v3826 = vadd.f32 0.0, %v3825
      %v3827 = vpop.f32.mrf.mxu0
      %3828 = vmatprep.mubr.bf16.mxu0 0
      %3829 = vmatmul.mubr.bf16.gmra.mxu0 %v3689
      %v3830 = vpop.f32.mrf.mxu0
      %v3831 = vadd.f32 0.0, %v3830
      %v3832 = vpop.f32.mrf.mxu0
      %v3833 = vpop.f32.mrf.mxu0
      %v3834 = vadd.f32 0.0, %v3833
      %v3835 = vpop.f32.mrf.mxu0
      %3836 = vmatprep.mubr.bf16.mxu0 0
      %3837 = vmatmul.mubr.bf16.gmra.mxu0 %v3691
      %v3838 = vpop.f32.mrf.mxu0
      %v3839 = vadd.f32 0.0, %v3838
      %v3840 = vpop.f32.mrf.mxu0
      %v3841 = vpop.f32.mrf.mxu0
      %v3842 = vadd.f32 0.0, %v3841
      %v3843 = vpop.f32.mrf.mxu0
      %3844 = vmatprep.mubr.bf16.mxu0 0
      %3845 = vmatmul.mubr.bf16.gmra.mxu0 %v3693
      %v3846 = vpop.f32.mrf.mxu0
      %v3847 = vadd.f32 0.0, %v3846
      %v3848 = vpop.f32.mrf.mxu0
      %v3849 = vpop.f32.mrf.mxu0
      %v3850 = vadd.f32 0.0, %v3849
      %v3851 = vpop.f32.mrf.mxu0
      %3852 = vmatprep.mubr.bf16.mxu0 0
      %3853 = vmatmul.mubr.bf16.gmra.mxu0 %v3695
      %v3854 = vpop.f32.mrf.mxu0
      %v3855 = vadd.f32 0.0, %v3854
      %v3856 = vpop.f32.mrf.mxu0
      %v3857 = vpop.f32.mrf.mxu0
      %v3858 = vadd.f32 0.0, %v3857
      %v3859 = vpop.f32.mrf.mxu0
      %3860 = vmatprep.mubr.bf16.mxu0 0
      %3861 = vmatmul.mubr.bf16.gmra.mxu0 %v3697
      %v3862 = vpop.f32.mrf.mxu0
      %v3863 = vadd.f32 0.0, %v3862
      %v3864 = vpop.f32.mrf.mxu0
      %v3865 = vpop.f32.mrf.mxu0
      %v3866 = vadd.f32 0.0, %v3865
      %v3867 = vpop.f32.mrf.mxu0
      %3868 = vmatprep.mubr.bf16.mxu0 0
      %3869 = vmatmul.mubr.bf16.gmra.mxu0 %v3699
      %v3870 = vpop.f32.mrf.mxu0
      %v3871 = vadd.f32 0.0, %v3870
      %v3872 = vpop.f32.mrf.mxu0
      %v3873 = vpop.f32.mrf.mxu0
      %v3874 = vadd.f32 0.0, %v3873
      %v3875 = vpop.f32.mrf.mxu0
      %3876 = vmatprep.mubr.bf16.mxu0 0
      %3877 = vmatmul.mubr.bf16.gmra.mxu0 %v3701
      %v3878 = vpop.f32.mrf.mxu0
      %v3879 = vadd.f32 0.0, %v3878
      %v3880 = vpop.f32.mrf.mxu0
      %v3881 = vpop.f32.mrf.mxu0
      %v3882 = vadd.f32 0.0, %v3881
      %v3883 = vpop.f32.mrf.mxu0
      %3884 = vmatprep.mubr.bf16.mxu0 0
      %3885 = vmatmul.mubr.bf16.gmra.mxu0 %v3703
      %v3886 = vpop.f32.mrf.mxu0
      %v3887 = vadd.f32 0.0, %v3886
      %v3888 = vpop.f32.mrf.mxu0
      %v3889 = vpop.f32.mrf.mxu0
      %v3890 = vadd.f32 0.0, %v3889
      %v3891 = vpop.f32.mrf.mxu0
      %3892 = vmatprep.mubr.bf16.mxu0 0
      %3893 = vmatmul.mubr.bf16.gmra.mxu0 %v3705
      %v3894 = vpop.f32.mrf.mxu0
      %v3895 = vadd.f32 0.0, %v3894
      %v3896 = vpop.f32.mrf.mxu0
      %v3897 = vpop.f32.mrf.mxu0
      %v3898 = vadd.f32 0.0, %v3897
      %v3899 = vpop.f32.mrf.mxu0
      %3900 = vmatprep.mubr.bf16.mxu0 0
      %3901 = vmatmul.mubr.bf16.gmra.mxu0 %v3707
      %v3902 = vpop.f32.mrf.mxu0
      %v3903 = vadd.f32 0.0, %v3902
      %v3904 = vpop.f32.mrf.mxu0
      %v3905 = vpop.f32.mrf.mxu0
      %v3906 = vadd.f32 0.0, %v3905
      %v3907 = vpop.f32.mrf.mxu0
      %3908 = vmatprep.mubr.bf16.mxu0 0
      %3909 = vmatmul.mubr.bf16.gmra.mxu0 %v3709
      %v3910 = vpop.f32.mrf.mxu0
      %v3911 = vadd.f32 0.0, %v3910
      %v3912 = vpop.f32.mrf.mxu0
      %v3913 = vpop.f32.mrf.mxu0
      %v3914 = vadd.f32 0.0, %v3913
      %v3915 = vpop.f32.mrf.mxu0
      %3916 = vmatprep.mubr.bf16.mxu0 0
      %3917 = vmatmul.mubr.bf16.gmra.mxu0 %v3711
      %v3918 = vpop.f32.mrf.mxu0
      %v3919 = vadd.f32 0.0, %v3918
      %v3920 = vpop.f32.mrf.mxu0
      %v3921 = vpop.f32.mrf.mxu0
      %v3922 = vadd.f32 0.0, %v3921
      %v3923 = vpop.f32.mrf.mxu0
      %3924 = vmatprep.mubr.bf16.mxu0 0
      %3925 = vmatmul.mubr.bf16.gmra.mxu0 %v3713
      %v3926 = vpop.f32.mrf.mxu0
      %v3927 = vadd.f32 0.0, %v3926
      %v3928 = vpop.f32.mrf.mxu0
      %v3929 = vpop.f32.mrf.mxu0
      %v3930 = vadd.f32 0.0, %v3929
      %v3931 = vpop.f32.mrf.mxu0
      %3932 = vmatprep.mubr.bf16.mxu0 0
      %3933 = vmatmul.mubr.bf16.gmra.mxu0 %v3715
      %v3934 = vpop.f32.mrf.mxu0
      %v3935 = vadd.f32 0.0, %v3934
      %v3936 = vpop.f32.mrf.mxu0
      %v3937 = vpop.f32.mrf.mxu0
      %v3938 = vadd.f32 0.0, %v3937
      %v3939 = vpop.f32.mrf.mxu0
      %3940 = vmatprep.mubr.bf16.mxu0 0
      %3941 = vmatmul.mubr.bf16.gmra.mxu0 %v3717
      %v3942 = vpop.f32.mrf.mxu0
      %v3943 = vadd.f32 0.0, %v3942
      %v3944 = vpop.f32.mrf.mxu0
      %v3945 = vpop.f32.mrf.mxu0
      %v3946 = vadd.f32 0.0, %v3945
      %v3947 = vpop.f32.mrf.mxu0
      %3948 = vmatprep.mubr.bf16.mxu0 0
      %3949 = vmatmul.mubr.bf16.gmra.mxu0 %v3719
      %v3950 = vpop.f32.mrf.mxu0
      %v3951 = vadd.f32 0.0, %v3950
      %v3952 = vpop.f32.mrf.mxu0
      %v3953 = vpop.f32.mrf.mxu0
      %v3954 = vadd.f32 0.0, %v3953
      %v3955 = vpop.f32.mrf.mxu0
      %3956 = vmatprep.mubr.bf16.mxu0 0
      %3957 = vmatmul.mubr.bf16.gmra.mxu0 %v3721
      %v3958 = vpop.f32.mrf.mxu0
      %v3959 = vadd.f32 0.0, %v3958
      %v3960 = vpop.f32.mrf.mxu0
      %v3961 = vpop.f32.mrf.mxu0
      %v3962 = vadd.f32 0.0, %v3961
      %v3963 = vpop.f32.mrf.mxu0
      %3964 = vdwg.mxu0
      %v3965 = vadd.f32 %v3627, %v3823
      %v3966 = vadd.f32 %v3628, %v3826
      %v3967 = vadd.f32 %v3629, %v3831
      %v3968 = vadd.f32 %v3630, %v3834
      %v3969 = vadd.f32 %v3631, %v3839
      %v3970 = vadd.f32 %v3632, %v3842
      %v3971 = vadd.f32 %v3633, %v3847
      %v3972 = vadd.f32 %v3634, %v3850
      %v3973 = vadd.f32 %v3635, %v3855
      %v3974 = vadd.f32 %v3636, %v3858
      %v3975 = vadd.f32 %v3637, %v3863
      %v3976 = vadd.f32 %v3638, %v3866
      %v3977 = vadd.f32 %v3639, %v3871
      %v3978 = vadd.f32 %v3640, %v3874
      %v3979 = vadd.f32 %v3641, %v3879
      %v3980 = vadd.f32 %v3642, %v3882
      %v3981 = vadd.f32 %v3643, %v3887
      %v3982 = vadd.f32 %v3644, %v3890
      %v3983 = vadd.f32 %v3645, %v3895
      %v3984 = vadd.f32 %v3646, %v3898
      %v3985 = vadd.f32 %v3647, %v3903
      %v3986 = vadd.f32 %v3648, %v3906
      %v3987 = vadd.f32 %v3649, %v3911
      %v3988 = vadd.f32 %v3650, %v3914
      %v3989 = vadd.f32 %v3651, %v3919
      %v3990 = vadd.f32 %v3652, %v3922
      %v3991 = vadd.f32 %v3653, %v3927
      %v3992 = vadd.f32 %v3654, %v3930
      %v3993 = vadd.f32 %v3655, %v3935
      %v3994 = vadd.f32 %v3656, %v3938
      %v3995 = vadd.f32 %v3657, %v3943
      %v3996 = vadd.f32 %v3658, %v3946
      %v3997 = vadd.f32 %v3659, %v3951
      %v3998 = vadd.f32 %v3660, %v3954
      %v3999 = vadd.f32 %v3661, %v3959
      %v4000 = vadd.f32 %v3662, %v3962
      %v4001 = vld [vmem:[%s286 + $0xbc] sm:$0x3]
      %s4002 = scalar_lea.vmem %s295, 512
      %v4003 = vld [vmem:[%s4002] sm:$0xf]
      %v4004 = vld [vmem:[%s4002 + $0x4] sm:$0xf]
      %v4005 = vld [vmem:[%s4002 + $0x8] sm:$0xf]
      %v4006 = vld [vmem:[%s4002 + $0xc] sm:$0xf]
      %v4007 = vld [vmem:[%s4002 + $0x10] sm:$0xf]
      %v4008 = vld [vmem:[%s4002 + $0x14] sm:$0xf]
      %v4009 = vld [vmem:[%s4002 + $0x18] sm:$0xf]
      %v4010 = vld [vmem:[%s4002 + $0x1c] sm:$0xf]
      %v4011 = vld [vmem:[%s4002 + $0x20] sm:$0xf]
      %v4012 = vld [vmem:[%s4002 + $0x24] sm:$0xf]
      %v4013 = vld [vmem:[%s4002 + $0x28] sm:$0xf]
      %v4014 = vld [vmem:[%s4002 + $0x2c] sm:$0xf]
      %v4015 = vld [vmem:[%s4002 + $0x30] sm:$0xf]
      %v4016 = vld [vmem:[%s4002 + $0x34] sm:$0xf]
      %v4017 = vld [vmem:[%s4002 + $0x38] sm:$0xf]
      %v4018 = vld [vmem:[%s4002 + $0x3c] sm:$0xf]
      %v4020 = vunpack.c.l.b16 %v4001
      %v4021 = vpack.c.b16 %v4020, %v4020
      %vm4022 = vsmask.f32 6400
      %v4024 = vshrl.u32 %v3683, 16
      %v4026 = vrot.slane %v4024, 1
      %v4027 = vshll.u32 %v3683, 16
      %v4029 = vrot.slane %v4027, 2
      %v4030 = vor.u32 %v4026, %v4029
      %v4031 = vrot.slane %v3248, 1
      %v4032 = vrot.slane %v3244, 2
      %v4033 = vor.u32 %v4031, %v4032
      %v4034 = vsel %vm4022, %v4030, %v4033
      %v4035 = vrot.slane %v3256, 1
      %v4036 = vrot.slane %v3252, 2
      %v4037 = vor.u32 %v4035, %v4036
      %v4038 = vsel %vm4022, %v4033, %v4037
      %v4039 = vrot.slane %v3264, 1
      %v4040 = vrot.slane %v3260, 2
      %v4041 = vor.u32 %v4039, %v4040
      %v4042 = vsel %vm4022, %v4037, %v4041
      %v4043 = vrot.slane %v3272, 1
      %v4044 = vrot.slane %v3268, 2
      %v4045 = vor.u32 %v4043, %v4044
      %v4046 = vsel %vm4022, %v4041, %v4045
      %v4047 = vrot.slane %v3280, 1
      %v4048 = vrot.slane %v3276, 2
      %v4049 = vor.u32 %v4047, %v4048
      %v4050 = vsel %vm4022, %v4045, %v4049
      %v4051 = vrot.slane %v3288, 1
      %v4052 = vrot.slane %v3284, 2
      %v4053 = vor.u32 %v4051, %v4052
      %v4054 = vsel %vm4022, %v4049, %v4053
      %v4055 = vrot.slane %v3296, 1
      %v4056 = vrot.slane %v3292, 2
      %v4057 = vor.u32 %v4055, %v4056
      %v4058 = vsel %vm4022, %v4053, %v4057
      %v4059 = vrot.slane %v3304, 1
      %v4060 = vrot.slane %v3300, 2
      %v4061 = vor.u32 %v4059, %v4060
      %v4062 = vsel %vm4022, %v4057, %v4061
      %v4063 = vrot.slane %v3312, 1
      %v4064 = vrot.slane %v3308, 2
      %v4065 = vor.u32 %v4063, %v4064
      %v4066 = vsel %vm4022, %v4061, %v4065
      %v4067 = vrot.slane %v3320, 1
      %v4068 = vrot.slane %v3316, 2
      %v4069 = vor.u32 %v4067, %v4068
      %v4070 = vsel %vm4022, %v4065, %v4069
      %v4071 = vrot.slane %v3328, 1
      %v4072 = vrot.slane %v3324, 2
      %v4073 = vor.u32 %v4071, %v4072
      %v4074 = vsel %vm4022, %v4069, %v4073
      %v4075 = vrot.slane %v3336, 1
      %v4076 = vrot.slane %v3332, 2
      %v4077 = vor.u32 %v4075, %v4076
      %v4078 = vsel %vm4022, %v4073, %v4077
      %v4079 = vrot.slane %v3344, 1
      %v4080 = vrot.slane %v3340, 2
      %v4081 = vor.u32 %v4079, %v4080
      %v4082 = vsel %vm4022, %v4077, %v4081
      %v4083 = vrot.slane %v3352, 1
      %v4084 = vrot.slane %v3348, 2
      %v4085 = vor.u32 %v4083, %v4084
      %v4086 = vsel %vm4022, %v4081, %v4085
      %v4087 = vrot.slane %v3360, 1
      %v4088 = vrot.slane %v3356, 2
      %v4089 = vor.u32 %v4087, %v4088
      %v4090 = vsel %vm4022, %v4085, %v4089
      %v4091 = vrot.slane %v3368, 1
      %v4092 = vrot.slane %v3364, 2
      %v4093 = vor.u32 %v4091, %v4092
      %v4094 = vsel %vm4022, %v4089, %v4093
      %v4095 = vrot.slane %v3376, 1
      %v4096 = vrot.slane %v3372, 2
      %v4097 = vor.u32 %v4095, %v4096
      %v4098 = vsel %vm4022, %v4093, %v4097
      %v4100 = vshrl.u32 %v4021, 16
      %v4102 = vrot.slane %v4100, 1
      %v4103 = vshll.u32 %v4021, 16
      %v4105 = vrot.slane %v4103, 2
      %v4106 = vor.u32 %v4102, %v4105
      %v4107 = vsel %vm4022, %v4097, %v4106
      %v4142 = vunpack.c.l.b16 %v4003
      %v4143 = vunpack.c.l.b16 %v4004
      %v4144 = vunpack.c.l.b16 %v4005
      %v4145 = vunpack.c.l.b16 %v4006
      %v4146 = vunpack.c.l.b16 %v4007
      %v4147 = vunpack.c.l.b16 %v4008
      %v4148 = vunpack.c.l.b16 %v4009
      %v4149 = vunpack.c.l.b16 %v4010
      %v4150 = vunpack.c.l.b16 %v4011
      %v4151 = vunpack.c.l.b16 %v4012
      %v4152 = vunpack.c.l.b16 %v4013
      %v4153 = vunpack.c.l.b16 %v4014
      %v4154 = vunpack.c.l.b16 %v4015
      %v4155 = vunpack.c.l.b16 %v4016
      %v4156 = vunpack.c.l.b16 %v4017
      %v4157 = vunpack.c.l.b16 %v4018
      %v4158 = vpack.c.b16 %v4143, %v4142
      %v4159 = vpack.c.b16 %v4145, %v4144
      %v4160 = vpack.c.b16 %v4147, %v4146
      %v4161 = vpack.c.b16 %v4149, %v4148
      %v4162 = vpack.c.b16 %v4151, %v4150
      %v4163 = vpack.c.b16 %v4153, %v4152
      %v4164 = vpack.c.b16 %v4155, %v4154
      %v4165 = vpack.c.b16 %v4157, %v4156
      %4174 = vmatprep.subr.bf16.mxu0 0
      %4175 = vmatpush1.bf16.msra.mxu0 %v4165
      %4176 = vmatprep.subr.bf16.mxu0 0
      %4177 = vmatpush1.bf16.msra.mxu0 %v4164
      %4178 = vmatprep.subr.bf16.mxu0 0
      %4179 = vmatpush1.bf16.msra.mxu0 %v4163
      %4180 = vmatprep.subr.bf16.mxu0 0
      %4181 = vmatpush1.bf16.msra.mxu0 %v4162
      %4182 = vmatprep.subr.bf16.mxu0 0
      %4183 = vmatpush1.bf16.msra.mxu0 %v4161
      %4184 = vmatprep.subr.bf16.mxu0 0
      %4185 = vmatpush1.bf16.msra.mxu0 %v4160
      %4186 = vmatprep.subr.bf16.mxu0 0
      %4187 = vmatpush1.bf16.msra.mxu0 %v4159
      %4188 = vmatprep.subr.bf16.mxu0 0
      %4189 = vmatpush1.bf16.msra.mxu0 %v4158
      %4190 = vmatprep.subr.bf16.mxu0 0
      %4191 = vmatpush2.bf16.msra.mxu0 0
      %4192 = vmatprep.subr.bf16.mxu0 0
      %4193 = vmatpush2.bf16.msra.mxu0 0
      %4194 = vmatprep.subr.bf16.mxu0 0
      %4195 = vmatpush2.bf16.msra.mxu0 0
      %4196 = vmatprep.subr.bf16.mxu0 0
      %4197 = vmatpush2.bf16.msra.mxu0 0
      %4198 = vmatprep.subr.bf16.mxu0 0
      %4199 = vmatpush2.bf16.msra.mxu0 0
      %4200 = vmatprep.subr.bf16.mxu0 0
      %4201 = vmatpush2.bf16.msra.mxu0 0
      %4202 = vmatprep.subr.bf16.mxu0 0
      %4203 = vmatpush2.bf16.msra.mxu0 0
      %4204 = vmatprep.subr.bf16.mxu0 0
      %4205 = vmatpush2.bf16.msra.mxu0 0
      %4206 = vmatprep.mubr.bf16.mxu0 0
      %4207 = vmatmul.mubr.bf16.gmra.mxu0 %v4034
      %v4208 = vpop.f32.mrf.mxu0
      %v4209 = vadd.f32 0.0, %v4208
      %v4210 = vpop.f32.mrf.mxu0
      %v4211 = vpop.f32.mrf.mxu0
      %v4212 = vadd.f32 0.0, %v4211
      %v4213 = vpop.f32.mrf.mxu0
      %4214 = vmatprep.mubr.bf16.mxu0 0
      %4215 = vmatmul.mubr.bf16.gmra.mxu0 %v4038
      %v4216 = vpop.f32.mrf.mxu0
      %v4217 = vadd.f32 0.0, %v4216
      %v4218 = vpop.f32.mrf.mxu0
      %v4219 = vpop.f32.mrf.mxu0
      %v4220 = vadd.f32 0.0, %v4219
      %v4221 = vpop.f32.mrf.mxu0
      %4222 = vmatprep.mubr.bf16.mxu0 0
      %4223 = vmatmul.mubr.bf16.gmra.mxu0 %v4042
      %v4224 = vpop.f32.mrf.mxu0
      %v4225 = vadd.f32 0.0, %v4224
      %v4226 = vpop.f32.mrf.mxu0
      %v4227 = vpop.f32.mrf.mxu0
      %v4228 = vadd.f32 0.0, %v4227
      %v4229 = vpop.f32.mrf.mxu0
      %4230 = vmatprep.mubr.bf16.mxu0 0
      %4231 = vmatmul.mubr.bf16.gmra.mxu0 %v4046
      %v4232 = vpop.f32.mrf.mxu0
      %v4233 = vadd.f32 0.0, %v4232
      %v4234 = vpop.f32.mrf.mxu0
      %v4235 = vpop.f32.mrf.mxu0
      %v4236 = vadd.f32 0.0, %v4235
      %v4237 = vpop.f32.mrf.mxu0
      %4238 = vmatprep.mubr.bf16.mxu0 0
      %4239 = vmatmul.mubr.bf16.gmra.mxu0 %v4050
      %v4240 = vpop.f32.mrf.mxu0
      %v4241 = vadd.f32 0.0, %v4240
      %v4242 = vpop.f32.mrf.mxu0
      %v4243 = vpop.f32.mrf.mxu0
      %v4244 = vadd.f32 0.0, %v4243
      %v4245 = vpop.f32.mrf.mxu0
      %4246 = vmatprep.mubr.bf16.mxu0 0
      %4247 = vmatmul.mubr.bf16.gmra.mxu0 %v4054
      %v4248 = vpop.f32.mrf.mxu0
      %v4249 = vadd.f32 0.0, %v4248
      %v4250 = vpop.f32.mrf.mxu0
      %v4251 = vpop.f32.mrf.mxu0
      %v4252 = vadd.f32 0.0, %v4251
      %v4253 = vpop.f32.mrf.mxu0
      %4254 = vmatprep.mubr.bf16.mxu0 0
      %4255 = vmatmul.mubr.bf16.gmra.mxu0 %v4058
      %v4256 = vpop.f32.mrf.mxu0
      %v4257 = vadd.f32 0.0, %v4256
      %v4258 = vpop.f32.mrf.mxu0
      %v4259 = vpop.f32.mrf.mxu0
      %v4260 = vadd.f32 0.0, %v4259
      %v4261 = vpop.f32.mrf.mxu0
      %4262 = vmatprep.mubr.bf16.mxu0 0
      %4263 = vmatmul.mubr.bf16.gmra.mxu0 %v4062
      %v4264 = vpop.f32.mrf.mxu0
      %v4265 = vadd.f32 0.0, %v4264
      %v4266 = vpop.f32.mrf.mxu0
      %v4267 = vpop.f32.mrf.mxu0
      %v4268 = vadd.f32 0.0, %v4267
      %v4269 = vpop.f32.mrf.mxu0
      %4270 = vmatprep.mubr.bf16.mxu0 0
      %4271 = vmatmul.mubr.bf16.gmra.mxu0 %v4066
      %v4272 = vpop.f32.mrf.mxu0
      %v4273 = vadd.f32 0.0, %v4272
      %v4274 = vpop.f32.mrf.mxu0
      %v4275 = vpop.f32.mrf.mxu0
      %v4276 = vadd.f32 0.0, %v4275
      %v4277 = vpop.f32.mrf.mxu0
      %4278 = vmatprep.mubr.bf16.mxu0 0
      %4279 = vmatmul.mubr.bf16.gmra.mxu0 %v4070
      %v4280 = vpop.f32.mrf.mxu0
      %v4281 = vadd.f32 0.0, %v4280
      %v4282 = vpop.f32.mrf.mxu0
      %v4283 = vpop.f32.mrf.mxu0
      %v4284 = vadd.f32 0.0, %v4283
      %v4285 = vpop.f32.mrf.mxu0
      %4286 = vmatprep.mubr.bf16.mxu0 0
      %4287 = vmatmul.mubr.bf16.gmra.mxu0 %v4074
      %v4288 = vpop.f32.mrf.mxu0
      %v4289 = vadd.f32 0.0, %v4288
      %v4290 = vpop.f32.mrf.mxu0
      %v4291 = vpop.f32.mrf.mxu0
      %v4292 = vadd.f32 0.0, %v4291
      %v4293 = vpop.f32.mrf.mxu0
      %4294 = vmatprep.mubr.bf16.mxu0 0
      %4295 = vmatmul.mubr.bf16.gmra.mxu0 %v4078
      %v4296 = vpop.f32.mrf.mxu0
      %v4297 = vadd.f32 0.0, %v4296
      %v4298 = vpop.f32.mrf.mxu0
      %v4299 = vpop.f32.mrf.mxu0
      %v4300 = vadd.f32 0.0, %v4299
      %v4301 = vpop.f32.mrf.mxu0
      %4302 = vmatprep.mubr.bf16.mxu0 0
      %4303 = vmatmul.mubr.bf16.gmra.mxu0 %v4082
      %v4304 = vpop.f32.mrf.mxu0
      %v4305 = vadd.f32 0.0, %v4304
      %v4306 = vpop.f32.mrf.mxu0
      %v4307 = vpop.f32.mrf.mxu0
      %v4308 = vadd.f32 0.0, %v4307
      %v4309 = vpop.f32.mrf.mxu0
      %4310 = vmatprep.mubr.bf16.mxu0 0
      %4311 = vmatmul.mubr.bf16.gmra.mxu0 %v4086
      %v4312 = vpop.f32.mrf.mxu0
      %v4313 = vadd.f32 0.0, %v4312
      %v4314 = vpop.f32.mrf.mxu0
      %v4315 = vpop.f32.mrf.mxu0
      %v4316 = vadd.f32 0.0, %v4315
      %v4317 = vpop.f32.mrf.mxu0
      %4318 = vmatprep.mubr.bf16.mxu0 0
      %4319 = vmatmul.mubr.bf16.gmra.mxu0 %v4090
      %v4320 = vpop.f32.mrf.mxu0
      %v4321 = vadd.f32 0.0, %v4320
      %v4322 = vpop.f32.mrf.mxu0
      %v4323 = vpop.f32.mrf.mxu0
      %v4324 = vadd.f32 0.0, %v4323
      %v4325 = vpop.f32.mrf.mxu0
      %4326 = vmatprep.mubr.bf16.mxu0 0
      %4327 = vmatmul.mubr.bf16.gmra.mxu0 %v4094
      %v4328 = vpop.f32.mrf.mxu0
      %v4329 = vadd.f32 0.0, %v4328
      %v4330 = vpop.f32.mrf.mxu0
      %v4331 = vpop.f32.mrf.mxu0
      %v4332 = vadd.f32 0.0, %v4331
      %v4333 = vpop.f32.mrf.mxu0
      %4334 = vmatprep.mubr.bf16.mxu0 0
      %4335 = vmatmul.mubr.bf16.gmra.mxu0 %v4098
      %v4336 = vpop.f32.mrf.mxu0
      %v4337 = vadd.f32 0.0, %v4336
      %v4338 = vpop.f32.mrf.mxu0
      %v4339 = vpop.f32.mrf.mxu0
      %v4340 = vadd.f32 0.0, %v4339
      %v4341 = vpop.f32.mrf.mxu0
      %4342 = vmatprep.mubr.bf16.mxu0 0
      %4343 = vmatmul.mubr.bf16.gmra.mxu0 %v4107
      %v4344 = vpop.f32.mrf.mxu0
      %v4345 = vadd.f32 0.0, %v4344
      %v4346 = vpop.f32.mrf.mxu0
      %v4347 = vpop.f32.mrf.mxu0
      %v4348 = vadd.f32 0.0, %v4347
      %v4349 = vpop.f32.mrf.mxu0
      %4350 = vdwg.mxu0
      %v4351 = vadd.f32 %v3965, %v4209
      %v4352 = vadd.f32 %v3966, %v4212
      %v4353 = vadd.f32 %v3967, %v4217
      %v4354 = vadd.f32 %v3968, %v4220
      %v4355 = vadd.f32 %v3969, %v4225
      %v4356 = vadd.f32 %v3970, %v4228
      %v4357 = vadd.f32 %v3971, %v4233
      %v4358 = vadd.f32 %v3972, %v4236
      %v4359 = vadd.f32 %v3973, %v4241
      %v4360 = vadd.f32 %v3974, %v4244
      %v4361 = vadd.f32 %v3975, %v4249
      %v4362 = vadd.f32 %v3976, %v4252
      %v4363 = vadd.f32 %v3977, %v4257
      %v4364 = vadd.f32 %v3978, %v4260
      %v4365 = vadd.f32 %v3979, %v4265
      %v4366 = vadd.f32 %v3980, %v4268
      %v4367 = vadd.f32 %v3981, %v4273
      %v4368 = vadd.f32 %v3982, %v4276
      %v4369 = vadd.f32 %v3983, %v4281
      %v4370 = vadd.f32 %v3984, %v4284
      %v4371 = vadd.f32 %v3985, %v4289
      %v4372 = vadd.f32 %v3986, %v4292
      %v4373 = vadd.f32 %v3987, %v4297
      %v4374 = vadd.f32 %v3988, %v4300
      %v4375 = vadd.f32 %v3989, %v4305
      %v4376 = vadd.f32 %v3990, %v4308
      %v4377 = vadd.f32 %v3991, %v4313
      %v4378 = vadd.f32 %v3992, %v4316
      %v4379 = vadd.f32 %v3993, %v4321
      %v4380 = vadd.f32 %v3994, %v4324
      %v4381 = vadd.f32 %v3995, %v4329
      %v4382 = vadd.f32 %v3996, %v4332
      %v4383 = vadd.f32 %v3997, %v4337
      %v4384 = vadd.f32 %v3998, %v4340
      %v4385 = vadd.f32 %v3999, %v4345
      %v4386 = vadd.f32 %v4000, %v4348
      %v4387 = vld [vmem:[#allocation2] sm:$0xff]
      %v4388 = vld [vmem:[#allocation2 + $0x8] sm:$0xff]
      %v4389 = vld [vmem:[#allocation2 + $0x10] sm:$0xff]
      %v4390 = vld [vmem:[#allocation2 + $0x18] sm:$0xff]
      %v4391 = vld [vmem:[#allocation2 + $0x20] sm:$0xff]
      %v4392 = vld [vmem:[#allocation2 + $0x28] sm:$0xff]
      %v4393 = vld [vmem:[#allocation2 + $0x30] sm:$0xff]
      %v4394 = vld [vmem:[#allocation2 + $0x38] sm:$0xff]
      %v4395 = vld [vmem:[#allocation2 + $0x40] sm:$0xff]
      %v4396 = vld [vmem:[#allocation2 + $0x48] sm:$0xff]
      %v4397 = vld [vmem:[#allocation2 + $0x50] sm:$0xff]
      %v4398 = vld [vmem:[#allocation2 + $0x58] sm:$0xff]
      %v4399 = vld [vmem:[#allocation2 + $0x60] sm:$0xff]
      %v4400 = vld [vmem:[#allocation2 + $0x68] sm:$0xff]
      %v4401 = vld [vmem:[#allocation2 + $0x70] sm:$0xff]
      %v4402 = vld [vmem:[#allocation2 + $0x78] sm:$0xff]
      %v4403 = vld [vmem:[#allocation2 + $0x80] sm:$0xff]
      %v4404 = vld [vmem:[#allocation2 + $0x88] sm:$0xff]
      %v4405 = vld [vmem:[#allocation2 + $0x90] sm:$0xff]
      %v4406 = vld [vmem:[#allocation2 + $0x98] sm:$0xff]
      %v4407 = vld [vmem:[#allocation2 + $0xa0] sm:$0xff]
      %v4408 = vld [vmem:[#allocation2 + $0xa8] sm:$0xff]
      %v4409 = vld [vmem:[#allocation2 + $0xb0] sm:$0xff]
      %v4410 = vld [vmem:[#allocation2 + $0xb8] sm:$0xff]
      %v4411 = vld [vmem:[#allocation2 + $0xc0] sm:$0xff]
      %v4412 = vld [vmem:[#allocation2 + $0xc8] sm:$0xff]
      %v4413 = vld [vmem:[#allocation2 + $0xd0] sm:$0xff]
      %v4414 = vld [vmem:[#allocation2 + $0xd8] sm:$0xff]
      %v4415 = vld [vmem:[#allocation2 + $0xe0] sm:$0xff]
      %v4416 = vld [vmem:[#allocation2 + $0xe8] sm:$0xff]
      %v4417 = vld [vmem:[#allocation2 + $0xf0] sm:$0xff]
      %v4418 = vld [vmem:[#allocation2 + $0xf8] sm:$0xff]
      %v4419 = vld [vmem:[#allocation2 + $0x100] sm:$0xff]
      %v4420 = vld [vmem:[#allocation2 + $0x108] sm:$0xff]
      %v4421 = vld [vmem:[#allocation2 + $0x110] sm:$0xff]
      %v4422 = vld [vmem:[#allocation2 + $0x118] sm:$0xff]
      %v4423 = vadd.f32 %v4387, %v4351
      %v4424 = vadd.f32 %v4388, %v4352
      %v4425 = vadd.f32 %v4389, %v4353
      %v4426 = vadd.f32 %v4390, %v4354
      %v4427 = vadd.f32 %v4391, %v4355
      %v4428 = vadd.f32 %v4392, %v4356
      %v4429 = vadd.f32 %v4393, %v4357
      %v4430 = vadd.f32 %v4394, %v4358
      %v4431 = vadd.f32 %v4395, %v4359
      %v4432 = vadd.f32 %v4396, %v4360
      %v4433 = vadd.f32 %v4397, %v4361
      %v4434 = vadd.f32 %v4398, %v4362
      %v4435 = vadd.f32 %v4399, %v4363
      %v4436 = vadd.f32 %v4400, %v4364
      %v4437 = vadd.f32 %v4401, %v4365
      %v4438 = vadd.f32 %v4402, %v4366
      %v4439 = vadd.f32 %v4403, %v4367
      %v4440 = vadd.f32 %v4404, %v4368
      %v4441 = vadd.f32 %v4405, %v4369
      %v4442 = vadd.f32 %v4406, %v4370
      %v4443 = vadd.f32 %v4407, %v4371
      %v4444 = vadd.f32 %v4408, %v4372
      %v4445 = vadd.f32 %v4409, %v4373
      %v4446 = vadd.f32 %v4410, %v4374
      %v4447 = vadd.f32 %v4411, %v4375
      %v4448 = vadd.f32 %v4412, %v4376
      %v4449 = vadd.f32 %v4413, %v4377
      %v4450 = vadd.f32 %v4414, %v4378
      %v4451 = vadd.f32 %v4415, %v4379
      %v4452 = vadd.f32 %v4416, %v4380
      %v4453 = vadd.f32 %v4417, %v4381
      %v4454 = vadd.f32 %v4418, %v4382
      %v4455 = vadd.f32 %v4419, %v4383
      %v4456 = vadd.f32 %v4420, %v4384
      %v4457 = vadd.f32 %v4421, %v4385
      %v4458 = vadd.f32 %v4422, %v4386
      %4459 = vst [vmem:[#allocation2] sm:$0xff] %v4423
      %4460 = vst [vmem:[#allocation2 + $0x8] sm:$0xff] %v4424
      %4461 = vst [vmem:[#allocation2 + $0x10] sm:$0xff] %v4425
      %4462 = vst [vmem:[#allocation2 + $0x18] sm:$0xff] %v4426
      %4463 = vst [vmem:[#allocation2 + $0x20] sm:$0xff] %v4427
      %4464 = vst [vmem:[#allocation2 + $0x28] sm:$0xff] %v4428
      %4465 = vst [vmem:[#allocation2 + $0x30] sm:$0xff] %v4429
      %4466 = vst [vmem:[#allocation2 + $0x38] sm:$0xff] %v4430
      %4467 = vst [vmem:[#allocation2 + $0x40] sm:$0xff] %v4431
      %4468 = vst [vmem:[#allocation2 + $0x48] sm:$0xff] %v4432
      %4469 = vst [vmem:[#allocation2 + $0x50] sm:$0xff] %v4433
      %4470 = vst [vmem:[#allocation2 + $0x58] sm:$0xff] %v4434
      %4471 = vst [vmem:[#allocation2 + $0x60] sm:$0xff] %v4435
      %4472 = vst [vmem:[#allocation2 + $0x68] sm:$0xff] %v4436
      %4473 = vst [vmem:[#allocation2 + $0x70] sm:$0xff] %v4437
      %4474 = vst [vmem:[#allocation2 + $0x78] sm:$0xff] %v4438
      %4475 = vst [vmem:[#allocation2 + $0x80] sm:$0xff] %v4439
      %4476 = vst [vmem:[#allocation2 + $0x88] sm:$0xff] %v4440
      %4477 = vst [vmem:[#allocation2 + $0x90] sm:$0xff] %v4441
      %4478 = vst [vmem:[#allocation2 + $0x98] sm:$0xff] %v4442
      %4479 = vst [vmem:[#allocation2 + $0xa0] sm:$0xff] %v4443
      %4480 = vst [vmem:[#allocation2 + $0xa8] sm:$0xff] %v4444
      %4481 = vst [vmem:[#allocation2 + $0xb0] sm:$0xff] %v4445
      %4482 = vst [vmem:[#allocation2 + $0xb8] sm:$0xff] %v4446
      %4483 = vst [vmem:[#allocation2 + $0xc0] sm:$0xff] %v4447
      %4484 = vst [vmem:[#allocation2 + $0xc8] sm:$0xff] %v4448
      %4485 = vst [vmem:[#allocation2 + $0xd0] sm:$0xff] %v4449
      %4486 = vst [vmem:[#allocation2 + $0xd8] sm:$0xff] %v4450
      %4487 = vst [vmem:[#allocation2 + $0xe0] sm:$0xff] %v4451
      %4488 = vst [vmem:[#allocation2 + $0xe8] sm:$0xff] %v4452
      %4489 = vst [vmem:[#allocation2 + $0xf0] sm:$0xff] %v4453
      %4490 = vst [vmem:[#allocation2 + $0xf8] sm:$0xff] %v4454
      %4491 = vst [vmem:[#allocation2 + $0x100] sm:$0xff] %v4455
      %4492 = vst [vmem:[#allocation2 + $0x108] sm:$0xff] %v4456
      %4493 = vst [vmem:[#allocation2 + $0x110] sm:$0xff] %v4457
      %4494 = vst [vmem:[#allocation2 + $0x118] sm:$0xff] %v4458
      // Predicated region
      $region41: #{residual_block_forward.3} parent=35 // pred_check
        %p4495 = pneg %p316
      $region42: #{residual_block_forward.3} parent=35 // pred_check_branch
        %4497 = sbr.rel (%p4495) target = $region44
      $region43: #{residual_block_forward.3} parent=35 // pred_region
        %v4498 = vld [vmem:[#allocation2] sm:$0xff]
        %v4499 = vld [vmem:[#allocation2 + $0x8] sm:$0xff]
        %v4500 = vld [vmem:[#allocation2 + $0x10] sm:$0xff]
        %v4501 = vld [vmem:[#allocation2 + $0x18] sm:$0xff]
        %v4502 = vld [vmem:[#allocation2 + $0x20] sm:$0xff]
        %v4503 = vld [vmem:[#allocation2 + $0x28] sm:$0xff]
        %v4504 = vld [vmem:[#allocation2 + $0x30] sm:$0xff]
        %v4505 = vld [vmem:[#allocation2 + $0x38] sm:$0xff]
        %v4506 = vld [vmem:[#allocation2 + $0x40] sm:$0xff]
        %v4507 = vld [vmem:[#allocation2 + $0x48] sm:$0xff]
        %v4508 = vld [vmem:[#allocation2 + $0x50] sm:$0xff]
        %v4509 = vld [vmem:[#allocation2 + $0x58] sm:$0xff]
        %v4510 = vld [vmem:[#allocation2 + $0x60] sm:$0xff]
        %v4511 = vld [vmem:[#allocation2 + $0x68] sm:$0xff]
        %v4512 = vld [vmem:[#allocation2 + $0x70] sm:$0xff]
        %v4513 = vld [vmem:[#allocation2 + $0x78] sm:$0xff]
        %v4514 = vld [vmem:[#allocation2 + $0x80] sm:$0xff]
        %v4515 = vld [vmem:[#allocation2 + $0x88] sm:$0xff]
        %v4516 = vld [vmem:[#allocation2 + $0x90] sm:$0xff]
        %v4517 = vld [vmem:[#allocation2 + $0x98] sm:$0xff]
        %v4518 = vld [vmem:[#allocation2 + $0xa0] sm:$0xff]
        %v4519 = vld [vmem:[#allocation2 + $0xa8] sm:$0xff]
        %v4520 = vld [vmem:[#allocation2 + $0xb0] sm:$0xff]
        %v4521 = vld [vmem:[#allocation2 + $0xb8] sm:$0xff]
        %v4522 = vld [vmem:[#allocation2 + $0xc0] sm:$0xff]
        %v4523 = vld [vmem:[#allocation2 + $0xc8] sm:$0xff]
        %v4524 = vld [vmem:[#allocation2 + $0xd0] sm:$0xff]
        %v4525 = vld [vmem:[#allocation2 + $0xd8] sm:$0xff]
        %v4526 = vld [vmem:[#allocation2 + $0xe0] sm:$0xff]
        %v4527 = vld [vmem:[#allocation2 + $0xe8] sm:$0xff]
        %v4528 = vld [vmem:[#allocation2 + $0xf0] sm:$0xff]
        %v4529 = vld [vmem:[#allocation2 + $0xf8] sm:$0xff]
        %v4530 = vld [vmem:[#allocation2 + $0x100] sm:$0xff]
        %v4531 = vld [vmem:[#allocation2 + $0x108] sm:$0xff]
        %v4532 = vld [vmem:[#allocation2 + $0x110] sm:$0xff]
        %v4533 = vld [vmem:[#allocation2 + $0x118] sm:$0xff]
        %v4534 = vld [vmem:[%s298] sm:$0x1]
        %v4536 = vlaneseq
        %v4537 = vshrl.u32 %v4536, 7
        %v4538 = vsub.s32 0, %v4537
        %v4539 = vrot.slane %v4534, %v4538
        %v4541 = vadd.f32 %v4498, %v4539
        %v4542 = vadd.f32 %v4499, %v4539
        %v4543 = vadd.f32 %v4500, %v4539
        %v4544 = vadd.f32 %v4501, %v4539
        %v4545 = vadd.f32 %v4502, %v4539
        %v4546 = vadd.f32 %v4503, %v4539
        %v4547 = vadd.f32 %v4504, %v4539
        %v4548 = vadd.f32 %v4505, %v4539
        %v4549 = vadd.f32 %v4506, %v4539
        %v4550 = vadd.f32 %v4507, %v4539
        %v4551 = vadd.f32 %v4508, %v4539
        %v4552 = vadd.f32 %v4509, %v4539
        %v4553 = vadd.f32 %v4510, %v4539
        %v4554 = vadd.f32 %v4511, %v4539
        %v4555 = vadd.f32 %v4512, %v4539
        %v4556 = vadd.f32 %v4513, %v4539
        %v4557 = vadd.f32 %v4514, %v4539
        %v4558 = vadd.f32 %v4515, %v4539
        %v4559 = vadd.f32 %v4516, %v4539
        %v4560 = vadd.f32 %v4517, %v4539
        %v4561 = vadd.f32 %v4518, %v4539
        %v4562 = vadd.f32 %v4519, %v4539
        %v4563 = vadd.f32 %v4520, %v4539
        %v4564 = vadd.f32 %v4521, %v4539
        %v4565 = vadd.f32 %v4522, %v4539
        %v4566 = vadd.f32 %v4523, %v4539
        %v4567 = vadd.f32 %v4524, %v4539
        %v4568 = vadd.f32 %v4525, %v4539
        %v4569 = vadd.f32 %v4526, %v4539
        %v4570 = vadd.f32 %v4527, %v4539
        %v4571 = vadd.f32 %v4528, %v4539
        %v4572 = vadd.f32 %v4529, %v4539
        %v4573 = vadd.f32 %v4530, %v4539
        %v4574 = vadd.f32 %v4531, %v4539
        %v4575 = vadd.f32 %v4532, %v4539
        %v4576 = vadd.f32 %v4533, %v4539
        %v4577 = vld [vmem:[%s306 + $0x24] sm:$0xf]
        %v4578 = vld [vmem:[%s306 + $0x28] sm:$0xf]
        %v4579 = vld [vmem:[%s306 + $0x2c] sm:$0xf]
        %v4580 = vld [vmem:[%s306 + $0x30] sm:$0xf]
        %v4581 = vld [vmem:[%s306 + $0x34] sm:$0xf]
        %v4582 = vld [vmem:[%s306 + $0x38] sm:$0xf]
        %v4583 = vld [vmem:[%s306 + $0x3c] sm:$0xf]
        %v4584 = vld [vmem:[%s306 + $0x40] sm:$0xf]
        %v4585 = vld [vmem:[%s306 + $0x44] sm:$0xf]
        %v4586 = vld [vmem:[%s306 + $0x48] sm:$0xf]
        %v4587 = vld [vmem:[%s306 + $0x4c] sm:$0xf]
        %v4588 = vld [vmem:[%s306 + $0x50] sm:$0xf]
        %v4589 = vld [vmem:[%s306 + $0x54] sm:$0xf]
        %v4590 = vld [vmem:[%s306 + $0x58] sm:$0xf]
        %v4591 = vld [vmem:[%s306 + $0x5c] sm:$0xf]
        %v4592 = vld [vmem:[%s306 + $0x60] sm:$0xf]
        %v4593 = vld [vmem:[%s306 + $0x64] sm:$0xf]
        %v4594 = vld [vmem:[%s306 + $0x68] sm:$0xf]
        %v4595 = vld [vmem:[%s306 + $0x6c] sm:$0xf]
        %v4596 = vld [vmem:[%s306 + $0x70] sm:$0xf]
        %v4597 = vld [vmem:[%s306 + $0x74] sm:$0xf]
        %v4598 = vld [vmem:[%s306 + $0x78] sm:$0xf]
        %v4599 = vld [vmem:[%s306 + $0x7c] sm:$0xf]
        %v4600 = vld [vmem:[%s306 + $0x80] sm:$0xf]
        %v4601 = vld [vmem:[%s306 + $0x84] sm:$0xf]
        %v4602 = vld [vmem:[%s306 + $0x88] sm:$0xf]
        %v4603 = vld [vmem:[%s306 + $0x8c] sm:$0xf]
        %v4604 = vld [vmem:[%s306 + $0x90] sm:$0xf]
        %v4605 = vld [vmem:[%s306 + $0x94] sm:$0xf]
        %v4606 = vld [vmem:[%s306 + $0x98] sm:$0xf]
        %v4607 = vld [vmem:[%s306 + $0x9c] sm:$0xf]
        %v4608 = vld [vmem:[%s306 + $0xa0] sm:$0xf]
        %v4609 = vld [vmem:[%s306 + $0xa4] sm:$0xf]
        %v4610 = vld [vmem:[%s306 + $0xa8] sm:$0xf]
        %v4611 = vld [vmem:[%s306 + $0xac] sm:$0xf]
        %v4612 = vld [vmem:[%s306 + $0xb0] sm:$0xf]
        %v4613 = vunpack.c.l.bf16 %v4577
        %v4614 = vunpack.c.l.bf16 %v4578
        %v4615 = vunpack.c.l.bf16 %v4579
        %v4616 = vunpack.c.l.bf16 %v4580
        %v4617 = vunpack.c.l.bf16 %v4581
        %v4618 = vunpack.c.l.bf16 %v4582
        %v4619 = vunpack.c.l.bf16 %v4583
        %v4620 = vunpack.c.l.bf16 %v4584
        %v4621 = vunpack.c.l.bf16 %v4585
        %v4622 = vunpack.c.l.bf16 %v4586
        %v4623 = vunpack.c.l.bf16 %v4587
        %v4624 = vunpack.c.l.bf16 %v4588
        %v4625 = vunpack.c.l.bf16 %v4589
        %v4626 = vunpack.c.l.bf16 %v4590
        %v4627 = vunpack.c.l.bf16 %v4591
        %v4628 = vunpack.c.l.bf16 %v4592
        %v4629 = vunpack.c.l.bf16 %v4593
        %v4630 = vunpack.c.l.bf16 %v4594
        %v4631 = vunpack.c.l.bf16 %v4595
        %v4632 = vunpack.c.l.bf16 %v4596
        %v4633 = vunpack.c.l.bf16 %v4597
        %v4634 = vunpack.c.l.bf16 %v4598
        %v4635 = vunpack.c.l.bf16 %v4599
        %v4636 = vunpack.c.l.bf16 %v4600
        %v4637 = vunpack.c.l.bf16 %v4601
        %v4638 = vunpack.c.l.bf16 %v4602
        %v4639 = vunpack.c.l.bf16 %v4603
        %v4640 = vunpack.c.l.bf16 %v4604
        %v4641 = vunpack.c.l.bf16 %v4605
        %v4642 = vunpack.c.l.bf16 %v4606
        %v4643 = vunpack.c.l.bf16 %v4607
        %v4644 = vunpack.c.l.bf16 %v4608
        %v4645 = vunpack.c.l.bf16 %v4609
        %v4646 = vunpack.c.l.bf16 %v4610
        %v4647 = vunpack.c.l.bf16 %v4611
        %v4648 = vunpack.c.l.bf16 %v4612
        %v4649 = vadd.f32 %v4541, %v4613
        %v4650 = vadd.f32 %v4542, %v4614
        %v4651 = vadd.f32 %v4543, %v4615
        %v4652 = vadd.f32 %v4544, %v4616
        %v4653 = vadd.f32 %v4545, %v4617
        %v4654 = vadd.f32 %v4546, %v4618
        %v4655 = vadd.f32 %v4547, %v4619
        %v4656 = vadd.f32 %v4548, %v4620
        %v4657 = vadd.f32 %v4549, %v4621
        %v4658 = vadd.f32 %v4550, %v4622
        %v4659 = vadd.f32 %v4551, %v4623
        %v4660 = vadd.f32 %v4552, %v4624
        %v4661 = vadd.f32 %v4553, %v4625
        %v4662 = vadd.f32 %v4554, %v4626
        %v4663 = vadd.f32 %v4555, %v4627
        %v4664 = vadd.f32 %v4556, %v4628
        %v4665 = vadd.f32 %v4557, %v4629
        %v4666 = vadd.f32 %v4558, %v4630
        %v4667 = vadd.f32 %v4559, %v4631
        %v4668 = vadd.f32 %v4560, %v4632
        %v4669 = vadd.f32 %v4561, %v4633
        %v4670 = vadd.f32 %v4562, %v4634
        %v4671 = vadd.f32 %v4563, %v4635
        %v4672 = vadd.f32 %v4564, %v4636
        %v4673 = vadd.f32 %v4565, %v4637
        %v4674 = vadd.f32 %v4566, %v4638
        %v4675 = vadd.f32 %v4567, %v4639
        %v4676 = vadd.f32 %v4568, %v4640
        %v4677 = vadd.f32 %v4569, %v4641
        %v4678 = vadd.f32 %v4570, %v4642
        %v4679 = vadd.f32 %v4571, %v4643
        %v4680 = vadd.f32 %v4572, %v4644
        %v4681 = vadd.f32 %v4573, %v4645
        %v4682 = vadd.f32 %v4574, %v4646
        %v4683 = vadd.f32 %v4575, %v4647
        %v4684 = vadd.f32 %v4576, %v4648
        %v4685 = vmax.f32 %v4649, 0.0
        %v4686 = vmax.f32 %v4650, 0.0
        %v4687 = vmax.f32 %v4651, 0.0
        %v4688 = vmax.f32 %v4652, 0.0
        %v4689 = vmax.f32 %v4653, 0.0
        %v4690 = vmax.f32 %v4654, 0.0
        %v4691 = vmax.f32 %v4655, 0.0
        %v4692 = vmax.f32 %v4656, 0.0
        %v4693 = vmax.f32 %v4657, 0.0
        %v4694 = vmax.f32 %v4658, 0.0
        %v4695 = vmax.f32 %v4659, 0.0
        %v4696 = vmax.f32 %v4660, 0.0
        %v4697 = vmax.f32 %v4661, 0.0
        %v4698 = vmax.f32 %v4662, 0.0
        %v4699 = vmax.f32 %v4663, 0.0
        %v4700 = vmax.f32 %v4664, 0.0
        %v4701 = vmax.f32 %v4665, 0.0
        %v4702 = vmax.f32 %v4666, 0.0
        %v4703 = vmax.f32 %v4667, 0.0
        %v4704 = vmax.f32 %v4668, 0.0
        %v4705 = vmax.f32 %v4669, 0.0
        %v4706 = vmax.f32 %v4670, 0.0
        %v4707 = vmax.f32 %v4671, 0.0
        %v4708 = vmax.f32 %v4672, 0.0
        %v4709 = vmax.f32 %v4673, 0.0
        %v4710 = vmax.f32 %v4674, 0.0
        %v4711 = vmax.f32 %v4675, 0.0
        %v4712 = vmax.f32 %v4676, 0.0
        %v4713 = vmax.f32 %v4677, 0.0
        %v4714 = vmax.f32 %v4678, 0.0
        %v4715 = vmax.f32 %v4679, 0.0
        %v4716 = vmax.f32 %v4680, 0.0
        %v4717 = vmax.f32 %v4681, 0.0
        %v4718 = vmax.f32 %v4682, 0.0
        %v4719 = vmax.f32 %v4683, 0.0
        %v4720 = vmax.f32 %v4684, 0.0
        %4721 = vst [vmem:[%s314] sm:$0xff] %v4685
        %4722 = vst [vmem:[%s314 + $0x8] sm:$0xff] %v4686
        %4723 = vst [vmem:[%s314 + $0x10] sm:$0xff] %v4687
        %4724 = vst [vmem:[%s314 + $0x18] sm:$0xff] %v4688
        %4725 = vst [vmem:[%s314 + $0x20] sm:$0xff] %v4689
        %4726 = vst [vmem:[%s314 + $0x28] sm:$0xff] %v4690
        %4727 = vst [vmem:[%s314 + $0x30] sm:$0xff] %v4691
        %4728 = vst [vmem:[%s314 + $0x38] sm:$0xff] %v4692
        %4729 = vst [vmem:[%s314 + $0x40] sm:$0xff] %v4693
        %4730 = vst [vmem:[%s314 + $0x48] sm:$0xff] %v4694
        %4731 = vst [vmem:[%s314 + $0x50] sm:$0xff] %v4695
        %4732 = vst [vmem:[%s314 + $0x58] sm:$0xff] %v4696
        %4733 = vst [vmem:[%s314 + $0x60] sm:$0xff] %v4697
        %4734 = vst [vmem:[%s314 + $0x68] sm:$0xff] %v4698
        %4735 = vst [vmem:[%s314 + $0x70] sm:$0xff] %v4699
        %4736 = vst [vmem:[%s314 + $0x78] sm:$0xff] %v4700
        %4737 = vst [vmem:[%s314 + $0x80] sm:$0xff] %v4701
        %4738 = vst [vmem:[%s314 + $0x88] sm:$0xff] %v4702
        %4739 = vst [vmem:[%s314 + $0x90] sm:$0xff] %v4703
        %4740 = vst [vmem:[%s314 + $0x98] sm:$0xff] %v4704
        %4741 = vst [vmem:[%s314 + $0xa0] sm:$0xff] %v4705
        %4742 = vst [vmem:[%s314 + $0xa8] sm:$0xff] %v4706
        %4743 = vst [vmem:[%s314 + $0xb0] sm:$0xff] %v4707
        %4744 = vst [vmem:[%s314 + $0xb8] sm:$0xff] %v4708
        %4745 = vst [vmem:[%s314 + $0xc0] sm:$0xff] %v4709
        %4746 = vst [vmem:[%s314 + $0xc8] sm:$0xff] %v4710
        %4747 = vst [vmem:[%s314 + $0xd0] sm:$0xff] %v4711
        %4748 = vst [vmem:[%s314 + $0xd8] sm:$0xff] %v4712
        %4749 = vst [vmem:[%s314 + $0xe0] sm:$0xff] %v4713
        %4750 = vst [vmem:[%s314 + $0xe8] sm:$0xff] %v4714
        %4751 = vst [vmem:[%s314 + $0xf0] sm:$0xff] %v4715
        %4752 = vst [vmem:[%s314 + $0xf8] sm:$0xff] %v4716
        %4753 = vst [vmem:[%s314 + $0x100] sm:$0xff] %v4717
        %4754 = vst [vmem:[%s314 + $0x108] sm:$0xff] %v4718
        %4755 = vst [vmem:[%s314 + $0x110] sm:$0xff] %v4719
        %4756 = vst [vmem:[%s314 + $0x118] sm:$0xff] %v4720
      $region44: #{residual_block_forward.3} parent=35 // pred_fallthru
        _
      %p4757 = scmp.lt.s32.totalorder %s20, 1
      %s4758 = scalar_select %p4757, %s20, 1
      %p4759 = scmp.lt.s32.totalorder %s21, 0
      %s4760 = scalar_select %p4759, %s21, 0
      %s4761 = smul.addr %s4758, 36
      %s4762 = sadd.s32 %s4760, %s4761
      %s4763 = smul.addr %s4762, 8
      %s4764 = scalar_lea.vmem %s4, %s4763
      // Predicated region
      $region45: #{residual_block_forward.3} parent=35 // pred_check
        %p4765 = pneg %p164
      $region46: #{residual_block_forward.3} parent=35 // pred_check_branch
        %4767 = sbr.rel (%p4765) target = $region48
      $region47: #{residual_block_forward.3} parent=35 // pred_region
        _
      $region48: #{residual_block_forward.3} parent=35 // pred_fallthru
        _
    $region36: #{residual_block_forward.3} parent=5 // pred_fallthru
      _
    %p4768 = scmp.le.s32.totalorder 2, %s10
    // Predicated region
    $region49: #{residual_block_forward.3} parent=5 // pred_check
      %p4769 = pneg %p4768
    $region50: #{residual_block_forward.3} parent=5 // pred_check_branch
      %4771 = sbr.rel (%p4769) target = $region52
    $region51: #{residual_block_forward.3} parent=5 // pred_region
      %s4772 = ssub.s32 %s10, 2
      // Predicated region
      $region53: #{residual_block_forward.3} parent=51 // pred_check
        %p4773 = pneg %p170
      $region54: #{residual_block_forward.3} parent=51 // pred_check_branch
        %4775 = sbr.rel (%p4773) target = $region56
      $region55: #{residual_block_forward.3} parent=51 // pred_region
        %p4776 = scmp.lt.s32.totalorder %s23, 1
        %s4777 = scalar_select %p4776, %s23, 1
        %p4778 = scmp.lt.s32.totalorder %s24, 0
        %s4779 = scalar_select %p4778, %s24, 0
        %s4780 = smul.addr %s4777, 36
        %s4781 = sadd.s32 %s4779, %s4780
        %s4782 = smul.addr %s4781, 8
        %s4783 = scalar_lea.vmem %s4, %s4782
      $region56: #{residual_block_forward.3} parent=51 // pred_fallthru
        _
    $region52: #{residual_block_forward.3} parent=5 // pred_fallthru
      _
  $region6: #{residual_block_forward.3} parent=0 // loop_footer
    %s14 = sadd.s32 1, %s10
  $region7: #{residual_block_forward.3} parent=0 // loop_footer_branch
    %9 = sbr.rel target = $region3
  $region8: #{residual_block_forward.3} parent=0 // loop_exit
    _

// kernel: residual_block_forward.2
$region0: #{residual_block_forward.2}
  #allocation0 [shape = 'u32[]', space=smem, size = 0x4, offset = 0x4, fixed_abs, tag = 'smem constant byte address 0x4 - core index']
  #allocation1 [shape = 'u32[144,128]{1,0:T(1,128)}', space=vmem, size = 0x12000, scoped, tag = 'internal scratch']
  #allocation2 [shape = 'f32[288,128]{1,0:T(8,128)}', space=vmem, size = 0x24000, scoped, tag = 'scratch operand']
  %s0 = inlined_call_operand.vmem [shape: bf16[2,396,128], index: 0, kind: input, shape index: {}]
  %s1 = inlined_call_operand.vmem [shape: bf16[1,1,9,128,128], index: 1, kind: input, shape index: {}]
  %s2 = inlined_call_operand.vmem [shape: f32[1,128], index: 2, kind: input, shape index: {}]
  %s3 = inlined_call_operand.vmem [shape: f32[288,1], index: 3, kind: input, shape index: {}]
  %s4 = inlined_call_operand.vmem [shape: bf16[2,396,128], index: 4, kind: output, shape index: {}]
  %s5 = sld [smem:[#allocation0]]
  $region57: #{residual_block_forward.2} parent=0
    _
  %s7 = ssub.s32 1, %s5
  %s8 = scalar_select 0, %s7, %s5
  loop: start=0, step=1, limit=4
  $region2: #{residual_block_forward.2} parent=0 // loop_pre_header
    _
  $region3: #{residual_block_forward.2} parent=0 // loop_header
    %s10 = sphi 0, %s14
    %p11 = scmp.ge.s32.totalorder %s10, 4
    %s17 = sphi 0, %s36
    %s18 = sphi 0, %s32
    %s19 = sphi 0, %s28
    %s20 = sphi 0, %s17
    %s21 = sphi 0, %s18
    %s22 = sphi 0, %s19
    %s23 = sphi 0, %s20
    %s24 = sphi 0, %s21
    %s25 = sphi 0, %s22
    %s41 = sphi 0, %s43
    %s44 = sphi 0, %s41
    %s45 = sphi 0, %s44
    %s61 = sphi 0, %s45
    %s69 = sphi 0, %s71
    %s72 = sphi 0, %s69
    %s73 = sphi 0, %s72
    %s89 = sphi 0, %s73
    %s95 = sphi 0, %s97
    %s98 = sphi 0, %s95
    %s99 = sphi 0, %s98
    %s115 = sphi 0, %s99
    %s119 = sphi 0, %s119
    %s121 = sphi 0, %s119
    %s122 = sphi 0, %s121
    %s136 = sphi 0, %s122
    %s144 = sphi 0, %s146
    %s147 = sphi 0, %s144
    %s148 = sphi 0, %s147
    %s164 = sphi 0, %s148
  $region4: #{residual_block_forward.2} parent=0 // loop_header_branch
    %13 = sbr.rel (%p11) target = $region8
  $region5: #{residual_block_forward.2} parent=0 // loop_body
    %s15 = ssub.s32 %s10, 1
    %s16 = ssub.s32 %s10, 2
    %s26 = sadd.s32 1, %s19
    %p27 = scmp.ge.s32.totalorder %s26, 1
    %s28 = scalar_select %p27, 0, %s26
    %s29 = sadd.s32 1, %s18
    %s30 = scalar_select %p27, %s29, %s18
    %p31 = scmp.ge.s32.totalorder %s30, 1
    %s32 = scalar_select %p31, 0, %s30
    %s33 = sadd.s32 1, %s17
    %s34 = scalar_select %p31, %s33, %s17
    %p35 = scmp.ge.s32.totalorder %s34, 2
    %s36 = scalar_select %p35, 0, %s34
    %s37 = ssub.s32 %s17, %s36
    %s38 = ssub.s32 %s19, %s28
    %s39 = sor.u32 %s37, %s38
    %p40 = scmp.eq.s32.totalorder %s39, 0
    %s42 = sadd.s32 %s41, 1
    %s43 = scalar_select %p40, %s41, %s42
    %p46 = pneg %p40
    %p47 = scmp.eq.s32.totalorder %s10, 1
    %p48 = por %p46, %p47
    %p49 = scmp.ne.s32.totalorder %s41, %s44
    %p50 = scmp.eq.s32.totalorder %s10, 0
    %p51 = por %p49, %p50
    %p52 = scmp.ne.s32.totalorder %s41, %s44
    %p53 = scmp.eq.s32.totalorder %s15, 1
    %p54 = por %p52, %p53
    %p55 = scmp.ne.s32.totalorder %s44, %s45
    %p56 = scmp.eq.s32.totalorder %s15, 0
    %p57 = por %p55, %p56
    %p58 = scmp.ne.s32.totalorder %s44, %s45
    %p59 = scmp.eq.s32.totalorder %s16, 1
    %p60 = por %p58, %p59
    %p62 = scmp.ne.s32.totalorder %s45, %s61
    %p63 = scmp.eq.s32.totalorder %s16, 0
    %p64 = por %p62, %p63
    %s65 = ssub.s32 %s19, %s28
    %s66 = ssub.s32 %s18, %s32
    %s67 = sor.u32 %s65, %s66
    %p68 = scmp.eq.s32.totalorder %s67, 0
    %s70 = sadd.s32 %s69, 1
    %s71 = scalar_select %p68, %s69, %s70
    %p74 = pneg %p68
    %p75 = scmp.eq.s32.totalorder %s10, 1
    %p76 = por %p74, %p75
    %p77 = scmp.ne.s32.totalorder %s69, %s72
    %p78 = scmp.eq.s32.totalorder %s10, 0
    %p79 = por %p77, %p78
    %p80 = scmp.ne.s32.totalorder %s69, %s72
    %p81 = scmp.eq.s32.totalorder %s15, 1
    %p82 = por %p80, %p81
    %p83 = scmp.ne.s32.totalorder %s72, %s73
    %p84 = scmp.eq.s32.totalorder %s15, 0
    %p85 = por %p83, %p84
    %p86 = scmp.ne.s32.totalorder %s72, %s73
    %p87 = scmp.eq.s32.totalorder %s16, 1
    %p88 = por %p86, %p87
    %p90 = scmp.ne.s32.totalorder %s73, %s89
    %p91 = scmp.eq.s32.totalorder %s16, 0
    %p92 = por %p90, %p91
    %s93 = ssub.s32 %s18, %s32
    %p94 = scmp.eq.s32.totalorder %s93, 0
    %s96 = sadd.s32 %s95, 1
    %s97 = scalar_select %p94, %s95, %s96
    %p100 = pneg %p94
    %p101 = scmp.eq.s32.totalorder %s10, 1
    %p102 = por %p100, %p101
    %p103 = scmp.ne.s32.totalorder %s95, %s98
    %p104 = scmp.eq.s32.totalorder %s10, 0
    %p105 = por %p103, %p104
    %p106 = scmp.ne.s32.totalorder %s95, %s98
    %p107 = scmp.eq.s32.totalorder %s15, 1
    %p108 = por %p106, %p107
    %p109 = scmp.ne.s32.totalorder %s98, %s99
    %p110 = scmp.eq.s32.totalorder %s15, 0
    %p111 = por %p109, %p110
    %p112 = scmp.ne.s32.totalorder %s98, %s99
    %p113 = scmp.eq.s32.totalorder %s16, 1
    %p114 = por %p112, %p113
    %p116 = scmp.ne.s32.totalorder %s99, %s115
    %p117 = scmp.eq.s32.totalorder %s16, 0
    %p118 = por %p116, %p117
    %s120 = sadd.s32 %s119, 1
    %p123 = scmp.eq.s32.totalorder %s10, 1
    %p124 = scmp.ne.s32.totalorder %s119, %s121
    %p125 = scmp.eq.s32.totalorder %s10, 0
    %p126 = por %p124, %p125
    %p127 = scmp.ne.s32.totalorder %s119, %s121
    %p128 = scmp.eq.s32.totalorder %s15, 1
    %p129 = por %p127, %p128
    %p130 = scmp.ne.s32.totalorder %s121, %s122
    %p131 = scmp.eq.s32.totalorder %s15, 0
    %p132 = por %p130, %p131
    %p133 = scmp.ne.s32.totalorder %s121, %s122
    %p134 = scmp.eq.s32.totalorder %s16, 1
    %p135 = por %p133, %p134
    %p137 = scmp.ne.s32.totalorder %s122, %s136
    %p138 = scmp.eq.s32.totalorder %s16, 0
    %p139 = por %p137, %p138
    %s140 = ssub.s32 %s17, %s36
    %s141 = ssub.s32 %s18, %s32
    %s142 = sor.u32 %s140, %s141
    %p143 = scmp.eq.s32.totalorder %s142, 0
    %s145 = sadd.s32 %s144, 1
    %s146 = scalar_select %p143, %s144, %s145
    %p149 = pneg %p143
    %p150 = scmp.eq.s32.totalorder %s10, 1
    %p151 = por %p149, %p150
    %p152 = scmp.ne.s32.totalorder %s144, %s147
    %p153 = scmp.eq.s32.totalorder %s10, 0
    %p154 = por %p152, %p153
    %p155 = scmp.ne.s32.totalorder %s144, %s147
    %p156 = scmp.eq.s32.totalorder %s15, 1
    %p157 = por %p155, %p156
    %p158 = scmp.ne.s32.totalorder %s147, %s148
    %p159 = scmp.eq.s32.totalorder %s15, 0
    %p160 = por %p158, %p159
    %p161 = scmp.ne.s32.totalorder %s147, %s148
    %p162 = scmp.eq.s32.totalorder %s16, 1
    %p163 = por %p161, %p162
    %p165 = scmp.ne.s32.totalorder %s148, %s164
    %p166 = scmp.eq.s32.totalorder %s16, 0
    %p167 = por %p165, %p166
    %p168 = scmp.le.s32.totalorder 1, %s10
    %p169 = scmp.lt.s32.totalorder %s10, 3
    %p170 = pnand %p168, %p169
    %p171 = pneg %p170
    // Predicated region
    $region9: #{residual_block_forward.2} parent=5 // pred_check
      _
    $region10: #{residual_block_forward.2} parent=5 // pred_check_branch
      %173 = sbr.rel (%p170) target = $region12
    $region11: #{residual_block_forward.2} parent=5 // pred_region
      %s174 = ssub.s32 %s10, 1
      // Predicated region
      $region13: #{residual_block_forward.2} parent=11 // pred_check
        %p175 = pneg %p85
      $region14: #{residual_block_forward.2} parent=11 // pred_check_branch
        %177 = sbr.rel (%p175) target = $region16
      $region15: #{residual_block_forward.2} parent=11 // pred_region
        %p178 = scmp.lt.s32.totalorder %s22, 0
        %s179 = scalar_select %p178, %s22, 0
        %p180 = scmp.lt.s32.totalorder %s21, 0
        %s181 = scalar_select %p180, %s21, 0
        %s182 = smul.addr %s181, 144
        %s183 = smul.addr %s179, 144
        %s184 = sadd.s32 %s182, %s183
        %s185 = smul.addr %s184, 4
        %s186 = scalar_lea.vmem %s1, %s185
      $region16: #{residual_block_forward.2} parent=11 // pred_fallthru
        _
      // Predicated region
      $region17: #{residual_block_forward.2} parent=11 // pred_check
        %p187 = pneg %p111
      $region18: #{residual_block_forward.2} parent=11 // pred_check_branch
        %189 = sbr.rel (%p187) target = $region20
      $region19: #{residual_block_forward.2} parent=11 // pred_region
        %p190 = scmp.lt.s32.totalorder %s21, 0
        %s191 = scalar_select %p190, %s21, 0
        %s192 = scalar_lea.vmem %s2, %s191
      $region20: #{residual_block_forward.2} parent=11 // pred_fallthru
        _
      // Predicated region
      $region21: #{residual_block_forward.2} parent=11 // pred_check
        %p193 = pneg %p132
      $region22: #{residual_block_forward.2} parent=11 // pred_check_branch
        %195 = sbr.rel (%p193) target = $region24
      $region23: #{residual_block_forward.2} parent=11 // pred_region
        _
      $region24: #{residual_block_forward.2} parent=11 // pred_fallthru
        _
    $region12: #{residual_block_forward.2} parent=5 // pred_fallthru
      _
    %p196 = scmp.lt.s32.totalorder %s10, 2
    // Predicated region
    $region25: #{residual_block_forward.2} parent=5 // pred_check
      %p197 = pneg %p196
    $region26: #{residual_block_forward.2} parent=5 // pred_check_branch
      %199 = sbr.rel (%p197) target = $region28
    $region27: #{residual_block_forward.2} parent=5 // pred_region
      // Predicated region
      $region29: #{residual_block_forward.2} parent=27 // pred_check
        %p200 = pneg %p51
      $region30: #{residual_block_forward.2} parent=27 // pred_check_branch
        %202 = sbr.rel (%p200) target = $region32
      $region31: #{residual_block_forward.2} parent=27 // pred_region
        %p203 = scmp.lt.s32.totalorder %s17, 1
        %s204 = scalar_select %p203, %s17, 1
        %p205 = scmp.lt.s32.totalorder %s19, 0
        %s206 = scalar_select %p205, %s19, 0
        %s207 = smul.addr %s204, 50
        %s208 = sadd.s32 %s206, %s207
        %s209 = smul.addr %s208, 4
        %s210 = scalar_lea.vmem %s0, %s209
      $region32: #{residual_block_forward.2} parent=27 // pred_fallthru
        _
    $region28: #{residual_block_forward.2} parent=5 // pred_fallthru
      _
    %p211 = scmp.le.s32.totalorder 1, %s10
    %p212 = scmp.lt.s32.totalorder %s10, 3
    %p213 = pnand %p211, %p212
    %p214 = pneg %p213
    // Predicated region
    $region33: #{residual_block_forward.2} parent=5 // pred_check
      _
    $region34: #{residual_block_forward.2} parent=5 // pred_check_branch
      %216 = sbr.rel (%p213) target = $region36
    $region35: #{residual_block_forward.2} parent=5 // pred_region
      %s217 = ssub.s32 %s10, 1
      %p218 = scmp.lt.s32.totalorder %s20, 1
      %s219 = scalar_select %p218, %s20, 1
      %p220 = scmp.lt.s32.totalorder %s22, 0
      %s221 = scalar_select %p220, %s22, 0
      %s222 = smul.addr %s219, 50
      %s223 = sadd.s32 %s221, %s222
      %s224 = smul.addr %s223, 4
      %s225 = scalar_lea.vmem %s0, %s224
      %p226 = pneg %p57
      %p227 = pneg %p54
      %p228 = scmp.lt.s32.totalorder %s22, 0
      %s229 = scalar_select %p228, %s22, 0
      %p230 = scmp.lt.s32.totalorder %s21, 0
      %s231 = scalar_select %p230, %s21, 0
      %s232 = smul.addr %s231, 144
      %s233 = smul.addr %s229, 144
      %s234 = sadd.s32 %s232, %s233
      %s235 = smul.addr %s234, 4
      %s236 = scalar_lea.vmem %s1, %s235
      %p237 = pneg %p85
      %p238 = pneg %p82
      %p239 = scmp.lt.s32.totalorder %s21, 0
      %s240 = scalar_select %p239, %s21, 0
      %s241 = scalar_lea.vmem %s2, %s240
      %p242 = pneg %p111
      %p243 = pneg %p108
      %p244 = pneg %p132
      %p245 = pneg %p129
      %p246 = pneg %p160
      %p247 = pneg %p157
      %p248 = scmp.lt.s32.totalorder %s20, 1
      %s249 = scalar_select %p248, %s20, 1
      %p250 = scmp.lt.s32.totalorder %s21, 0
      %s251 = scalar_select %p250, %s21, 0
      %s252 = smul.addr %s249, 50
      %s253 = sadd.s32 %s251, %s252
      %s254 = smul.addr %s253, 4
      %s255 = scalar_lea.vmem %s4, %s254
      %p256 = scmp.lt.s32.totalorder %s20, 1
      %s257 = scalar_select %p256, %s20, 1
      %p258 = scmp.lt.s32.totalorder %s22, 0
      %s259 = scalar_select %p258, %s22, 0
      %s260 = smul.addr %s257, 50
      %s261 = sadd.s32 %s259, %s260
      %s262 = smul.addr %s261, 4
      %s263 = scalar_lea.vmem %s0, %s262
      %p264 = scmp.lt.s32.totalorder %s22, 0
      %s265 = scalar_select %p264, %s22, 0
      %p266 = scmp.lt.s32.totalorder %s21, 0
      %s267 = scalar_select %p266, %s21, 0
      %s268 = smul.addr %s267, 144
      %s269 = smul.addr %s265, 144
      %s270 = sadd.s32 %s268, %s269
      %s271 = smul.addr %s270, 4
      %s272 = scalar_lea.vmem %s1, %s271
      %p273 = scmp.lt.s32.totalorder %s21, 0
      %s274 = scalar_select %p273, %s21, 0
      %s275 = scalar_lea.vmem %s2, %s274
      %p276 = scmp.lt.s32.totalorder %s20, 1
      %s277 = scalar_select %p276, %s20, 1
      %p278 = scmp.lt.s32.totalorder %s21, 0
      %s279 = scalar_select %p278, %s21, 0
      %s280 = smul.addr %s277, 50
      %s281 = sadd.s32 %s279, %s280
      %s282 = smul.addr %s281, 4
      %s283 = scalar_lea.vmem %s4, %s282
      %p285 = scmp.eq.s32.totalorder %s22, 0
      // Predicated region
      $region37: #{residual_block_forward.2} parent=35 // pred_check
        %p286 = pneg %p285
      $region38: #{residual_block_forward.2} parent=35 // pred_check_branch
        %288 = sbr.rel (%p286) target = $region40
      $region39: #{residual_block_forward.2} parent=35 // pred_region
        %289 = vst [vmem:[#allocation2] sm:$0xff] 0.0
        %290 = vst [vmem:[#allocation2 + $0x8] sm:$0xff] 0.0
        %291 = vst [vmem:[#allocation2 + $0x10] sm:$0xff] 0.0
        %292 = vst [vmem:[#allocation2 + $0x18] sm:$0xff] 0.0
        %293 = vst [vmem:[#allocation2 + $0x20] sm:$0xff] 0.0
        %294 = vst [vmem:[#allocation2 + $0x28] sm:$0xff] 0.0
        %295 = vst [vmem:[#allocation2 + $0x30] sm:$0xff] 0.0
        %296 = vst [vmem:[#allocation2 + $0x38] sm:$0xff] 0.0
        %297 = vst [vmem:[#allocation2 + $0x40] sm:$0xff] 0.0
        %298 = vst [vmem:[#allocation2 + $0x48] sm:$0xff] 0.0
        %299 = vst [vmem:[#allocation2 + $0x50] sm:$0xff] 0.0
        %300 = vst [vmem:[#allocation2 + $0x58] sm:$0xff] 0.0
        %301 = vst [vmem:[#allocation2 + $0x60] sm:$0xff] 0.0
        %302 = vst [vmem:[#allocation2 + $0x68] sm:$0xff] 0.0
        %303 = vst [vmem:[#allocation2 + $0x70] sm:$0xff] 0.0
        %304 = vst [vmem:[#allocation2 + $0x78] sm:$0xff] 0.0
        %305 = vst [vmem:[#allocation2 + $0x80] sm:$0xff] 0.0
        %306 = vst [vmem:[#allocation2 + $0x88] sm:$0xff] 0.0
        %307 = vst [vmem:[#allocation2 + $0x90] sm:$0xff] 0.0
        %308 = vst [vmem:[#allocation2 + $0x98] sm:$0xff] 0.0
        %309 = vst [vmem:[#allocation2 + $0xa0] sm:$0xff] 0.0
        %310 = vst [vmem:[#allocation2 + $0xa8] sm:$0xff] 0.0
        %311 = vst [vmem:[#allocation2 + $0xb0] sm:$0xff] 0.0
        %312 = vst [vmem:[#allocation2 + $0xb8] sm:$0xff] 0.0
        %313 = vst [vmem:[#allocation2 + $0xc0] sm:$0xff] 0.0
        %314 = vst [vmem:[#allocation2 + $0xc8] sm:$0xff] 0.0
        %315 = vst [vmem:[#allocation2 + $0xd0] sm:$0xff] 0.0
        %316 = vst [vmem:[#allocation2 + $0xd8] sm:$0xff] 0.0
        %317 = vst [vmem:[#allocation2 + $0xe0] sm:$0xff] 0.0
        %318 = vst [vmem:[#allocation2 + $0xe8] sm:$0xff] 0.0
        %319 = vst [vmem:[#allocation2 + $0xf0] sm:$0xff] 0.0
        %320 = vst [vmem:[#allocation2 + $0xf8] sm:$0xff] 0.0
        %321 = vst [vmem:[#allocation2 + $0x100] sm:$0xff] 0.0
        %322 = vst [vmem:[#allocation2 + $0x108] sm:$0xff] 0.0
        %323 = vst [vmem:[#allocation2 + $0x110] sm:$0xff] 0.0
        %324 = vst [vmem:[#allocation2 + $0x118] sm:$0xff] 0.0
      $region40: #{residual_block_forward.2} parent=35 // pred_fallthru
        _
      %v325 = vld [vmem:[%s263 + $0x18] sm:$0xc]
      %v326 = vld [vmem:[%s263 + $0x1c] sm:$0xf]
      %v327 = vld [vmem:[%s263 + $0x20] sm:$0xf]
      %v328 = vld [vmem:[%s263 + $0x24] sm:$0xf]
      %v329 = vld [vmem:[%s263 + $0x28] sm:$0xf]
      %v330 = vld [vmem:[%s263 + $0x2c] sm:$0xf]
      %v331 = vld [vmem:[%s263 + $0x30] sm:$0xf]
      %v332 = vld [vmem:[%s263 + $0x34] sm:$0xf]
      %v333 = vld [vmem:[%s263 + $0x38] sm:$0xf]
      %v334 = vld [vmem:[%s263 + $0x3c] sm:$0xf]
      %v335 = vld [vmem:[%s263 + $0x40] sm:$0xf]
      %v336 = vld [vmem:[%s263 + $0x44] sm:$0xf]
      %v337 = vld [vmem:[%s263 + $0x48] sm:$0xf]
      %v338 = vld [vmem:[%s263 + $0x4c] sm:$0xf]
      %v339 = vld [vmem:[%s263 + $0x50] sm:$0xf]
      %v340 = vld [vmem:[%s263 + $0x54] sm:$0xf]
      %v341 = vld [vmem:[%s263 + $0x58] sm:$0xf]
      %v342 = vld [vmem:[%s263 + $0x5c] sm:$0xf]
      %v343 = vld [vmem:[%s263 + $0x60] sm:$0xf]
      %v344 = vld [vmem:[%s263 + $0x64] sm:$0xf]
      %v345 = vld [vmem:[%s263 + $0x68] sm:$0xf]
      %v346 = vld [vmem:[%s263 + $0x6c] sm:$0xf]
      %v347 = vld [vmem:[%s263 + $0x70] sm:$0xf]
      %v348 = vld [vmem:[%s263 + $0x74] sm:$0xf]
      %v349 = vld [vmem:[%s263 + $0x78] sm:$0xf]
      %v350 = vld [vmem:[%s263 + $0x7c] sm:$0xf]
      %v351 = vld [vmem:[%s263 + $0x80] sm:$0xf]
      %v352 = vld [vmem:[%s263 + $0x84] sm:$0xf]
      %v353 = vld [vmem:[%s263 + $0x88] sm:$0xf]
      %v354 = vld [vmem:[%s263 + $0x8c] sm:$0xf]
      %v355 = vld [vmem:[%s263 + $0x90] sm:$0xf]
      %v356 = vld [vmem:[%s263 + $0x94] sm:$0xf]
      %v357 = vld [vmem:[%s263 + $0x98] sm:$0xf]
      %v358 = vld [vmem:[%s263 + $0x9c] sm:$0xf]
      %v359 = vld [vmem:[%s263 + $0xa0] sm:$0xf]
      %v360 = vld [vmem:[%s263 + $0xa4] sm:$0xf]
      %v361 = vld [vmem:[%s263 + $0xa8] sm:$0x7]
      %v362 = vld [vmem:[%s272] sm:$0xf]
      %v363 = vld [vmem:[%s272 + $0x4] sm:$0xf]
      %v364 = vld [vmem:[%s272 + $0x8] sm:$0xf]
      %v365 = vld [vmem:[%s272 + $0xc] sm:$0xf]
      %v366 = vld [vmem:[%s272 + $0x10] sm:$0xf]
      %v367 = vld [vmem:[%s272 + $0x14] sm:$0xf]
      %v368 = vld [vmem:[%s272 + $0x18] sm:$0xf]
      %v369 = vld [vmem:[%s272 + $0x1c] sm:$0xf]
      %v370 = vld [vmem:[%s272 + $0x20] sm:$0xf]
      %v371 = vld [vmem:[%s272 + $0x24] sm:$0xf]
      %v372 = vld [vmem:[%s272 + $0x28] sm:$0xf]
      %v373 = vld [vmem:[%s272 + $0x2c] sm:$0xf]
      %v374 = vld [vmem:[%s272 + $0x30] sm:$0xf]
      %v375 = vld [vmem:[%s272 + $0x34] sm:$0xf]
      %v376 = vld [vmem:[%s272 + $0x38] sm:$0xf]
      %v377 = vld [vmem:[%s272 + $0x3c] sm:$0xf]
      %v378 = vld [vmem:[%s263 + $0x18] sm:$0x8]
      %s379 = scalar_lea.vmem %s272, 64
      %v380 = vld [vmem:[%s379] sm:$0xf]
      %v381 = vld [vmem:[%s379 + $0x4] sm:$0xf]
      %v382 = vld [vmem:[%s379 + $0x8] sm:$0xf]
      %v383 = vld [vmem:[%s379 + $0xc] sm:$0xf]
      %v384 = vld [vmem:[%s379 + $0x10] sm:$0xf]
      %v385 = vld [vmem:[%s379 + $0x14] sm:$0xf]
      %v386 = vld [vmem:[%s379 + $0x18] sm:$0xf]
      %v387 = vld [vmem:[%s379 + $0x1c] sm:$0xf]
      %v388 = vld [vmem:[%s379 + $0x20] sm:$0xf]
      %v389 = vld [vmem:[%s379 + $0x24] sm:$0xf]
      %v390 = vld [vmem:[%s379 + $0x28] sm:$0xf]
      %v391 = vld [vmem:[%s379 + $0x2c] sm:$0xf]
      %v392 = vld [vmem:[%s379 + $0x30] sm:$0xf]
      %v393 = vld [vmem:[%s379 + $0x34] sm:$0xf]
      %v394 = vld [vmem:[%s379 + $0x38] sm:$0xf]
      %v395 = vld [vmem:[%s379 + $0x3c] sm:$0xf]
      %v433 = vunpack.c.l.b16 %v378
      %v434 = vunpack.c.l.b16 %v326
      %v435 = vunpack.c.l.b16 %v327
      %v436 = vunpack.c.l.b16 %v328
      %v437 = vunpack.c.l.b16 %v329
      %v438 = vunpack.c.l.b16 %v330
      %v439 = vunpack.c.l.b16 %v331
      %v440 = vunpack.c.l.b16 %v332
      %v441 = vunpack.c.l.b16 %v333
      %v442 = vunpack.c.l.b16 %v334
      %v443 = vunpack.c.l.b16 %v335
      %v444 = vunpack.c.l.b16 %v336
      %v445 = vunpack.c.l.b16 %v337
      %v446 = vunpack.c.l.b16 %v338
      %v447 = vunpack.c.l.b16 %v339
      %v448 = vunpack.c.l.b16 %v340
      %v449 = vunpack.c.l.b16 %v341
      %v450 = vunpack.c.l.b16 %v342
      %v451 = vunpack.c.l.b16 %v343
      %v452 = vunpack.c.l.b16 %v344
      %v453 = vunpack.c.l.b16 %v345
      %v454 = vunpack.c.l.b16 %v346
      %v455 = vunpack.c.l.b16 %v347
      %v456 = vunpack.c.l.b16 %v348
      %v457 = vunpack.c.l.b16 %v349
      %v458 = vunpack.c.l.b16 %v350
      %v459 = vunpack.c.l.b16 %v351
      %v460 = vunpack.c.l.b16 %v352
      %v461 = vunpack.c.l.b16 %v353
      %v462 = vunpack.c.l.b16 %v354
      %v463 = vunpack.c.l.b16 %v355
      %v464 = vunpack.c.l.b16 %v356
      %v465 = vunpack.c.l.b16 %v357
      %v466 = vunpack.c.l.b16 %v358
      %v467 = vunpack.c.l.b16 %v359
      %v468 = vunpack.c.l.b16 %v360
      %v469 = vunpack.c.l.b16 %v361
      %v470 = vpack.c.b16 %v434, %v433
      %v471 = vpack.c.b16 %v436, %v435
      %v472 = vpack.c.b16 %v438, %v437
      %v473 = vpack.c.b16 %v440, %v439
      %v474 = vpack.c.b16 %v442, %v441
      %v475 = vpack.c.b16 %v444, %v443
      %v476 = vpack.c.b16 %v446, %v445
      %v477 = vpack.c.b16 %v448, %v447
      %v478 = vpack.c.b16 %v450, %v449
      %v479 = vpack.c.b16 %v452, %v451
      %v480 = vpack.c.b16 %v454, %v453
      %v481 = vpack.c.b16 %v456, %v455
      %v482 = vpack.c.b16 %v458, %v457
      %v483 = vpack.c.b16 %v460, %v459
      %v484 = vpack.c.b16 %v462, %v461
      %v485 = vpack.c.b16 %v464, %v463
      %v486 = vpack.c.b16 %v466, %v465
      %v487 = vpack.c.b16 %v468, %v467
      %v488 = vpack.c.b16 %v469, %v469
      %vm489 = vcmask 1044480
      %v490 = vrot.slane %v470, 3
      %v491 = vrot.slane %v471, 3
      %v492 = vsel %vm489, %v490, %v491
      %v493 = vrot.slane %v472, 3
      %v494 = vsel %vm489, %v491, %v493
      %v495 = vrot.slane %v473, 3
      %v496 = vsel %vm489, %v493, %v495
      %v497 = vrot.slane %v474, 3
      %v498 = vsel %vm489, %v495, %v497
      %v499 = vrot.slane %v475, 3
      %v500 = vsel %vm489, %v497, %v499
      %v501 = vrot.slane %v476, 3
      %v502 = vsel %vm489, %v499, %v501
      %v503 = vrot.slane %v477, 3
      %v504 = vsel %vm489, %v501, %v503
      %v505 = vrot.slane %v478, 3
      %v506 = vsel %vm489, %v503, %v505
      %v507 = vrot.slane %v479, 3
      %v508 = vsel %vm489, %v505, %v507
      %v509 = vrot.slane %v480, 3
      %v510 = vsel %vm489, %v507, %v509
      %v511 = vrot.slane %v481, 3
      %v512 = vsel %vm489, %v509, %v511
      %v513 = vrot.slane %v482, 3
      %v514 = vsel %vm489, %v511, %v513
      %v515 = vrot.slane %v483, 3
      %v516 = vsel %vm489, %v513, %v515
      %v517 = vrot.slane %v484, 3
      %v518 = vsel %vm489, %v515, %v517
      %v519 = vrot.slane %v485, 3
      %v520 = vsel %vm489, %v517, %v519
      %v521 = vrot.slane %v486, 3
      %v522 = vsel %vm489, %v519, %v521
      %v523 = vrot.slane %v487, 3
      %v524 = vsel %vm489, %v521, %v523
      %v525 = vrot.slane %v488, 3
      %v526 = vsel %vm489, %v523, %v525
      %v561 = vunpack.c.l.b16 %v380
      %v562 = vunpack.c.l.b16 %v381
      %v563 = vunpack.c.l.b16 %v382
      %v564 = vunpack.c.l.b16 %v383
      %v565 = vunpack.c.l.b16 %v384
      %v566 = vunpack.c.l.b16 %v385
      %v567 = vunpack.c.l.b16 %v386
      %v568 = vunpack.c.l.b16 %v387
      %v569 = vunpack.c.l.b16 %v388
      %v570 = vunpack.c.l.b16 %v389
      %v571 = vunpack.c.l.b16 %v390
      %v572 = vunpack.c.l.b16 %v391
      %v573 = vunpack.c.l.b16 %v392
      %v574 = vunpack.c.l.b16 %v393
      %v575 = vunpack.c.l.b16 %v394
      %v576 = vunpack.c.l.b16 %v395
      %v577 = vpack.c.b16 %v562, %v561
      %v578 = vpack.c.b16 %v564, %v563
      %v579 = vpack.c.b16 %v566, %v565
      %v580 = vpack.c.b16 %v568, %v567
      %v581 = vpack.c.b16 %v570, %v569
      %v582 = vpack.c.b16 %v572, %v571
      %v583 = vpack.c.b16 %v574, %v573
      %v584 = vpack.c.b16 %v576, %v575
      %593 = vmatprep.subr.bf16.mxu0 0
      %594 = vmatpush1.bf16.msra.mxu0 %v584
      %595 = vmatprep.subr.bf16.mxu0 0
      %596 = vmatpush1.bf16.msra.mxu0 %v583
      %597 = vmatprep.subr.bf16.mxu0 0
      %598 = vmatpush1.bf16.msra.mxu0 %v582
      %599 = vmatprep.subr.bf16.mxu0 0
      %600 = vmatpush1.bf16.msra.mxu0 %v581
      %601 = vmatprep.subr.bf16.mxu0 0
      %602 = vmatpush1.bf16.msra.mxu0 %v580
      %603 = vmatprep.subr.bf16.mxu0 0
      %604 = vmatpush1.bf16.msra.mxu0 %v579
      %605 = vmatprep.subr.bf16.mxu0 0
      %606 = vmatpush1.bf16.msra.mxu0 %v578
      %607 = vmatprep.subr.bf16.mxu0 0
      %608 = vmatpush1.bf16.msra.mxu0 %v577
      %609 = vmatprep.subr.bf16.mxu0 0
      %610 = vmatpush2.bf16.msra.mxu0 0
      %611 = vmatprep.subr.bf16.mxu0 0
      %612 = vmatpush2.bf16.msra.mxu0 0
      %613 = vmatprep.subr.bf16.mxu0 0
      %614 = vmatpush2.bf16.msra.mxu0 0
      %615 = vmatprep.subr.bf16.mxu0 0
      %616 = vmatpush2.bf16.msra.mxu0 0
      %617 = vmatprep.subr.bf16.mxu0 0
      %618 = vmatpush2.bf16.msra.mxu0 0
      %619 = vmatprep.subr.bf16.mxu0 0
      %620 = vmatpush2.bf16.msra.mxu0 0
      %621 = vmatprep.subr.bf16.mxu0 0
      %622 = vmatpush2.bf16.msra.mxu0 0
      %623 = vmatprep.subr.bf16.mxu0 0
      %624 = vmatpush2.bf16.msra.mxu0 0
      %625 = vmatprep.mubr.bf16.mxu0 0
      %626 = vmatmul.mubr.bf16.gmra.mxu0 %v492
      %v627 = vpop.f32.mrf.mxu0
      %v628 = vadd.f32 0.0, %v627
      %v629 = vpop.f32.mrf.mxu0
      %v630 = vpop.f32.mrf.mxu0
      %v631 = vadd.f32 0.0, %v630
      %v632 = vpop.f32.mrf.mxu0
      %633 = vmatprep.mubr.bf16.mxu0 0
      %634 = vmatmul.mubr.bf16.gmra.mxu0 %v494
      %v635 = vpop.f32.mrf.mxu0
      %v636 = vadd.f32 0.0, %v635
      %v637 = vpop.f32.mrf.mxu0
      %v638 = vpop.f32.mrf.mxu0
      %v639 = vadd.f32 0.0, %v638
      %v640 = vpop.f32.mrf.mxu0
      %641 = vmatprep.mubr.bf16.mxu0 0
      %642 = vmatmul.mubr.bf16.gmra.mxu0 %v496
      %v643 = vpop.f32.mrf.mxu0
      %v644 = vadd.f32 0.0, %v643
      %v645 = vpop.f32.mrf.mxu0
      %v646 = vpop.f32.mrf.mxu0
      %v647 = vadd.f32 0.0, %v646
      %v648 = vpop.f32.mrf.mxu0
      %649 = vmatprep.mubr.bf16.mxu0 0
      %650 = vmatmul.mubr.bf16.gmra.mxu0 %v498
      %v651 = vpop.f32.mrf.mxu0
      %v652 = vadd.f32 0.0, %v651
      %v653 = vpop.f32.mrf.mxu0
      %v654 = vpop.f32.mrf.mxu0
      %v655 = vadd.f32 0.0, %v654
      %v656 = vpop.f32.mrf.mxu0
      %657 = vmatprep.mubr.bf16.mxu0 0
      %658 = vmatmul.mubr.bf16.gmra.mxu0 %v500
      %v659 = vpop.f32.mrf.mxu0
      %v660 = vadd.f32 0.0, %v659
      %v661 = vpop.f32.mrf.mxu0
      %v662 = vpop.f32.mrf.mxu0
      %v663 = vadd.f32 0.0, %v662
      %v664 = vpop.f32.mrf.mxu0
      %665 = vmatprep.mubr.bf16.mxu0 0
      %666 = vmatmul.mubr.bf16.gmra.mxu0 %v502
      %v667 = vpop.f32.mrf.mxu0
      %v668 = vadd.f32 0.0, %v667
      %v669 = vpop.f32.mrf.mxu0
      %v670 = vpop.f32.mrf.mxu0
      %v671 = vadd.f32 0.0, %v670
      %v672 = vpop.f32.mrf.mxu0
      %673 = vmatprep.mubr.bf16.mxu0 0
      %674 = vmatmul.mubr.bf16.gmra.mxu0 %v504
      %v675 = vpop.f32.mrf.mxu0
      %v676 = vadd.f32 0.0, %v675
      %v677 = vpop.f32.mrf.mxu0
      %v678 = vpop.f32.mrf.mxu0
      %v679 = vadd.f32 0.0, %v678
      %v680 = vpop.f32.mrf.mxu0
      %681 = vmatprep.mubr.bf16.mxu0 0
      %682 = vmatmul.mubr.bf16.gmra.mxu0 %v506
      %v683 = vpop.f32.mrf.mxu0
      %v684 = vadd.f32 0.0, %v683
      %v685 = vpop.f32.mrf.mxu0
      %v686 = vpop.f32.mrf.mxu0
      %v687 = vadd.f32 0.0, %v686
      %v688 = vpop.f32.mrf.mxu0
      %689 = vmatprep.mubr.bf16.mxu0 0
      %690 = vmatmul.mubr.bf16.gmra.mxu0 %v508
      %v691 = vpop.f32.mrf.mxu0
      %v692 = vadd.f32 0.0, %v691
      %v693 = vpop.f32.mrf.mxu0
      %v694 = vpop.f32.mrf.mxu0
      %v695 = vadd.f32 0.0, %v694
      %v696 = vpop.f32.mrf.mxu0
      %697 = vmatprep.mubr.bf16.mxu0 0
      %698 = vmatmul.mubr.bf16.gmra.mxu0 %v510
      %v699 = vpop.f32.mrf.mxu0
      %v700 = vadd.f32 0.0, %v699
      %v701 = vpop.f32.mrf.mxu0
      %v702 = vpop.f32.mrf.mxu0
      %v703 = vadd.f32 0.0, %v702
      %v704 = vpop.f32.mrf.mxu0
      %705 = vmatprep.mubr.bf16.mxu0 0
      %706 = vmatmul.mubr.bf16.gmra.mxu0 %v512
      %v707 = vpop.f32.mrf.mxu0
      %v708 = vadd.f32 0.0, %v707
      %v709 = vpop.f32.mrf.mxu0
      %v710 = vpop.f32.mrf.mxu0
      %v711 = vadd.f32 0.0, %v710
      %v712 = vpop.f32.mrf.mxu0
      %713 = vmatprep.mubr.bf16.mxu0 0
      %714 = vmatmul.mubr.bf16.gmra.mxu0 %v514
      %v715 = vpop.f32.mrf.mxu0
      %v716 = vadd.f32 0.0, %v715
      %v717 = vpop.f32.mrf.mxu0
      %v718 = vpop.f32.mrf.mxu0
      %v719 = vadd.f32 0.0, %v718
      %v720 = vpop.f32.mrf.mxu0
      %721 = vmatprep.mubr.bf16.mxu0 0
      %722 = vmatmul.mubr.bf16.gmra.mxu0 %v516
      %v723 = vpop.f32.mrf.mxu0
      %v724 = vadd.f32 0.0, %v723
      %v725 = vpop.f32.mrf.mxu0
      %v726 = vpop.f32.mrf.mxu0
      %v727 = vadd.f32 0.0, %v726
      %v728 = vpop.f32.mrf.mxu0
      %729 = vmatprep.mubr.bf16.mxu0 0
      %730 = vmatmul.mubr.bf16.gmra.mxu0 %v518
      %v731 = vpop.f32.mrf.mxu0
      %v732 = vadd.f32 0.0, %v731
      %v733 = vpop.f32.mrf.mxu0
      %v734 = vpop.f32.mrf.mxu0
      %v735 = vadd.f32 0.0, %v734
      %v736 = vpop.f32.mrf.mxu0
      %737 = vmatprep.mubr.bf16.mxu0 0
      %738 = vmatmul.mubr.bf16.gmra.mxu0 %v520
      %v739 = vpop.f32.mrf.mxu0
      %v740 = vadd.f32 0.0, %v739
      %v741 = vpop.f32.mrf.mxu0
      %v742 = vpop.f32.mrf.mxu0
      %v743 = vadd.f32 0.0, %v742
      %v744 = vpop.f32.mrf.mxu0
      %745 = vmatprep.mubr.bf16.mxu0 0
      %746 = vmatmul.mubr.bf16.gmra.mxu0 %v522
      %v747 = vpop.f32.mrf.mxu0
      %v748 = vadd.f32 0.0, %v747
      %v749 = vpop.f32.mrf.mxu0
      %v750 = vpop.f32.mrf.mxu0
      %v751 = vadd.f32 0.0, %v750
      %v752 = vpop.f32.mrf.mxu0
      %753 = vmatprep.mubr.bf16.mxu0 0
      %754 = vmatmul.mubr.bf16.gmra.mxu0 %v524
      %v755 = vpop.f32.mrf.mxu0
      %v756 = vadd.f32 0.0, %v755
      %v757 = vpop.f32.mrf.mxu0
      %v758 = vpop.f32.mrf.mxu0
      %v759 = vadd.f32 0.0, %v758
      %v760 = vpop.f32.mrf.mxu0
      %761 = vmatprep.mubr.bf16.mxu0 0
      %762 = vmatmul.mubr.bf16.gmra.mxu0 %v526
      %v763 = vpop.f32.mrf.mxu0
      %v764 = vadd.f32 0.0, %v763
      %v765 = vpop.f32.mrf.mxu0
      %v766 = vpop.f32.mrf.mxu0
      %v767 = vadd.f32 0.0, %v766
      %v768 = vpop.f32.mrf.mxu0
      %769 = vdwg.mxu0
      %v771 = vunpack.c.l.b16 %v325
      %v772 = vpack.c.b16 %v434, %v771
      %vm773 = vsmask.f32 5376
      %v775 = vshrl.u32 %v772, 16
      %v777 = vrot.slane %v775, 2
      %v778 = vshll.u32 %v772, 16
      %v780 = vrot.slane %v778, 3
      %v781 = vor.u32 %v777, %v780
      %v783 = vshrl.u32 %v471, 16
      %v785 = vrot.slane %v783, 2
      %v786 = vshll.u32 %v471, 16
      %v788 = vrot.slane %v786, 3
      %v789 = vor.u32 %v785, %v788
      %v790 = vsel %vm773, %v781, %v789
      %v792 = vshrl.u32 %v472, 16
      %v794 = vrot.slane %v792, 2
      %v795 = vshll.u32 %v472, 16
      %v797 = vrot.slane %v795, 3
      %v798 = vor.u32 %v794, %v797
      %v799 = vsel %vm773, %v789, %v798
      %v801 = vshrl.u32 %v473, 16
      %v803 = vrot.slane %v801, 2
      %v804 = vshll.u32 %v473, 16
      %v806 = vrot.slane %v804, 3
      %v807 = vor.u32 %v803, %v806
      %v808 = vsel %vm773, %v798, %v807
      %v810 = vshrl.u32 %v474, 16
      %v812 = vrot.slane %v810, 2
      %v813 = vshll.u32 %v474, 16
      %v815 = vrot.slane %v813, 3
      %v816 = vor.u32 %v812, %v815
      %v817 = vsel %vm773, %v807, %v816
      %v819 = vshrl.u32 %v475, 16
      %v821 = vrot.slane %v819, 2
      %v822 = vshll.u32 %v475, 16
      %v824 = vrot.slane %v822, 3
      %v825 = vor.u32 %v821, %v824
      %v826 = vsel %vm773, %v816, %v825
      %v828 = vshrl.u32 %v476, 16
      %v830 = vrot.slane %v828, 2
      %v831 = vshll.u32 %v476, 16
      %v833 = vrot.slane %v831, 3
      %v834 = vor.u32 %v830, %v833
      %v835 = vsel %vm773, %v825, %v834
      %v837 = vshrl.u32 %v477, 16
      %v839 = vrot.slane %v837, 2
      %v840 = vshll.u32 %v477, 16
      %v842 = vrot.slane %v840, 3
      %v843 = vor.u32 %v839, %v842
      %v844 = vsel %vm773, %v834, %v843
      %v846 = vshrl.u32 %v478, 16
      %v848 = vrot.slane %v846, 2
      %v849 = vshll.u32 %v478, 16
      %v851 = vrot.slane %v849, 3
      %v852 = vor.u32 %v848, %v851
      %v853 = vsel %vm773, %v843, %v852
      %v855 = vshrl.u32 %v479, 16
      %v857 = vrot.slane %v855, 2
      %v858 = vshll.u32 %v479, 16
      %v860 = vrot.slane %v858, 3
      %v861 = vor.u32 %v857, %v860
      %v862 = vsel %vm773, %v852, %v861
      %v864 = vshrl.u32 %v480, 16
      %v866 = vrot.slane %v864, 2
      %v867 = vshll.u32 %v480, 16
      %v869 = vrot.slane %v867, 3
      %v870 = vor.u32 %v866, %v869
      %v871 = vsel %vm773, %v861, %v870
      %v873 = vshrl.u32 %v481, 16
      %v875 = vrot.slane %v873, 2
      %v876 = vshll.u32 %v481, 16
      %v878 = vrot.slane %v876, 3
      %v879 = vor.u32 %v875, %v878
      %v880 = vsel %vm773, %v870, %v879
      %v882 = vshrl.u32 %v482, 16
      %v884 = vrot.slane %v882, 2
      %v885 = vshll.u32 %v482, 16
      %v887 = vrot.slane %v885, 3
      %v888 = vor.u32 %v884, %v887
      %v889 = vsel %vm773, %v879, %v888
      %v891 = vshrl.u32 %v483, 16
      %v893 = vrot.slane %v891, 2
      %v894 = vshll.u32 %v483, 16
      %v896 = vrot.slane %v894, 3
      %v897 = vor.u32 %v893, %v896
      %v898 = vsel %vm773, %v888, %v897
      %v900 = vshrl.u32 %v484, 16
      %v902 = vrot.slane %v900, 2
      %v903 = vshll.u32 %v484, 16
      %v905 = vrot.slane %v903, 3
      %v906 = vor.u32 %v902, %v905
      %v907 = vsel %vm773, %v897, %v906
      %v909 = vshrl.u32 %v485, 16
      %v911 = vrot.slane %v909, 2
      %v912 = vshll.u32 %v485, 16
      %v914 = vrot.slane %v912, 3
      %v915 = vor.u32 %v911, %v914
      %v916 = vsel %vm773, %v906, %v915
      %v918 = vshrl.u32 %v486, 16
      %v920 = vrot.slane %v918, 2
      %v921 = vshll.u32 %v486, 16
      %v923 = vrot.slane %v921, 3
      %v924 = vor.u32 %v920, %v923
      %v925 = vsel %vm773, %v915, %v924
      %v927 = vshrl.u32 %v487, 16
      %v929 = vrot.slane %v927, 2
      %v930 = vshll.u32 %v487, 16
      %v932 = vrot.slane %v930, 3
      %v933 = vor.u32 %v929, %v932
      %v934 = vsel %vm773, %v924, %v933
      %v936 = vshrl.u32 %v488, 16
      %v938 = vrot.slane %v936, 2
      %v939 = vshll.u32 %v488, 16
      %v941 = vrot.slane %v939, 3
      %v942 = vor.u32 %v938, %v941
      %v943 = vsel %vm773, %v933, %v942
      %v978 = vunpack.c.l.b16 %v362
      %v979 = vunpack.c.l.b16 %v363
      %v980 = vunpack.c.l.b16 %v364
      %v981 = vunpack.c.l.b16 %v365
      %v982 = vunpack.c.l.b16 %v366
      %v983 = vunpack.c.l.b16 %v367
      %v984 = vunpack.c.l.b16 %v368
      %v985 = vunpack.c.l.b16 %v369
      %v986 = vunpack.c.l.b16 %v370
      %v987 = vunpack.c.l.b16 %v371
      %v988 = vunpack.c.l.b16 %v372
      %v989 = vunpack.c.l.b16 %v373
      %v990 = vunpack.c.l.b16 %v374
      %v991 = vunpack.c.l.b16 %v375
      %v992 = vunpack.c.l.b16 %v376
      %v993 = vunpack.c.l.b16 %v377
      %v994 = vpack.c.b16 %v979, %v978
      %v995 = vpack.c.b16 %v981, %v980
      %v996 = vpack.c.b16 %v983, %v982
      %v997 = vpack.c.b16 %v985, %v984
      %v998 = vpack.c.b16 %v987, %v986
      %v999 = vpack.c.b16 %v989, %v988
      %v1000 = vpack.c.b16 %v991, %v990
      %v1001 = vpack.c.b16 %v993, %v992
      %1010 = vmatprep.subr.bf16.mxu0 0
      %1011 = vmatpush1.bf16.msra.mxu0 %v1001
      %1012 = vmatprep.subr.bf16.mxu0 0
      %1013 = vmatpush1.bf16.msra.mxu0 %v1000
      %1014 = vmatprep.subr.bf16.mxu0 0
      %1015 = vmatpush1.bf16.msra.mxu0 %v999
      %1016 = vmatprep.subr.bf16.mxu0 0
      %1017 = vmatpush1.bf16.msra.mxu0 %v998
      %1018 = vmatprep.subr.bf16.mxu0 0
      %1019 = vmatpush1.bf16.msra.mxu0 %v997
      %1020 = vmatprep.subr.bf16.mxu0 0
      %1021 = vmatpush1.bf16.msra.mxu0 %v996
      %1022 = vmatprep.subr.bf16.mxu0 0
      %1023 = vmatpush1.bf16.msra.mxu0 %v995
      %1024 = vmatprep.subr.bf16.mxu0 0
      %1025 = vmatpush1.bf16.msra.mxu0 %v994
      %1026 = vmatprep.subr.bf16.mxu0 0
      %1027 = vmatpush2.bf16.msra.mxu0 0
      %1028 = vmatprep.subr.bf16.mxu0 0
      %1029 = vmatpush2.bf16.msra.mxu0 0
      %1030 = vmatprep.subr.bf16.mxu0 0
      %1031 = vmatpush2.bf16.msra.mxu0 0
      %1032 = vmatprep.subr.bf16.mxu0 0
      %1033 = vmatpush2.bf16.msra.mxu0 0
      %1034 = vmatprep.subr.bf16.mxu0 0
      %1035 = vmatpush2.bf16.msra.mxu0 0
      %1036 = vmatprep.subr.bf16.mxu0 0
      %1037 = vmatpush2.bf16.msra.mxu0 0
      %1038 = vmatprep.subr.bf16.mxu0 0
      %1039 = vmatpush2.bf16.msra.mxu0 0
      %1040 = vmatprep.subr.bf16.mxu0 0
      %1041 = vmatpush2.bf16.msra.mxu0 0
      %1042 = vmatprep.mubr.bf16.mxu0 0
      %1043 = vmatmul.mubr.bf16.gmra.mxu0 %v790
      %v1044 = vpop.f32.mrf.mxu0
      %v1045 = vadd.f32 %v628, %v1044
      %v1046 = vpop.f32.mrf.mxu0
      %v1047 = vpop.f32.mrf.mxu0
      %v1048 = vadd.f32 %v631, %v1047
      %v1049 = vpop.f32.mrf.mxu0
      %1050 = vmatprep.mubr.bf16.mxu0 0
      %1051 = vmatmul.mubr.bf16.gmra.mxu0 %v799
      %v1052 = vpop.f32.mrf.mxu0
      %v1053 = vadd.f32 %v636, %v1052
      %v1054 = vpop.f32.mrf.mxu0
      %v1055 = vpop.f32.mrf.mxu0
      %v1056 = vadd.f32 %v639, %v1055
      %v1057 = vpop.f32.mrf.mxu0
      %1058 = vmatprep.mubr.bf16.mxu0 0
      %1059 = vmatmul.mubr.bf16.gmra.mxu0 %v808
      %v1060 = vpop.f32.mrf.mxu0
      %v1061 = vadd.f32 %v644, %v1060
      %v1062 = vpop.f32.mrf.mxu0
      %v1063 = vpop.f32.mrf.mxu0
      %v1064 = vadd.f32 %v647, %v1063
      %v1065 = vpop.f32.mrf.mxu0
      %1066 = vmatprep.mubr.bf16.mxu0 0
      %1067 = vmatmul.mubr.bf16.gmra.mxu0 %v817
      %v1068 = vpop.f32.mrf.mxu0
      %v1069 = vadd.f32 %v652, %v1068
      %v1070 = vpop.f32.mrf.mxu0
      %v1071 = vpop.f32.mrf.mxu0
      %v1072 = vadd.f32 %v655, %v1071
      %v1073 = vpop.f32.mrf.mxu0
      %1074 = vmatprep.mubr.bf16.mxu0 0
      %1075 = vmatmul.mubr.bf16.gmra.mxu0 %v826
      %v1076 = vpop.f32.mrf.mxu0
      %v1077 = vadd.f32 %v660, %v1076
      %v1078 = vpop.f32.mrf.mxu0
      %v1079 = vpop.f32.mrf.mxu0
      %v1080 = vadd.f32 %v663, %v1079
      %v1081 = vpop.f32.mrf.mxu0
      %1082 = vmatprep.mubr.bf16.mxu0 0
      %1083 = vmatmul.mubr.bf16.gmra.mxu0 %v835
      %v1084 = vpop.f32.mrf.mxu0
      %v1085 = vadd.f32 %v668, %v1084
      %v1086 = vpop.f32.mrf.mxu0
      %v1087 = vpop.f32.mrf.mxu0
      %v1088 = vadd.f32 %v671, %v1087
      %v1089 = vpop.f32.mrf.mxu0
      %1090 = vmatprep.mubr.bf16.mxu0 0
      %1091 = vmatmul.mubr.bf16.gmra.mxu0 %v844
      %v1092 = vpop.f32.mrf.mxu0
      %v1093 = vadd.f32 %v676, %v1092
      %v1094 = vpop.f32.mrf.mxu0
      %v1095 = vpop.f32.mrf.mxu0
      %v1096 = vadd.f32 %v679, %v1095
      %v1097 = vpop.f32.mrf.mxu0
      %1098 = vmatprep.mubr.bf16.mxu0 0
      %1099 = vmatmul.mubr.bf16.gmra.mxu0 %v853
      %v1100 = vpop.f32.mrf.mxu0
      %v1101 = vadd.f32 %v684, %v1100
      %v1102 = vpop.f32.mrf.mxu0
      %v1103 = vpop.f32.mrf.mxu0
      %v1104 = vadd.f32 %v687, %v1103
      %v1105 = vpop.f32.mrf.mxu0
      %1106 = vmatprep.mubr.bf16.mxu0 0
      %1107 = vmatmul.mubr.bf16.gmra.mxu0 %v862
      %v1108 = vpop.f32.mrf.mxu0
      %v1109 = vadd.f32 %v692, %v1108
      %v1110 = vpop.f32.mrf.mxu0
      %v1111 = vpop.f32.mrf.mxu0
      %v1112 = vadd.f32 %v695, %v1111
      %v1113 = vpop.f32.mrf.mxu0
      %1114 = vmatprep.mubr.bf16.mxu0 0
      %1115 = vmatmul.mubr.bf16.gmra.mxu0 %v871
      %v1116 = vpop.f32.mrf.mxu0
      %v1117 = vadd.f32 %v700, %v1116
      %v1118 = vpop.f32.mrf.mxu0
      %v1119 = vpop.f32.mrf.mxu0
      %v1120 = vadd.f32 %v703, %v1119
      %v1121 = vpop.f32.mrf.mxu0
      %1122 = vmatprep.mubr.bf16.mxu0 0
      %1123 = vmatmul.mubr.bf16.gmra.mxu0 %v880
      %v1124 = vpop.f32.mrf.mxu0
      %v1125 = vadd.f32 %v708, %v1124
      %v1126 = vpop.f32.mrf.mxu0
      %v1127 = vpop.f32.mrf.mxu0
      %v1128 = vadd.f32 %v711, %v1127
      %v1129 = vpop.f32.mrf.mxu0
      %1130 = vmatprep.mubr.bf16.mxu0 0
      %1131 = vmatmul.mubr.bf16.gmra.mxu0 %v889
      %v1132 = vpop.f32.mrf.mxu0
      %v1133 = vadd.f32 %v716, %v1132
      %v1134 = vpop.f32.mrf.mxu0
      %v1135 = vpop.f32.mrf.mxu0
      %v1136 = vadd.f32 %v719, %v1135
      %v1137 = vpop.f32.mrf.mxu0
      %1138 = vmatprep.mubr.bf16.mxu0 0
      %1139 = vmatmul.mubr.bf16.gmra.mxu0 %v898
      %v1140 = vpop.f32.mrf.mxu0
      %v1141 = vadd.f32 %v724, %v1140
      %v1142 = vpop.f32.mrf.mxu0
      %v1143 = vpop.f32.mrf.mxu0
      %v1144 = vadd.f32 %v727, %v1143
      %v1145 = vpop.f32.mrf.mxu0
      %1146 = vmatprep.mubr.bf16.mxu0 0
      %1147 = vmatmul.mubr.bf16.gmra.mxu0 %v907
      %v1148 = vpop.f32.mrf.mxu0
      %v1149 = vadd.f32 %v732, %v1148
      %v1150 = vpop.f32.mrf.mxu0
      %v1151 = vpop.f32.mrf.mxu0
      %v1152 = vadd.f32 %v735, %v1151
      %v1153 = vpop.f32.mrf.mxu0
      %1154 = vmatprep.mubr.bf16.mxu0 0
      %1155 = vmatmul.mubr.bf16.gmra.mxu0 %v916
      %v1156 = vpop.f32.mrf.mxu0
      %v1157 = vadd.f32 %v740, %v1156
      %v1158 = vpop.f32.mrf.mxu0
      %v1159 = vpop.f32.mrf.mxu0
      %v1160 = vadd.f32 %v743, %v1159
      %v1161 = vpop.f32.mrf.mxu0
      %1162 = vmatprep.mubr.bf16.mxu0 0
      %1163 = vmatmul.mubr.bf16.gmra.mxu0 %v925
      %v1164 = vpop.f32.mrf.mxu0
      %v1165 = vadd.f32 %v748, %v1164
      %v1166 = vpop.f32.mrf.mxu0
      %v1167 = vpop.f32.mrf.mxu0
      %v1168 = vadd.f32 %v751, %v1167
      %v1169 = vpop.f32.mrf.mxu0
      %1170 = vmatprep.mubr.bf16.mxu0 0
      %1171 = vmatmul.mubr.bf16.gmra.mxu0 %v934
      %v1172 = vpop.f32.mrf.mxu0
      %v1173 = vadd.f32 %v756, %v1172
      %v1174 = vpop.f32.mrf.mxu0
      %v1175 = vpop.f32.mrf.mxu0
      %v1176 = vadd.f32 %v759, %v1175
      %v1177 = vpop.f32.mrf.mxu0
      %1178 = vmatprep.mubr.bf16.mxu0 0
      %1179 = vmatmul.mubr.bf16.gmra.mxu0 %v943
      %v1180 = vpop.f32.mrf.mxu0
      %v1181 = vadd.f32 %v764, %v1180
      %v1182 = vpop.f32.mrf.mxu0
      %v1183 = vpop.f32.mrf.mxu0
      %v1184 = vadd.f32 %v767, %v1183
      %v1185 = vpop.f32.mrf.mxu0
      %1186 = vdwg.mxu0
      %v1187 = vld [vmem:[%s263 + $0xa8] sm:$0xf]
      %s1188 = scalar_lea.vmem %s272, 128
      %v1189 = vld [vmem:[%s1188] sm:$0xf]
      %v1190 = vld [vmem:[%s1188 + $0x4] sm:$0xf]
      %v1191 = vld [vmem:[%s1188 + $0x8] sm:$0xf]
      %v1192 = vld [vmem:[%s1188 + $0xc] sm:$0xf]
      %v1193 = vld [vmem:[%s1188 + $0x10] sm:$0xf]
      %v1194 = vld [vmem:[%s1188 + $0x14] sm:$0xf]
      %v1195 = vld [vmem:[%s1188 + $0x18] sm:$0xf]
      %v1196 = vld [vmem:[%s1188 + $0x1c] sm:$0xf]
      %v1197 = vld [vmem:[%s1188 + $0x20] sm:$0xf]
      %v1198 = vld [vmem:[%s1188 + $0x24] sm:$0xf]
      %v1199 = vld [vmem:[%s1188 + $0x28] sm:$0xf]
      %v1200 = vld [vmem:[%s1188 + $0x2c] sm:$0xf]
      %v1201 = vld [vmem:[%s1188 + $0x30] sm:$0xf]
      %v1202 = vld [vmem:[%s1188 + $0x34] sm:$0xf]
      %v1203 = vld [vmem:[%s1188 + $0x38] sm:$0xf]
      %v1204 = vld [vmem:[%s1188 + $0x3c] sm:$0xf]
      %v1206 = vunpack.c.l.b16 %v1187
      %v1207 = vpack.c.b16 %v1206, %v1206
      %vm1208 = vsmask.f32 4352
      %v1210 = vshrl.u32 %v470, 16
      %v1212 = vrot.slane %v1210, 3
      %v1213 = vshll.u32 %v470, 16
      %v1215 = vrot.slane %v1213, 4
      %v1216 = vor.u32 %v1212, %v1215
      %v1217 = vrot.slane %v783, 3
      %v1218 = vrot.slane %v786, 4
      %v1219 = vor.u32 %v1217, %v1218
      %v1220 = vsel %vm1208, %v1216, %v1219
      %v1221 = vrot.slane %v792, 3
      %v1222 = vrot.slane %v795, 4
      %v1223 = vor.u32 %v1221, %v1222
      %v1224 = vsel %vm1208, %v1219, %v1223
      %v1225 = vrot.slane %v801, 3
      %v1226 = vrot.slane %v804, 4
      %v1227 = vor.u32 %v1225, %v1226
      %v1228 = vsel %vm1208, %v1223, %v1227
      %v1229 = vrot.slane %v810, 3
      %v1230 = vrot.slane %v813, 4
      %v1231 = vor.u32 %v1229, %v1230
      %v1232 = vsel %vm1208, %v1227, %v1231
      %v1233 = vrot.slane %v819, 3
      %v1234 = vrot.slane %v822, 4
      %v1235 = vor.u32 %v1233, %v1234
      %v1236 = vsel %vm1208, %v1231, %v1235
      %v1237 = vrot.slane %v828, 3
      %v1238 = vrot.slane %v831, 4
      %v1239 = vor.u32 %v1237, %v1238
      %v1240 = vsel %vm1208, %v1235, %v1239
      %v1241 = vrot.slane %v837, 3
      %v1242 = vrot.slane %v840, 4
      %v1243 = vor.u32 %v1241, %v1242
      %v1244 = vsel %vm1208, %v1239, %v1243
      %v1245 = vrot.slane %v846, 3
      %v1246 = vrot.slane %v849, 4
      %v1247 = vor.u32 %v1245, %v1246
      %v1248 = vsel %vm1208, %v1243, %v1247
      %v1249 = vrot.slane %v855, 3
      %v1250 = vrot.slane %v858, 4
      %v1251 = vor.u32 %v1249, %v1250
      %v1252 = vsel %vm1208, %v1247, %v1251
      %v1253 = vrot.slane %v864, 3
      %v1254 = vrot.slane %v867, 4
      %v1255 = vor.u32 %v1253, %v1254
      %v1256 = vsel %vm1208, %v1251, %v1255
      %v1257 = vrot.slane %v873, 3
      %v1258 = vrot.slane %v876, 4
      %v1259 = vor.u32 %v1257, %v1258
      %v1260 = vsel %vm1208, %v1255, %v1259
      %v1261 = vrot.slane %v882, 3
      %v1262 = vrot.slane %v885, 4
      %v1263 = vor.u32 %v1261, %v1262
      %v1264 = vsel %vm1208, %v1259, %v1263
      %v1265 = vrot.slane %v891, 3
      %v1266 = vrot.slane %v894, 4
      %v1267 = vor.u32 %v1265, %v1266
      %v1268 = vsel %vm1208, %v1263, %v1267
      %v1269 = vrot.slane %v900, 3
      %v1270 = vrot.slane %v903, 4
      %v1271 = vor.u32 %v1269, %v1270
      %v1272 = vsel %vm1208, %v1267, %v1271
      %v1273 = vrot.slane %v909, 3
      %v1274 = vrot.slane %v912, 4
      %v1275 = vor.u32 %v1273, %v1274
      %v1276 = vsel %vm1208, %v1271, %v1275
      %v1277 = vrot.slane %v918, 3
      %v1278 = vrot.slane %v921, 4
      %v1279 = vor.u32 %v1277, %v1278
      %v1280 = vsel %vm1208, %v1275, %v1279
      %v1281 = vrot.slane %v927, 3
      %v1282 = vrot.slane %v930, 4
      %v1283 = vor.u32 %v1281, %v1282
      %v1284 = vsel %vm1208, %v1279, %v1283
      %v1286 = vshrl.u32 %v1207, 16
      %v1288 = vrot.slane %v1286, 3
      %v1289 = vshll.u32 %v1207, 16
      %v1291 = vrot.slane %v1289, 4
      %v1292 = vor.u32 %v1288, %v1291
      %v1293 = vsel %vm1208, %v1283, %v1292
      %v1328 = vunpack.c.l.b16 %v1189
      %v1329 = vunpack.c.l.b16 %v1190
      %v1330 = vunpack.c.l.b16 %v1191
      %v1331 = vunpack.c.l.b16 %v1192
      %v1332 = vunpack.c.l.b16 %v1193
      %v1333 = vunpack.c.l.b16 %v1194
      %v1334 = vunpack.c.l.b16 %v1195
      %v1335 = vunpack.c.l.b16 %v1196
      %v1336 = vunpack.c.l.b16 %v1197
      %v1337 = vunpack.c.l.b16 %v1198
      %v1338 = vunpack.c.l.b16 %v1199
      %v1339 = vunpack.c.l.b16 %v1200
      %v1340 = vunpack.c.l.b16 %v1201
      %v1341 = vunpack.c.l.b16 %v1202
      %v1342 = vunpack.c.l.b16 %v1203
      %v1343 = vunpack.c.l.b16 %v1204
      %v1344 = vpack.c.b16 %v1329, %v1328
      %v1345 = vpack.c.b16 %v1331, %v1330
      %v1346 = vpack.c.b16 %v1333, %v1332
      %v1347 = vpack.c.b16 %v1335, %v1334
      %v1348 = vpack.c.b16 %v1337, %v1336
      %v1349 = vpack.c.b16 %v1339, %v1338
      %v1350 = vpack.c.b16 %v1341, %v1340
      %v1351 = vpack.c.b16 %v1343, %v1342
      %1360 = vmatprep.subr.bf16.mxu0 0
      %1361 = vmatpush1.bf16.msra.mxu0 %v1351
      %1362 = vmatprep.subr.bf16.mxu0 0
      %1363 = vmatpush1.bf16.msra.mxu0 %v1350
      %1364 = vmatprep.subr.bf16.mxu0 0
      %1365 = vmatpush1.bf16.msra.mxu0 %v1349
      %1366 = vmatprep.subr.bf16.mxu0 0
      %1367 = vmatpush1.bf16.msra.mxu0 %v1348
      %1368 = vmatprep.subr.bf16.mxu0 0
      %1369 = vmatpush1.bf16.msra.mxu0 %v1347
      %1370 = vmatprep.subr.bf16.mxu0 0
      %1371 = vmatpush1.bf16.msra.mxu0 %v1346
      %1372 = vmatprep.subr.bf16.mxu0 0
      %1373 = vmatpush1.bf16.msra.mxu0 %v1345
      %1374 = vmatprep.subr.bf16.mxu0 0
      %1375 = vmatpush1.bf16.msra.mxu0 %v1344
      %1376 = vmatprep.subr.bf16.mxu0 0
      %1377 = vmatpush2.bf16.msra.mxu0 0
      %1378 = vmatprep.subr.bf16.mxu0 0
      %1379 = vmatpush2.bf16.msra.mxu0 0
      %1380 = vmatprep.subr.bf16.mxu0 0
      %1381 = vmatpush2.bf16.msra.mxu0 0
      %1382 = vmatprep.subr.bf16.mxu0 0
      %1383 = vmatpush2.bf16.msra.mxu0 0
      %1384 = vmatprep.subr.bf16.mxu0 0
      %1385 = vmatpush2.bf16.msra.mxu0 0
      %1386 = vmatprep.subr.bf16.mxu0 0
      %1387 = vmatpush2.bf16.msra.mxu0 0
      %1388 = vmatprep.subr.bf16.mxu0 0
      %1389 = vmatpush2.bf16.msra.mxu0 0
      %1390 = vmatprep.subr.bf16.mxu0 0
      %1391 = vmatpush2.bf16.msra.mxu0 0
      %1392 = vmatprep.mubr.bf16.mxu0 0
      %1393 = vmatmul.mubr.bf16.gmra.mxu0 %v1220
      %v1394 = vpop.f32.mrf.mxu0
      %v1395 = vadd.f32 0.0, %v1394
      %v1396 = vpop.f32.mrf.mxu0
      %v1397 = vpop.f32.mrf.mxu0
      %v1398 = vadd.f32 0.0, %v1397
      %v1399 = vpop.f32.mrf.mxu0
      %1400 = vmatprep.mubr.bf16.mxu0 0
      %1401 = vmatmul.mubr.bf16.gmra.mxu0 %v1224
      %v1402 = vpop.f32.mrf.mxu0
      %v1403 = vadd.f32 0.0, %v1402
      %v1404 = vpop.f32.mrf.mxu0
      %v1405 = vpop.f32.mrf.mxu0
      %v1406 = vadd.f32 0.0, %v1405
      %v1407 = vpop.f32.mrf.mxu0
      %1408 = vmatprep.mubr.bf16.mxu0 0
      %1409 = vmatmul.mubr.bf16.gmra.mxu0 %v1228
      %v1410 = vpop.f32.mrf.mxu0
      %v1411 = vadd.f32 0.0, %v1410
      %v1412 = vpop.f32.mrf.mxu0
      %v1413 = vpop.f32.mrf.mxu0
      %v1414 = vadd.f32 0.0, %v1413
      %v1415 = vpop.f32.mrf.mxu0
      %1416 = vmatprep.mubr.bf16.mxu0 0
      %1417 = vmatmul.mubr.bf16.gmra.mxu0 %v1232
      %v1418 = vpop.f32.mrf.mxu0
      %v1419 = vadd.f32 0.0, %v1418
      %v1420 = vpop.f32.mrf.mxu0
      %v1421 = vpop.f32.mrf.mxu0
      %v1422 = vadd.f32 0.0, %v1421
      %v1423 = vpop.f32.mrf.mxu0
      %1424 = vmatprep.mubr.bf16.mxu0 0
      %1425 = vmatmul.mubr.bf16.gmra.mxu0 %v1236
      %v1426 = vpop.f32.mrf.mxu0
      %v1427 = vadd.f32 0.0, %v1426
      %v1428 = vpop.f32.mrf.mxu0
      %v1429 = vpop.f32.mrf.mxu0
      %v1430 = vadd.f32 0.0, %v1429
      %v1431 = vpop.f32.mrf.mxu0
      %1432 = vmatprep.mubr.bf16.mxu0 0
      %1433 = vmatmul.mubr.bf16.gmra.mxu0 %v1240
      %v1434 = vpop.f32.mrf.mxu0
      %v1435 = vadd.f32 0.0, %v1434
      %v1436 = vpop.f32.mrf.mxu0
      %v1437 = vpop.f32.mrf.mxu0
      %v1438 = vadd.f32 0.0, %v1437
      %v1439 = vpop.f32.mrf.mxu0
      %1440 = vmatprep.mubr.bf16.mxu0 0
      %1441 = vmatmul.mubr.bf16.gmra.mxu0 %v1244
      %v1442 = vpop.f32.mrf.mxu0
      %v1443 = vadd.f32 0.0, %v1442
      %v1444 = vpop.f32.mrf.mxu0
      %v1445 = vpop.f32.mrf.mxu0
      %v1446 = vadd.f32 0.0, %v1445
      %v1447 = vpop.f32.mrf.mxu0
      %1448 = vmatprep.mubr.bf16.mxu0 0
      %1449 = vmatmul.mubr.bf16.gmra.mxu0 %v1248
      %v1450 = vpop.f32.mrf.mxu0
      %v1451 = vadd.f32 0.0, %v1450
      %v1452 = vpop.f32.mrf.mxu0
      %v1453 = vpop.f32.mrf.mxu0
      %v1454 = vadd.f32 0.0, %v1453
      %v1455 = vpop.f32.mrf.mxu0
      %1456 = vmatprep.mubr.bf16.mxu0 0
      %1457 = vmatmul.mubr.bf16.gmra.mxu0 %v1252
      %v1458 = vpop.f32.mrf.mxu0
      %v1459 = vadd.f32 0.0, %v1458
      %v1460 = vpop.f32.mrf.mxu0
      %v1461 = vpop.f32.mrf.mxu0
      %v1462 = vadd.f32 0.0, %v1461
      %v1463 = vpop.f32.mrf.mxu0
      %1464 = vmatprep.mubr.bf16.mxu0 0
      %1465 = vmatmul.mubr.bf16.gmra.mxu0 %v1256
      %v1466 = vpop.f32.mrf.mxu0
      %v1467 = vadd.f32 0.0, %v1466
      %v1468 = vpop.f32.mrf.mxu0
      %v1469 = vpop.f32.mrf.mxu0
      %v1470 = vadd.f32 0.0, %v1469
      %v1471 = vpop.f32.mrf.mxu0
      %1472 = vmatprep.mubr.bf16.mxu0 0
      %1473 = vmatmul.mubr.bf16.gmra.mxu0 %v1260
      %v1474 = vpop.f32.mrf.mxu0
      %v1475 = vadd.f32 0.0, %v1474
      %v1476 = vpop.f32.mrf.mxu0
      %v1477 = vpop.f32.mrf.mxu0
      %v1478 = vadd.f32 0.0, %v1477
      %v1479 = vpop.f32.mrf.mxu0
      %1480 = vmatprep.mubr.bf16.mxu0 0
      %1481 = vmatmul.mubr.bf16.gmra.mxu0 %v1264
      %v1482 = vpop.f32.mrf.mxu0
      %v1483 = vadd.f32 0.0, %v1482
      %v1484 = vpop.f32.mrf.mxu0
      %v1485 = vpop.f32.mrf.mxu0
      %v1486 = vadd.f32 0.0, %v1485
      %v1487 = vpop.f32.mrf.mxu0
      %1488 = vmatprep.mubr.bf16.mxu0 0
      %1489 = vmatmul.mubr.bf16.gmra.mxu0 %v1268
      %v1490 = vpop.f32.mrf.mxu0
      %v1491 = vadd.f32 0.0, %v1490
      %v1492 = vpop.f32.mrf.mxu0
      %v1493 = vpop.f32.mrf.mxu0
      %v1494 = vadd.f32 0.0, %v1493
      %v1495 = vpop.f32.mrf.mxu0
      %1496 = vmatprep.mubr.bf16.mxu0 0
      %1497 = vmatmul.mubr.bf16.gmra.mxu0 %v1272
      %v1498 = vpop.f32.mrf.mxu0
      %v1499 = vadd.f32 0.0, %v1498
      %v1500 = vpop.f32.mrf.mxu0
      %v1501 = vpop.f32.mrf.mxu0
      %v1502 = vadd.f32 0.0, %v1501
      %v1503 = vpop.f32.mrf.mxu0
      %1504 = vmatprep.mubr.bf16.mxu0 0
      %1505 = vmatmul.mubr.bf16.gmra.mxu0 %v1276
      %v1506 = vpop.f32.mrf.mxu0
      %v1507 = vadd.f32 0.0, %v1506
      %v1508 = vpop.f32.mrf.mxu0
      %v1509 = vpop.f32.mrf.mxu0
      %v1510 = vadd.f32 0.0, %v1509
      %v1511 = vpop.f32.mrf.mxu0
      %1512 = vmatprep.mubr.bf16.mxu0 0
      %1513 = vmatmul.mubr.bf16.gmra.mxu0 %v1280
      %v1514 = vpop.f32.mrf.mxu0
      %v1515 = vadd.f32 0.0, %v1514
      %v1516 = vpop.f32.mrf.mxu0
      %v1517 = vpop.f32.mrf.mxu0
      %v1518 = vadd.f32 0.0, %v1517
      %v1519 = vpop.f32.mrf.mxu0
      %1520 = vmatprep.mubr.bf16.mxu0 0
      %1521 = vmatmul.mubr.bf16.gmra.mxu0 %v1284
      %v1522 = vpop.f32.mrf.mxu0
      %v1523 = vadd.f32 0.0, %v1522
      %v1524 = vpop.f32.mrf.mxu0
      %v1525 = vpop.f32.mrf.mxu0
      %v1526 = vadd.f32 0.0, %v1525
      %v1527 = vpop.f32.mrf.mxu0
      %1528 = vmatprep.mubr.bf16.mxu0 0
      %1529 = vmatmul.mubr.bf16.gmra.mxu0 %v1293
      %v1530 = vpop.f32.mrf.mxu0
      %v1531 = vadd.f32 0.0, %v1530
      %v1532 = vpop.f32.mrf.mxu0
      %v1533 = vpop.f32.mrf.mxu0
      %v1534 = vadd.f32 0.0, %v1533
      %v1535 = vpop.f32.mrf.mxu0
      %1536 = vdwg.mxu0
      %v1537 = vadd.f32 %v1045, %v1395
      %v1538 = vadd.f32 %v1048, %v1398
      %v1539 = vadd.f32 %v1053, %v1403
      %v1540 = vadd.f32 %v1056, %v1406
      %v1541 = vadd.f32 %v1061, %v1411
      %v1542 = vadd.f32 %v1064, %v1414
      %v1543 = vadd.f32 %v1069, %v1419
      %v1544 = vadd.f32 %v1072, %v1422
      %v1545 = vadd.f32 %v1077, %v1427
      %v1546 = vadd.f32 %v1080, %v1430
      %v1547 = vadd.f32 %v1085, %v1435
      %v1548 = vadd.f32 %v1088, %v1438
      %v1549 = vadd.f32 %v1093, %v1443
      %v1550 = vadd.f32 %v1096, %v1446
      %v1551 = vadd.f32 %v1101, %v1451
      %v1552 = vadd.f32 %v1104, %v1454
      %v1553 = vadd.f32 %v1109, %v1459
      %v1554 = vadd.f32 %v1112, %v1462
      %v1555 = vadd.f32 %v1117, %v1467
      %v1556 = vadd.f32 %v1120, %v1470
      %v1557 = vadd.f32 %v1125, %v1475
      %v1558 = vadd.f32 %v1128, %v1478
      %v1559 = vadd.f32 %v1133, %v1483
      %v1560 = vadd.f32 %v1136, %v1486
      %v1561 = vadd.f32 %v1141, %v1491
      %v1562 = vadd.f32 %v1144, %v1494
      %v1563 = vadd.f32 %v1149, %v1499
      %v1564 = vadd.f32 %v1152, %v1502
      %v1565 = vadd.f32 %v1157, %v1507
      %v1566 = vadd.f32 %v1160, %v1510
      %v1567 = vadd.f32 %v1165, %v1515
      %v1568 = vadd.f32 %v1168, %v1518
      %v1569 = vadd.f32 %v1173, %v1523
      %v1570 = vadd.f32 %v1176, %v1526
      %v1571 = vadd.f32 %v1181, %v1531
      %v1572 = vadd.f32 %v1184, %v1534
      %v1573 = vld [vmem:[%s263 + $0x20] sm:$0x8]
      %v1574 = vld [vmem:[%s263 + $0x24] sm:$0xf]
      %v1575 = vld [vmem:[%s263 + $0x28] sm:$0xf]
      %v1576 = vld [vmem:[%s263 + $0x2c] sm:$0xf]
      %v1577 = vld [vmem:[%s263 + $0x30] sm:$0xf]
      %v1578 = vld [vmem:[%s263 + $0x34] sm:$0xf]
      %v1579 = vld [vmem:[%s263 + $0x38] sm:$0xf]
      %v1580 = vld [vmem:[%s263 + $0x3c] sm:$0xf]
      %v1581 = vld [vmem:[%s263 + $0x40] sm:$0xf]
      %v1582 = vld [vmem:[%s263 + $0x44] sm:$0xf]
      %v1583 = vld [vmem:[%s263 + $0x48] sm:$0xf]
      %v1584 = vld [vmem:[%s263 + $0x4c] sm:$0xf]
      %v1585 = vld [vmem:[%s263 + $0x50] sm:$0xf]
      %v1586 = vld [vmem:[%s263 + $0x54] sm:$0xf]
      %v1587 = vld [vmem:[%s263 + $0x58] sm:$0xf]
      %v1588 = vld [vmem:[%s263 + $0x5c] sm:$0xf]
      %v1589 = vld [vmem:[%s263 + $0x60] sm:$0xf]
      %v1590 = vld [vmem:[%s263 + $0x64] sm:$0xf]
      %v1591 = vld [vmem:[%s263 + $0x68] sm:$0xf]
      %v1592 = vld [vmem:[%s263 + $0x6c] sm:$0xf]
      %v1593 = vld [vmem:[%s263 + $0x70] sm:$0xf]
      %v1594 = vld [vmem:[%s263 + $0x74] sm:$0xf]
      %v1595 = vld [vmem:[%s263 + $0x78] sm:$0xf]
      %v1596 = vld [vmem:[%s263 + $0x7c] sm:$0xf]
      %v1597 = vld [vmem:[%s263 + $0x80] sm:$0xf]
      %v1598 = vld [vmem:[%s263 + $0x84] sm:$0xf]
      %v1599 = vld [vmem:[%s263 + $0x88] sm:$0xf]
      %v1600 = vld [vmem:[%s263 + $0x8c] sm:$0xf]
      %v1601 = vld [vmem:[%s263 + $0x90] sm:$0xf]
      %v1602 = vld [vmem:[%s263 + $0x94] sm:$0xf]
      %v1603 = vld [vmem:[%s263 + $0x98] sm:$0xf]
      %v1604 = vld [vmem:[%s263 + $0x9c] sm:$0xf]
      %v1605 = vld [vmem:[%s263 + $0xa0] sm:$0xf]
      %v1606 = vld [vmem:[%s263 + $0xa4] sm:$0xf]
      %v1607 = vld [vmem:[%s263 + $0xa8] sm:$0xf]
      %v1608 = vld [vmem:[%s263 + $0xac] sm:$0xf]
      %v1609 = vld [vmem:[%s263 + $0xb0] sm:$0xf]
      %s1610 = scalar_lea.vmem %s272, 192
      %v1611 = vld [vmem:[%s1610] sm:$0xf]
      %v1612 = vld [vmem:[%s1610 + $0x4] sm:$0xf]
      %v1613 = vld [vmem:[%s1610 + $0x8] sm:$0xf]
      %v1614 = vld [vmem:[%s1610 + $0xc] sm:$0xf]
      %v1615 = vld [vmem:[%s1610 + $0x10] sm:$0xf]
      %v1616 = vld [vmem:[%s1610 + $0x14] sm:$0xf]
      %v1617 = vld [vmem:[%s1610 + $0x18] sm:$0xf]
      %v1618 = vld [vmem:[%s1610 + $0x1c] sm:$0xf]
      %v1619 = vld [vmem:[%s1610 + $0x20] sm:$0xf]
      %v1620 = vld [vmem:[%s1610 + $0x24] sm:$0xf]
      %v1621 = vld [vmem:[%s1610 + $0x28] sm:$0xf]
      %v1622 = vld [vmem:[%s1610 + $0x2c] sm:$0xf]
      %v1623 = vld [vmem:[%s1610 + $0x30] sm:$0xf]
      %v1624 = vld [vmem:[%s1610 + $0x34] sm:$0xf]
      %v1625 = vld [vmem:[%s1610 + $0x38] sm:$0xf]
      %v1626 = vld [vmem:[%s1610 + $0x3c] sm:$0xf]
      %v1664 = vunpack.c.l.b16 %v1573
      %v1665 = vunpack.c.l.b16 %v1574
      %v1666 = vunpack.c.l.b16 %v1575
      %v1667 = vunpack.c.l.b16 %v1576
      %v1668 = vunpack.c.l.b16 %v1577
      %v1669 = vunpack.c.l.b16 %v1578
      %v1670 = vunpack.c.l.b16 %v1579
      %v1671 = vunpack.c.l.b16 %v1580
      %v1672 = vunpack.c.l.b16 %v1581
      %v1673 = vunpack.c.l.b16 %v1582
      %v1674 = vunpack.c.l.b16 %v1583
      %v1675 = vunpack.c.l.b16 %v1584
      %v1676 = vunpack.c.l.b16 %v1585
      %v1677 = vunpack.c.l.b16 %v1586
      %v1678 = vunpack.c.l.b16 %v1587
      %v1679 = vunpack.c.l.b16 %v1588
      %v1680 = vunpack.c.l.b16 %v1589
      %v1681 = vunpack.c.l.b16 %v1590
      %v1682 = vunpack.c.l.b16 %v1591
      %v1683 = vunpack.c.l.b16 %v1592
      %v1684 = vunpack.c.l.b16 %v1593
      %v1685 = vunpack.c.l.b16 %v1594
      %v1686 = vunpack.c.l.b16 %v1595
      %v1687 = vunpack.c.l.b16 %v1596
      %v1688 = vunpack.c.l.b16 %v1597
      %v1689 = vunpack.c.l.b16 %v1598
      %v1690 = vunpack.c.l.b16 %v1599
      %v1691 = vunpack.c.l.b16 %v1600
      %v1692 = vunpack.c.l.b16 %v1601
      %v1693 = vunpack.c.l.b16 %v1602
      %v1694 = vunpack.c.l.b16 %v1603
      %v1695 = vunpack.c.l.b16 %v1604
      %v1696 = vunpack.c.l.b16 %v1605
      %v1697 = vunpack.c.l.b16 %v1606
      %v1698 = vunpack.c.l.b16 %v1607
      %v1699 = vunpack.c.l.b16 %v1608
      %v1700 = vunpack.c.l.b16 %v1609
      %v1701 = vpack.c.b16 %v1665, %v1664
      %v1702 = vpack.c.b16 %v1667, %v1666
      %v1703 = vpack.c.b16 %v1669, %v1668
      %v1704 = vpack.c.b16 %v1671, %v1670
      %v1705 = vpack.c.b16 %v1673, %v1672
      %v1706 = vpack.c.b16 %v1675, %v1674
      %v1707 = vpack.c.b16 %v1677, %v1676
      %v1708 = vpack.c.b16 %v1679, %v1678
      %v1709 = vpack.c.b16 %v1681, %v1680
      %v1710 = vpack.c.b16 %v1683, %v1682
      %v1711 = vpack.c.b16 %v1685, %v1684
      %v1712 = vpack.c.b16 %v1687, %v1686
      %v1713 = vpack.c.b16 %v1689, %v1688
      %v1714 = vpack.c.b16 %v1691, %v1690
      %v1715 = vpack.c.b16 %v1693, %v1692
      %v1716 = vpack.c.b16 %v1695, %v1694
      %v1717 = vpack.c.b16 %v1697, %v1696
      %v1718 = vpack.c.b16 %v1699, %v1698
      %v1719 = vpack.c.b16 %v1700, %v1700
      %v1721 = vshrl.u32 %v1701, 16
      %v1723 = vrot.slane %v1721, 3
      %v1724 = vshll.u32 %v1701, 16
      %v1726 = vrot.slane %v1724, 4
      %v1727 = vor.u32 %v1723, %v1726
      %v1729 = vshrl.u32 %v1702, 16
      %v1731 = vrot.slane %v1729, 3
      %v1732 = vshll.u32 %v1702, 16
      %v1734 = vrot.slane %v1732, 4
      %v1735 = vor.u32 %v1731, %v1734
      %v1736 = vsel %vm1208, %v1727, %v1735
      %v1738 = vshrl.u32 %v1703, 16
      %v1740 = vrot.slane %v1738, 3
      %v1741 = vshll.u32 %v1703, 16
      %v1743 = vrot.slane %v1741, 4
      %v1744 = vor.u32 %v1740, %v1743
      %v1745 = vsel %vm1208, %v1735, %v1744
      %v1747 = vshrl.u32 %v1704, 16
      %v1749 = vrot.slane %v1747, 3
      %v1750 = vshll.u32 %v1704, 16
      %v1752 = vrot.slane %v1750, 4
      %v1753 = vor.u32 %v1749, %v1752
      %v1754 = vsel %vm1208, %v1744, %v1753
      %v1756 = vshrl.u32 %v1705, 16
      %v1758 = vrot.slane %v1756, 3
      %v1759 = vshll.u32 %v1705, 16
      %v1761 = vrot.slane %v1759, 4
      %v1762 = vor.u32 %v1758, %v1761
      %v1763 = vsel %vm1208, %v1753, %v1762
      %v1765 = vshrl.u32 %v1706, 16
      %v1767 = vrot.slane %v1765, 3
      %v1768 = vshll.u32 %v1706, 16
      %v1770 = vrot.slane %v1768, 4
      %v1771 = vor.u32 %v1767, %v1770
      %v1772 = vsel %vm1208, %v1762, %v1771
      %v1774 = vshrl.u32 %v1707, 16
      %v1776 = vrot.slane %v1774, 3
      %v1777 = vshll.u32 %v1707, 16
      %v1779 = vrot.slane %v1777, 4
      %v1780 = vor.u32 %v1776, %v1779
      %v1781 = vsel %vm1208, %v1771, %v1780
      %v1783 = vshrl.u32 %v1708, 16
      %v1785 = vrot.slane %v1783, 3
      %v1786 = vshll.u32 %v1708, 16
      %v1788 = vrot.slane %v1786, 4
      %v1789 = vor.u32 %v1785, %v1788
      %v1790 = vsel %vm1208, %v1780, %v1789
      %v1792 = vshrl.u32 %v1709, 16
      %v1794 = vrot.slane %v1792, 3
      %v1795 = vshll.u32 %v1709, 16
      %v1797 = vrot.slane %v1795, 4
      %v1798 = vor.u32 %v1794, %v1797
      %v1799 = vsel %vm1208, %v1789, %v1798
      %v1801 = vshrl.u32 %v1710, 16
      %v1803 = vrot.slane %v1801, 3
      %v1804 = vshll.u32 %v1710, 16
      %v1806 = vrot.slane %v1804, 4
      %v1807 = vor.u32 %v1803, %v1806
      %v1808 = vsel %vm1208, %v1798, %v1807
      %v1810 = vshrl.u32 %v1711, 16
      %v1812 = vrot.slane %v1810, 3
      %v1813 = vshll.u32 %v1711, 16
      %v1815 = vrot.slane %v1813, 4
      %v1816 = vor.u32 %v1812, %v1815
      %v1817 = vsel %vm1208, %v1807, %v1816
      %v1819 = vshrl.u32 %v1712, 16
      %v1821 = vrot.slane %v1819, 3
      %v1822 = vshll.u32 %v1712, 16
      %v1824 = vrot.slane %v1822, 4
      %v1825 = vor.u32 %v1821, %v1824
      %v1826 = vsel %vm1208, %v1816, %v1825
      %v1828 = vshrl.u32 %v1713, 16
      %v1830 = vrot.slane %v1828, 3
      %v1831 = vshll.u32 %v1713, 16
      %v1833 = vrot.slane %v1831, 4
      %v1834 = vor.u32 %v1830, %v1833
      %v1835 = vsel %vm1208, %v1825, %v1834
      %v1837 = vshrl.u32 %v1714, 16
      %v1839 = vrot.slane %v1837, 3
      %v1840 = vshll.u32 %v1714, 16
      %v1842 = vrot.slane %v1840, 4
      %v1843 = vor.u32 %v1839, %v1842
      %v1844 = vsel %vm1208, %v1834, %v1843
      %v1846 = vshrl.u32 %v1715, 16
      %v1848 = vrot.slane %v1846, 3
      %v1849 = vshll.u32 %v1715, 16
      %v1851 = vrot.slane %v1849, 4
      %v1852 = vor.u32 %v1848, %v1851
      %v1853 = vsel %vm1208, %v1843, %v1852
      %v1855 = vshrl.u32 %v1716, 16
      %v1857 = vrot.slane %v1855, 3
      %v1858 = vshll.u32 %v1716, 16
      %v1860 = vrot.slane %v1858, 4
      %v1861 = vor.u32 %v1857, %v1860
      %v1862 = vsel %vm1208, %v1852, %v1861
      %v1864 = vshrl.u32 %v1717, 16
      %v1866 = vrot.slane %v1864, 3
      %v1867 = vshll.u32 %v1717, 16
      %v1869 = vrot.slane %v1867, 4
      %v1870 = vor.u32 %v1866, %v1869
      %v1871 = vsel %vm1208, %v1861, %v1870
      %v1873 = vshrl.u32 %v1718, 16
      %v1875 = vrot.slane %v1873, 3
      %v1876 = vshll.u32 %v1718, 16
      %v1878 = vrot.slane %v1876, 4
      %v1879 = vor.u32 %v1875, %v1878
      %v1880 = vsel %vm1208, %v1870, %v1879
      %v1882 = vshrl.u32 %v1719, 16
      %v1884 = vrot.slane %v1882, 3
      %v1885 = vshll.u32 %v1719, 16
      %v1887 = vrot.slane %v1885, 4
      %v1888 = vor.u32 %v1884, %v1887
      %v1889 = vsel %vm1208, %v1879, %v1888
      %v1924 = vunpack.c.l.b16 %v1611
      %v1925 = vunpack.c.l.b16 %v1612
      %v1926 = vunpack.c.l.b16 %v1613
      %v1927 = vunpack.c.l.b16 %v1614
      %v1928 = vunpack.c.l.b16 %v1615
      %v1929 = vunpack.c.l.b16 %v1616
      %v1930 = vunpack.c.l.b16 %v1617
      %v1931 = vunpack.c.l.b16 %v1618
      %v1932 = vunpack.c.l.b16 %v1619
      %v1933 = vunpack.c.l.b16 %v1620
      %v1934 = vunpack.c.l.b16 %v1621
      %v1935 = vunpack.c.l.b16 %v1622
      %v1936 = vunpack.c.l.b16 %v1623
      %v1937 = vunpack.c.l.b16 %v1624
      %v1938 = vunpack.c.l.b16 %v1625
      %v1939 = vunpack.c.l.b16 %v1626
      %v1940 = vpack.c.b16 %v1925, %v1924
      %v1941 = vpack.c.b16 %v1927, %v1926
      %v1942 = vpack.c.b16 %v1929, %v1928
      %v1943 = vpack.c.b16 %v1931, %v1930
      %v1944 = vpack.c.b16 %v1933, %v1932
      %v1945 = vpack.c.b16 %v1935, %v1934
      %v1946 = vpack.c.b16 %v1937, %v1936
      %v1947 = vpack.c.b16 %v1939, %v1938
      %1956 = vmatprep.subr.bf16.mxu0 0
      %1957 = vmatpush1.bf16.msra.mxu0 %v1947
      %1958 = vmatprep.subr.bf16.mxu0 0
      %1959 = vmatpush1.bf16.msra.mxu0 %v1946
      %1960 = vmatprep.subr.bf16.mxu0 0
      %1961 = vmatpush1.bf16.msra.mxu0 %v1945
      %1962 = vmatprep.subr.bf16.mxu0 0
      %1963 = vmatpush1.bf16.msra.mxu0 %v1944
      %1964 = vmatprep.subr.bf16.mxu0 0
      %1965 = vmatpush1.bf16.msra.mxu0 %v1943
      %1966 = vmatprep.subr.bf16.mxu0 0
      %1967 = vmatpush1.bf16.msra.mxu0 %v1942
      %1968 = vmatprep.subr.bf16.mxu0 0
      %1969 = vmatpush1.bf16.msra.mxu0 %v1941
      %1970 = vmatprep.subr.bf16.mxu0 0
      %1971 = vmatpush1.bf16.msra.mxu0 %v1940
      %1972 = vmatprep.subr.bf16.mxu0 0
      %1973 = vmatpush2.bf16.msra.mxu0 0
      %1974 = vmatprep.subr.bf16.mxu0 0
      %1975 = vmatpush2.bf16.msra.mxu0 0
      %1976 = vmatprep.subr.bf16.mxu0 0
      %1977 = vmatpush2.bf16.msra.mxu0 0
      %1978 = vmatprep.subr.bf16.mxu0 0
      %1979 = vmatpush2.bf16.msra.mxu0 0
      %1980 = vmatprep.subr.bf16.mxu0 0
      %1981 = vmatpush2.bf16.msra.mxu0 0
      %1982 = vmatprep.subr.bf16.mxu0 0
      %1983 = vmatpush2.bf16.msra.mxu0 0
      %1984 = vmatprep.subr.bf16.mxu0 0
      %1985 = vmatpush2.bf16.msra.mxu0 0
      %1986 = vmatprep.subr.bf16.mxu0 0
      %1987 = vmatpush2.bf16.msra.mxu0 0
      %1988 = vmatprep.mubr.bf16.mxu0 0
      %1989 = vmatmul.mubr.bf16.gmra.mxu0 %v1736
      %v1990 = vpop.f32.mrf.mxu0
      %v1991 = vadd.f32 0.0, %v1990
      %v1992 = vpop.f32.mrf.mxu0
      %v1993 = vpop.f32.mrf.mxu0
      %v1994 = vadd.f32 0.0, %v1993
      %v1995 = vpop.f32.mrf.mxu0
      %1996 = vmatprep.mubr.bf16.mxu0 0
      %1997 = vmatmul.mubr.bf16.gmra.mxu0 %v1745
      %v1998 = vpop.f32.mrf.mxu0
      %v1999 = vadd.f32 0.0, %v1998
      %v2000 = vpop.f32.mrf.mxu0
      %v2001 = vpop.f32.mrf.mxu0
      %v2002 = vadd.f32 0.0, %v2001
      %v2003 = vpop.f32.mrf.mxu0
      %2004 = vmatprep.mubr.bf16.mxu0 0
      %2005 = vmatmul.mubr.bf16.gmra.mxu0 %v1754
      %v2006 = vpop.f32.mrf.mxu0
      %v2007 = vadd.f32 0.0, %v2006
      %v2008 = vpop.f32.mrf.mxu0
      %v2009 = vpop.f32.mrf.mxu0
      %v2010 = vadd.f32 0.0, %v2009
      %v2011 = vpop.f32.mrf.mxu0
      %2012 = vmatprep.mubr.bf16.mxu0 0
      %2013 = vmatmul.mubr.bf16.gmra.mxu0 %v1763
      %v2014 = vpop.f32.mrf.mxu0
      %v2015 = vadd.f32 0.0, %v2014
      %v2016 = vpop.f32.mrf.mxu0
      %v2017 = vpop.f32.mrf.mxu0
      %v2018 = vadd.f32 0.0, %v2017
      %v2019 = vpop.f32.mrf.mxu0
      %2020 = vmatprep.mubr.bf16.mxu0 0
      %2021 = vmatmul.mubr.bf16.gmra.mxu0 %v1772
      %v2022 = vpop.f32.mrf.mxu0
      %v2023 = vadd.f32 0.0, %v2022
      %v2024 = vpop.f32.mrf.mxu0
      %v2025 = vpop.f32.mrf.mxu0
      %v2026 = vadd.f32 0.0, %v2025
      %v2027 = vpop.f32.mrf.mxu0
      %2028 = vmatprep.mubr.bf16.mxu0 0
      %2029 = vmatmul.mubr.bf16.gmra.mxu0 %v1781
      %v2030 = vpop.f32.mrf.mxu0
      %v2031 = vadd.f32 0.0, %v2030
      %v2032 = vpop.f32.mrf.mxu0
      %v2033 = vpop.f32.mrf.mxu0
      %v2034 = vadd.f32 0.0, %v2033
      %v2035 = vpop.f32.mrf.mxu0
      %2036 = vmatprep.mubr.bf16.mxu0 0
      %2037 = vmatmul.mubr.bf16.gmra.mxu0 %v1790
      %v2038 = vpop.f32.mrf.mxu0
      %v2039 = vadd.f32 0.0, %v2038
      %v2040 = vpop.f32.mrf.mxu0
      %v2041 = vpop.f32.mrf.mxu0
      %v2042 = vadd.f32 0.0, %v2041
      %v2043 = vpop.f32.mrf.mxu0
      %2044 = vmatprep.mubr.bf16.mxu0 0
      %2045 = vmatmul.mubr.bf16.gmra.mxu0 %v1799
      %v2046 = vpop.f32.mrf.mxu0
      %v2047 = vadd.f32 0.0, %v2046
      %v2048 = vpop.f32.mrf.mxu0
      %v2049 = vpop.f32.mrf.mxu0
      %v2050 = vadd.f32 0.0, %v2049
      %v2051 = vpop.f32.mrf.mxu0
      %2052 = vmatprep.mubr.bf16.mxu0 0
      %2053 = vmatmul.mubr.bf16.gmra.mxu0 %v1808
      %v2054 = vpop.f32.mrf.mxu0
      %v2055 = vadd.f32 0.0, %v2054
      %v2056 = vpop.f32.mrf.mxu0
      %v2057 = vpop.f32.mrf.mxu0
      %v2058 = vadd.f32 0.0, %v2057
      %v2059 = vpop.f32.mrf.mxu0
      %2060 = vmatprep.mubr.bf16.mxu0 0
      %2061 = vmatmul.mubr.bf16.gmra.mxu0 %v1817
      %v2062 = vpop.f32.mrf.mxu0
      %v2063 = vadd.f32 0.0, %v2062
      %v2064 = vpop.f32.mrf.mxu0
      %v2065 = vpop.f32.mrf.mxu0
      %v2066 = vadd.f32 0.0, %v2065
      %v2067 = vpop.f32.mrf.mxu0
      %2068 = vmatprep.mubr.bf16.mxu0 0
      %2069 = vmatmul.mubr.bf16.gmra.mxu0 %v1826
      %v2070 = vpop.f32.mrf.mxu0
      %v2071 = vadd.f32 0.0, %v2070
      %v2072 = vpop.f32.mrf.mxu0
      %v2073 = vpop.f32.mrf.mxu0
      %v2074 = vadd.f32 0.0, %v2073
      %v2075 = vpop.f32.mrf.mxu0
      %2076 = vmatprep.mubr.bf16.mxu0 0
      %2077 = vmatmul.mubr.bf16.gmra.mxu0 %v1835
      %v2078 = vpop.f32.mrf.mxu0
      %v2079 = vadd.f32 0.0, %v2078
      %v2080 = vpop.f32.mrf.mxu0
      %v2081 = vpop.f32.mrf.mxu0
      %v2082 = vadd.f32 0.0, %v2081
      %v2083 = vpop.f32.mrf.mxu0
      %2084 = vmatprep.mubr.bf16.mxu0 0
      %2085 = vmatmul.mubr.bf16.gmra.mxu0 %v1844
      %v2086 = vpop.f32.mrf.mxu0
      %v2087 = vadd.f32 0.0, %v2086
      %v2088 = vpop.f32.mrf.mxu0
      %v2089 = vpop.f32.mrf.mxu0
      %v2090 = vadd.f32 0.0, %v2089
      %v2091 = vpop.f32.mrf.mxu0
      %2092 = vmatprep.mubr.bf16.mxu0 0
      %2093 = vmatmul.mubr.bf16.gmra.mxu0 %v1853
      %v2094 = vpop.f32.mrf.mxu0
      %v2095 = vadd.f32 0.0, %v2094
      %v2096 = vpop.f32.mrf.mxu0
      %v2097 = vpop.f32.mrf.mxu0
      %v2098 = vadd.f32 0.0, %v2097
      %v2099 = vpop.f32.mrf.mxu0
      %2100 = vmatprep.mubr.bf16.mxu0 0
      %2101 = vmatmul.mubr.bf16.gmra.mxu0 %v1862
      %v2102 = vpop.f32.mrf.mxu0
      %v2103 = vadd.f32 0.0, %v2102
      %v2104 = vpop.f32.mrf.mxu0
      %v2105 = vpop.f32.mrf.mxu0
      %v2106 = vadd.f32 0.0, %v2105
      %v2107 = vpop.f32.mrf.mxu0
      %2108 = vmatprep.mubr.bf16.mxu0 0
      %2109 = vmatmul.mubr.bf16.gmra.mxu0 %v1871
      %v2110 = vpop.f32.mrf.mxu0
      %v2111 = vadd.f32 0.0, %v2110
      %v2112 = vpop.f32.mrf.mxu0
      %v2113 = vpop.f32.mrf.mxu0
      %v2114 = vadd.f32 0.0, %v2113
      %v2115 = vpop.f32.mrf.mxu0
      %2116 = vmatprep.mubr.bf16.mxu0 0
      %2117 = vmatmul.mubr.bf16.gmra.mxu0 %v1880
      %v2118 = vpop.f32.mrf.mxu0
      %v2119 = vadd.f32 0.0, %v2118
      %v2120 = vpop.f32.mrf.mxu0
      %v2121 = vpop.f32.mrf.mxu0
      %v2122 = vadd.f32 0.0, %v2121
      %v2123 = vpop.f32.mrf.mxu0
      %2124 = vmatprep.mubr.bf16.mxu0 0
      %2125 = vmatmul.mubr.bf16.gmra.mxu0 %v1889
      %v2126 = vpop.f32.mrf.mxu0
      %v2127 = vadd.f32 0.0, %v2126
      %v2128 = vpop.f32.mrf.mxu0
      %v2129 = vpop.f32.mrf.mxu0
      %v2130 = vadd.f32 0.0, %v2129
      %v2131 = vpop.f32.mrf.mxu0
      %2132 = vdwg.mxu0
      %v2133 = vadd.f32 %v1537, %v1991
      %v2134 = vadd.f32 %v1538, %v1994
      %v2135 = vadd.f32 %v1539, %v1999
      %v2136 = vadd.f32 %v1540, %v2002
      %v2137 = vadd.f32 %v1541, %v2007
      %v2138 = vadd.f32 %v1542, %v2010
      %v2139 = vadd.f32 %v1543, %v2015
      %v2140 = vadd.f32 %v1544, %v2018
      %v2141 = vadd.f32 %v1545, %v2023
      %v2142 = vadd.f32 %v1546, %v2026
      %v2143 = vadd.f32 %v1547, %v2031
      %v2144 = vadd.f32 %v1548, %v2034
      %v2145 = vadd.f32 %v1549, %v2039
      %v2146 = vadd.f32 %v1550, %v2042
      %v2147 = vadd.f32 %v1551, %v2047
      %v2148 = vadd.f32 %v1552, %v2050
      %v2149 = vadd.f32 %v1553, %v2055
      %v2150 = vadd.f32 %v1554, %v2058
      %v2151 = vadd.f32 %v1555, %v2063
      %v2152 = vadd.f32 %v1556, %v2066
      %v2153 = vadd.f32 %v1557, %v2071
      %v2154 = vadd.f32 %v1558, %v2074
      %v2155 = vadd.f32 %v1559, %v2079
      %v2156 = vadd.f32 %v1560, %v2082
      %v2157 = vadd.f32 %v1561, %v2087
      %v2158 = vadd.f32 %v1562, %v2090
      %v2159 = vadd.f32 %v1563, %v2095
      %v2160 = vadd.f32 %v1564, %v2098
      %v2161 = vadd.f32 %v1565, %v2103
      %v2162 = vadd.f32 %v1566, %v2106
      %v2163 = vadd.f32 %v1567, %v2111
      %v2164 = vadd.f32 %v1568, %v2114
      %v2165 = vadd.f32 %v1569, %v2119
      %v2166 = vadd.f32 %v1570, %v2122
      %v2167 = vadd.f32 %v1571, %v2127
      %v2168 = vadd.f32 %v1572, %v2130
      %s2169 = scalar_lea.vmem %s272, 256
      %v2170 = vld [vmem:[%s2169] sm:$0xf]
      %v2171 = vld [vmem:[%s2169 + $0x4] sm:$0xf]
      %v2172 = vld [vmem:[%s2169 + $0x8] sm:$0xf]
      %v2173 = vld [vmem:[%s2169 + $0xc] sm:$0xf]
      %v2174 = vld [vmem:[%s2169 + $0x10] sm:$0xf]
      %v2175 = vld [vmem:[%s2169 + $0x14] sm:$0xf]
      %v2176 = vld [vmem:[%s2169 + $0x18] sm:$0xf]
      %v2177 = vld [vmem:[%s2169 + $0x1c] sm:$0xf]
      %v2178 = vld [vmem:[%s2169 + $0x20] sm:$0xf]
      %v2179 = vld [vmem:[%s2169 + $0x24] sm:$0xf]
      %v2180 = vld [vmem:[%s2169 + $0x28] sm:$0xf]
      %v2181 = vld [vmem:[%s2169 + $0x2c] sm:$0xf]
      %v2182 = vld [vmem:[%s2169 + $0x30] sm:$0xf]
      %v2183 = vld [vmem:[%s2169 + $0x34] sm:$0xf]
      %v2184 = vld [vmem:[%s2169 + $0x38] sm:$0xf]
      %v2185 = vld [vmem:[%s2169 + $0x3c] sm:$0xf]
      %v2186 = vpack.c.b16 %v1666, %v1665
      %v2187 = vpack.c.b16 %v1668, %v1667
      %v2188 = vpack.c.b16 %v1670, %v1669
      %v2189 = vpack.c.b16 %v1672, %v1671
      %v2190 = vpack.c.b16 %v1674, %v1673
      %v2191 = vpack.c.b16 %v1676, %v1675
      %v2192 = vpack.c.b16 %v1678, %v1677
      %v2193 = vpack.c.b16 %v1680, %v1679
      %v2194 = vpack.c.b16 %v1682, %v1681
      %v2195 = vpack.c.b16 %v1684, %v1683
      %v2196 = vpack.c.b16 %v1686, %v1685
      %v2197 = vpack.c.b16 %v1688, %v1687
      %v2198 = vpack.c.b16 %v1690, %v1689
      %v2199 = vpack.c.b16 %v1692, %v1691
      %v2200 = vpack.c.b16 %v1694, %v1693
      %v2201 = vpack.c.b16 %v1696, %v1695
      %v2202 = vpack.c.b16 %v1698, %v1697
      %v2203 = vpack.c.b16 %v1700, %v1699
      %v2238 = vunpack.c.l.b16 %v2170
      %v2239 = vunpack.c.l.b16 %v2171
      %v2240 = vunpack.c.l.b16 %v2172
      %v2241 = vunpack.c.l.b16 %v2173
      %v2242 = vunpack.c.l.b16 %v2174
      %v2243 = vunpack.c.l.b16 %v2175
      %v2244 = vunpack.c.l.b16 %v2176
      %v2245 = vunpack.c.l.b16 %v2177
      %v2246 = vunpack.c.l.b16 %v2178
      %v2247 = vunpack.c.l.b16 %v2179
      %v2248 = vunpack.c.l.b16 %v2180
      %v2249 = vunpack.c.l.b16 %v2181
      %v2250 = vunpack.c.l.b16 %v2182
      %v2251 = vunpack.c.l.b16 %v2183
      %v2252 = vunpack.c.l.b16 %v2184
      %v2253 = vunpack.c.l.b16 %v2185
      %v2254 = vpack.c.b16 %v2239, %v2238
      %v2255 = vpack.c.b16 %v2241, %v2240
      %v2256 = vpack.c.b16 %v2243, %v2242
      %v2257 = vpack.c.b16 %v2245, %v2244
      %v2258 = vpack.c.b16 %v2247, %v2246
      %v2259 = vpack.c.b16 %v2249, %v2248
      %v2260 = vpack.c.b16 %v2251, %v2250
      %v2261 = vpack.c.b16 %v2253, %v2252
      %2270 = vmatprep.subr.bf16.mxu0 0
      %2271 = vmatpush1.bf16.msra.mxu0 %v2261
      %2272 = vmatprep.subr.bf16.mxu0 0
      %2273 = vmatpush1.bf16.msra.mxu0 %v2260
      %2274 = vmatprep.subr.bf16.mxu0 0
      %2275 = vmatpush1.bf16.msra.mxu0 %v2259
      %2276 = vmatprep.subr.bf16.mxu0 0
      %2277 = vmatpush1.bf16.msra.mxu0 %v2258
      %2278 = vmatprep.subr.bf16.mxu0 0
      %2279 = vmatpush1.bf16.msra.mxu0 %v2257
      %2280 = vmatprep.subr.bf16.mxu0 0
      %2281 = vmatpush1.bf16.msra.mxu0 %v2256
      %2282 = vmatprep.subr.bf16.mxu0 0
      %2283 = vmatpush1.bf16.msra.mxu0 %v2255
      %2284 = vmatprep.subr.bf16.mxu0 0
      %2285 = vmatpush1.bf16.msra.mxu0 %v2254
      %2286 = vmatprep.subr.bf16.mxu0 0
      %2287 = vmatpush2.bf16.msra.mxu0 0
      %2288 = vmatprep.subr.bf16.mxu0 0
      %2289 = vmatpush2.bf16.msra.mxu0 0
      %2290 = vmatprep.subr.bf16.mxu0 0
      %2291 = vmatpush2.bf16.msra.mxu0 0
      %2292 = vmatprep.subr.bf16.mxu0 0
      %2293 = vmatpush2.bf16.msra.mxu0 0
      %2294 = vmatprep.subr.bf16.mxu0 0
      %2295 = vmatpush2.bf16.msra.mxu0 0
      %2296 = vmatprep.subr.bf16.mxu0 0
      %2297 = vmatpush2.bf16.msra.mxu0 0
      %2298 = vmatprep.subr.bf16.mxu0 0
      %2299 = vmatpush2.bf16.msra.mxu0 0
      %2300 = vmatprep.subr.bf16.mxu0 0
      %2301 = vmatpush2.bf16.msra.mxu0 0
      %2302 = vmatprep.mubr.bf16.mxu0 0
      %2303 = vmatmul.mubr.bf16.gmra.mxu0 %v2186
      %v2304 = vpop.f32.mrf.mxu0
      %v2305 = vadd.f32 0.0, %v2304
      %v2306 = vpop.f32.mrf.mxu0
      %v2307 = vpop.f32.mrf.mxu0
      %v2308 = vadd.f32 0.0, %v2307
      %v2309 = vpop.f32.mrf.mxu0
      %2310 = vmatprep.mubr.bf16.mxu0 0
      %2311 = vmatmul.mubr.bf16.gmra.mxu0 %v2187
      %v2312 = vpop.f32.mrf.mxu0
      %v2313 = vadd.f32 0.0, %v2312
      %v2314 = vpop.f32.mrf.mxu0
      %v2315 = vpop.f32.mrf.mxu0
      %v2316 = vadd.f32 0.0, %v2315
      %v2317 = vpop.f32.mrf.mxu0
      %2318 = vmatprep.mubr.bf16.mxu0 0
      %2319 = vmatmul.mubr.bf16.gmra.mxu0 %v2188
      %v2320 = vpop.f32.mrf.mxu0
      %v2321 = vadd.f32 0.0, %v2320
      %v2322 = vpop.f32.mrf.mxu0
      %v2323 = vpop.f32.mrf.mxu0
      %v2324 = vadd.f32 0.0, %v2323
      %v2325 = vpop.f32.mrf.mxu0
      %2326 = vmatprep.mubr.bf16.mxu0 0
      %2327 = vmatmul.mubr.bf16.gmra.mxu0 %v2189
      %v2328 = vpop.f32.mrf.mxu0
      %v2329 = vadd.f32 0.0, %v2328
      %v2330 = vpop.f32.mrf.mxu0
      %v2331 = vpop.f32.mrf.mxu0
      %v2332 = vadd.f32 0.0, %v2331
      %v2333 = vpop.f32.mrf.mxu0
      %2334 = vmatprep.mubr.bf16.mxu0 0
      %2335 = vmatmul.mubr.bf16.gmra.mxu0 %v2190
      %v2336 = vpop.f32.mrf.mxu0
      %v2337 = vadd.f32 0.0, %v2336
      %v2338 = vpop.f32.mrf.mxu0
      %v2339 = vpop.f32.mrf.mxu0
      %v2340 = vadd.f32 0.0, %v2339
      %v2341 = vpop.f32.mrf.mxu0
      %2342 = vmatprep.mubr.bf16.mxu0 0
      %2343 = vmatmul.mubr.bf16.gmra.mxu0 %v2191
      %v2344 = vpop.f32.mrf.mxu0
      %v2345 = vadd.f32 0.0, %v2344
      %v2346 = vpop.f32.mrf.mxu0
      %v2347 = vpop.f32.mrf.mxu0
      %v2348 = vadd.f32 0.0, %v2347
      %v2349 = vpop.f32.mrf.mxu0
      %2350 = vmatprep.mubr.bf16.mxu0 0
      %2351 = vmatmul.mubr.bf16.gmra.mxu0 %v2192
      %v2352 = vpop.f32.mrf.mxu0
      %v2353 = vadd.f32 0.0, %v2352
      %v2354 = vpop.f32.mrf.mxu0
      %v2355 = vpop.f32.mrf.mxu0
      %v2356 = vadd.f32 0.0, %v2355
      %v2357 = vpop.f32.mrf.mxu0
      %2358 = vmatprep.mubr.bf16.mxu0 0
      %2359 = vmatmul.mubr.bf16.gmra.mxu0 %v2193
      %v2360 = vpop.f32.mrf.mxu0
      %v2361 = vadd.f32 0.0, %v2360
      %v2362 = vpop.f32.mrf.mxu0
      %v2363 = vpop.f32.mrf.mxu0
      %v2364 = vadd.f32 0.0, %v2363
      %v2365 = vpop.f32.mrf.mxu0
      %2366 = vmatprep.mubr.bf16.mxu0 0
      %2367 = vmatmul.mubr.bf16.gmra.mxu0 %v2194
      %v2368 = vpop.f32.mrf.mxu0
      %v2369 = vadd.f32 0.0, %v2368
      %v2370 = vpop.f32.mrf.mxu0
      %v2371 = vpop.f32.mrf.mxu0
      %v2372 = vadd.f32 0.0, %v2371
      %v2373 = vpop.f32.mrf.mxu0
      %2374 = vmatprep.mubr.bf16.mxu0 0
      %2375 = vmatmul.mubr.bf16.gmra.mxu0 %v2195
      %v2376 = vpop.f32.mrf.mxu0
      %v2377 = vadd.f32 0.0, %v2376
      %v2378 = vpop.f32.mrf.mxu0
      %v2379 = vpop.f32.mrf.mxu0
      %v2380 = vadd.f32 0.0, %v2379
      %v2381 = vpop.f32.mrf.mxu0
      %2382 = vmatprep.mubr.bf16.mxu0 0
      %2383 = vmatmul.mubr.bf16.gmra.mxu0 %v2196
      %v2384 = vpop.f32.mrf.mxu0
      %v2385 = vadd.f32 0.0, %v2384
      %v2386 = vpop.f32.mrf.mxu0
      %v2387 = vpop.f32.mrf.mxu0
      %v2388 = vadd.f32 0.0, %v2387
      %v2389 = vpop.f32.mrf.mxu0
      %2390 = vmatprep.mubr.bf16.mxu0 0
      %2391 = vmatmul.mubr.bf16.gmra.mxu0 %v2197
      %v2392 = vpop.f32.mrf.mxu0
      %v2393 = vadd.f32 0.0, %v2392
      %v2394 = vpop.f32.mrf.mxu0
      %v2395 = vpop.f32.mrf.mxu0
      %v2396 = vadd.f32 0.0, %v2395
      %v2397 = vpop.f32.mrf.mxu0
      %2398 = vmatprep.mubr.bf16.mxu0 0
      %2399 = vmatmul.mubr.bf16.gmra.mxu0 %v2198
      %v2400 = vpop.f32.mrf.mxu0
      %v2401 = vadd.f32 0.0, %v2400
      %v2402 = vpop.f32.mrf.mxu0
      %v2403 = vpop.f32.mrf.mxu0
      %v2404 = vadd.f32 0.0, %v2403
      %v2405 = vpop.f32.mrf.mxu0
      %2406 = vmatprep.mubr.bf16.mxu0 0
      %2407 = vmatmul.mubr.bf16.gmra.mxu0 %v2199
      %v2408 = vpop.f32.mrf.mxu0
      %v2409 = vadd.f32 0.0, %v2408
      %v2410 = vpop.f32.mrf.mxu0
      %v2411 = vpop.f32.mrf.mxu0
      %v2412 = vadd.f32 0.0, %v2411
      %v2413 = vpop.f32.mrf.mxu0
      %2414 = vmatprep.mubr.bf16.mxu0 0
      %2415 = vmatmul.mubr.bf16.gmra.mxu0 %v2200
      %v2416 = vpop.f32.mrf.mxu0
      %v2417 = vadd.f32 0.0, %v2416
      %v2418 = vpop.f32.mrf.mxu0
      %v2419 = vpop.f32.mrf.mxu0
      %v2420 = vadd.f32 0.0, %v2419
      %v2421 = vpop.f32.mrf.mxu0
      %2422 = vmatprep.mubr.bf16.mxu0 0
      %2423 = vmatmul.mubr.bf16.gmra.mxu0 %v2201
      %v2424 = vpop.f32.mrf.mxu0
      %v2425 = vadd.f32 0.0, %v2424
      %v2426 = vpop.f32.mrf.mxu0
      %v2427 = vpop.f32.mrf.mxu0
      %v2428 = vadd.f32 0.0, %v2427
      %v2429 = vpop.f32.mrf.mxu0
      %2430 = vmatprep.mubr.bf16.mxu0 0
      %2431 = vmatmul.mubr.bf16.gmra.mxu0 %v2202
      %v2432 = vpop.f32.mrf.mxu0
      %v2433 = vadd.f32 0.0, %v2432
      %v2434 = vpop.f32.mrf.mxu0
      %v2435 = vpop.f32.mrf.mxu0
      %v2436 = vadd.f32 0.0, %v2435
      %v2437 = vpop.f32.mrf.mxu0
      %2438 = vmatprep.mubr.bf16.mxu0 0
      %2439 = vmatmul.mubr.bf16.gmra.mxu0 %v2203
      %v2440 = vpop.f32.mrf.mxu0
      %v2441 = vadd.f32 0.0, %v2440
      %v2442 = vpop.f32.mrf.mxu0
      %v2443 = vpop.f32.mrf.mxu0
      %v2444 = vadd.f32 0.0, %v2443
      %v2445 = vpop.f32.mrf.mxu0
      %2446 = vdwg.mxu0
      %v2447 = vadd.f32 %v2133, %v2305
      %v2448 = vadd.f32 %v2134, %v2308
      %v2449 = vadd.f32 %v2135, %v2313
      %v2450 = vadd.f32 %v2136, %v2316
      %v2451 = vadd.f32 %v2137, %v2321
      %v2452 = vadd.f32 %v2138, %v2324
      %v2453 = vadd.f32 %v2139, %v2329
      %v2454 = vadd.f32 %v2140, %v2332
      %v2455 = vadd.f32 %v2141, %v2337
      %v2456 = vadd.f32 %v2142, %v2340
      %v2457 = vadd.f32 %v2143, %v2345
      %v2458 = vadd.f32 %v2144, %v2348
      %v2459 = vadd.f32 %v2145, %v2353
      %v2460 = vadd.f32 %v2146, %v2356
      %v2461 = vadd.f32 %v2147, %v2361
      %v2462 = vadd.f32 %v2148, %v2364
      %v2463 = vadd.f32 %v2149, %v2369
      %v2464 = vadd.f32 %v2150, %v2372
      %v2465 = vadd.f32 %v2151, %v2377
      %v2466 = vadd.f32 %v2152, %v2380
      %v2467 = vadd.f32 %v2153, %v2385
      %v2468 = vadd.f32 %v2154, %v2388
      %v2469 = vadd.f32 %v2155, %v2393
      %v2470 = vadd.f32 %v2156, %v2396
      %v2471 = vadd.f32 %v2157, %v2401
      %v2472 = vadd.f32 %v2158, %v2404
      %v2473 = vadd.f32 %v2159, %v2409
      %v2474 = vadd.f32 %v2160, %v2412
      %v2475 = vadd.f32 %v2161, %v2417
      %v2476 = vadd.f32 %v2162, %v2420
      %v2477 = vadd.f32 %v2163, %v2425
      %v2478 = vadd.f32 %v2164, %v2428
      %v2479 = vadd.f32 %v2165, %v2433
      %v2480 = vadd.f32 %v2166, %v2436
      %v2481 = vadd.f32 %v2167, %v2441
      %v2482 = vadd.f32 %v2168, %v2444
      %v2483 = vld [vmem:[%s263 + $0x24] sm:$0xf]
      %v2484 = vld [vmem:[%s263 + $0x28] sm:$0xf]
      %v2485 = vld [vmem:[%s263 + $0x2c] sm:$0xf]
      %v2486 = vld [vmem:[%s263 + $0x30] sm:$0xf]
      %v2487 = vld [vmem:[%s263 + $0x34] sm:$0xf]
      %v2488 = vld [vmem:[%s263 + $0x38] sm:$0xf]
      %v2489 = vld [vmem:[%s263 + $0x3c] sm:$0xf]
      %v2490 = vld [vmem:[%s263 + $0x40] sm:$0xf]
      %v2491 = vld [vmem:[%s263 + $0x44] sm:$0xf]
      %v2492 = vld [vmem:[%s263 + $0x48] sm:$0xf]
      %v2493 = vld [vmem:[%s263 + $0x4c] sm:$0xf]
      %v2494 = vld [vmem:[%s263 + $0x50] sm:$0xf]
      %v2495 = vld [vmem:[%s263 + $0x54] sm:$0xf]
      %v2496 = vld [vmem:[%s263 + $0x58] sm:$0xf]
      %v2497 = vld [vmem:[%s263 + $0x5c] sm:$0xf]
      %v2498 = vld [vmem:[%s263 + $0x60] sm:$0xf]
      %v2499 = vld [vmem:[%s263 + $0x64] sm:$0xf]
      %v2500 = vld [vmem:[%s263 + $0x68] sm:$0xf]
      %v2501 = vld [vmem:[%s263 + $0x6c] sm:$0xf]
      %v2502 = vld [vmem:[%s263 + $0x70] sm:$0xf]
      %v2503 = vld [vmem:[%s263 + $0x74] sm:$0xf]
      %v2504 = vld [vmem:[%s263 + $0x78] sm:$0xf]
      %v2505 = vld [vmem:[%s263 + $0x7c] sm:$0xf]
      %v2506 = vld [vmem:[%s263 + $0x80] sm:$0xf]
      %v2507 = vld [vmem:[%s263 + $0x84] sm:$0xf]
      %v2508 = vld [vmem:[%s263 + $0x88] sm:$0xf]
      %v2509 = vld [vmem:[%s263 + $0x8c] sm:$0xf]
      %v2510 = vld [vmem:[%s263 + $0x90] sm:$0xf]
      %v2511 = vld [vmem:[%s263 + $0x94] sm:$0xf]
      %v2512 = vld [vmem:[%s263 + $0x98] sm:$0xf]
      %v2513 = vld [vmem:[%s263 + $0x9c] sm:$0xf]
      %v2514 = vld [vmem:[%s263 + $0xa0] sm:$0xf]
      %v2515 = vld [vmem:[%s263 + $0xa4] sm:$0xf]
      %v2516 = vld [vmem:[%s263 + $0xa8] sm:$0xf]
      %v2517 = vld [vmem:[%s263 + $0xac] sm:$0xf]
      %v2518 = vld [vmem:[%s263 + $0xb0] sm:$0xf]
      %v2519 = vld [vmem:[%s263 + $0xb4] sm:$0x1]
      %s2520 = scalar_lea.vmem %s272, 320
      %v2521 = vld [vmem:[%s2520] sm:$0xf]
      %v2522 = vld [vmem:[%s2520 + $0x4] sm:$0xf]
      %v2523 = vld [vmem:[%s2520 + $0x8] sm:$0xf]
      %v2524 = vld [vmem:[%s2520 + $0xc] sm:$0xf]
      %v2525 = vld [vmem:[%s2520 + $0x10] sm:$0xf]
      %v2526 = vld [vmem:[%s2520 + $0x14] sm:$0xf]
      %v2527 = vld [vmem:[%s2520 + $0x18] sm:$0xf]
      %v2528 = vld [vmem:[%s2520 + $0x1c] sm:$0xf]
      %v2529 = vld [vmem:[%s2520 + $0x20] sm:$0xf]
      %v2530 = vld [vmem:[%s2520 + $0x24] sm:$0xf]
      %v2531 = vld [vmem:[%s2520 + $0x28] sm:$0xf]
      %v2532 = vld [vmem:[%s2520 + $0x2c] sm:$0xf]
      %v2533 = vld [vmem:[%s2520 + $0x30] sm:$0xf]
      %v2534 = vld [vmem:[%s2520 + $0x34] sm:$0xf]
      %v2535 = vld [vmem:[%s2520 + $0x38] sm:$0xf]
      %v2536 = vld [vmem:[%s2520 + $0x3c] sm:$0xf]
      %v2574 = vunpack.c.l.b16 %v2483
      %v2575 = vunpack.c.l.b16 %v2484
      %v2576 = vunpack.c.l.b16 %v2485
      %v2577 = vunpack.c.l.b16 %v2486
      %v2578 = vunpack.c.l.b16 %v2487
      %v2579 = vunpack.c.l.b16 %v2488
      %v2580 = vunpack.c.l.b16 %v2489
      %v2581 = vunpack.c.l.b16 %v2490
      %v2582 = vunpack.c.l.b16 %v2491
      %v2583 = vunpack.c.l.b16 %v2492
      %v2584 = vunpack.c.l.b16 %v2493
      %v2585 = vunpack.c.l.b16 %v2494
      %v2586 = vunpack.c.l.b16 %v2495
      %v2587 = vunpack.c.l.b16 %v2496
      %v2588 = vunpack.c.l.b16 %v2497
      %v2589 = vunpack.c.l.b16 %v2498
      %v2590 = vunpack.c.l.b16 %v2499
      %v2591 = vunpack.c.l.b16 %v2500
      %v2592 = vunpack.c.l.b16 %v2501
      %v2593 = vunpack.c.l.b16 %v2502
      %v2594 = vunpack.c.l.b16 %v2503
      %v2595 = vunpack.c.l.b16 %v2504
      %v2596 = vunpack.c.l.b16 %v2505
      %v2597 = vunpack.c.l.b16 %v2506
      %v2598 = vunpack.c.l.b16 %v2507
      %v2599 = vunpack.c.l.b16 %v2508
      %v2600 = vunpack.c.l.b16 %v2509
      %v2601 = vunpack.c.l.b16 %v2510
      %v2602 = vunpack.c.l.b16 %v2511
      %v2603 = vunpack.c.l.b16 %v2512
      %v2604 = vunpack.c.l.b16 %v2513
      %v2605 = vunpack.c.l.b16 %v2514
      %v2606 = vunpack.c.l.b16 %v2515
      %v2607 = vunpack.c.l.b16 %v2516
      %v2608 = vunpack.c.l.b16 %v2517
      %v2609 = vunpack.c.l.b16 %v2518
      %v2610 = vunpack.c.l.b16 %v2519
      %v2611 = vpack.c.b16 %v2575, %v2574
      %v2612 = vpack.c.b16 %v2577, %v2576
      %v2613 = vpack.c.b16 %v2579, %v2578
      %v2614 = vpack.c.b16 %v2581, %v2580
      %v2615 = vpack.c.b16 %v2583, %v2582
      %v2616 = vpack.c.b16 %v2585, %v2584
      %v2617 = vpack.c.b16 %v2587, %v2586
      %v2618 = vpack.c.b16 %v2589, %v2588
      %v2619 = vpack.c.b16 %v2591, %v2590
      %v2620 = vpack.c.b16 %v2593, %v2592
      %v2621 = vpack.c.b16 %v2595, %v2594
      %v2622 = vpack.c.b16 %v2597, %v2596
      %v2623 = vpack.c.b16 %v2599, %v2598
      %v2624 = vpack.c.b16 %v2601, %v2600
      %v2625 = vpack.c.b16 %v2603, %v2602
      %v2626 = vpack.c.b16 %v2605, %v2604
      %v2627 = vpack.c.b16 %v2607, %v2606
      %v2628 = vpack.c.b16 %v2609, %v2608
      %v2629 = vpack.c.b16 %v2610, %v2610
      %vm2630 = vsmask.f32 7424
      %v2632 = vshrl.u32 %v2611, 16
      %v2634 = vshll.u32 %v2611, 16
      %v2636 = vrot.slane %v2634, 1
      %v2637 = vor.u32 %v2632, %v2636
      %v2639 = vshll.u32 %v2612, 16
      %v2641 = vrot.slane %v2639, 1
      %v2642 = vsel %vm2630, %v2637, %v2641
      %v2643 = vshrl.u32 %v2612, 16
      %v2645 = vor.u32 %v2643, %v2641
      %v2647 = vshll.u32 %v2613, 16
      %v2649 = vrot.slane %v2647, 1
      %v2650 = vsel %vm2630, %v2645, %v2649
      %v2651 = vshrl.u32 %v2613, 16
      %v2653 = vor.u32 %v2651, %v2649
      %v2655 = vshll.u32 %v2614, 16
      %v2657 = vrot.slane %v2655, 1
      %v2658 = vsel %vm2630, %v2653, %v2657
      %v2659 = vshrl.u32 %v2614, 16
      %v2661 = vor.u32 %v2659, %v2657
      %v2663 = vshll.u32 %v2615, 16
      %v2665 = vrot.slane %v2663, 1
      %v2666 = vsel %vm2630, %v2661, %v2665
      %v2667 = vshrl.u32 %v2615, 16
      %v2669 = vor.u32 %v2667, %v2665
      %v2671 = vshll.u32 %v2616, 16
      %v2673 = vrot.slane %v2671, 1
      %v2674 = vsel %vm2630, %v2669, %v2673
      %v2675 = vshrl.u32 %v2616, 16
      %v2677 = vor.u32 %v2675, %v2673
      %v2679 = vshll.u32 %v2617, 16
      %v2681 = vrot.slane %v2679, 1
      %v2682 = vsel %vm2630, %v2677, %v2681
      %v2683 = vshrl.u32 %v2617, 16
      %v2685 = vor.u32 %v2683, %v2681
      %v2687 = vshll.u32 %v2618, 16
      %v2689 = vrot.slane %v2687, 1
      %v2690 = vsel %vm2630, %v2685, %v2689
      %v2691 = vshrl.u32 %v2618, 16
      %v2693 = vor.u32 %v2691, %v2689
      %v2695 = vshll.u32 %v2619, 16
      %v2697 = vrot.slane %v2695, 1
      %v2698 = vsel %vm2630, %v2693, %v2697
      %v2699 = vshrl.u32 %v2619, 16
      %v2701 = vor.u32 %v2699, %v2697
      %v2703 = vshll.u32 %v2620, 16
      %v2705 = vrot.slane %v2703, 1
      %v2706 = vsel %vm2630, %v2701, %v2705
      %v2707 = vshrl.u32 %v2620, 16
      %v2709 = vor.u32 %v2707, %v2705
      %v2711 = vshll.u32 %v2621, 16
      %v2713 = vrot.slane %v2711, 1
      %v2714 = vsel %vm2630, %v2709, %v2713
      %v2715 = vshrl.u32 %v2621, 16
      %v2717 = vor.u32 %v2715, %v2713
      %v2719 = vshll.u32 %v2622, 16
      %v2721 = vrot.slane %v2719, 1
      %v2722 = vsel %vm2630, %v2717, %v2721
      %v2723 = vshrl.u32 %v2622, 16
      %v2725 = vor.u32 %v2723, %v2721
      %v2727 = vshll.u32 %v2623, 16
      %v2729 = vrot.slane %v2727, 1
      %v2730 = vsel %vm2630, %v2725, %v2729
      %v2731 = vshrl.u32 %v2623, 16
      %v2733 = vor.u32 %v2731, %v2729
      %v2735 = vshll.u32 %v2624, 16
      %v2737 = vrot.slane %v2735, 1
      %v2738 = vsel %vm2630, %v2733, %v2737
      %v2739 = vshrl.u32 %v2624, 16
      %v2741 = vor.u32 %v2739, %v2737
      %v2743 = vshll.u32 %v2625, 16
      %v2745 = vrot.slane %v2743, 1
      %v2746 = vsel %vm2630, %v2741, %v2745
      %v2747 = vshrl.u32 %v2625, 16
      %v2749 = vor.u32 %v2747, %v2745
      %v2751 = vshll.u32 %v2626, 16
      %v2753 = vrot.slane %v2751, 1
      %v2754 = vsel %vm2630, %v2749, %v2753
      %v2755 = vshrl.u32 %v2626, 16
      %v2757 = vor.u32 %v2755, %v2753
      %v2759 = vshll.u32 %v2627, 16
      %v2761 = vrot.slane %v2759, 1
      %v2762 = vsel %vm2630, %v2757, %v2761
      %v2763 = vshrl.u32 %v2627, 16
      %v2765 = vor.u32 %v2763, %v2761
      %v2767 = vshll.u32 %v2628, 16
      %v2769 = vrot.slane %v2767, 1
      %v2770 = vsel %vm2630, %v2765, %v2769
      %v2771 = vshrl.u32 %v2628, 16
      %v2773 = vor.u32 %v2771, %v2769
      %v2775 = vshll.u32 %v2629, 16
      %v2777 = vrot.slane %v2775, 1
      %v2778 = vsel %vm2630, %v2773, %v2777
      %v2813 = vunpack.c.l.b16 %v2521
      %v2814 = vunpack.c.l.b16 %v2522
      %v2815 = vunpack.c.l.b16 %v2523
      %v2816 = vunpack.c.l.b16 %v2524
      %v2817 = vunpack.c.l.b16 %v2525
      %v2818 = vunpack.c.l.b16 %v2526
      %v2819 = vunpack.c.l.b16 %v2527
      %v2820 = vunpack.c.l.b16 %v2528
      %v2821 = vunpack.c.l.b16 %v2529
      %v2822 = vunpack.c.l.b16 %v2530
      %v2823 = vunpack.c.l.b16 %v2531
      %v2824 = vunpack.c.l.b16 %v2532
      %v2825 = vunpack.c.l.b16 %v2533
      %v2826 = vunpack.c.l.b16 %v2534
      %v2827 = vunpack.c.l.b16 %v2535
      %v2828 = vunpack.c.l.b16 %v2536
      %v2829 = vpack.c.b16 %v2814, %v2813
      %v2830 = vpack.c.b16 %v2816, %v2815
      %v2831 = vpack.c.b16 %v2818, %v2817
      %v2832 = vpack.c.b16 %v2820, %v2819
      %v2833 = vpack.c.b16 %v2822, %v2821
      %v2834 = vpack.c.b16 %v2824, %v2823
      %v2835 = vpack.c.b16 %v2826, %v2825
      %v2836 = vpack.c.b16 %v2828, %v2827
      %2845 = vmatprep.subr.bf16.mxu0 0
      %2846 = vmatpush1.bf16.msra.mxu0 %v2836
      %2847 = vmatprep.subr.bf16.mxu0 0
      %2848 = vmatpush1.bf16.msra.mxu0 %v2835
      %2849 = vmatprep.subr.bf16.mxu0 0
      %2850 = vmatpush1.bf16.msra.mxu0 %v2834
      %2851 = vmatprep.subr.bf16.mxu0 0
      %2852 = vmatpush1.bf16.msra.mxu0 %v2833
      %2853 = vmatprep.subr.bf16.mxu0 0
      %2854 = vmatpush1.bf16.msra.mxu0 %v2832
      %2855 = vmatprep.subr.bf16.mxu0 0
      %2856 = vmatpush1.bf16.msra.mxu0 %v2831
      %2857 = vmatprep.subr.bf16.mxu0 0
      %2858 = vmatpush1.bf16.msra.mxu0 %v2830
      %2859 = vmatprep.subr.bf16.mxu0 0
      %2860 = vmatpush1.bf16.msra.mxu0 %v2829
      %2861 = vmatprep.subr.bf16.mxu0 0
      %2862 = vmatpush2.bf16.msra.mxu0 0
      %2863 = vmatprep.subr.bf16.mxu0 0
      %2864 = vmatpush2.bf16.msra.mxu0 0
      %2865 = vmatprep.subr.bf16.mxu0 0
      %2866 = vmatpush2.bf16.msra.mxu0 0
      %2867 = vmatprep.subr.bf16.mxu0 0
      %2868 = vmatpush2.bf16.msra.mxu0 0
      %2869 = vmatprep.subr.bf16.mxu0 0
      %2870 = vmatpush2.bf16.msra.mxu0 0
      %2871 = vmatprep.subr.bf16.mxu0 0
      %2872 = vmatpush2.bf16.msra.mxu0 0
      %2873 = vmatprep.subr.bf16.mxu0 0
      %2874 = vmatpush2.bf16.msra.mxu0 0
      %2875 = vmatprep.subr.bf16.mxu0 0
      %2876 = vmatpush2.bf16.msra.mxu0 0
      %2877 = vmatprep.mubr.bf16.mxu0 0
      %2878 = vmatmul.mubr.bf16.gmra.mxu0 %v2642
      %v2879 = vpop.f32.mrf.mxu0
      %v2880 = vadd.f32 0.0, %v2879
      %v2881 = vpop.f32.mrf.mxu0
      %v2882 = vpop.f32.mrf.mxu0
      %v2883 = vadd.f32 0.0, %v2882
      %v2884 = vpop.f32.mrf.mxu0
      %2885 = vmatprep.mubr.bf16.mxu0 0
      %2886 = vmatmul.mubr.bf16.gmra.mxu0 %v2650
      %v2887 = vpop.f32.mrf.mxu0
      %v2888 = vadd.f32 0.0, %v2887
      %v2889 = vpop.f32.mrf.mxu0
      %v2890 = vpop.f32.mrf.mxu0
      %v2891 = vadd.f32 0.0, %v2890
      %v2892 = vpop.f32.mrf.mxu0
      %2893 = vmatprep.mubr.bf16.mxu0 0
      %2894 = vmatmul.mubr.bf16.gmra.mxu0 %v2658
      %v2895 = vpop.f32.mrf.mxu0
      %v2896 = vadd.f32 0.0, %v2895
      %v2897 = vpop.f32.mrf.mxu0
      %v2898 = vpop.f32.mrf.mxu0
      %v2899 = vadd.f32 0.0, %v2898
      %v2900 = vpop.f32.mrf.mxu0
      %2901 = vmatprep.mubr.bf16.mxu0 0
      %2902 = vmatmul.mubr.bf16.gmra.mxu0 %v2666
      %v2903 = vpop.f32.mrf.mxu0
      %v2904 = vadd.f32 0.0, %v2903
      %v2905 = vpop.f32.mrf.mxu0
      %v2906 = vpop.f32.mrf.mxu0
      %v2907 = vadd.f32 0.0, %v2906
      %v2908 = vpop.f32.mrf.mxu0
      %2909 = vmatprep.mubr.bf16.mxu0 0
      %2910 = vmatmul.mubr.bf16.gmra.mxu0 %v2674
      %v2911 = vpop.f32.mrf.mxu0
      %v2912 = vadd.f32 0.0, %v2911
      %v2913 = vpop.f32.mrf.mxu0
      %v2914 = vpop.f32.mrf.mxu0
      %v2915 = vadd.f32 0.0, %v2914
      %v2916 = vpop.f32.mrf.mxu0
      %2917 = vmatprep.mubr.bf16.mxu0 0
      %2918 = vmatmul.mubr.bf16.gmra.mxu0 %v2682
      %v2919 = vpop.f32.mrf.mxu0
      %v2920 = vadd.f32 0.0, %v2919
      %v2921 = vpop.f32.mrf.mxu0
      %v2922 = vpop.f32.mrf.mxu0
      %v2923 = vadd.f32 0.0, %v2922
      %v2924 = vpop.f32.mrf.mxu0
      %2925 = vmatprep.mubr.bf16.mxu0 0
      %2926 = vmatmul.mubr.bf16.gmra.mxu0 %v2690
      %v2927 = vpop.f32.mrf.mxu0
      %v2928 = vadd.f32 0.0, %v2927
      %v2929 = vpop.f32.mrf.mxu0
      %v2930 = vpop.f32.mrf.mxu0
      %v2931 = vadd.f32 0.0, %v2930
      %v2932 = vpop.f32.mrf.mxu0
      %2933 = vmatprep.mubr.bf16.mxu0 0
      %2934 = vmatmul.mubr.bf16.gmra.mxu0 %v2698
      %v2935 = vpop.f32.mrf.mxu0
      %v2936 = vadd.f32 0.0, %v2935
      %v2937 = vpop.f32.mrf.mxu0
      %v2938 = vpop.f32.mrf.mxu0
      %v2939 = vadd.f32 0.0, %v2938
      %v2940 = vpop.f32.mrf.mxu0
      %2941 = vmatprep.mubr.bf16.mxu0 0
      %2942 = vmatmul.mubr.bf16.gmra.mxu0 %v2706
      %v2943 = vpop.f32.mrf.mxu0
      %v2944 = vadd.f32 0.0, %v2943
      %v2945 = vpop.f32.mrf.mxu0
      %v2946 = vpop.f32.mrf.mxu0
      %v2947 = vadd.f32 0.0, %v2946
      %v2948 = vpop.f32.mrf.mxu0
      %2949 = vmatprep.mubr.bf16.mxu0 0
      %2950 = vmatmul.mubr.bf16.gmra.mxu0 %v2714
      %v2951 = vpop.f32.mrf.mxu0
      %v2952 = vadd.f32 0.0, %v2951
      %v2953 = vpop.f32.mrf.mxu0
      %v2954 = vpop.f32.mrf.mxu0
      %v2955 = vadd.f32 0.0, %v2954
      %v2956 = vpop.f32.mrf.mxu0
      %2957 = vmatprep.mubr.bf16.mxu0 0
      %2958 = vmatmul.mubr.bf16.gmra.mxu0 %v2722
      %v2959 = vpop.f32.mrf.mxu0
      %v2960 = vadd.f32 0.0, %v2959
      %v2961 = vpop.f32.mrf.mxu0
      %v2962 = vpop.f32.mrf.mxu0
      %v2963 = vadd.f32 0.0, %v2962
      %v2964 = vpop.f32.mrf.mxu0
      %2965 = vmatprep.mubr.bf16.mxu0 0
      %2966 = vmatmul.mubr.bf16.gmra.mxu0 %v2730
      %v2967 = vpop.f32.mrf.mxu0
      %v2968 = vadd.f32 0.0, %v2967
      %v2969 = vpop.f32.mrf.mxu0
      %v2970 = vpop.f32.mrf.mxu0
      %v2971 = vadd.f32 0.0, %v2970
      %v2972 = vpop.f32.mrf.mxu0
      %2973 = vmatprep.mubr.bf16.mxu0 0
      %2974 = vmatmul.mubr.bf16.gmra.mxu0 %v2738
      %v2975 = vpop.f32.mrf.mxu0
      %v2976 = vadd.f32 0.0, %v2975
      %v2977 = vpop.f32.mrf.mxu0
      %v2978 = vpop.f32.mrf.mxu0
      %v2979 = vadd.f32 0.0, %v2978
      %v2980 = vpop.f32.mrf.mxu0
      %2981 = vmatprep.mubr.bf16.mxu0 0
      %2982 = vmatmul.mubr.bf16.gmra.mxu0 %v2746
      %v2983 = vpop.f32.mrf.mxu0
      %v2984 = vadd.f32 0.0, %v2983
      %v2985 = vpop.f32.mrf.mxu0
      %v2986 = vpop.f32.mrf.mxu0
      %v2987 = vadd.f32 0.0, %v2986
      %v2988 = vpop.f32.mrf.mxu0
      %2989 = vmatprep.mubr.bf16.mxu0 0
      %2990 = vmatmul.mubr.bf16.gmra.mxu0 %v2754
      %v2991 = vpop.f32.mrf.mxu0
      %v2992 = vadd.f32 0.0, %v2991
      %v2993 = vpop.f32.mrf.mxu0
      %v2994 = vpop.f32.mrf.mxu0
      %v2995 = vadd.f32 0.0, %v2994
      %v2996 = vpop.f32.mrf.mxu0
      %2997 = vmatprep.mubr.bf16.mxu0 0
      %2998 = vmatmul.mubr.bf16.gmra.mxu0 %v2762
      %v2999 = vpop.f32.mrf.mxu0
      %v3000 = vadd.f32 0.0, %v2999
      %v3001 = vpop.f32.mrf.mxu0
      %v3002 = vpop.f32.mrf.mxu0
      %v3003 = vadd.f32 0.0, %v3002
      %v3004 = vpop.f32.mrf.mxu0
      %3005 = vmatprep.mubr.bf16.mxu0 0
      %3006 = vmatmul.mubr.bf16.gmra.mxu0 %v2770
      %v3007 = vpop.f32.mrf.mxu0
      %v3008 = vadd.f32 0.0, %v3007
      %v3009 = vpop.f32.mrf.mxu0
      %v3010 = vpop.f32.mrf.mxu0
      %v3011 = vadd.f32 0.0, %v3010
      %v3012 = vpop.f32.mrf.mxu0
      %3013 = vmatprep.mubr.bf16.mxu0 0
      %3014 = vmatmul.mubr.bf16.gmra.mxu0 %v2778
      %v3015 = vpop.f32.mrf.mxu0
      %v3016 = vadd.f32 0.0, %v3015
      %v3017 = vpop.f32.mrf.mxu0
      %v3018 = vpop.f32.mrf.mxu0
      %v3019 = vadd.f32 0.0, %v3018
      %v3020 = vpop.f32.mrf.mxu0
      %3021 = vdwg.mxu0
      %v3022 = vadd.f32 %v2447, %v2880
      %v3023 = vadd.f32 %v2448, %v2883
      %v3024 = vadd.f32 %v2449, %v2888
      %v3025 = vadd.f32 %v2450, %v2891
      %v3026 = vadd.f32 %v2451, %v2896
      %v3027 = vadd.f32 %v2452, %v2899
      %v3028 = vadd.f32 %v2453, %v2904
      %v3029 = vadd.f32 %v2454, %v2907
      %v3030 = vadd.f32 %v2455, %v2912
      %v3031 = vadd.f32 %v2456, %v2915
      %v3032 = vadd.f32 %v2457, %v2920
      %v3033 = vadd.f32 %v2458, %v2923
      %v3034 = vadd.f32 %v2459, %v2928
      %v3035 = vadd.f32 %v2460, %v2931
      %v3036 = vadd.f32 %v2461, %v2936
      %v3037 = vadd.f32 %v2462, %v2939
      %v3038 = vadd.f32 %v2463, %v2944
      %v3039 = vadd.f32 %v2464, %v2947
      %v3040 = vadd.f32 %v2465, %v2952
      %v3041 = vadd.f32 %v2466, %v2955
      %v3042 = vadd.f32 %v2467, %v2960
      %v3043 = vadd.f32 %v2468, %v2963
      %v3044 = vadd.f32 %v2469, %v2968
      %v3045 = vadd.f32 %v2470, %v2971
      %v3046 = vadd.f32 %v2471, %v2976
      %v3047 = vadd.f32 %v2472, %v2979
      %v3048 = vadd.f32 %v2473, %v2984
      %v3049 = vadd.f32 %v2474, %v2987
      %v3050 = vadd.f32 %v2475, %v2992
      %v3051 = vadd.f32 %v2476, %v2995
      %v3052 = vadd.f32 %v2477, %v3000
      %v3053 = vadd.f32 %v2478, %v3003
      %v3054 = vadd.f32 %v2479, %v3008
      %v3055 = vadd.f32 %v2480, %v3011
      %v3056 = vadd.f32 %v2481, %v3016
      %v3057 = vadd.f32 %v2482, %v3019
      %v3058 = vld [vmem:[%s263 + $0x2c] sm:$0xf]
      %v3059 = vld [vmem:[%s263 + $0x30] sm:$0xf]
      %v3060 = vld [vmem:[%s263 + $0x34] sm:$0xf]
      %v3061 = vld [vmem:[%s263 + $0x38] sm:$0xf]
      %v3062 = vld [vmem:[%s263 + $0x3c] sm:$0xf]
      %v3063 = vld [vmem:[%s263 + $0x40] sm:$0xf]
      %v3064 = vld [vmem:[%s263 + $0x44] sm:$0xf]
      %v3065 = vld [vmem:[%s263 + $0x48] sm:$0xf]
      %v3066 = vld [vmem:[%s263 + $0x4c] sm:$0xf]
      %v3067 = vld [vmem:[%s263 + $0x50] sm:$0xf]
      %v3068 = vld [vmem:[%s263 + $0x54] sm:$0xf]
      %v3069 = vld [vmem:[%s263 + $0x58] sm:$0xf]
      %v3070 = vld [vmem:[%s263 + $0x5c] sm:$0xf]
      %v3071 = vld [vmem:[%s263 + $0x60] sm:$0xf]
      %v3072 = vld [vmem:[%s263 + $0x64] sm:$0xf]
      %v3073 = vld [vmem:[%s263 + $0x68] sm:$0xf]
      %v3074 = vld [vmem:[%s263 + $0x6c] sm:$0xf]
      %v3075 = vld [vmem:[%s263 + $0x70] sm:$0xf]
      %v3076 = vld [vmem:[%s263 + $0x74] sm:$0xf]
      %v3077 = vld [vmem:[%s263 + $0x78] sm:$0xf]
      %v3078 = vld [vmem:[%s263 + $0x7c] sm:$0xf]
      %v3079 = vld [vmem:[%s263 + $0x80] sm:$0xf]
      %v3080 = vld [vmem:[%s263 + $0x84] sm:$0xf]
      %v3081 = vld [vmem:[%s263 + $0x88] sm:$0xf]
      %v3082 = vld [vmem:[%s263 + $0x8c] sm:$0xf]
      %v3083 = vld [vmem:[%s263 + $0x90] sm:$0xf]
      %v3084 = vld [vmem:[%s263 + $0x94] sm:$0xf]
      %v3085 = vld [vmem:[%s263 + $0x98] sm:$0xf]
      %v3086 = vld [vmem:[%s263 + $0x9c] sm:$0xf]
      %v3087 = vld [vmem:[%s263 + $0xa0] sm:$0xf]
      %v3088 = vld [vmem:[%s263 + $0xa4] sm:$0xf]
      %v3089 = vld [vmem:[%s263 + $0xa8] sm:$0xf]
      %v3090 = vld [vmem:[%s263 + $0xac] sm:$0xf]
      %v3091 = vld [vmem:[%s263 + $0xb0] sm:$0xf]
      %v3092 = vld [vmem:[%s263 + $0xb4] sm:$0xf]
      %v3093 = vld [vmem:[%s263 + $0xb8] sm:$0xf]
      %v3094 = vld [vmem:[%s263 + $0xbc] sm:$0x1]
      %s3095 = scalar_lea.vmem %s272, 384
      %v3096 = vld [vmem:[%s3095] sm:$0xf]
      %v3097 = vld [vmem:[%s3095 + $0x4] sm:$0xf]
      %v3098 = vld [vmem:[%s3095 + $0x8] sm:$0xf]
      %v3099 = vld [vmem:[%s3095 + $0xc] sm:$0xf]
      %v3100 = vld [vmem:[%s3095 + $0x10] sm:$0xf]
      %v3101 = vld [vmem:[%s3095 + $0x14] sm:$0xf]
      %v3102 = vld [vmem:[%s3095 + $0x18] sm:$0xf]
      %v3103 = vld [vmem:[%s3095 + $0x1c] sm:$0xf]
      %v3104 = vld [vmem:[%s3095 + $0x20] sm:$0xf]
      %v3105 = vld [vmem:[%s3095 + $0x24] sm:$0xf]
      %v3106 = vld [vmem:[%s3095 + $0x28] sm:$0xf]
      %v3107 = vld [vmem:[%s3095 + $0x2c] sm:$0xf]
      %v3108 = vld [vmem:[%s3095 + $0x30] sm:$0xf]
      %v3109 = vld [vmem:[%s3095 + $0x34] sm:$0xf]
      %v3110 = vld [vmem:[%s3095 + $0x38] sm:$0xf]
      %v3111 = vld [vmem:[%s3095 + $0x3c] sm:$0xf]
      %v3149 = vunpack.c.l.b16 %v3058
      %v3150 = vunpack.c.l.b16 %v3059
      %v3151 = vunpack.c.l.b16 %v3060
      %v3152 = vunpack.c.l.b16 %v3061
      %v3153 = vunpack.c.l.b16 %v3062
      %v3154 = vunpack.c.l.b16 %v3063
      %v3155 = vunpack.c.l.b16 %v3064
      %v3156 = vunpack.c.l.b16 %v3065
      %v3157 = vunpack.c.l.b16 %v3066
      %v3158 = vunpack.c.l.b16 %v3067
      %v3159 = vunpack.c.l.b16 %v3068
      %v3160 = vunpack.c.l.b16 %v3069
      %v3161 = vunpack.c.l.b16 %v3070
      %v3162 = vunpack.c.l.b16 %v3071
      %v3163 = vunpack.c.l.b16 %v3072
      %v3164 = vunpack.c.l.b16 %v3073
      %v3165 = vunpack.c.l.b16 %v3074
      %v3166 = vunpack.c.l.b16 %v3075
      %v3167 = vunpack.c.l.b16 %v3076
      %v3168 = vunpack.c.l.b16 %v3077
      %v3169 = vunpack.c.l.b16 %v3078
      %v3170 = vunpack.c.l.b16 %v3079
      %v3171 = vunpack.c.l.b16 %v3080
      %v3172 = vunpack.c.l.b16 %v3081
      %v3173 = vunpack.c.l.b16 %v3082
      %v3174 = vunpack.c.l.b16 %v3083
      %v3175 = vunpack.c.l.b16 %v3084
      %v3176 = vunpack.c.l.b16 %v3085
      %v3177 = vunpack.c.l.b16 %v3086
      %v3178 = vunpack.c.l.b16 %v3087
      %v3179 = vunpack.c.l.b16 %v3088
      %v3180 = vunpack.c.l.b16 %v3089
      %v3181 = vunpack.c.l.b16 %v3090
      %v3182 = vunpack.c.l.b16 %v3091
      %v3183 = vunpack.c.l.b16 %v3092
      %v3184 = vunpack.c.l.b16 %v3093
      %v3185 = vunpack.c.l.b16 %v3094
      %v3186 = vpack.c.b16 %v3150, %v3149
      %v3187 = vpack.c.b16 %v3152, %v3151
      %v3188 = vpack.c.b16 %v3154, %v3153
      %v3189 = vpack.c.b16 %v3156, %v3155
      %v3190 = vpack.c.b16 %v3158, %v3157
      %v3191 = vpack.c.b16 %v3160, %v3159
      %v3192 = vpack.c.b16 %v3162, %v3161
      %v3193 = vpack.c.b16 %v3164, %v3163
      %v3194 = vpack.c.b16 %v3166, %v3165
      %v3195 = vpack.c.b16 %v3168, %v3167
      %v3196 = vpack.c.b16 %v3170, %v3169
      %v3197 = vpack.c.b16 %v3172, %v3171
      %v3198 = vpack.c.b16 %v3174, %v3173
      %v3199 = vpack.c.b16 %v3176, %v3175
      %v3200 = vpack.c.b16 %v3178, %v3177
      %v3201 = vpack.c.b16 %v3180, %v3179
      %v3202 = vpack.c.b16 %v3182, %v3181
      %v3203 = vpack.c.b16 %v3184, %v3183
      %v3204 = vpack.c.b16 %v3185, %v3185
      %v3206 = vshrl.u32 %v3186, 16
      %v3208 = vshll.u32 %v3186, 16
      %v3210 = vrot.slane %v3208, 1
      %v3211 = vor.u32 %v3206, %v3210
      %v3213 = vshll.u32 %v3187, 16
      %v3215 = vrot.slane %v3213, 1
      %v3216 = vsel %vm2630, %v3211, %v3215
      %v3217 = vshrl.u32 %v3187, 16
      %v3219 = vor.u32 %v3217, %v3215
      %v3221 = vshll.u32 %v3188, 16
      %v3223 = vrot.slane %v3221, 1
      %v3224 = vsel %vm2630, %v3219, %v3223
      %v3225 = vshrl.u32 %v3188, 16
      %v3227 = vor.u32 %v3225, %v3223
      %v3229 = vshll.u32 %v3189, 16
      %v3231 = vrot.slane %v3229, 1
      %v3232 = vsel %vm2630, %v3227, %v3231
      %v3233 = vshrl.u32 %v3189, 16
      %v3235 = vor.u32 %v3233, %v3231
      %v3237 = vshll.u32 %v3190, 16
      %v3239 = vrot.slane %v3237, 1
      %v3240 = vsel %vm2630, %v3235, %v3239
      %v3241 = vshrl.u32 %v3190, 16
      %v3243 = vor.u32 %v3241, %v3239
      %v3245 = vshll.u32 %v3191, 16
      %v3247 = vrot.slane %v3245, 1
      %v3248 = vsel %vm2630, %v3243, %v3247
      %v3249 = vshrl.u32 %v3191, 16
      %v3251 = vor.u32 %v3249, %v3247
      %v3253 = vshll.u32 %v3192, 16
      %v3255 = vrot.slane %v3253, 1
      %v3256 = vsel %vm2630, %v3251, %v3255
      %v3257 = vshrl.u32 %v3192, 16
      %v3259 = vor.u32 %v3257, %v3255
      %v3261 = vshll.u32 %v3193, 16
      %v3263 = vrot.slane %v3261, 1
      %v3264 = vsel %vm2630, %v3259, %v3263
      %v3265 = vshrl.u32 %v3193, 16
      %v3267 = vor.u32 %v3265, %v3263
      %v3269 = vshll.u32 %v3194, 16
      %v3271 = vrot.slane %v3269, 1
      %v3272 = vsel %vm2630, %v3267, %v3271
      %v3273 = vshrl.u32 %v3194, 16
      %v3275 = vor.u32 %v3273, %v3271
      %v3277 = vshll.u32 %v3195, 16
      %v3279 = vrot.slane %v3277, 1
      %v3280 = vsel %vm2630, %v3275, %v3279
      %v3281 = vshrl.u32 %v3195, 16
      %v3283 = vor.u32 %v3281, %v3279
      %v3285 = vshll.u32 %v3196, 16
      %v3287 = vrot.slane %v3285, 1
      %v3288 = vsel %vm2630, %v3283, %v3287
      %v3289 = vshrl.u32 %v3196, 16
      %v3291 = vor.u32 %v3289, %v3287
      %v3293 = vshll.u32 %v3197, 16
      %v3295 = vrot.slane %v3293, 1
      %v3296 = vsel %vm2630, %v3291, %v3295
      %v3297 = vshrl.u32 %v3197, 16
      %v3299 = vor.u32 %v3297, %v3295
      %v3301 = vshll.u32 %v3198, 16
      %v3303 = vrot.slane %v3301, 1
      %v3304 = vsel %vm2630, %v3299, %v3303
      %v3305 = vshrl.u32 %v3198, 16
      %v3307 = vor.u32 %v3305, %v3303
      %v3309 = vshll.u32 %v3199, 16
      %v3311 = vrot.slane %v3309, 1
      %v3312 = vsel %vm2630, %v3307, %v3311
      %v3313 = vshrl.u32 %v3199, 16
      %v3315 = vor.u32 %v3313, %v3311
      %v3317 = vshll.u32 %v3200, 16
      %v3319 = vrot.slane %v3317, 1
      %v3320 = vsel %vm2630, %v3315, %v3319
      %v3321 = vshrl.u32 %v3200, 16
      %v3323 = vor.u32 %v3321, %v3319
      %v3325 = vshll.u32 %v3201, 16
      %v3327 = vrot.slane %v3325, 1
      %v3328 = vsel %vm2630, %v3323, %v3327
      %v3329 = vshrl.u32 %v3201, 16
      %v3331 = vor.u32 %v3329, %v3327
      %v3333 = vshll.u32 %v3202, 16
      %v3335 = vrot.slane %v3333, 1
      %v3336 = vsel %vm2630, %v3331, %v3335
      %v3337 = vshrl.u32 %v3202, 16
      %v3339 = vor.u32 %v3337, %v3335
      %v3341 = vshll.u32 %v3203, 16
      %v3343 = vrot.slane %v3341, 1
      %v3344 = vsel %vm2630, %v3339, %v3343
      %v3345 = vshrl.u32 %v3203, 16
      %v3347 = vor.u32 %v3345, %v3343
      %v3349 = vshll.u32 %v3204, 16
      %v3351 = vrot.slane %v3349, 1
      %v3352 = vsel %vm2630, %v3347, %v3351
      %v3387 = vunpack.c.l.b16 %v3096
      %v3388 = vunpack.c.l.b16 %v3097
      %v3389 = vunpack.c.l.b16 %v3098
      %v3390 = vunpack.c.l.b16 %v3099
      %v3391 = vunpack.c.l.b16 %v3100
      %v3392 = vunpack.c.l.b16 %v3101
      %v3393 = vunpack.c.l.b16 %v3102
      %v3394 = vunpack.c.l.b16 %v3103
      %v3395 = vunpack.c.l.b16 %v3104
      %v3396 = vunpack.c.l.b16 %v3105
      %v3397 = vunpack.c.l.b16 %v3106
      %v3398 = vunpack.c.l.b16 %v3107
      %v3399 = vunpack.c.l.b16 %v3108
      %v3400 = vunpack.c.l.b16 %v3109
      %v3401 = vunpack.c.l.b16 %v3110
      %v3402 = vunpack.c.l.b16 %v3111
      %v3403 = vpack.c.b16 %v3388, %v3387
      %v3404 = vpack.c.b16 %v3390, %v3389
      %v3405 = vpack.c.b16 %v3392, %v3391
      %v3406 = vpack.c.b16 %v3394, %v3393
      %v3407 = vpack.c.b16 %v3396, %v3395
      %v3408 = vpack.c.b16 %v3398, %v3397
      %v3409 = vpack.c.b16 %v3400, %v3399
      %v3410 = vpack.c.b16 %v3402, %v3401
      %3419 = vmatprep.subr.bf16.mxu0 0
      %3420 = vmatpush1.bf16.msra.mxu0 %v3410
      %3421 = vmatprep.subr.bf16.mxu0 0
      %3422 = vmatpush1.bf16.msra.mxu0 %v3409
      %3423 = vmatprep.subr.bf16.mxu0 0
      %3424 = vmatpush1.bf16.msra.mxu0 %v3408
      %3425 = vmatprep.subr.bf16.mxu0 0
      %3426 = vmatpush1.bf16.msra.mxu0 %v3407
      %3427 = vmatprep.subr.bf16.mxu0 0
      %3428 = vmatpush1.bf16.msra.mxu0 %v3406
      %3429 = vmatprep.subr.bf16.mxu0 0
      %3430 = vmatpush1.bf16.msra.mxu0 %v3405
      %3431 = vmatprep.subr.bf16.mxu0 0
      %3432 = vmatpush1.bf16.msra.mxu0 %v3404
      %3433 = vmatprep.subr.bf16.mxu0 0
      %3434 = vmatpush1.bf16.msra.mxu0 %v3403
      %3435 = vmatprep.subr.bf16.mxu0 0
      %3436 = vmatpush2.bf16.msra.mxu0 0
      %3437 = vmatprep.subr.bf16.mxu0 0
      %3438 = vmatpush2.bf16.msra.mxu0 0
      %3439 = vmatprep.subr.bf16.mxu0 0
      %3440 = vmatpush2.bf16.msra.mxu0 0
      %3441 = vmatprep.subr.bf16.mxu0 0
      %3442 = vmatpush2.bf16.msra.mxu0 0
      %3443 = vmatprep.subr.bf16.mxu0 0
      %3444 = vmatpush2.bf16.msra.mxu0 0
      %3445 = vmatprep.subr.bf16.mxu0 0
      %3446 = vmatpush2.bf16.msra.mxu0 0
      %3447 = vmatprep.subr.bf16.mxu0 0
      %3448 = vmatpush2.bf16.msra.mxu0 0
      %3449 = vmatprep.subr.bf16.mxu0 0
      %3450 = vmatpush2.bf16.msra.mxu0 0
      %3451 = vmatprep.mubr.bf16.mxu0 0
      %3452 = vmatmul.mubr.bf16.gmra.mxu0 %v3216
      %v3453 = vpop.f32.mrf.mxu0
      %v3454 = vadd.f32 0.0, %v3453
      %v3455 = vpop.f32.mrf.mxu0
      %v3456 = vpop.f32.mrf.mxu0
      %v3457 = vadd.f32 0.0, %v3456
      %v3458 = vpop.f32.mrf.mxu0
      %3459 = vmatprep.mubr.bf16.mxu0 0
      %3460 = vmatmul.mubr.bf16.gmra.mxu0 %v3224
      %v3461 = vpop.f32.mrf.mxu0
      %v3462 = vadd.f32 0.0, %v3461
      %v3463 = vpop.f32.mrf.mxu0
      %v3464 = vpop.f32.mrf.mxu0
      %v3465 = vadd.f32 0.0, %v3464
      %v3466 = vpop.f32.mrf.mxu0
      %3467 = vmatprep.mubr.bf16.mxu0 0
      %3468 = vmatmul.mubr.bf16.gmra.mxu0 %v3232
      %v3469 = vpop.f32.mrf.mxu0
      %v3470 = vadd.f32 0.0, %v3469
      %v3471 = vpop.f32.mrf.mxu0
      %v3472 = vpop.f32.mrf.mxu0
      %v3473 = vadd.f32 0.0, %v3472
      %v3474 = vpop.f32.mrf.mxu0
      %3475 = vmatprep.mubr.bf16.mxu0 0
      %3476 = vmatmul.mubr.bf16.gmra.mxu0 %v3240
      %v3477 = vpop.f32.mrf.mxu0
      %v3478 = vadd.f32 0.0, %v3477
      %v3479 = vpop.f32.mrf.mxu0
      %v3480 = vpop.f32.mrf.mxu0
      %v3481 = vadd.f32 0.0, %v3480
      %v3482 = vpop.f32.mrf.mxu0
      %3483 = vmatprep.mubr.bf16.mxu0 0
      %3484 = vmatmul.mubr.bf16.gmra.mxu0 %v3248
      %v3485 = vpop.f32.mrf.mxu0
      %v3486 = vadd.f32 0.0, %v3485
      %v3487 = vpop.f32.mrf.mxu0
      %v3488 = vpop.f32.mrf.mxu0
      %v3489 = vadd.f32 0.0, %v3488
      %v3490 = vpop.f32.mrf.mxu0
      %3491 = vmatprep.mubr.bf16.mxu0 0
      %3492 = vmatmul.mubr.bf16.gmra.mxu0 %v3256
      %v3493 = vpop.f32.mrf.mxu0
      %v3494 = vadd.f32 0.0, %v3493
      %v3495 = vpop.f32.mrf.mxu0
      %v3496 = vpop.f32.mrf.mxu0
      %v3497 = vadd.f32 0.0, %v3496
      %v3498 = vpop.f32.mrf.mxu0
      %3499 = vmatprep.mubr.bf16.mxu0 0
      %3500 = vmatmul.mubr.bf16.gmra.mxu0 %v3264
      %v3501 = vpop.f32.mrf.mxu0
      %v3502 = vadd.f32 0.0, %v3501
      %v3503 = vpop.f32.mrf.mxu0
      %v3504 = vpop.f32.mrf.mxu0
      %v3505 = vadd.f32 0.0, %v3504
      %v3506 = vpop.f32.mrf.mxu0
      %3507 = vmatprep.mubr.bf16.mxu0 0
      %3508 = vmatmul.mubr.bf16.gmra.mxu0 %v3272
      %v3509 = vpop.f32.mrf.mxu0
      %v3510 = vadd.f32 0.0, %v3509
      %v3511 = vpop.f32.mrf.mxu0
      %v3512 = vpop.f32.mrf.mxu0
      %v3513 = vadd.f32 0.0, %v3512
      %v3514 = vpop.f32.mrf.mxu0
      %3515 = vmatprep.mubr.bf16.mxu0 0
      %3516 = vmatmul.mubr.bf16.gmra.mxu0 %v3280
      %v3517 = vpop.f32.mrf.mxu0
      %v3518 = vadd.f32 0.0, %v3517
      %v3519 = vpop.f32.mrf.mxu0
      %v3520 = vpop.f32.mrf.mxu0
      %v3521 = vadd.f32 0.0, %v3520
      %v3522 = vpop.f32.mrf.mxu0
      %3523 = vmatprep.mubr.bf16.mxu0 0
      %3524 = vmatmul.mubr.bf16.gmra.mxu0 %v3288
      %v3525 = vpop.f32.mrf.mxu0
      %v3526 = vadd.f32 0.0, %v3525
      %v3527 = vpop.f32.mrf.mxu0
      %v3528 = vpop.f32.mrf.mxu0
      %v3529 = vadd.f32 0.0, %v3528
      %v3530 = vpop.f32.mrf.mxu0
      %3531 = vmatprep.mubr.bf16.mxu0 0
      %3532 = vmatmul.mubr.bf16.gmra.mxu0 %v3296
      %v3533 = vpop.f32.mrf.mxu0
      %v3534 = vadd.f32 0.0, %v3533
      %v3535 = vpop.f32.mrf.mxu0
      %v3536 = vpop.f32.mrf.mxu0
      %v3537 = vadd.f32 0.0, %v3536
      %v3538 = vpop.f32.mrf.mxu0
      %3539 = vmatprep.mubr.bf16.mxu0 0
      %3540 = vmatmul.mubr.bf16.gmra.mxu0 %v3304
      %v3541 = vpop.f32.mrf.mxu0
      %v3542 = vadd.f32 0.0, %v3541
      %v3543 = vpop.f32.mrf.mxu0
      %v3544 = vpop.f32.mrf.mxu0
      %v3545 = vadd.f32 0.0, %v3544
      %v3546 = vpop.f32.mrf.mxu0
      %3547 = vmatprep.mubr.bf16.mxu0 0
      %3548 = vmatmul.mubr.bf16.gmra.mxu0 %v3312
      %v3549 = vpop.f32.mrf.mxu0
      %v3550 = vadd.f32 0.0, %v3549
      %v3551 = vpop.f32.mrf.mxu0
      %v3552 = vpop.f32.mrf.mxu0
      %v3553 = vadd.f32 0.0, %v3552
      %v3554 = vpop.f32.mrf.mxu0
      %3555 = vmatprep.mubr.bf16.mxu0 0
      %3556 = vmatmul.mubr.bf16.gmra.mxu0 %v3320
      %v3557 = vpop.f32.mrf.mxu0
      %v3558 = vadd.f32 0.0, %v3557
      %v3559 = vpop.f32.mrf.mxu0
      %v3560 = vpop.f32.mrf.mxu0
      %v3561 = vadd.f32 0.0, %v3560
      %v3562 = vpop.f32.mrf.mxu0
      %3563 = vmatprep.mubr.bf16.mxu0 0
      %3564 = vmatmul.mubr.bf16.gmra.mxu0 %v3328
      %v3565 = vpop.f32.mrf.mxu0
      %v3566 = vadd.f32 0.0, %v3565
      %v3567 = vpop.f32.mrf.mxu0
      %v3568 = vpop.f32.mrf.mxu0
      %v3569 = vadd.f32 0.0, %v3568
      %v3570 = vpop.f32.mrf.mxu0
      %3571 = vmatprep.mubr.bf16.mxu0 0
      %3572 = vmatmul.mubr.bf16.gmra.mxu0 %v3336
      %v3573 = vpop.f32.mrf.mxu0
      %v3574 = vadd.f32 0.0, %v3573
      %v3575 = vpop.f32.mrf.mxu0
      %v3576 = vpop.f32.mrf.mxu0
      %v3577 = vadd.f32 0.0, %v3576
      %v3578 = vpop.f32.mrf.mxu0
      %3579 = vmatprep.mubr.bf16.mxu0 0
      %3580 = vmatmul.mubr.bf16.gmra.mxu0 %v3344
      %v3581 = vpop.f32.mrf.mxu0
      %v3582 = vadd.f32 0.0, %v3581
      %v3583 = vpop.f32.mrf.mxu0
      %v3584 = vpop.f32.mrf.mxu0
      %v3585 = vadd.f32 0.0, %v3584
      %v3586 = vpop.f32.mrf.mxu0
      %3587 = vmatprep.mubr.bf16.mxu0 0
      %3588 = vmatmul.mubr.bf16.gmra.mxu0 %v3352
      %v3589 = vpop.f32.mrf.mxu0
      %v3590 = vadd.f32 0.0, %v3589
      %v3591 = vpop.f32.mrf.mxu0
      %v3592 = vpop.f32.mrf.mxu0
      %v3593 = vadd.f32 0.0, %v3592
      %v3594 = vpop.f32.mrf.mxu0
      %3595 = vdwg.mxu0
      %v3596 = vadd.f32 %v3022, %v3454
      %v3597 = vadd.f32 %v3023, %v3457
      %v3598 = vadd.f32 %v3024, %v3462
      %v3599 = vadd.f32 %v3025, %v3465
      %v3600 = vadd.f32 %v3026, %v3470
      %v3601 = vadd.f32 %v3027, %v3473
      %v3602 = vadd.f32 %v3028, %v3478
      %v3603 = vadd.f32 %v3029, %v3481
      %v3604 = vadd.f32 %v3030, %v3486
      %v3605 = vadd.f32 %v3031, %v3489
      %v3606 = vadd.f32 %v3032, %v3494
      %v3607 = vadd.f32 %v3033, %v3497
      %v3608 = vadd.f32 %v3034, %v3502
      %v3609 = vadd.f32 %v3035, %v3505
      %v3610 = vadd.f32 %v3036, %v3510
      %v3611 = vadd.f32 %v3037, %v3513
      %v3612 = vadd.f32 %v3038, %v3518
      %v3613 = vadd.f32 %v3039, %v3521
      %v3614 = vadd.f32 %v3040, %v3526
      %v3615 = vadd.f32 %v3041, %v3529
      %v3616 = vadd.f32 %v3042, %v3534
      %v3617 = vadd.f32 %v3043, %v3537
      %v3618 = vadd.f32 %v3044, %v3542
      %v3619 = vadd.f32 %v3045, %v3545
      %v3620 = vadd.f32 %v3046, %v3550
      %v3621 = vadd.f32 %v3047, %v3553
      %v3622 = vadd.f32 %v3048, %v3558
      %v3623 = vadd.f32 %v3049, %v3561
      %v3624 = vadd.f32 %v3050, %v3566
      %v3625 = vadd.f32 %v3051, %v3569
      %v3626 = vadd.f32 %v3052, %v3574
      %v3627 = vadd.f32 %v3053, %v3577
      %v3628 = vadd.f32 %v3054, %v3582
      %v3629 = vadd.f32 %v3055, %v3585
      %v3630 = vadd.f32 %v3056, %v3590
      %v3631 = vadd.f32 %v3057, %v3593
      %v3632 = vld [vmem:[%s263 + $0x2c] sm:$0xe]
      %s3633 = scalar_lea.vmem %s272, 448
      %v3634 = vld [vmem:[%s3633] sm:$0xf]
      %v3635 = vld [vmem:[%s3633 + $0x4] sm:$0xf]
      %v3636 = vld [vmem:[%s3633 + $0x8] sm:$0xf]
      %v3637 = vld [vmem:[%s3633 + $0xc] sm:$0xf]
      %v3638 = vld [vmem:[%s3633 + $0x10] sm:$0xf]
      %v3639 = vld [vmem:[%s3633 + $0x14] sm:$0xf]
      %v3640 = vld [vmem:[%s3633 + $0x18] sm:$0xf]
      %v3641 = vld [vmem:[%s3633 + $0x1c] sm:$0xf]
      %v3642 = vld [vmem:[%s3633 + $0x20] sm:$0xf]
      %v3643 = vld [vmem:[%s3633 + $0x24] sm:$0xf]
      %v3644 = vld [vmem:[%s3633 + $0x28] sm:$0xf]
      %v3645 = vld [vmem:[%s3633 + $0x2c] sm:$0xf]
      %v3646 = vld [vmem:[%s3633 + $0x30] sm:$0xf]
      %v3647 = vld [vmem:[%s3633 + $0x34] sm:$0xf]
      %v3648 = vld [vmem:[%s3633 + $0x38] sm:$0xf]
      %v3649 = vld [vmem:[%s3633 + $0x3c] sm:$0xf]
      %v3651 = vunpack.c.l.b16 %v3632
      %v3652 = vpack.c.b16 %v3150, %v3651
      %vm3653 = vcmask 1046528
      %v3654 = vrot.slane %v3652, 1
      %v3655 = vrot.slane %v3187, 1
      %v3656 = vsel %vm3653, %v3654, %v3655
      %v3657 = vrot.slane %v3188, 1
      %v3658 = vsel %vm3653, %v3655, %v3657
      %v3659 = vrot.slane %v3189, 1
      %v3660 = vsel %vm3653, %v3657, %v3659
      %v3661 = vrot.slane %v3190, 1
      %v3662 = vsel %vm3653, %v3659, %v3661
      %v3663 = vrot.slane %v3191, 1
      %v3664 = vsel %vm3653, %v3661, %v3663
      %v3665 = vrot.slane %v3192, 1
      %v3666 = vsel %vm3653, %v3663, %v3665
      %v3667 = vrot.slane %v3193, 1
      %v3668 = vsel %vm3653, %v3665, %v3667
      %v3669 = vrot.slane %v3194, 1
      %v3670 = vsel %vm3653, %v3667, %v3669
      %v3671 = vrot.slane %v3195, 1
      %v3672 = vsel %vm3653, %v3669, %v3671
      %v3673 = vrot.slane %v3196, 1
      %v3674 = vsel %vm3653, %v3671, %v3673
      %v3675 = vrot.slane %v3197, 1
      %v3676 = vsel %vm3653, %v3673, %v3675
      %v3677 = vrot.slane %v3198, 1
      %v3678 = vsel %vm3653, %v3675, %v3677
      %v3679 = vrot.slane %v3199, 1
      %v3680 = vsel %vm3653, %v3677, %v3679
      %v3681 = vrot.slane %v3200, 1
      %v3682 = vsel %vm3653, %v3679, %v3681
      %v3683 = vrot.slane %v3201, 1
      %v3684 = vsel %vm3653, %v3681, %v3683
      %v3685 = vrot.slane %v3202, 1
      %v3686 = vsel %vm3653, %v3683, %v3685
      %v3687 = vrot.slane %v3203, 1
      %v3688 = vsel %vm3653, %v3685, %v3687
      %v3689 = vrot.slane %v3204, 1
      %v3690 = vsel %vm3653, %v3687, %v3689
      %v3725 = vunpack.c.l.b16 %v3634
      %v3726 = vunpack.c.l.b16 %v3635
      %v3727 = vunpack.c.l.b16 %v3636
      %v3728 = vunpack.c.l.b16 %v3637
      %v3729 = vunpack.c.l.b16 %v3638
      %v3730 = vunpack.c.l.b16 %v3639
      %v3731 = vunpack.c.l.b16 %v3640
      %v3732 = vunpack.c.l.b16 %v3641
      %v3733 = vunpack.c.l.b16 %v3642
      %v3734 = vunpack.c.l.b16 %v3643
      %v3735 = vunpack.c.l.b16 %v3644
      %v3736 = vunpack.c.l.b16 %v3645
      %v3737 = vunpack.c.l.b16 %v3646
      %v3738 = vunpack.c.l.b16 %v3647
      %v3739 = vunpack.c.l.b16 %v3648
      %v3740 = vunpack.c.l.b16 %v3649
      %v3741 = vpack.c.b16 %v3726, %v3725
      %v3742 = vpack.c.b16 %v3728, %v3727
      %v3743 = vpack.c.b16 %v3730, %v3729
      %v3744 = vpack.c.b16 %v3732, %v3731
      %v3745 = vpack.c.b16 %v3734, %v3733
      %v3746 = vpack.c.b16 %v3736, %v3735
      %v3747 = vpack.c.b16 %v3738, %v3737
      %v3748 = vpack.c.b16 %v3740, %v3739
      %3757 = vmatprep.subr.bf16.mxu0 0
      %3758 = vmatpush1.bf16.msra.mxu0 %v3748
      %3759 = vmatprep.subr.bf16.mxu0 0
      %3760 = vmatpush1.bf16.msra.mxu0 %v3747
      %3761 = vmatprep.subr.bf16.mxu0 0
      %3762 = vmatpush1.bf16.msra.mxu0 %v3746
      %3763 = vmatprep.subr.bf16.mxu0 0
      %3764 = vmatpush1.bf16.msra.mxu0 %v3745
      %3765 = vmatprep.subr.bf16.mxu0 0
      %3766 = vmatpush1.bf16.msra.mxu0 %v3744
      %3767 = vmatprep.subr.bf16.mxu0 0
      %3768 = vmatpush1.bf16.msra.mxu0 %v3743
      %3769 = vmatprep.subr.bf16.mxu0 0
      %3770 = vmatpush1.bf16.msra.mxu0 %v3742
      %3771 = vmatprep.subr.bf16.mxu0 0
      %3772 = vmatpush1.bf16.msra.mxu0 %v3741
      %3773 = vmatprep.subr.bf16.mxu0 0
      %3774 = vmatpush2.bf16.msra.mxu0 0
      %3775 = vmatprep.subr.bf16.mxu0 0
      %3776 = vmatpush2.bf16.msra.mxu0 0
      %3777 = vmatprep.subr.bf16.mxu0 0
      %3778 = vmatpush2.bf16.msra.mxu0 0
      %3779 = vmatprep.subr.bf16.mxu0 0
      %3780 = vmatpush2.bf16.msra.mxu0 0
      %3781 = vmatprep.subr.bf16.mxu0 0
      %3782 = vmatpush2.bf16.msra.mxu0 0
      %3783 = vmatprep.subr.bf16.mxu0 0
      %3784 = vmatpush2.bf16.msra.mxu0 0
      %3785 = vmatprep.subr.bf16.mxu0 0
      %3786 = vmatpush2.bf16.msra.mxu0 0
      %3787 = vmatprep.subr.bf16.mxu0 0
      %3788 = vmatpush2.bf16.msra.mxu0 0
      %3789 = vmatprep.mubr.bf16.mxu0 0
      %3790 = vmatmul.mubr.bf16.gmra.mxu0 %v3656
      %v3791 = vpop.f32.mrf.mxu0
      %v3792 = vadd.f32 0.0, %v3791
      %v3793 = vpop.f32.mrf.mxu0
      %v3794 = vpop.f32.mrf.mxu0
      %v3795 = vadd.f32 0.0, %v3794
      %v3796 = vpop.f32.mrf.mxu0
      %3797 = vmatprep.mubr.bf16.mxu0 0
      %3798 = vmatmul.mubr.bf16.gmra.mxu0 %v3658
      %v3799 = vpop.f32.mrf.mxu0
      %v3800 = vadd.f32 0.0, %v3799
      %v3801 = vpop.f32.mrf.mxu0
      %v3802 = vpop.f32.mrf.mxu0
      %v3803 = vadd.f32 0.0, %v3802
      %v3804 = vpop.f32.mrf.mxu0
      %3805 = vmatprep.mubr.bf16.mxu0 0
      %3806 = vmatmul.mubr.bf16.gmra.mxu0 %v3660
      %v3807 = vpop.f32.mrf.mxu0
      %v3808 = vadd.f32 0.0, %v3807
      %v3809 = vpop.f32.mrf.mxu0
      %v3810 = vpop.f32.mrf.mxu0
      %v3811 = vadd.f32 0.0, %v3810
      %v3812 = vpop.f32.mrf.mxu0
      %3813 = vmatprep.mubr.bf16.mxu0 0
      %3814 = vmatmul.mubr.bf16.gmra.mxu0 %v3662
      %v3815 = vpop.f32.mrf.mxu0
      %v3816 = vadd.f32 0.0, %v3815
      %v3817 = vpop.f32.mrf.mxu0
      %v3818 = vpop.f32.mrf.mxu0
      %v3819 = vadd.f32 0.0, %v3818
      %v3820 = vpop.f32.mrf.mxu0
      %3821 = vmatprep.mubr.bf16.mxu0 0
      %3822 = vmatmul.mubr.bf16.gmra.mxu0 %v3664
      %v3823 = vpop.f32.mrf.mxu0
      %v3824 = vadd.f32 0.0, %v3823
      %v3825 = vpop.f32.mrf.mxu0
      %v3826 = vpop.f32.mrf.mxu0
      %v3827 = vadd.f32 0.0, %v3826
      %v3828 = vpop.f32.mrf.mxu0
      %3829 = vmatprep.mubr.bf16.mxu0 0
      %3830 = vmatmul.mubr.bf16.gmra.mxu0 %v3666
      %v3831 = vpop.f32.mrf.mxu0
      %v3832 = vadd.f32 0.0, %v3831
      %v3833 = vpop.f32.mrf.mxu0
      %v3834 = vpop.f32.mrf.mxu0
      %v3835 = vadd.f32 0.0, %v3834
      %v3836 = vpop.f32.mrf.mxu0
      %3837 = vmatprep.mubr.bf16.mxu0 0
      %3838 = vmatmul.mubr.bf16.gmra.mxu0 %v3668
      %v3839 = vpop.f32.mrf.mxu0
      %v3840 = vadd.f32 0.0, %v3839
      %v3841 = vpop.f32.mrf.mxu0
      %v3842 = vpop.f32.mrf.mxu0
      %v3843 = vadd.f32 0.0, %v3842
      %v3844 = vpop.f32.mrf.mxu0
      %3845 = vmatprep.mubr.bf16.mxu0 0
      %3846 = vmatmul.mubr.bf16.gmra.mxu0 %v3670
      %v3847 = vpop.f32.mrf.mxu0
      %v3848 = vadd.f32 0.0, %v3847
      %v3849 = vpop.f32.mrf.mxu0
      %v3850 = vpop.f32.mrf.mxu0
      %v3851 = vadd.f32 0.0, %v3850
      %v3852 = vpop.f32.mrf.mxu0
      %3853 = vmatprep.mubr.bf16.mxu0 0
      %3854 = vmatmul.mubr.bf16.gmra.mxu0 %v3672
      %v3855 = vpop.f32.mrf.mxu0
      %v3856 = vadd.f32 0.0, %v3855
      %v3857 = vpop.f32.mrf.mxu0
      %v3858 = vpop.f32.mrf.mxu0
      %v3859 = vadd.f32 0.0, %v3858
      %v3860 = vpop.f32.mrf.mxu0
      %3861 = vmatprep.mubr.bf16.mxu0 0
      %3862 = vmatmul.mubr.bf16.gmra.mxu0 %v3674
      %v3863 = vpop.f32.mrf.mxu0
      %v3864 = vadd.f32 0.0, %v3863
      %v3865 = vpop.f32.mrf.mxu0
      %v3866 = vpop.f32.mrf.mxu0
      %v3867 = vadd.f32 0.0, %v3866
      %v3868 = vpop.f32.mrf.mxu0
      %3869 = vmatprep.mubr.bf16.mxu0 0
      %3870 = vmatmul.mubr.bf16.gmra.mxu0 %v3676
      %v3871 = vpop.f32.mrf.mxu0
      %v3872 = vadd.f32 0.0, %v3871
      %v3873 = vpop.f32.mrf.mxu0
      %v3874 = vpop.f32.mrf.mxu0
      %v3875 = vadd.f32 0.0, %v3874
      %v3876 = vpop.f32.mrf.mxu0
      %3877 = vmatprep.mubr.bf16.mxu0 0
      %3878 = vmatmul.mubr.bf16.gmra.mxu0 %v3678
      %v3879 = vpop.f32.mrf.mxu0
      %v3880 = vadd.f32 0.0, %v3879
      %v3881 = vpop.f32.mrf.mxu0
      %v3882 = vpop.f32.mrf.mxu0
      %v3883 = vadd.f32 0.0, %v3882
      %v3884 = vpop.f32.mrf.mxu0
      %3885 = vmatprep.mubr.bf16.mxu0 0
      %3886 = vmatmul.mubr.bf16.gmra.mxu0 %v3680
      %v3887 = vpop.f32.mrf.mxu0
      %v3888 = vadd.f32 0.0, %v3887
      %v3889 = vpop.f32.mrf.mxu0
      %v3890 = vpop.f32.mrf.mxu0
      %v3891 = vadd.f32 0.0, %v3890
      %v3892 = vpop.f32.mrf.mxu0
      %3893 = vmatprep.mubr.bf16.mxu0 0
      %3894 = vmatmul.mubr.bf16.gmra.mxu0 %v3682
      %v3895 = vpop.f32.mrf.mxu0
      %v3896 = vadd.f32 0.0, %v3895
      %v3897 = vpop.f32.mrf.mxu0
      %v3898 = vpop.f32.mrf.mxu0
      %v3899 = vadd.f32 0.0, %v3898
      %v3900 = vpop.f32.mrf.mxu0
      %3901 = vmatprep.mubr.bf16.mxu0 0
      %3902 = vmatmul.mubr.bf16.gmra.mxu0 %v3684
      %v3903 = vpop.f32.mrf.mxu0
      %v3904 = vadd.f32 0.0, %v3903
      %v3905 = vpop.f32.mrf.mxu0
      %v3906 = vpop.f32.mrf.mxu0
      %v3907 = vadd.f32 0.0, %v3906
      %v3908 = vpop.f32.mrf.mxu0
      %3909 = vmatprep.mubr.bf16.mxu0 0
      %3910 = vmatmul.mubr.bf16.gmra.mxu0 %v3686
      %v3911 = vpop.f32.mrf.mxu0
      %v3912 = vadd.f32 0.0, %v3911
      %v3913 = vpop.f32.mrf.mxu0
      %v3914 = vpop.f32.mrf.mxu0
      %v3915 = vadd.f32 0.0, %v3914
      %v3916 = vpop.f32.mrf.mxu0
      %3917 = vmatprep.mubr.bf16.mxu0 0
      %3918 = vmatmul.mubr.bf16.gmra.mxu0 %v3688
      %v3919 = vpop.f32.mrf.mxu0
      %v3920 = vadd.f32 0.0, %v3919
      %v3921 = vpop.f32.mrf.mxu0
      %v3922 = vpop.f32.mrf.mxu0
      %v3923 = vadd.f32 0.0, %v3922
      %v3924 = vpop.f32.mrf.mxu0
      %3925 = vmatprep.mubr.bf16.mxu0 0
      %3926 = vmatmul.mubr.bf16.gmra.mxu0 %v3690
      %v3927 = vpop.f32.mrf.mxu0
      %v3928 = vadd.f32 0.0, %v3927
      %v3929 = vpop.f32.mrf.mxu0
      %v3930 = vpop.f32.mrf.mxu0
      %v3931 = vadd.f32 0.0, %v3930
      %v3932 = vpop.f32.mrf.mxu0
      %3933 = vdwg.mxu0
      %v3934 = vadd.f32 %v3596, %v3792
      %v3935 = vadd.f32 %v3597, %v3795
      %v3936 = vadd.f32 %v3598, %v3800
      %v3937 = vadd.f32 %v3599, %v3803
      %v3938 = vadd.f32 %v3600, %v3808
      %v3939 = vadd.f32 %v3601, %v3811
      %v3940 = vadd.f32 %v3602, %v3816
      %v3941 = vadd.f32 %v3603, %v3819
      %v3942 = vadd.f32 %v3604, %v3824
      %v3943 = vadd.f32 %v3605, %v3827
      %v3944 = vadd.f32 %v3606, %v3832
      %v3945 = vadd.f32 %v3607, %v3835
      %v3946 = vadd.f32 %v3608, %v3840
      %v3947 = vadd.f32 %v3609, %v3843
      %v3948 = vadd.f32 %v3610, %v3848
      %v3949 = vadd.f32 %v3611, %v3851
      %v3950 = vadd.f32 %v3612, %v3856
      %v3951 = vadd.f32 %v3613, %v3859
      %v3952 = vadd.f32 %v3614, %v3864
      %v3953 = vadd.f32 %v3615, %v3867
      %v3954 = vadd.f32 %v3616, %v3872
      %v3955 = vadd.f32 %v3617, %v3875
      %v3956 = vadd.f32 %v3618, %v3880
      %v3957 = vadd.f32 %v3619, %v3883
      %v3958 = vadd.f32 %v3620, %v3888
      %v3959 = vadd.f32 %v3621, %v3891
      %v3960 = vadd.f32 %v3622, %v3896
      %v3961 = vadd.f32 %v3623, %v3899
      %v3962 = vadd.f32 %v3624, %v3904
      %v3963 = vadd.f32 %v3625, %v3907
      %v3964 = vadd.f32 %v3626, %v3912
      %v3965 = vadd.f32 %v3627, %v3915
      %v3966 = vadd.f32 %v3628, %v3920
      %v3967 = vadd.f32 %v3629, %v3923
      %v3968 = vadd.f32 %v3630, %v3928
      %v3969 = vadd.f32 %v3631, %v3931
      %v3970 = vld [vmem:[%s263 + $0xbc] sm:$0x3]
      %s3971 = scalar_lea.vmem %s272, 512
      %v3972 = vld [vmem:[%s3971] sm:$0xf]
      %v3973 = vld [vmem:[%s3971 + $0x4] sm:$0xf]
      %v3974 = vld [vmem:[%s3971 + $0x8] sm:$0xf]
      %v3975 = vld [vmem:[%s3971 + $0xc] sm:$0xf]
      %v3976 = vld [vmem:[%s3971 + $0x10] sm:$0xf]
      %v3977 = vld [vmem:[%s3971 + $0x14] sm:$0xf]
      %v3978 = vld [vmem:[%s3971 + $0x18] sm:$0xf]
      %v3979 = vld [vmem:[%s3971 + $0x1c] sm:$0xf]
      %v3980 = vld [vmem:[%s3971 + $0x20] sm:$0xf]
      %v3981 = vld [vmem:[%s3971 + $0x24] sm:$0xf]
      %v3982 = vld [vmem:[%s3971 + $0x28] sm:$0xf]
      %v3983 = vld [vmem:[%s3971 + $0x2c] sm:$0xf]
      %v3984 = vld [vmem:[%s3971 + $0x30] sm:$0xf]
      %v3985 = vld [vmem:[%s3971 + $0x34] sm:$0xf]
      %v3986 = vld [vmem:[%s3971 + $0x38] sm:$0xf]
      %v3987 = vld [vmem:[%s3971 + $0x3c] sm:$0xf]
      %v3989 = vunpack.c.l.b16 %v3970
      %v3990 = vpack.c.b16 %v3989, %v3989
      %vm3991 = vsmask.f32 6400
      %v3993 = vshrl.u32 %v3652, 16
      %v3995 = vrot.slane %v3993, 1
      %v3996 = vshll.u32 %v3652, 16
      %v3998 = vrot.slane %v3996, 2
      %v3999 = vor.u32 %v3995, %v3998
      %v4000 = vrot.slane %v3217, 1
      %v4001 = vrot.slane %v3213, 2
      %v4002 = vor.u32 %v4000, %v4001
      %v4003 = vsel %vm3991, %v3999, %v4002
      %v4004 = vrot.slane %v3225, 1
      %v4005 = vrot.slane %v3221, 2
      %v4006 = vor.u32 %v4004, %v4005
      %v4007 = vsel %vm3991, %v4002, %v4006
      %v4008 = vrot.slane %v3233, 1
      %v4009 = vrot.slane %v3229, 2
      %v4010 = vor.u32 %v4008, %v4009
      %v4011 = vsel %vm3991, %v4006, %v4010
      %v4012 = vrot.slane %v3241, 1
      %v4013 = vrot.slane %v3237, 2
      %v4014 = vor.u32 %v4012, %v4013
      %v4015 = vsel %vm3991, %v4010, %v4014
      %v4016 = vrot.slane %v3249, 1
      %v4017 = vrot.slane %v3245, 2
      %v4018 = vor.u32 %v4016, %v4017
      %v4019 = vsel %vm3991, %v4014, %v4018
      %v4020 = vrot.slane %v3257, 1
      %v4021 = vrot.slane %v3253, 2
      %v4022 = vor.u32 %v4020, %v4021
      %v4023 = vsel %vm3991, %v4018, %v4022
      %v4024 = vrot.slane %v3265, 1
      %v4025 = vrot.slane %v3261, 2
      %v4026 = vor.u32 %v4024, %v4025
      %v4027 = vsel %vm3991, %v4022, %v4026
      %v4028 = vrot.slane %v3273, 1
      %v4029 = vrot.slane %v3269, 2
      %v4030 = vor.u32 %v4028, %v4029
      %v4031 = vsel %vm3991, %v4026, %v4030
      %v4032 = vrot.slane %v3281, 1
      %v4033 = vrot.slane %v3277, 2
      %v4034 = vor.u32 %v4032, %v4033
      %v4035 = vsel %vm3991, %v4030, %v4034
      %v4036 = vrot.slane %v3289, 1
      %v4037 = vrot.slane %v3285, 2
      %v4038 = vor.u32 %v4036, %v4037
      %v4039 = vsel %vm3991, %v4034, %v4038
      %v4040 = vrot.slane %v3297, 1
      %v4041 = vrot.slane %v3293, 2
      %v4042 = vor.u32 %v4040, %v4041
      %v4043 = vsel %vm3991, %v4038, %v4042
      %v4044 = vrot.slane %v3305, 1
      %v4045 = vrot.slane %v3301, 2
      %v4046 = vor.u32 %v4044, %v4045
      %v4047 = vsel %vm3991, %v4042, %v4046
      %v4048 = vrot.slane %v3313, 1
      %v4049 = vrot.slane %v3309, 2
      %v4050 = vor.u32 %v4048, %v4049
      %v4051 = vsel %vm3991, %v4046, %v4050
      %v4052 = vrot.slane %v3321, 1
      %v4053 = vrot.slane %v3317, 2
      %v4054 = vor.u32 %v4052, %v4053
      %v4055 = vsel %vm3991, %v4050, %v4054
      %v4056 = vrot.slane %v3329, 1
      %v4057 = vrot.slane %v3325, 2
      %v4058 = vor.u32 %v4056, %v4057
      %v4059 = vsel %vm3991, %v4054, %v4058
      %v4060 = vrot.slane %v3337, 1
      %v4061 = vrot.slane %v3333, 2
      %v4062 = vor.u32 %v4060, %v4061
      %v4063 = vsel %vm3991, %v4058, %v4062
      %v4064 = vrot.slane %v3345, 1
      %v4065 = vrot.slane %v3341, 2
      %v4066 = vor.u32 %v4064, %v4065
      %v4067 = vsel %vm3991, %v4062, %v4066
      %v4069 = vshrl.u32 %v3990, 16
      %v4071 = vrot.slane %v4069, 1
      %v4072 = vshll.u32 %v3990, 16
      %v4074 = vrot.slane %v4072, 2
      %v4075 = vor.u32 %v4071, %v4074
      %v4076 = vsel %vm3991, %v4066, %v4075
      %v4111 = vunpack.c.l.b16 %v3972
      %v4112 = vunpack.c.l.b16 %v3973
      %v4113 = vunpack.c.l.b16 %v3974
      %v4114 = vunpack.c.l.b16 %v3975
      %v4115 = vunpack.c.l.b16 %v3976
      %v4116 = vunpack.c.l.b16 %v3977
      %v4117 = vunpack.c.l.b16 %v3978
      %v4118 = vunpack.c.l.b16 %v3979
      %v4119 = vunpack.c.l.b16 %v3980
      %v4120 = vunpack.c.l.b16 %v3981
      %v4121 = vunpack.c.l.b16 %v3982
      %v4122 = vunpack.c.l.b16 %v3983
      %v4123 = vunpack.c.l.b16 %v3984
      %v4124 = vunpack.c.l.b16 %v3985
      %v4125 = vunpack.c.l.b16 %v3986
      %v4126 = vunpack.c.l.b16 %v3987
      %v4127 = vpack.c.b16 %v4112, %v4111
      %v4128 = vpack.c.b16 %v4114, %v4113
      %v4129 = vpack.c.b16 %v4116, %v4115
      %v4130 = vpack.c.b16 %v4118, %v4117
      %v4131 = vpack.c.b16 %v4120, %v4119
      %v4132 = vpack.c.b16 %v4122, %v4121
      %v4133 = vpack.c.b16 %v4124, %v4123
      %v4134 = vpack.c.b16 %v4126, %v4125
      %4143 = vmatprep.subr.bf16.mxu0 0
      %4144 = vmatpush1.bf16.msra.mxu0 %v4134
      %4145 = vmatprep.subr.bf16.mxu0 0
      %4146 = vmatpush1.bf16.msra.mxu0 %v4133
      %4147 = vmatprep.subr.bf16.mxu0 0
      %4148 = vmatpush1.bf16.msra.mxu0 %v4132
      %4149 = vmatprep.subr.bf16.mxu0 0
      %4150 = vmatpush1.bf16.msra.mxu0 %v4131
      %4151 = vmatprep.subr.bf16.mxu0 0
      %4152 = vmatpush1.bf16.msra.mxu0 %v4130
      %4153 = vmatprep.subr.bf16.mxu0 0
      %4154 = vmatpush1.bf16.msra.mxu0 %v4129
      %4155 = vmatprep.subr.bf16.mxu0 0
      %4156 = vmatpush1.bf16.msra.mxu0 %v4128
      %4157 = vmatprep.subr.bf16.mxu0 0
      %4158 = vmatpush1.bf16.msra.mxu0 %v4127
      %4159 = vmatprep.subr.bf16.mxu0 0
      %4160 = vmatpush2.bf16.msra.mxu0 0
      %4161 = vmatprep.subr.bf16.mxu0 0
      %4162 = vmatpush2.bf16.msra.mxu0 0
      %4163 = vmatprep.subr.bf16.mxu0 0
      %4164 = vmatpush2.bf16.msra.mxu0 0
      %4165 = vmatprep.subr.bf16.mxu0 0
      %4166 = vmatpush2.bf16.msra.mxu0 0
      %4167 = vmatprep.subr.bf16.mxu0 0
      %4168 = vmatpush2.bf16.msra.mxu0 0
      %4169 = vmatprep.subr.bf16.mxu0 0
      %4170 = vmatpush2.bf16.msra.mxu0 0
      %4171 = vmatprep.subr.bf16.mxu0 0
      %4172 = vmatpush2.bf16.msra.mxu0 0
      %4173 = vmatprep.subr.bf16.mxu0 0
      %4174 = vmatpush2.bf16.msra.mxu0 0
      %4175 = vmatprep.mubr.bf16.mxu0 0
      %4176 = vmatmul.mubr.bf16.gmra.mxu0 %v4003
      %v4177 = vpop.f32.mrf.mxu0
      %v4178 = vadd.f32 0.0, %v4177
      %v4179 = vpop.f32.mrf.mxu0
      %v4180 = vpop.f32.mrf.mxu0
      %v4181 = vadd.f32 0.0, %v4180
      %v4182 = vpop.f32.mrf.mxu0
      %4183 = vmatprep.mubr.bf16.mxu0 0
      %4184 = vmatmul.mubr.bf16.gmra.mxu0 %v4007
      %v4185 = vpop.f32.mrf.mxu0
      %v4186 = vadd.f32 0.0, %v4185
      %v4187 = vpop.f32.mrf.mxu0
      %v4188 = vpop.f32.mrf.mxu0
      %v4189 = vadd.f32 0.0, %v4188
      %v4190 = vpop.f32.mrf.mxu0
      %4191 = vmatprep.mubr.bf16.mxu0 0
      %4192 = vmatmul.mubr.bf16.gmra.mxu0 %v4011
      %v4193 = vpop.f32.mrf.mxu0
      %v4194 = vadd.f32 0.0, %v4193
      %v4195 = vpop.f32.mrf.mxu0
      %v4196 = vpop.f32.mrf.mxu0
      %v4197 = vadd.f32 0.0, %v4196
      %v4198 = vpop.f32.mrf.mxu0
      %4199 = vmatprep.mubr.bf16.mxu0 0
      %4200 = vmatmul.mubr.bf16.gmra.mxu0 %v4015
      %v4201 = vpop.f32.mrf.mxu0
      %v4202 = vadd.f32 0.0, %v4201
      %v4203 = vpop.f32.mrf.mxu0
      %v4204 = vpop.f32.mrf.mxu0
      %v4205 = vadd.f32 0.0, %v4204
      %v4206 = vpop.f32.mrf.mxu0
      %4207 = vmatprep.mubr.bf16.mxu0 0
      %4208 = vmatmul.mubr.bf16.gmra.mxu0 %v4019
      %v4209 = vpop.f32.mrf.mxu0
      %v4210 = vadd.f32 0.0, %v4209
      %v4211 = vpop.f32.mrf.mxu0
      %v4212 = vpop.f32.mrf.mxu0
      %v4213 = vadd.f32 0.0, %v4212
      %v4214 = vpop.f32.mrf.mxu0
      %4215 = vmatprep.mubr.bf16.mxu0 0
      %4216 = vmatmul.mubr.bf16.gmra.mxu0 %v4023
      %v4217 = vpop.f32.mrf.mxu0
      %v4218 = vadd.f32 0.0, %v4217
      %v4219 = vpop.f32.mrf.mxu0
      %v4220 = vpop.f32.mrf.mxu0
      %v4221 = vadd.f32 0.0, %v4220
      %v4222 = vpop.f32.mrf.mxu0
      %4223 = vmatprep.mubr.bf16.mxu0 0
      %4224 = vmatmul.mubr.bf16.gmra.mxu0 %v4027
      %v4225 = vpop.f32.mrf.mxu0
      %v4226 = vadd.f32 0.0, %v4225
      %v4227 = vpop.f32.mrf.mxu0
      %v4228 = vpop.f32.mrf.mxu0
      %v4229 = vadd.f32 0.0, %v4228
      %v4230 = vpop.f32.mrf.mxu0
      %4231 = vmatprep.mubr.bf16.mxu0 0
      %4232 = vmatmul.mubr.bf16.gmra.mxu0 %v4031
      %v4233 = vpop.f32.mrf.mxu0
      %v4234 = vadd.f32 0.0, %v4233
      %v4235 = vpop.f32.mrf.mxu0
      %v4236 = vpop.f32.mrf.mxu0
      %v4237 = vadd.f32 0.0, %v4236
      %v4238 = vpop.f32.mrf.mxu0
      %4239 = vmatprep.mubr.bf16.mxu0 0
      %4240 = vmatmul.mubr.bf16.gmra.mxu0 %v4035
      %v4241 = vpop.f32.mrf.mxu0
      %v4242 = vadd.f32 0.0, %v4241
      %v4243 = vpop.f32.mrf.mxu0
      %v4244 = vpop.f32.mrf.mxu0
      %v4245 = vadd.f32 0.0, %v4244
      %v4246 = vpop.f32.mrf.mxu0
      %4247 = vmatprep.mubr.bf16.mxu0 0
      %4248 = vmatmul.mubr.bf16.gmra.mxu0 %v4039
      %v4249 = vpop.f32.mrf.mxu0
      %v4250 = vadd.f32 0.0, %v4249
      %v4251 = vpop.f32.mrf.mxu0
      %v4252 = vpop.f32.mrf.mxu0
      %v4253 = vadd.f32 0.0, %v4252
      %v4254 = vpop.f32.mrf.mxu0
      %4255 = vmatprep.mubr.bf16.mxu0 0
      %4256 = vmatmul.mubr.bf16.gmra.mxu0 %v4043
      %v4257 = vpop.f32.mrf.mxu0
      %v4258 = vadd.f32 0.0, %v4257
      %v4259 = vpop.f32.mrf.mxu0
      %v4260 = vpop.f32.mrf.mxu0
      %v4261 = vadd.f32 0.0, %v4260
      %v4262 = vpop.f32.mrf.mxu0
      %4263 = vmatprep.mubr.bf16.mxu0 0
      %4264 = vmatmul.mubr.bf16.gmra.mxu0 %v4047
      %v4265 = vpop.f32.mrf.mxu0
      %v4266 = vadd.f32 0.0, %v4265
      %v4267 = vpop.f32.mrf.mxu0
      %v4268 = vpop.f32.mrf.mxu0
      %v4269 = vadd.f32 0.0, %v4268
      %v4270 = vpop.f32.mrf.mxu0
      %4271 = vmatprep.mubr.bf16.mxu0 0
      %4272 = vmatmul.mubr.bf16.gmra.mxu0 %v4051
      %v4273 = vpop.f32.mrf.mxu0
      %v4274 = vadd.f32 0.0, %v4273
      %v4275 = vpop.f32.mrf.mxu0
      %v4276 = vpop.f32.mrf.mxu0
      %v4277 = vadd.f32 0.0, %v4276
      %v4278 = vpop.f32.mrf.mxu0
      %4279 = vmatprep.mubr.bf16.mxu0 0
      %4280 = vmatmul.mubr.bf16.gmra.mxu0 %v4055
      %v4281 = vpop.f32.mrf.mxu0
      %v4282 = vadd.f32 0.0, %v4281
      %v4283 = vpop.f32.mrf.mxu0
      %v4284 = vpop.f32.mrf.mxu0
      %v4285 = vadd.f32 0.0, %v4284
      %v4286 = vpop.f32.mrf.mxu0
      %4287 = vmatprep.mubr.bf16.mxu0 0
      %4288 = vmatmul.mubr.bf16.gmra.mxu0 %v4059
      %v4289 = vpop.f32.mrf.mxu0
      %v4290 = vadd.f32 0.0, %v4289
      %v4291 = vpop.f32.mrf.mxu0
      %v4292 = vpop.f32.mrf.mxu0
      %v4293 = vadd.f32 0.0, %v4292
      %v4294 = vpop.f32.mrf.mxu0
      %4295 = vmatprep.mubr.bf16.mxu0 0
      %4296 = vmatmul.mubr.bf16.gmra.mxu0 %v4063
      %v4297 = vpop.f32.mrf.mxu0
      %v4298 = vadd.f32 0.0, %v4297
      %v4299 = vpop.f32.mrf.mxu0
      %v4300 = vpop.f32.mrf.mxu0
      %v4301 = vadd.f32 0.0, %v4300
      %v4302 = vpop.f32.mrf.mxu0
      %4303 = vmatprep.mubr.bf16.mxu0 0
      %4304 = vmatmul.mubr.bf16.gmra.mxu0 %v4067
      %v4305 = vpop.f32.mrf.mxu0
      %v4306 = vadd.f32 0.0, %v4305
      %v4307 = vpop.f32.mrf.mxu0
      %v4308 = vpop.f32.mrf.mxu0
      %v4309 = vadd.f32 0.0, %v4308
      %v4310 = vpop.f32.mrf.mxu0
      %4311 = vmatprep.mubr.bf16.mxu0 0
      %4312 = vmatmul.mubr.bf16.gmra.mxu0 %v4076
      %v4313 = vpop.f32.mrf.mxu0
      %v4314 = vadd.f32 0.0, %v4313
      %v4315 = vpop.f32.mrf.mxu0
      %v4316 = vpop.f32.mrf.mxu0
      %v4317 = vadd.f32 0.0, %v4316
      %v4318 = vpop.f32.mrf.mxu0
      %4319 = vdwg.mxu0
      %v4320 = vadd.f32 %v3934, %v4178
      %v4321 = vadd.f32 %v3935, %v4181
      %v4322 = vadd.f32 %v3936, %v4186
      %v4323 = vadd.f32 %v3937, %v4189
      %v4324 = vadd.f32 %v3938, %v4194
      %v4325 = vadd.f32 %v3939, %v4197
      %v4326 = vadd.f32 %v3940, %v4202
      %v4327 = vadd.f32 %v3941, %v4205
      %v4328 = vadd.f32 %v3942, %v4210
      %v4329 = vadd.f32 %v3943, %v4213
      %v4330 = vadd.f32 %v3944, %v4218
      %v4331 = vadd.f32 %v3945, %v4221
      %v4332 = vadd.f32 %v3946, %v4226
      %v4333 = vadd.f32 %v3947, %v4229
      %v4334 = vadd.f32 %v3948, %v4234
      %v4335 = vadd.f32 %v3949, %v4237
      %v4336 = vadd.f32 %v3950, %v4242
      %v4337 = vadd.f32 %v3951, %v4245
      %v4338 = vadd.f32 %v3952, %v4250
      %v4339 = vadd.f32 %v3953, %v4253
      %v4340 = vadd.f32 %v3954, %v4258
      %v4341 = vadd.f32 %v3955, %v4261
      %v4342 = vadd.f32 %v3956, %v4266
      %v4343 = vadd.f32 %v3957, %v4269
      %v4344 = vadd.f32 %v3958, %v4274
      %v4345 = vadd.f32 %v3959, %v4277
      %v4346 = vadd.f32 %v3960, %v4282
      %v4347 = vadd.f32 %v3961, %v4285
      %v4348 = vadd.f32 %v3962, %v4290
      %v4349 = vadd.f32 %v3963, %v4293
      %v4350 = vadd.f32 %v3964, %v4298
      %v4351 = vadd.f32 %v3965, %v4301
      %v4352 = vadd.f32 %v3966, %v4306
      %v4353 = vadd.f32 %v3967, %v4309
      %v4354 = vadd.f32 %v3968, %v4314
      %v4355 = vadd.f32 %v3969, %v4317
      %v4356 = vld [vmem:[#allocation2] sm:$0xff]
      %v4357 = vld [vmem:[#allocation2 + $0x8] sm:$0xff]
      %v4358 = vld [vmem:[#allocation2 + $0x10] sm:$0xff]
      %v4359 = vld [vmem:[#allocation2 + $0x18] sm:$0xff]
      %v4360 = vld [vmem:[#allocation2 + $0x20] sm:$0xff]
      %v4361 = vld [vmem:[#allocation2 + $0x28] sm:$0xff]
      %v4362 = vld [vmem:[#allocation2 + $0x30] sm:$0xff]
      %v4363 = vld [vmem:[#allocation2 + $0x38] sm:$0xff]
      %v4364 = vld [vmem:[#allocation2 + $0x40] sm:$0xff]
      %v4365 = vld [vmem:[#allocation2 + $0x48] sm:$0xff]
      %v4366 = vld [vmem:[#allocation2 + $0x50] sm:$0xff]
      %v4367 = vld [vmem:[#allocation2 + $0x58] sm:$0xff]
      %v4368 = vld [vmem:[#allocation2 + $0x60] sm:$0xff]
      %v4369 = vld [vmem:[#allocation2 + $0x68] sm:$0xff]
      %v4370 = vld [vmem:[#allocation2 + $0x70] sm:$0xff]
      %v4371 = vld [vmem:[#allocation2 + $0x78] sm:$0xff]
      %v4372 = vld [vmem:[#allocation2 + $0x80] sm:$0xff]
      %v4373 = vld [vmem:[#allocation2 + $0x88] sm:$0xff]
      %v4374 = vld [vmem:[#allocation2 + $0x90] sm:$0xff]
      %v4375 = vld [vmem:[#allocation2 + $0x98] sm:$0xff]
      %v4376 = vld [vmem:[#allocation2 + $0xa0] sm:$0xff]
      %v4377 = vld [vmem:[#allocation2 + $0xa8] sm:$0xff]
      %v4378 = vld [vmem:[#allocation2 + $0xb0] sm:$0xff]
      %v4379 = vld [vmem:[#allocation2 + $0xb8] sm:$0xff]
      %v4380 = vld [vmem:[#allocation2 + $0xc0] sm:$0xff]
      %v4381 = vld [vmem:[#allocation2 + $0xc8] sm:$0xff]
      %v4382 = vld [vmem:[#allocation2 + $0xd0] sm:$0xff]
      %v4383 = vld [vmem:[#allocation2 + $0xd8] sm:$0xff]
      %v4384 = vld [vmem:[#allocation2 + $0xe0] sm:$0xff]
      %v4385 = vld [vmem:[#allocation2 + $0xe8] sm:$0xff]
      %v4386 = vld [vmem:[#allocation2 + $0xf0] sm:$0xff]
      %v4387 = vld [vmem:[#allocation2 + $0xf8] sm:$0xff]
      %v4388 = vld [vmem:[#allocation2 + $0x100] sm:$0xff]
      %v4389 = vld [vmem:[#allocation2 + $0x108] sm:$0xff]
      %v4390 = vld [vmem:[#allocation2 + $0x110] sm:$0xff]
      %v4391 = vld [vmem:[#allocation2 + $0x118] sm:$0xff]
      %v4392 = vadd.f32 %v4356, %v4320
      %v4393 = vadd.f32 %v4357, %v4321
      %v4394 = vadd.f32 %v4358, %v4322
      %v4395 = vadd.f32 %v4359, %v4323
      %v4396 = vadd.f32 %v4360, %v4324
      %v4397 = vadd.f32 %v4361, %v4325
      %v4398 = vadd.f32 %v4362, %v4326
      %v4399 = vadd.f32 %v4363, %v4327
      %v4400 = vadd.f32 %v4364, %v4328
      %v4401 = vadd.f32 %v4365, %v4329
      %v4402 = vadd.f32 %v4366, %v4330
      %v4403 = vadd.f32 %v4367, %v4331
      %v4404 = vadd.f32 %v4368, %v4332
      %v4405 = vadd.f32 %v4369, %v4333
      %v4406 = vadd.f32 %v4370, %v4334
      %v4407 = vadd.f32 %v4371, %v4335
      %v4408 = vadd.f32 %v4372, %v4336
      %v4409 = vadd.f32 %v4373, %v4337
      %v4410 = vadd.f32 %v4374, %v4338
      %v4411 = vadd.f32 %v4375, %v4339
      %v4412 = vadd.f32 %v4376, %v4340
      %v4413 = vadd.f32 %v4377, %v4341
      %v4414 = vadd.f32 %v4378, %v4342
      %v4415 = vadd.f32 %v4379, %v4343
      %v4416 = vadd.f32 %v4380, %v4344
      %v4417 = vadd.f32 %v4381, %v4345
      %v4418 = vadd.f32 %v4382, %v4346
      %v4419 = vadd.f32 %v4383, %v4347
      %v4420 = vadd.f32 %v4384, %v4348
      %v4421 = vadd.f32 %v4385, %v4349
      %v4422 = vadd.f32 %v4386, %v4350
      %v4423 = vadd.f32 %v4387, %v4351
      %v4424 = vadd.f32 %v4388, %v4352
      %v4425 = vadd.f32 %v4389, %v4353
      %v4426 = vadd.f32 %v4390, %v4354
      %v4427 = vadd.f32 %v4391, %v4355
      %4428 = vst [vmem:[#allocation2] sm:$0xff] %v4392
      %4429 = vst [vmem:[#allocation2 + $0x8] sm:$0xff] %v4393
      %4430 = vst [vmem:[#allocation2 + $0x10] sm:$0xff] %v4394
      %4431 = vst [vmem:[#allocation2 + $0x18] sm:$0xff] %v4395
      %4432 = vst [vmem:[#allocation2 + $0x20] sm:$0xff] %v4396
      %4433 = vst [vmem:[#allocation2 + $0x28] sm:$0xff] %v4397
      %4434 = vst [vmem:[#allocation2 + $0x30] sm:$0xff] %v4398
      %4435 = vst [vmem:[#allocation2 + $0x38] sm:$0xff] %v4399
      %4436 = vst [vmem:[#allocation2 + $0x40] sm:$0xff] %v4400
      %4437 = vst [vmem:[#allocation2 + $0x48] sm:$0xff] %v4401
      %4438 = vst [vmem:[#allocation2 + $0x50] sm:$0xff] %v4402
      %4439 = vst [vmem:[#allocation2 + $0x58] sm:$0xff] %v4403
      %4440 = vst [vmem:[#allocation2 + $0x60] sm:$0xff] %v4404
      %4441 = vst [vmem:[#allocation2 + $0x68] sm:$0xff] %v4405
      %4442 = vst [vmem:[#allocation2 + $0x70] sm:$0xff] %v4406
      %4443 = vst [vmem:[#allocation2 + $0x78] sm:$0xff] %v4407
      %4444 = vst [vmem:[#allocation2 + $0x80] sm:$0xff] %v4408
      %4445 = vst [vmem:[#allocation2 + $0x88] sm:$0xff] %v4409
      %4446 = vst [vmem:[#allocation2 + $0x90] sm:$0xff] %v4410
      %4447 = vst [vmem:[#allocation2 + $0x98] sm:$0xff] %v4411
      %4448 = vst [vmem:[#allocation2 + $0xa0] sm:$0xff] %v4412
      %4449 = vst [vmem:[#allocation2 + $0xa8] sm:$0xff] %v4413
      %4450 = vst [vmem:[#allocation2 + $0xb0] sm:$0xff] %v4414
      %4451 = vst [vmem:[#allocation2 + $0xb8] sm:$0xff] %v4415
      %4452 = vst [vmem:[#allocation2 + $0xc0] sm:$0xff] %v4416
      %4453 = vst [vmem:[#allocation2 + $0xc8] sm:$0xff] %v4417
      %4454 = vst [vmem:[#allocation2 + $0xd0] sm:$0xff] %v4418
      %4455 = vst [vmem:[#allocation2 + $0xd8] sm:$0xff] %v4419
      %4456 = vst [vmem:[#allocation2 + $0xe0] sm:$0xff] %v4420
      %4457 = vst [vmem:[#allocation2 + $0xe8] sm:$0xff] %v4421
      %4458 = vst [vmem:[#allocation2 + $0xf0] sm:$0xff] %v4422
      %4459 = vst [vmem:[#allocation2 + $0xf8] sm:$0xff] %v4423
      %4460 = vst [vmem:[#allocation2 + $0x100] sm:$0xff] %v4424
      %4461 = vst [vmem:[#allocation2 + $0x108] sm:$0xff] %v4425
      %4462 = vst [vmem:[#allocation2 + $0x110] sm:$0xff] %v4426
      %4463 = vst [vmem:[#allocation2 + $0x118] sm:$0xff] %v4427
      // Predicated region
      $region41: #{residual_block_forward.2} parent=35 // pred_check
        %p4464 = pneg %p285
      $region42: #{residual_block_forward.2} parent=35 // pred_check_branch
        %4466 = sbr.rel (%p4464) target = $region44
      $region43: #{residual_block_forward.2} parent=35 // pred_region
        %v4467 = vld [vmem:[#allocation2] sm:$0xff]
        %v4468 = vld [vmem:[#allocation2 + $0x8] sm:$0xff]
        %v4469 = vld [vmem:[#allocation2 + $0x10] sm:$0xff]
        %v4470 = vld [vmem:[#allocation2 + $0x18] sm:$0xff]
        %v4471 = vld [vmem:[#allocation2 + $0x20] sm:$0xff]
        %v4472 = vld [vmem:[#allocation2 + $0x28] sm:$0xff]
        %v4473 = vld [vmem:[#allocation2 + $0x30] sm:$0xff]
        %v4474 = vld [vmem:[#allocation2 + $0x38] sm:$0xff]
        %v4475 = vld [vmem:[#allocation2 + $0x40] sm:$0xff]
        %v4476 = vld [vmem:[#allocation2 + $0x48] sm:$0xff]
        %v4477 = vld [vmem:[#allocation2 + $0x50] sm:$0xff]
        %v4478 = vld [vmem:[#allocation2 + $0x58] sm:$0xff]
        %v4479 = vld [vmem:[#allocation2 + $0x60] sm:$0xff]
        %v4480 = vld [vmem:[#allocation2 + $0x68] sm:$0xff]
        %v4481 = vld [vmem:[#allocation2 + $0x70] sm:$0xff]
        %v4482 = vld [vmem:[#allocation2 + $0x78] sm:$0xff]
        %v4483 = vld [vmem:[#allocation2 + $0x80] sm:$0xff]
        %v4484 = vld [vmem:[#allocation2 + $0x88] sm:$0xff]
        %v4485 = vld [vmem:[#allocation2 + $0x90] sm:$0xff]
        %v4486 = vld [vmem:[#allocation2 + $0x98] sm:$0xff]
        %v4487 = vld [vmem:[#allocation2 + $0xa0] sm:$0xff]
        %v4488 = vld [vmem:[#allocation2 + $0xa8] sm:$0xff]
        %v4489 = vld [vmem:[#allocation2 + $0xb0] sm:$0xff]
        %v4490 = vld [vmem:[#allocation2 + $0xb8] sm:$0xff]
        %v4491 = vld [vmem:[#allocation2 + $0xc0] sm:$0xff]
        %v4492 = vld [vmem:[#allocation2 + $0xc8] sm:$0xff]
        %v4493 = vld [vmem:[#allocation2 + $0xd0] sm:$0xff]
        %v4494 = vld [vmem:[#allocation2 + $0xd8] sm:$0xff]
        %v4495 = vld [vmem:[#allocation2 + $0xe0] sm:$0xff]
        %v4496 = vld [vmem:[#allocation2 + $0xe8] sm:$0xff]
        %v4497 = vld [vmem:[#allocation2 + $0xf0] sm:$0xff]
        %v4498 = vld [vmem:[#allocation2 + $0xf8] sm:$0xff]
        %v4499 = vld [vmem:[#allocation2 + $0x100] sm:$0xff]
        %v4500 = vld [vmem:[#allocation2 + $0x108] sm:$0xff]
        %v4501 = vld [vmem:[#allocation2 + $0x110] sm:$0xff]
        %v4502 = vld [vmem:[#allocation2 + $0x118] sm:$0xff]
        %v4503 = vld [vmem:[%s275] sm:$0x1]
        %v4505 = vlaneseq
        %v4506 = vshrl.u32 %v4505, 7
        %v4507 = vsub.s32 0, %v4506
        %v4508 = vrot.slane %v4503, %v4507
        %v4510 = vadd.f32 %v4467, %v4508
        %v4511 = vadd.f32 %v4468, %v4508
        %v4512 = vadd.f32 %v4469, %v4508
        %v4513 = vadd.f32 %v4470, %v4508
        %v4514 = vadd.f32 %v4471, %v4508
        %v4515 = vadd.f32 %v4472, %v4508
        %v4516 = vadd.f32 %v4473, %v4508
        %v4517 = vadd.f32 %v4474, %v4508
        %v4518 = vadd.f32 %v4475, %v4508
        %v4519 = vadd.f32 %v4476, %v4508
        %v4520 = vadd.f32 %v4477, %v4508
        %v4521 = vadd.f32 %v4478, %v4508
        %v4522 = vadd.f32 %v4479, %v4508
        %v4523 = vadd.f32 %v4480, %v4508
        %v4524 = vadd.f32 %v4481, %v4508
        %v4525 = vadd.f32 %v4482, %v4508
        %v4526 = vadd.f32 %v4483, %v4508
        %v4527 = vadd.f32 %v4484, %v4508
        %v4528 = vadd.f32 %v4485, %v4508
        %v4529 = vadd.f32 %v4486, %v4508
        %v4530 = vadd.f32 %v4487, %v4508
        %v4531 = vadd.f32 %v4488, %v4508
        %v4532 = vadd.f32 %v4489, %v4508
        %v4533 = vadd.f32 %v4490, %v4508
        %v4534 = vadd.f32 %v4491, %v4508
        %v4535 = vadd.f32 %v4492, %v4508
        %v4536 = vadd.f32 %v4493, %v4508
        %v4537 = vadd.f32 %v4494, %v4508
        %v4538 = vadd.f32 %v4495, %v4508
        %v4539 = vadd.f32 %v4496, %v4508
        %v4540 = vadd.f32 %v4497, %v4508
        %v4541 = vadd.f32 %v4498, %v4508
        %v4542 = vadd.f32 %v4499, %v4508
        %v4543 = vadd.f32 %v4500, %v4508
        %v4544 = vadd.f32 %v4501, %v4508
        %v4545 = vadd.f32 %v4502, %v4508
        %v4546 = vmax.f32 %v4510, 0.0
        %v4547 = vmax.f32 %v4511, 0.0
        %v4548 = vmax.f32 %v4512, 0.0
        %v4549 = vmax.f32 %v4513, 0.0
        %v4550 = vmax.f32 %v4514, 0.0
        %v4551 = vmax.f32 %v4515, 0.0
        %v4552 = vmax.f32 %v4516, 0.0
        %v4553 = vmax.f32 %v4517, 0.0
        %v4554 = vmax.f32 %v4518, 0.0
        %v4555 = vmax.f32 %v4519, 0.0
        %v4556 = vmax.f32 %v4520, 0.0
        %v4557 = vmax.f32 %v4521, 0.0
        %v4558 = vmax.f32 %v4522, 0.0
        %v4559 = vmax.f32 %v4523, 0.0
        %v4560 = vmax.f32 %v4524, 0.0
        %v4561 = vmax.f32 %v4525, 0.0
        %v4562 = vmax.f32 %v4526, 0.0
        %v4563 = vmax.f32 %v4527, 0.0
        %v4564 = vmax.f32 %v4528, 0.0
        %v4565 = vmax.f32 %v4529, 0.0
        %v4566 = vmax.f32 %v4530, 0.0
        %v4567 = vmax.f32 %v4531, 0.0
        %v4568 = vmax.f32 %v4532, 0.0
        %v4569 = vmax.f32 %v4533, 0.0
        %v4570 = vmax.f32 %v4534, 0.0
        %v4571 = vmax.f32 %v4535, 0.0
        %v4572 = vmax.f32 %v4536, 0.0
        %v4573 = vmax.f32 %v4537, 0.0
        %v4574 = vmax.f32 %v4538, 0.0
        %v4575 = vmax.f32 %v4539, 0.0
        %v4576 = vmax.f32 %v4540, 0.0
        %v4577 = vmax.f32 %v4541, 0.0
        %v4578 = vmax.f32 %v4542, 0.0
        %v4579 = vmax.f32 %v4543, 0.0
        %v4580 = vmax.f32 %v4544, 0.0
        %v4581 = vmax.f32 %v4545, 0.0
        %v4582 = vld [vmem:[%s3] sm:$0xff]
        %v4583 = vld [vmem:[%s3 + $0x8] sm:$0xff]
        %v4584 = vld [vmem:[%s3 + $0x10] sm:$0xff]
        %v4585 = vld [vmem:[%s3 + $0x18] sm:$0xff]
        %v4586 = vld [vmem:[%s3 + $0x20] sm:$0xff]
        %v4587 = vld [vmem:[%s3 + $0x28] sm:$0xff]
        %v4588 = vld [vmem:[%s3 + $0x30] sm:$0xff]
        %v4589 = vld [vmem:[%s3 + $0x38] sm:$0xff]
        %v4590 = vld [vmem:[%s3 + $0x40] sm:$0xff]
        %v4591 = vld [vmem:[%s3 + $0x48] sm:$0xff]
        %v4592 = vld [vmem:[%s3 + $0x50] sm:$0xff]
        %v4593 = vld [vmem:[%s3 + $0x58] sm:$0xff]
        %v4594 = vld [vmem:[%s3 + $0x60] sm:$0xff]
        %v4595 = vld [vmem:[%s3 + $0x68] sm:$0xff]
        %v4596 = vld [vmem:[%s3 + $0x70] sm:$0xff]
        %v4597 = vld [vmem:[%s3 + $0x78] sm:$0xff]
        %v4598 = vld [vmem:[%s3 + $0x80] sm:$0xff]
        %v4599 = vld [vmem:[%s3 + $0x88] sm:$0xff]
        %v4600 = vld [vmem:[%s3 + $0x90] sm:$0xff]
        %v4601 = vld [vmem:[%s3 + $0x98] sm:$0xff]
        %v4602 = vld [vmem:[%s3 + $0xa0] sm:$0xff]
        %v4603 = vld [vmem:[%s3 + $0xa8] sm:$0xff]
        %v4604 = vld [vmem:[%s3 + $0xb0] sm:$0xff]
        %v4605 = vld [vmem:[%s3 + $0xb8] sm:$0xff]
        %v4606 = vld [vmem:[%s3 + $0xc0] sm:$0xff]
        %v4607 = vld [vmem:[%s3 + $0xc8] sm:$0xff]
        %v4608 = vld [vmem:[%s3 + $0xd0] sm:$0xff]
        %v4609 = vld [vmem:[%s3 + $0xd8] sm:$0xff]
        %v4610 = vld [vmem:[%s3 + $0xe0] sm:$0xff]
        %v4611 = vld [vmem:[%s3 + $0xe8] sm:$0xff]
        %v4612 = vld [vmem:[%s3 + $0xf0] sm:$0xff]
        %v4613 = vld [vmem:[%s3 + $0xf8] sm:$0xff]
        %v4614 = vld [vmem:[%s3 + $0x100] sm:$0xff]
        %v4615 = vld [vmem:[%s3 + $0x108] sm:$0xff]
        %v4616 = vld [vmem:[%s3 + $0x110] sm:$0xff]
        %v4617 = vld [vmem:[%s3 + $0x118] sm:$0xff]
        %4619 = vset.pattern.permute.xlu0 0
        %4620 = vperm.xlu0 %4619, %v4582
        %v4621 = vpop.permute.xlu0 %4620
        %4624 = vset.pattern.permute.xlu0 0
        %4625 = vperm.xlu0 %4624, %v4583
        %v4626 = vpop.permute.xlu0 %4625
        %4629 = vset.pattern.permute.xlu0 0
        %4630 = vperm.xlu0 %4629, %v4584
        %v4631 = vpop.permute.xlu0 %4630
        %4634 = vset.pattern.permute.xlu0 0
        %4635 = vperm.xlu0 %4634, %v4585
        %v4636 = vpop.permute.xlu0 %4635
        %4639 = vset.pattern.permute.xlu0 0
        %4640 = vperm.xlu0 %4639, %v4586
        %v4641 = vpop.permute.xlu0 %4640
        %4644 = vset.pattern.permute.xlu0 0
        %4645 = vperm.xlu0 %4644, %v4587
        %v4646 = vpop.permute.xlu0 %4645
        %4649 = vset.pattern.permute.xlu0 0
        %4650 = vperm.xlu0 %4649, %v4588
        %v4651 = vpop.permute.xlu0 %4650
        %4654 = vset.pattern.permute.xlu0 0
        %4655 = vperm.xlu0 %4654, %v4589
        %v4656 = vpop.permute.xlu0 %4655
        %4659 = vset.pattern.permute.xlu0 0
        %4660 = vperm.xlu0 %4659, %v4590
        %v4661 = vpop.permute.xlu0 %4660
        %4664 = vset.pattern.permute.xlu0 0
        %4665 = vperm.xlu0 %4664, %v4591
        %v4666 = vpop.permute.xlu0 %4665
        %4669 = vset.pattern.permute.xlu0 0
        %4670 = vperm.xlu0 %4669, %v4592
        %v4671 = vpop.permute.xlu0 %4670
        %4674 = vset.pattern.permute.xlu0 0
        %4675 = vperm.xlu0 %4674, %v4593
        %v4676 = vpop.permute.xlu0 %4675
        %4679 = vset.pattern.permute.xlu0 0
        %4680 = vperm.xlu0 %4679, %v4594
        %v4681 = vpop.permute.xlu0 %4680
        %4684 = vset.pattern.permute.xlu0 0
        %4685 = vperm.xlu0 %4684, %v4595
        %v4686 = vpop.permute.xlu0 %4685
        %4689 = vset.pattern.permute.xlu0 0
        %4690 = vperm.xlu0 %4689, %v4596
        %v4691 = vpop.permute.xlu0 %4690
        %4694 = vset.pattern.permute.xlu0 0
        %4695 = vperm.xlu0 %4694, %v4597
        %v4696 = vpop.permute.xlu0 %4695
        %4699 = vset.pattern.permute.xlu0 0
        %4700 = vperm.xlu0 %4699, %v4598
        %v4701 = vpop.permute.xlu0 %4700
        %4704 = vset.pattern.permute.xlu0 0
        %4705 = vperm.xlu0 %4704, %v4599
        %v4706 = vpop.permute.xlu0 %4705
        %4709 = vset.pattern.permute.xlu0 0
        %4710 = vperm.xlu0 %4709, %v4600
        %v4711 = vpop.permute.xlu0 %4710
        %4714 = vset.pattern.permute.xlu0 0
        %4715 = vperm.xlu0 %4714, %v4601
        %v4716 = vpop.permute.xlu0 %4715
        %4719 = vset.pattern.permute.xlu0 0
        %4720 = vperm.xlu0 %4719, %v4602
        %v4721 = vpop.permute.xlu0 %4720
        %4724 = vset.pattern.permute.xlu0 0
        %4725 = vperm.xlu0 %4724, %v4603
        %v4726 = vpop.permute.xlu0 %4725
        %4729 = vset.pattern.permute.xlu0 0
        %4730 = vperm.xlu0 %4729, %v4604
        %v4731 = vpop.permute.xlu0 %4730
        %4734 = vset.pattern.permute.xlu0 0
        %4735 = vperm.xlu0 %4734, %v4605
        %v4736 = vpop.permute.xlu0 %4735
        %4739 = vset.pattern.permute.xlu0 0
        %4740 = vperm.xlu0 %4739, %v4606
        %v4741 = vpop.permute.xlu0 %4740
        %4744 = vset.pattern.permute.xlu0 0
        %4745 = vperm.xlu0 %4744, %v4607
        %v4746 = vpop.permute.xlu0 %4745
        %4749 = vset.pattern.permute.xlu0 0
        %4750 = vperm.xlu0 %4749, %v4608
        %v4751 = vpop.permute.xlu0 %4750
        %4754 = vset.pattern.permute.xlu0 0
        %4755 = vperm.xlu0 %4754, %v4609
        %v4756 = vpop.permute.xlu0 %4755
        %4759 = vset.pattern.permute.xlu0 0
        %4760 = vperm.xlu0 %4759, %v4610
        %v4761 = vpop.permute.xlu0 %4760
        %4764 = vset.pattern.permute.xlu0 0
        %4765 = vperm.xlu0 %4764, %v4611
        %v4766 = vpop.permute.xlu0 %4765
        %4769 = vset.pattern.permute.xlu0 0
        %4770 = vperm.xlu0 %4769, %v4612
        %v4771 = vpop.permute.xlu0 %4770
        %4774 = vset.pattern.permute.xlu0 0
        %4775 = vperm.xlu0 %4774, %v4613
        %v4776 = vpop.permute.xlu0 %4775
        %4779 = vset.pattern.permute.xlu0 0
        %4780 = vperm.xlu0 %4779, %v4614
        %v4781 = vpop.permute.xlu0 %4780
        %4784 = vset.pattern.permute.xlu0 0
        %4785 = vperm.xlu0 %4784, %v4615
        %v4786 = vpop.permute.xlu0 %4785
        %4789 = vset.pattern.permute.xlu0 0
        %4790 = vperm.xlu0 %4789, %v4616
        %v4791 = vpop.permute.xlu0 %4790
        %4794 = vset.pattern.permute.xlu0 0
        %4795 = vperm.xlu0 %4794, %v4617
        %v4796 = vpop.permute.xlu0 %4795
        %v4798 = vmul.f32 %v4546, %v4621
        %v4799 = vmul.f32 %v4547, %v4626
        %v4800 = vmul.f32 %v4548, %v4631
        %v4801 = vmul.f32 %v4549, %v4636
        %v4802 = vmul.f32 %v4550, %v4641
        %v4803 = vmul.f32 %v4551, %v4646
        %v4804 = vmul.f32 %v4552, %v4651
        %v4805 = vmul.f32 %v4553, %v4656
        %v4806 = vmul.f32 %v4554, %v4661
        %v4807 = vmul.f32 %v4555, %v4666
        %v4808 = vmul.f32 %v4556, %v4671
        %v4809 = vmul.f32 %v4557, %v4676
        %v4810 = vmul.f32 %v4558, %v4681
        %v4811 = vmul.f32 %v4559, %v4686
        %v4812 = vmul.f32 %v4560, %v4691
        %v4813 = vmul.f32 %v4561, %v4696
        %v4814 = vmul.f32 %v4562, %v4701
        %v4815 = vmul.f32 %v4563, %v4706
        %v4816 = vmul.f32 %v4564, %v4711
        %v4817 = vmul.f32 %v4565, %v4716
        %v4818 = vmul.f32 %v4566, %v4721
        %v4819 = vmul.f32 %v4567, %v4726
        %v4820 = vmul.f32 %v4568, %v4731
        %v4821 = vmul.f32 %v4569, %v4736
        %v4822 = vmul.f32 %v4570, %v4741
        %v4823 = vmul.f32 %v4571, %v4746
        %v4824 = vmul.f32 %v4572, %v4751
        %v4825 = vmul.f32 %v4573, %v4756
        %v4826 = vmul.f32 %v4574, %v4761
        %v4827 = vmul.f32 %v4575, %v4766
        %v4828 = vmul.f32 %v4576, %v4771
        %v4829 = vmul.f32 %v4577, %v4776
        %v4830 = vmul.f32 %v4578, %v4781
        %v4831 = vmul.f32 %v4579, %v4786
        %v4832 = vmul.f32 %v4580, %v4791
        %v4833 = vmul.f32 %v4581, %v4796
        %4834 = vst [vmem:[%s283] sm:$0xf] 0
        %4835 = vst [vmem:[%s283 + $0x4] sm:$0xf] 0
        %4836 = vst [vmem:[%s283 + $0x8] sm:$0xf] 0
        %4837 = vst [vmem:[%s283 + $0xc] sm:$0xf] 0
        %4838 = vst [vmem:[%s283 + $0x10] sm:$0xf] 0
        %4839 = vst [vmem:[%s283 + $0x14] sm:$0xf] 0
        %4840 = vst [vmem:[%s283 + $0x18] sm:$0xf] 0
        %4841 = vst [vmem:[%s283 + $0x1c] sm:$0xf] 0
        %4842 = vst [vmem:[%s283 + $0x20] sm:$0xf] 0
        %4843 = vst [vmem:[%s283 + $0x24] sm:$0xf] 0
        %4844 = vst [vmem:[%s283 + $0x28] sm:$0xf] 0
        %4845 = vst [vmem:[%s283 + $0x2c] sm:$0xf] 0
        %4846 = vst [vmem:[%s283 + $0x30] sm:$0xf] 0
        %4847 = vst [vmem:[%s283 + $0x34] sm:$0xf] 0
        %4848 = vst [vmem:[%s283 + $0x38] sm:$0xf] 0
        %4849 = vst [vmem:[%s283 + $0x3c] sm:$0xf] 0
        %4850 = vst [vmem:[%s283 + $0x40] sm:$0xf] 0
        %4851 = vst [vmem:[%s283 + $0x44] sm:$0xf] 0
        %4852 = vst [vmem:[%s283 + $0x48] sm:$0xf] 0
        %4853 = vst [vmem:[%s283 + $0x4c] sm:$0xf] 0
        %4854 = vst [vmem:[%s283 + $0x50] sm:$0xf] 0
        %4855 = vst [vmem:[%s283 + $0x54] sm:$0xf] 0
        %4856 = vst [vmem:[%s283 + $0x58] sm:$0xf] 0
        %4857 = vst [vmem:[%s283 + $0x5c] sm:$0xf] 0
        %4858 = vst [vmem:[%s283 + $0x60] sm:$0xf] 0
        %4859 = vst [vmem:[%s283 + $0x64] sm:$0xf] 0
        %4860 = vst [vmem:[%s283 + $0x68] sm:$0xf] 0
        %4861 = vst [vmem:[%s283 + $0x6c] sm:$0xf] 0
        %4862 = vst [vmem:[%s283 + $0x70] sm:$0xf] 0
        %4863 = vst [vmem:[%s283 + $0x74] sm:$0xf] 0
        %4864 = vst [vmem:[%s283 + $0x78] sm:$0xf] 0
        %4865 = vst [vmem:[%s283 + $0x7c] sm:$0xf] 0
        %4866 = vst [vmem:[%s283 + $0x80] sm:$0xf] 0
        %4867 = vst [vmem:[%s283 + $0x84] sm:$0xf] 0
        %4868 = vst [vmem:[%s283 + $0x88] sm:$0xf] 0
        %4869 = vst [vmem:[%s283 + $0x8c] sm:$0xf] 0
        %4870 = vst [vmem:[%s283 + $0x90] sm:$0xf] 0
        %4871 = vst [vmem:[%s283 + $0x94] sm:$0xf] 0
        %4872 = vst [vmem:[%s283 + $0x98] sm:$0xf] 0
        %4873 = vst [vmem:[%s283 + $0x9c] sm:$0xf] 0
        %4874 = vst [vmem:[%s283 + $0xa0] sm:$0xf] 0
        %4875 = vst [vmem:[%s283 + $0xa4] sm:$0xf] 0
        %4876 = vst [vmem:[%s283 + $0xa8] sm:$0xf] 0
        %4877 = vst [vmem:[%s283 + $0xac] sm:$0xf] 0
        %4878 = vst [vmem:[%s283 + $0xb0] sm:$0xf] 0
        %4879 = vst [vmem:[%s283 + $0xb4] sm:$0xf] 0
        %4880 = vst [vmem:[%s283 + $0xb8] sm:$0xf] 0
        %4881 = vst [vmem:[%s283 + $0xbc] sm:$0xf] 0
        %4882 = vst [vmem:[%s283 + $0xc0] sm:$0xf] 0
        %4883 = vst [vmem:[%s283 + $0xc4] sm:$0x3] 0
        %v4884 = vpack.c.bf16 %v4799, %v4798
        %v4885 = vpack.c.bf16 %v4801, %v4800
        %v4886 = vpack.c.bf16 %v4803, %v4802
        %v4887 = vpack.c.bf16 %v4805, %v4804
        %v4888 = vpack.c.bf16 %v4807, %v4806
        %v4889 = vpack.c.bf16 %v4809, %v4808
        %v4890 = vpack.c.bf16 %v4811, %v4810
        %v4891 = vpack.c.bf16 %v4813, %v4812
        %v4892 = vpack.c.bf16 %v4815, %v4814
        %v4893 = vpack.c.bf16 %v4817, %v4816
        %v4894 = vpack.c.bf16 %v4819, %v4818
        %v4895 = vpack.c.bf16 %v4821, %v4820
        %v4896 = vpack.c.bf16 %v4823, %v4822
        %v4897 = vpack.c.bf16 %v4825, %v4824
        %v4898 = vpack.c.bf16 %v4827, %v4826
        %v4899 = vpack.c.bf16 %v4829, %v4828
        %v4900 = vpack.c.bf16 %v4831, %v4830
        %v4901 = vpack.c.bf16 %v4833, %v4832
        %v4920 = vunpack.c.l.b16 %v4884
        %v4921 = vunpack.c.h.b16 %v4884
        %v4922 = vunpack.c.l.b16 %v4885
        %v4923 = vunpack.c.h.b16 %v4885
        %v4924 = vunpack.c.l.b16 %v4886
        %v4925 = vunpack.c.h.b16 %v4886
        %v4926 = vunpack.c.l.b16 %v4887
        %v4927 = vunpack.c.h.b16 %v4887
        %v4928 = vunpack.c.l.b16 %v4888
        %v4929 = vunpack.c.h.b16 %v4888
        %v4930 = vunpack.c.l.b16 %v4889
        %v4931 = vunpack.c.h.b16 %v4889
        %v4932 = vunpack.c.l.b16 %v4890
        %v4933 = vunpack.c.h.b16 %v4890
        %v4934 = vunpack.c.l.b16 %v4891
        %v4935 = vunpack.c.h.b16 %v4891
        %v4936 = vunpack.c.l.b16 %v4892
        %v4937 = vunpack.c.h.b16 %v4892
        %v4938 = vunpack.c.l.b16 %v4893
        %v4939 = vunpack.c.h.b16 %v4893
        %v4940 = vunpack.c.l.b16 %v4894
        %v4941 = vunpack.c.h.b16 %v4894
        %v4942 = vunpack.c.l.b16 %v4895
        %v4943 = vunpack.c.h.b16 %v4895
        %v4944 = vunpack.c.l.b16 %v4896
        %v4945 = vunpack.c.h.b16 %v4896
        %v4946 = vunpack.c.l.b16 %v4897
        %v4947 = vunpack.c.h.b16 %v4897
        %v4948 = vunpack.c.l.b16 %v4898
        %v4949 = vunpack.c.h.b16 %v4898
        %v4950 = vunpack.c.l.b16 %v4899
        %v4951 = vunpack.c.h.b16 %v4899
        %v4952 = vunpack.c.l.b16 %v4900
        %v4953 = vunpack.c.h.b16 %v4900
        %v4954 = vunpack.c.l.b16 %v4901
        %v4955 = vunpack.c.h.b16 %v4901
        %v4956 = vpack.c.b16 %v4920, %v4920
        %v4957 = vpack.c.b16 %v4921, %v4921
        %v4958 = vpack.c.b16 %v4922, %v4922
        %v4959 = vpack.c.b16 %v4923, %v4923
        %v4960 = vpack.c.b16 %v4924, %v4924
        %v4961 = vpack.c.b16 %v4925, %v4925
        %v4962 = vpack.c.b16 %v4926, %v4926
        %v4963 = vpack.c.b16 %v4927, %v4927
        %v4964 = vpack.c.b16 %v4928, %v4928
        %v4965 = vpack.c.b16 %v4929, %v4929
        %v4966 = vpack.c.b16 %v4930, %v4930
        %v4967 = vpack.c.b16 %v4931, %v4931
        %v4968 = vpack.c.b16 %v4932, %v4932
        %v4969 = vpack.c.b16 %v4933, %v4933
        %v4970 = vpack.c.b16 %v4934, %v4934
        %v4971 = vpack.c.b16 %v4935, %v4935
        %v4972 = vpack.c.b16 %v4936, %v4936
        %v4973 = vpack.c.b16 %v4937, %v4937
        %v4974 = vpack.c.b16 %v4938, %v4938
        %v4975 = vpack.c.b16 %v4939, %v4939
        %v4976 = vpack.c.b16 %v4940, %v4940
        %v4977 = vpack.c.b16 %v4941, %v4941
        %v4978 = vpack.c.b16 %v4942, %v4942
        %v4979 = vpack.c.b16 %v4943, %v4943
        %v4980 = vpack.c.b16 %v4944, %v4944
        %v4981 = vpack.c.b16 %v4945, %v4945
        %v4982 = vpack.c.b16 %v4946, %v4946
        %v4983 = vpack.c.b16 %v4947, %v4947
        %v4984 = vpack.c.b16 %v4948, %v4948
        %v4985 = vpack.c.b16 %v4949, %v4949
        %v4986 = vpack.c.b16 %v4950, %v4950
        %v4987 = vpack.c.b16 %v4951, %v4951
        %v4988 = vpack.c.b16 %v4952, %v4952
        %v4989 = vpack.c.b16 %v4953, %v4953
        %v4990 = vpack.c.b16 %v4954, %v4954
        %v4991 = vpack.c.b16 %v4955, %v4955
        %5028 = vst [vmem:[%s283 + $0x24] sm:$0xf] %v4956
        %5029 = vst [vmem:[%s283 + $0x28] sm:$0xf] %v4957
        %5030 = vst [vmem:[%s283 + $0x2c] sm:$0xf] %v4958
        %5031 = vst [vmem:[%s283 + $0x30] sm:$0xf] %v4959
        %5032 = vst [vmem:[%s283 + $0x34] sm:$0xf] %v4960
        %5033 = vst [vmem:[%s283 + $0x38] sm:$0xf] %v4961
        %5034 = vst [vmem:[%s283 + $0x3c] sm:$0xf] %v4962
        %5035 = vst [vmem:[%s283 + $0x40] sm:$0xf] %v4963
        %5036 = vst [vmem:[%s283 + $0x44] sm:$0xf] %v4964
        %5037 = vst [vmem:[%s283 + $0x48] sm:$0xf] %v4965
        %5038 = vst [vmem:[%s283 + $0x4c] sm:$0xf] %v4966
        %5039 = vst [vmem:[%s283 + $0x50] sm:$0xf] %v4967
        %5040 = vst [vmem:[%s283 + $0x54] sm:$0xf] %v4968
        %5041 = vst [vmem:[%s283 + $0x58] sm:$0xf] %v4969
        %5042 = vst [vmem:[%s283 + $0x5c] sm:$0xf] %v4970
        %5043 = vst [vmem:[%s283 + $0x60] sm:$0xf] %v4971
        %5044 = vst [vmem:[%s283 + $0x64] sm:$0xf] %v4972
        %5045 = vst [vmem:[%s283 + $0x68] sm:$0xf] %v4973
        %5046 = vst [vmem:[%s283 + $0x6c] sm:$0xf] %v4974
        %5047 = vst [vmem:[%s283 + $0x70] sm:$0xf] %v4975
        %5048 = vst [vmem:[%s283 + $0x74] sm:$0xf] %v4976
        %5049 = vst [vmem:[%s283 + $0x78] sm:$0xf] %v4977
        %5050 = vst [vmem:[%s283 + $0x7c] sm:$0xf] %v4978
        %5051 = vst [vmem:[%s283 + $0x80] sm:$0xf] %v4979
        %5052 = vst [vmem:[%s283 + $0x84] sm:$0xf] %v4980
        %5053 = vst [vmem:[%s283 + $0x88] sm:$0xf] %v4981
        %5054 = vst [vmem:[%s283 + $0x8c] sm:$0xf] %v4982
        %5055 = vst [vmem:[%s283 + $0x90] sm:$0xf] %v4983
        %5056 = vst [vmem:[%s283 + $0x94] sm:$0xf] %v4984
        %5057 = vst [vmem:[%s283 + $0x98] sm:$0xf] %v4985
        %5058 = vst [vmem:[%s283 + $0x9c] sm:$0xf] %v4986
        %5059 = vst [vmem:[%s283 + $0xa0] sm:$0xf] %v4987
        %5060 = vst [vmem:[%s283 + $0xa4] sm:$0xf] %v4988
        %5061 = vst [vmem:[%s283 + $0xa8] sm:$0xf] %v4989
        %5062 = vst [vmem:[%s283 + $0xac] sm:$0xf] %v4990
        %5063 = vst [vmem:[%s283 + $0xb0] sm:$0xf] %v4991
      $region44: #{residual_block_forward.2} parent=35 // pred_fallthru
        _
      %p5064 = scmp.lt.s32.totalorder %s20, 1
      %s5065 = scalar_select %p5064, %s20, 1
      %p5066 = scmp.lt.s32.totalorder %s21, 0
      %s5067 = scalar_select %p5066, %s21, 0
      %s5068 = smul.addr %s5065, 50
      %s5069 = sadd.s32 %s5067, %s5068
      %s5070 = smul.addr %s5069, 4
      %s5071 = scalar_lea.vmem %s4, %s5070
      // Predicated region
      $region45: #{residual_block_forward.2} parent=35 // pred_check
        %p5072 = pneg %p157
      $region46: #{residual_block_forward.2} parent=35 // pred_check_branch
        %5074 = sbr.rel (%p5072) target = $region48
      $region47: #{residual_block_forward.2} parent=35 // pred_region
        _
      $region48: #{residual_block_forward.2} parent=35 // pred_fallthru
        _
    $region36: #{residual_block_forward.2} parent=5 // pred_fallthru
      _
    %p5075 = scmp.le.s32.totalorder 2, %s10
    // Predicated region
    $region49: #{residual_block_forward.2} parent=5 // pred_check
      %p5076 = pneg %p5075
    $region50: #{residual_block_forward.2} parent=5 // pred_check_branch
      %5078 = sbr.rel (%p5076) target = $region52
    $region51: #{residual_block_forward.2} parent=5 // pred_region
      %s5079 = ssub.s32 %s10, 2
      // Predicated region
      $region53: #{residual_block_forward.2} parent=51 // pred_check
        %p5080 = pneg %p163
      $region54: #{residual_block_forward.2} parent=51 // pred_check_branch
        %5082 = sbr.rel (%p5080) target = $region56
      $region55: #{residual_block_forward.2} parent=51 // pred_region
        %p5083 = scmp.lt.s32.totalorder %s23, 1
        %s5084 = scalar_select %p5083, %s23, 1
        %p5085 = scmp.lt.s32.totalorder %s24, 0
        %s5086 = scalar_select %p5085, %s24, 0
        %s5087 = smul.addr %s5084, 50
        %s5088 = sadd.s32 %s5086, %s5087
        %s5089 = smul.addr %s5088, 4
        %s5090 = scalar_lea.vmem %s4, %s5089
      $region56: #{residual_block_forward.2} parent=51 // pred_fallthru
        _
    $region52: #{residual_block_forward.2} parent=5 // pred_fallthru
      _
  $region6: #{residual_block_forward.2} parent=0 // loop_footer
    %s14 = sadd.s32 1, %s10
  $region7: #{residual_block_forward.2} parent=0 // loop_footer_branch
    %9 = sbr.rel target = $region3
  $region8: #{residual_block_forward.2} parent=0 // loop_exit
    _

</llo_original>
